<compile_context>
chip_gen: v7x
topology: tpu7x:2x2x1
jax: 0.10.0
libtpu: 0.0.40
codegen_flags: <defaults>
</compile_context>

<pallas_src>
import functools
from math import ceil

import jax
import jax.numpy as jnp
import numpy as np
from jax.experimental import pallas as pl
from jax.experimental.pallas import tpu as pltpu

KERNEL = 5            # conv kernel size (both convs)
PAD = KERNEL // 2     # 'same' padding
LANES = 128           # TPU lane width; all channel dims padded to this
C1, C2 = 16, 32       # conv1 / conv2 output channels (fixed by the model)
FCH = 128             # fc1 output width (fixed by the model)

# The shifted-slice conv2 relies on row-wrap taps landing in zero pad columns.
assert KERNEL - 1 <= 2 * PAD


def _round_up(x, m):
    return -(-x // m) * m


def _derive_dims(img_h, img_w, colour_size, n_classes):
    """Static shape bookkeeping mirroring ConvNet.__init__ plus kernel layout dims."""
    H1, W1 = img_h, img_w                     # conv1: 'same', stride 1
    H2, W2 = H1 // 3, W1 // 3                 # maxPool3 (kernel 3, stride 3)
    H3, W3 = H2 // 2, W2 // 2                 # conv2 'same' then maxPool2 (2, 2)
    Hp2, Wp2 = H2 + 2 * PAD, W2 + 2 * PAD     # conv2 zero-padded grid
    L2 = Hp2 * Wp2
    P2 = PAD * Wp2 + PAD
    K1 = KERNEL * KERNEL * colour_size        # conv1 im2col depth
    return dict(
        H1=H1, W1=W1, L1=H1 * W1, L1P=_round_up(H1 * W1, 8),
        H2=H2, W2=W2, H3=H3, W3=W3,
        Hp2=Hp2, Wp2=Wp2, L2=L2, P2=P2, R2=L2 + 2 * P2,
        Cin=colour_size, K1=K1, K1P=_round_up(K1, 16),
        NCP=_round_up(max(n_classes, 1), LANES),
        flattened=H3 * W3 * C2,
    )


def init_params(key, img_h, img_w, n_classes, colour_size):
    """Deterministic params mirroring ConvNet.__init__ shape bookkeeping."""
    h, w = img_h, img_w
    h, w = ceil(h / 1), ceil(w / 1)      # conv1 ('same', stride 1)
    h, w = int(h / 3), int(w / 3)        # maxPool3
    h, w = ceil(h / 1), ceil(w / 1)      # conv2
    h, w = int(h / 2), int(w / 2)        # maxPool2
    flattened = h * w * 32

    keys = jax.random.split(key, 12)

    def u(k, shape, fan_in):
        bound = 1.0 / float(fan_in) ** 0.5
        return jax.random.uniform(k, shape, jnp.float32, -bound, bound)

    params = {
        "conv1_w": u(keys[0], (5, 5, colour_size, 16), 5 * 5 * colour_size),
        "conv1_b": u(keys[1], (16,), 5 * 5 * colour_size),
        "conv2_w": u(keys[2], (5, 5, 16, 32), 5 * 5 * 16),
        "conv2_b": u(keys[3], (32,), 5 * 5 * 16),
        "fc1_w":   u(keys[4], (flattened, 128), flattened),
        "fc1_b":   u(keys[5], (128,), flattened),
        "fc2_w":   u(keys[6], (128, 64), 128),
        "fc2_b":   u(keys[7], (64,), 128),
        "fc3_w":   u(keys[8], (64, 32), 64),
        "fc3_b":   u(keys[9], (32,), 64),
        "fc4_w":   u(keys[10], (32, n_classes), 32),
        "fc4_b":   u(keys[11], (n_classes,), 32),
    }
    return params, flattened


def prepare_kernel_params(params, img_h, img_w, colour_size, n_classes):
    """One-time host-side repacking into lane-dense, tile-aligned bf16 layouts."""
    d = _derive_dims(img_h, img_w, colour_size, n_classes)
    K1, K1P, NCP, H3, W3 = d["K1"], d["K1P"], d["NCP"], d["H3"], d["W3"]

    # conv1: im2col weight, rows in (kh, kw, c) order matching the XLA-prologue
    # lane order; zero-padded to K1P rows / 128 output lanes.
    w1 = np.asarray(params["conv1_w"], np.float32)            # (5,5,Cin,16)
    w1k = np.zeros((K1P, LANES), np.float32)
    w1k[:K1, :C1] = w1.reshape(K1, C1)

    # conv2: tap-major 128-row blocks (tap t = kh*5+kw occupies rows
    # [t*128, t*128+16)), matching the in-kernel im2col lane order.
    w2 = np.asarray(params["conv2_w"], np.float32)            # (5,5,16,32)
    w2k = np.zeros((KERNEL * KERNEL * LANES, LANES), np.float32)
    for kh in range(KERNEL):
        for kw in range(KERNEL):
            t = kh * KERNEL + kw
            w2k[t * LANES:t * LANES + C1, :C2] = w2[kh, kw]

    # fc1: fold torch's NCHW flatten (index c*H3*W3 + p) into the weight,
    # laid out per spatial position p in 128-row (channel) blocks.
    f1 = np.asarray(params["fc1_w"], np.float32)               # (flattened, 128)
    wf1k = np.zeros((H3 * W3, LANES, FCH), np.float32)
    wf1k[:, :C2, :] = f1.reshape(C2, H3 * W3, FCH).transpose(1, 0, 2)
    wf1k = wf1k.reshape(H3 * W3 * LANES, FCH)

    def pad2d(w, rows, cols):
        a = np.asarray(w, np.float32)
        out = np.zeros((rows, cols), np.float32)
        out[:a.shape[0], :a.shape[1]] = a
        return out

    def padb(b, cols):
        a = np.asarray(b, np.float32)
        out = np.zeros((1, cols), np.float32)
        out[0, :a.shape[0]] = a
        return out

    bf16 = lambda a: jnp.asarray(a, jnp.bfloat16)
    f32 = lambda a: jnp.asarray(a, jnp.float32)
    return {
        "w1": bf16(w1k), "b1": f32(padb(params["conv1_b"], LANES)),
        "w2": bf16(w2k), "b2": f32(padb(params["conv2_b"], LANES)),
        "wf1": bf16(wf1k), "bf1": f32(padb(params["fc1_b"], FCH)),
        "wf2": bf16(pad2d(params["fc2_w"], FCH, LANES)),
        "bf2": f32(padb(params["fc2_b"], LANES)),
        "wf3": bf16(pad2d(params["fc3_w"], LANES, LANES)),
        "bf3": f32(padb(params["fc3_b"], LANES)),
        "wf4": bf16(pad2d(params["fc4_w"], LANES, NCP)),
        "bf4": f32(padb(params["fc4_b"], NCP)),
    }


def convnet_forward(prep, x_nchw, *, dims, n_classes, batch_block=None):
    d = dims
    B = x_nchw.shape[0]
    H1, W1, L1, L1P = d["H1"], d["W1"], d["L1"], d["L1P"]
    H2, W2, H3, W3 = d["H2"], d["W2"], d["H3"], d["W3"]
    Wp2, L2, P2, R2 = d["Wp2"], d["L2"], d["P2"], d["R2"]
    K1, K1P, NCP = d["K1"], d["K1P"], d["NCP"]

    # Batch blocking: bb samples per grid step (FC tail runs at M=bb); keep
    # at least 2 grid steps so both v7x TensorCores get work.
    if batch_block is None:
        batch_block = 1 if B <= 2 else max(1, min(8, B // 2))
    bb = batch_block
    G = -(-B // bb)
    Bp = G * bb

    # ---- XLA prologue: NCHW -> NHWC -> 'same' pad -> conv1 im2col (bf16) ----
    # conv1 then becomes a single (L1P, K1P) x (K1P, 128) matmul in the kernel.
    xh = jnp.transpose(x_nchw, (0, 2, 3, 1)).astype(jnp.bfloat16)
    xp = jnp.pad(xh, ((0, 0), (PAD, PAD), (PAD, PAD), (0, 0)))
    cols = [xp[:, kh:kh + H1, kw:kw + W1, :]
            for kh in range(KERNEL) for kw in range(KERNEL)]
    xc = jnp.concatenate(cols, axis=-1).reshape(B, L1, K1)
    xc = jnp.pad(xc, ((0, Bp - B), (0, L1P - L1), (0, K1P - K1)))

    tap2 = [kh * Wp2 + kw for kh in range(KERNEL) for kw in range(KERNEL)]

    def kernel(x_ref, w1_ref, b1_ref, w2_ref, b2_ref,
               wf1_ref, bf1_ref, wf2_ref, bf2_ref, wf3_ref, bf3_ref,
               wf4_ref, bf4_ref, o_ref, y1_ref, x2_ref, y2_ref):
        f32 = jnp.float32
        bf16_ = jnp.bfloat16

        # conv2's zero-padded grid: zero once per step (pad rows are never
        # written; interior rows are fully overwritten for every sample).
        x2_ref[...] = jnp.zeros_like(x2_ref)

        rows = []
        for s in range(bb):
            # conv1 + bias + relu: ONE matmul on the prologue im2col.
            y1 = jnp.dot(x_ref[s], w1_ref[...], preferred_element_type=f32)
            y1_ref[...] = jnp.maximum(y1 + b1_ref[...], 0.0)

            # maxpool 3x3 / stride 3 via stride-3 slices, scattered straight
            # into the interior rows of conv2's zero-padded grid (one bf16 cast).
            for i2 in range(H2):
                slab = None
                for di in range(3):
                    row0 = (3 * i2 + di) * W1
                    for dj in range(3):
                        piece = y1_ref[pl.ds(row0 + dj, W2, stride=3), :]
                        slab = piece if slab is None else jnp.maximum(slab, piece)
                dst = P2 + (PAD + i2) * Wp2 + PAD
                x2_ref[dst:dst + W2, :] = slab.astype(bf16_)

            # conv2 + bias + relu: in-kernel im2col (lane concat of the 25
            # shifted bf16 slices) -> ONE K=25*128 matmul.
            x2col = jnp.concatenate([x2_ref[t:t + L2, :] for t in tap2], axis=-1)
            y2 = jnp.dot(x2col, w2_ref[...], preferred_element_type=f32)
            y2_ref[...] = jnp.maximum(y2 + b2_ref[...], 0.0)

            # maxpool 2x2 / stride 2 only at the H3*W3 needed positions, fused
            # with torch's NCHW flatten: one lane-dense (1, H3*W3*128) fc1 row.
            pieces = []
            for i3 in range(H3):
                for j3 in range(W3):
                    base = (PAD + 2 * i3) * Wp2 + (PAD + 2 * j3)
                    v = jnp.maximum(y2_ref[base:base + 1, :],
                                    y2_ref[base + 1:base + 2, :])
                    v = jnp.maximum(v, y2_ref[base + Wp2:base + Wp2 + 1, :])
                    v = jnp.maximum(v, y2_ref[base + Wp2 + 1:base + Wp2 + 2, :])
                    pieces.append(v)
            rows.append(jnp.concatenate(pieces, axis=-1))

        # FC tail at M=bb; one deep-K matmul for fc1, value-level throughout.
        h = rows[0] if bb == 1 else jnp.concatenate(rows, axis=0)
        h = jnp.maximum(jnp.dot(h.astype(bf16_), wf1_ref[...],
                                preferred_element_type=f32) + bf1_ref[...], 0.0)
        h = jnp.maximum(jnp.dot(h.astype(bf16_), wf2_ref[...],
                                preferred_element_type=f32) + bf2_ref[...], 0.0)
        h = jnp.maximum(jnp.dot(h.astype(bf16_), wf3_ref[...],
                                preferred_element_type=f32) + bf3_ref[...], 0.0)
        o_ref[...] = jnp.dot(h.astype(bf16_), wf4_ref[...],
                             preferred_element_type=f32) + bf4_ref[...]

    weight_args = [prep["w1"], prep["b1"], prep["w2"], prep["b2"],
                   prep["wf1"], prep["bf1"], prep["wf2"], prep["bf2"],
                   prep["wf3"], prep["bf3"], prep["wf4"], prep["bf4"]]

    out = pl.pallas_call(
        kernel,
        out_shape=jax.ShapeDtypeStruct((G, bb, NCP), jnp.float32),
        grid=(G,),
        in_specs=[pl.BlockSpec((bb, L1P, K1P), lambda g: (g, 0, 0))]
                 + [pl.BlockSpec(a.shape, lambda g: (0, 0)) for a in weight_args],
        out_specs=pl.BlockSpec((None, bb, NCP), lambda g: (g, 0, 0)),
        scratch_shapes=[
            pltpu.VMEM((L1P, LANES), jnp.float32),   # conv1 output grid
            pltpu.VMEM((R2, LANES), jnp.bfloat16),   # conv2 zero-padded (extended) input
            pltpu.VMEM((L2, LANES), jnp.float32),    # conv2 output (padded grid)
        ],
        compiler_params=pltpu.CompilerParams(
            dimension_semantics=("parallel",),
            vmem_limit_bytes=32 * 1024 * 1024),
    )(xc, *weight_args)

    return out.reshape(Bp, NCP)[:B, :n_classes]


def reference_forward(params, x_nchw):
    """Plain-JAX (XLA) reference matching the PyTorch ConvNet forward."""
    x = jnp.transpose(x_nchw, (0, 2, 3, 1)).astype(jnp.float32)

    def conv_relu(x, w, b):
        B, H, W, Ci = x.shape
        xp = jnp.pad(x, ((0, 0), (PAD, PAD), (PAD, PAD), (0, 0)))
        cols = [xp[:, kh:kh + H, kw:kw + W, :]
                for kh in range(KERNEL) for kw in range(KERNEL)]
        p = jnp.stack(cols, axis=3).reshape(B * H * W, KERNEL * KERNEL * Ci)
        o = p @ w.reshape(KERNEL * KERNEL * Ci, -1) + b
        return jnp.maximum(o, 0.0).reshape(B, H, W, -1)

    def maxpool(x, k, s):
        B, H, W, Cc = x.shape
        Ho, Wo = (H - k) // s + 1, (W - k) // s + 1
        wins = [x[:, di:di + s * Ho:s, dj:dj + s * Wo:s, :]
                for di in range(k) for dj in range(k)]
        return jnp.stack(wins, 0).max(0)

    x = maxpool(conv_relu(x, params["conv1_w"], params["conv1_b"]), 3, 3)
    x = maxpool(conv_relu(x, params["conv2_w"], params["conv2_b"]), 2, 2)
    x = jnp.transpose(x, (0, 3, 1, 2)).reshape(x.shape[0], -1)
    x = jnp.maximum(x @ params["fc1_w"] + params["fc1_b"], 0.0)
    x = jnp.maximum(x @ params["fc2_w"] + params["fc2_b"], 0.0)
    x = jnp.maximum(x @ params["fc3_w"] + params["fc3_b"], 0.0)
    return x @ params["fc4_w"] + params["fc4_b"]


if __name__ == "__main__":
    IMG_H = IMG_W = 24
    N_CLASSES = 10
    COLOUR = 1
    BATCH = 2

    key = jax.random.PRNGKey(0)
    pkey, xkey = jax.random.split(key)
    params, flattened = init_params(pkey, IMG_H, IMG_W, N_CLASSES, COLOUR)
    x = jax.random.normal(xkey, (BATCH, COLOUR, IMG_H, IMG_W), jnp.float32)

    dims = _derive_dims(IMG_H, IMG_W, COLOUR, N_CLASSES)
    assert dims["flattened"] == flattened, (dims["flattened"], flattened)
    prep = prepare_kernel_params(params, IMG_H, IMG_W, COLOUR, N_CLASSES)

    fwd = jax.jit(functools.partial(convnet_forward, dims=dims, n_classes=N_CLASSES))
    out = fwd(prep, x)
    jax.block_until_ready(out)
    assert out.shape == (BATCH, N_CLASSES), out.shape

    # Numerical check vs the plain-JAX reference (bf16 matmul operands in-kernel).
    ref = reference_forward(params, x)
    err = float(jnp.max(jnp.abs(out - ref)))
    assert err < 5e-2, f"max |err| vs reference = {err}"
    print("KERNEL_OK")
</pallas_src>

<mosaic_0001>
module attributes {stable_mosaic.version = 11 : i64} {
  func.func @kernel(%arg0: i32, %arg1: memref<1x576x32xbf16, #tpu.memory_space<vmem>>, %arg2: memref<32x128xbf16, #tpu.memory_space<vmem>>, %arg3: memref<1x128xf32, #tpu.memory_space<vmem>>, %arg4: memref<3200x128xbf16, #tpu.memory_space<vmem>>, %arg5: memref<1x128xf32, #tpu.memory_space<vmem>>, %arg6: memref<2048x128xbf16, #tpu.memory_space<vmem>>, %arg7: memref<1x128xf32, #tpu.memory_space<vmem>>, %arg8: memref<128x128xbf16, #tpu.memory_space<vmem>>, %arg9: memref<1x128xf32, #tpu.memory_space<vmem>>, %arg10: memref<128x128xbf16, #tpu.memory_space<vmem>>, %arg11: memref<1x128xf32, #tpu.memory_space<vmem>>, %arg12: memref<128x128xbf16, #tpu.memory_space<vmem>>, %arg13: memref<1x128xf32, #tpu.memory_space<vmem>>, %arg14: memref<1x1x128xf32, #tpu.memory_space<vmem>>, %arg15: memref<576x128xf32, #tpu.memory_space<vmem>>, %arg16: memref<196x128xbf16, #tpu.memory_space<vmem>>, %arg17: memref<144x128xf32, #tpu.memory_space<vmem>>) attributes {dimension_semantics = [#tpu.dimension_semantics<parallel>], iteration_bounds = array<i64: 2>, scalar_prefetch = 0 : i64, scratch_operands = 3 : i64, tpu.core_type = #tpu.core_type<tc>, window_params = [{transform_indices = @transform_0, window_bounds = array<i64: 1, 576, 32>}, {pipeline_mode = #tpu.pipeline_mode<synchronous>, transform_indices = @transform_1, window_bounds = array<i64: 32, 128>}, {pipeline_mode = #tpu.pipeline_mode<synchronous>, transform_indices = @transform_2, window_bounds = array<i64: 1, 128>}, {pipeline_mode = #tpu.pipeline_mode<synchronous>, transform_indices = @transform_3, window_bounds = array<i64: 3200, 128>}, {pipeline_mode = #tpu.pipeline_mode<synchronous>, transform_indices = @transform_4, window_bounds = array<i64: 1, 128>}, {pipeline_mode = #tpu.pipeline_mode<synchronous>, transform_indices = @transform_5, window_bounds = array<i64: 2048, 128>}, {pipeline_mode = #tpu.pipeline_mode<synchronous>, transform_indices = @transform_6, window_bounds = array<i64: 1, 128>}, {pipeline_mode = #tpu.pipeline_mode<synchronous>, transform_indices = @transform_7, window_bounds = array<i64: 128, 128>}, {pipeline_mode = #tpu.pipeline_mode<synchronous>, transform_indices = @transform_8, window_bounds = array<i64: 1, 128>}, {pipeline_mode = #tpu.pipeline_mode<synchronous>, transform_indices = @transform_9, window_bounds = array<i64: 128, 128>}, {pipeline_mode = #tpu.pipeline_mode<synchronous>, transform_indices = @transform_10, window_bounds = array<i64: 1, 128>}, {pipeline_mode = #tpu.pipeline_mode<synchronous>, transform_indices = @transform_11, window_bounds = array<i64: 128, 128>}, {pipeline_mode = #tpu.pipeline_mode<synchronous>, transform_indices = @transform_12, window_bounds = array<i64: 1, 128>}, {transform_indices = @transform_13, window_bounds = array<i64: 1, 1, 128>}]} {
    %cst = arith.constant 0.000000e+00 : bf16
    %0 = vector.broadcast %cst : bf16 to vector<196x128xbf16>
    %c0 = arith.constant 0 : index
    %c0_0 = arith.constant 0 : index
    %1 = vector.load %arg16[%c0, %c0_0] : memref<196x128xbf16, #tpu.memory_space<vmem>>, vector<196x128xbf16>
    tpu.vector_store %arg16[%c0, %c0_0], %0 {strides = array<i32>} : memref<196x128xbf16, #tpu.memory_space<vmem>>, vector<196x128xbf16>,
    %c0_1 = arith.constant 0 : index
    %c0_2 = arith.constant 0 : index
    %c0_3 = arith.constant 0 : index
    %2 = vector.load %arg1[%c0_1, %c0_2, %c0_3] : memref<1x576x32xbf16, #tpu.memory_space<vmem>>, vector<1x576x32xbf16>
    %3 = vector.shape_cast %2 : vector<1x576x32xbf16> to vector<576x32xbf16>
    %c0_4 = arith.constant 0 : index
    %c0_5 = arith.constant 0 : index
    %4 = vector.load %arg2[%c0_4, %c0_5] : memref<32x128xbf16, #tpu.memory_space<vmem>>, vector<32x128xbf16>
    %cst_6 = arith.constant dense<0.000000e+00> : vector<576x128xf32>
    %5 = tpu.matmul %3, %4, %cst_6 {dimension_numbers = #tpu.dot_dimension_numbers<[1], [0], [0], [1], [0, 0, 1, 1], [], []>} : vector<576x32xbf16>, vector<32x128xbf16>, vector<576x128xf32> -> vector<576x128xf32>
    %c0_7 = arith.constant 0 : index
    %c0_8 = arith.constant 0 : index
    %6 = vector.load %arg3[%c0_7, %c0_8] : memref<1x128xf32, #tpu.memory_space<vmem>>, vector<1x128xf32>
    %7 = vector.broadcast %6 : vector<1x128xf32> to vector<576x128xf32>
    %8 = arith.addf %5, %7 : vector<576x128xf32>
    %cst_9 = arith.constant 0.000000e+00 : f32
    %9 = vector.broadcast %cst_9 : f32 to vector<576x128xf32>
    %10 = arith.maximumf %8, %9 : vector<576x128xf32>
    %c0_10 = arith.constant 0 : index
    %c0_11 = arith.constant 0 : index
    %11 = vector.load %arg15[%c0_10, %c0_11] : memref<576x128xf32, #tpu.memory_space<vmem>>, vector<576x128xf32>
    tpu.vector_store %arg15[%c0_10, %c0_11], %10 {strides = array<i32>} : memref<576x128xf32, #tpu.memory_space<vmem>>, vector<576x128xf32>,
    %c0_12 = arith.constant 0 : index
    %c0_13 = arith.constant 0 : index
    %12 = tpu.strided_load %arg15[%c0_12, %c0_13] {strides = array<i32: 3, 1>} : memref<576x128xf32, #tpu.memory_space<vmem>>, vector<8x128xf32>
    %c1 = arith.constant 1 : index
    %c0_14 = arith.constant 0 : index
    %13 = tpu.strided_load %arg15[%c1, %c0_14] {strides = array<i32: 3, 1>} : memref<576x128xf32, #tpu.memory_space<vmem>>, vector<8x128xf32>
    %14 = arith.maximumf %12, %13 : vector<8x128xf32>
    %c2 = arith.constant 2 : index
    %c0_15 = arith.constant 0 : index
    %15 = tpu.strided_load %arg15[%c2, %c0_15] {strides = array<i32: 3, 1>} : memref<576x128xf32, #tpu.memory_space<vmem>>, vector<8x128xf32>
    %16 = arith.maximumf %14, %15 : vector<8x128xf32>
    %c24 = arith.constant 24 : index
    %c0_16 = arith.constant 0 : index
    %17 = tpu.strided_load %arg15[%c24, %c0_16] {strides = array<i32: 3, 1>} : memref<576x128xf32, #tpu.memory_space<vmem>>, vector<8x128xf32>
    %18 = arith.maximumf %16, %17 : vector<8x128xf32>
    %c25 = arith.constant 25 : index
    %c0_17 = arith.constant 0 : index
    %19 = tpu.strided_load %arg15[%c25, %c0_17] {strides = array<i32: 3, 1>} : memref<576x128xf32, #tpu.memory_space<vmem>>, vector<8x128xf32>
    %20 = arith.maximumf %18, %19 : vector<8x128xf32>
    %c26 = arith.constant 26 : index
    %c0_18 = arith.constant 0 : index
    %21 = tpu.strided_load %arg15[%c26, %c0_18] {strides = array<i32: 3, 1>} : memref<576x128xf32, #tpu.memory_space<vmem>>, vector<8x128xf32>
    %22 = arith.maximumf %20, %21 : vector<8x128xf32>
    %c48 = arith.constant 48 : index
    %c0_19 = arith.constant 0 : index
    %23 = tpu.strided_load %arg15[%c48, %c0_19] {strides = array<i32: 3, 1>} : memref<576x128xf32, #tpu.memory_space<vmem>>, vector<8x128xf32>
    %24 = arith.maximumf %22, %23 : vector<8x128xf32>
    %c49 = arith.constant 49 : index
    %c0_20 = arith.constant 0 : index
    %25 = tpu.strided_load %arg15[%c49, %c0_20] {strides = array<i32: 3, 1>} : memref<576x128xf32, #tpu.memory_space<vmem>>, vector<8x128xf32>
    %26 = arith.maximumf %24, %25 : vector<8x128xf32>
    %c50 = arith.constant 50 : index
    %c0_21 = arith.constant 0 : index
    %27 = tpu.strided_load %arg15[%c50, %c0_21] {strides = array<i32: 3, 1>} : memref<576x128xf32, #tpu.memory_space<vmem>>, vector<8x128xf32>
    %28 = arith.maximumf %26, %27 : vector<8x128xf32>
    %29 = arith.truncf %28 : vector<8x128xf32> to vector<8x128xbf16>
    %c52 = arith.constant 52 : index
    %c0_22 = arith.constant 0 : index
    %30 = vector.load %arg16[%c52, %c0_22] : memref<196x128xbf16, #tpu.memory_space<vmem>>, vector<8x128xbf16>
    tpu.vector_store %arg16[%c52, %c0_22], %29 {strides = array<i32>} : memref<196x128xbf16, #tpu.memory_space<vmem>>, vector<8x128xbf16>,
    %c72 = arith.constant 72 : index
    %c0_23 = arith.constant 0 : index
    %31 = tpu.strided_load %arg15[%c72, %c0_23] {strides = array<i32: 3, 1>} : memref<576x128xf32, #tpu.memory_space<vmem>>, vector<8x128xf32>
    %c73 = arith.constant 73 : index
    %c0_24 = arith.constant 0 : index
    %32 = tpu.strided_load %arg15[%c73, %c0_24] {strides = array<i32: 3, 1>} : memref<576x128xf32, #tpu.memory_space<vmem>>, vector<8x128xf32>
    %33 = arith.maximumf %31, %32 : vector<8x128xf32>
    %c74 = arith.constant 74 : index
    %c0_25 = arith.constant 0 : index
    %34 = tpu.strided_load %arg15[%c74, %c0_25] {strides = array<i32: 3, 1>} : memref<576x128xf32, #tpu.memory_space<vmem>>, vector<8x128xf32>
    %35 = arith.maximumf %33, %34 : vector<8x128xf32>
    %c96 = arith.constant 96 : index
    %c0_26 = arith.constant 0 : index
    %36 = tpu.strided_load %arg15[%c96, %c0_26] {strides = array<i32: 3, 1>} : memref<576x128xf32, #tpu.memory_space<vmem>>, vector<8x128xf32>
    %37 = arith.maximumf %35, %36 : vector<8x128xf32>
    %c97 = arith.constant 97 : index
    %c0_27 = arith.constant 0 : index
    %38 = tpu.strided_load %arg15[%c97, %c0_27] {strides = array<i32: 3, 1>} : memref<576x128xf32, #tpu.memory_space<vmem>>, vector<8x128xf32>
    %39 = arith.maximumf %37, %38 : vector<8x128xf32>
    %c98 = arith.constant 98 : index
    %c0_28 = arith.constant 0 : index
    %40 = tpu.strided_load %arg15[%c98, %c0_28] {strides = array<i32: 3, 1>} : memref<576x128xf32, #tpu.memory_space<vmem>>, vector<8x128xf32>
    %41 = arith.maximumf %39, %40 : vector<8x128xf32>
    %c120 = arith.constant 120 : index
    %c0_29 = arith.constant 0 : index
    %42 = tpu.strided_load %arg15[%c120, %c0_29] {strides = array<i32: 3, 1>} : memref<576x128xf32, #tpu.memory_space<vmem>>, vector<8x128xf32>
    %43 = arith.maximumf %41, %42 : vector<8x128xf32>
    %c121 = arith.constant 121 : index
    %c0_30 = arith.constant 0 : index
    %44 = tpu.strided_load %arg15[%c121, %c0_30] {strides = array<i32: 3, 1>} : memref<576x128xf32, #tpu.memory_space<vmem>>, vector<8x128xf32>
    %45 = arith.maximumf %43, %44 : vector<8x128xf32>
    %c122 = arith.constant 122 : index
    %c0_31 = arith.constant 0 : index
    %46 = tpu.strided_load %arg15[%c122, %c0_31] {strides = array<i32: 3, 1>} : memref<576x128xf32, #tpu.memory_space<vmem>>, vector<8x128xf32>
    %47 = arith.maximumf %45, %46 : vector<8x128xf32>
    %48 = arith.truncf %47 : vector<8x128xf32> to vector<8x128xbf16>
    %c64 = arith.constant 64 : index
    %c0_32 = arith.constant 0 : index
    %49 = vector.load %arg16[%c64, %c0_32] : memref<196x128xbf16, #tpu.memory_space<vmem>>, vector<8x128xbf16>
    tpu.vector_store %arg16[%c64, %c0_32], %48 {strides = array<i32>} : memref<196x128xbf16, #tpu.memory_space<vmem>>, vector<8x128xbf16>,
    %c144 = arith.constant 144 : index
    %c0_33 = arith.constant 0 : index
    %50 = tpu.strided_load %arg15[%c144, %c0_33] {strides = array<i32: 3, 1>} : memref<576x128xf32, #tpu.memory_space<vmem>>, vector<8x128xf32>
    %c145 = arith.constant 145 : index
    %c0_34 = arith.constant 0 : index
    %51 = tpu.strided_load %arg15[%c145, %c0_34] {strides = array<i32: 3, 1>} : memref<576x128xf32, #tpu.memory_space<vmem>>, vector<8x128xf32>
    %52 = arith.maximumf %50, %51 : vector<8x128xf32>
    %c146 = arith.constant 146 : index
    %c0_35 = arith.constant 0 : index
    %53 = tpu.strided_load %arg15[%c146, %c0_35] {strides = array<i32: 3, 1>} : memref<576x128xf32, #tpu.memory_space<vmem>>, vector<8x128xf32>
    %54 = arith.maximumf %52, %53 : vector<8x128xf32>
    %c168 = arith.constant 168 : index
    %c0_36 = arith.constant 0 : index
    %55 = tpu.strided_load %arg15[%c168, %c0_36] {strides = array<i32: 3, 1>} : memref<576x128xf32, #tpu.memory_space<vmem>>, vector<8x128xf32>
    %56 = arith.maximumf %54, %55 : vector<8x128xf32>
    %c169 = arith.constant 169 : index
    %c0_37 = arith.constant 0 : index
    %57 = tpu.strided_load %arg15[%c169, %c0_37] {strides = array<i32: 3, 1>} : memref<576x128xf32, #tpu.memory_space<vmem>>, vector<8x128xf32>
    %58 = arith.maximumf %56, %57 : vector<8x128xf32>
    %c170 = arith.constant 170 : index
    %c0_38 = arith.constant 0 : index
    %59 = tpu.strided_load %arg15[%c170, %c0_38] {strides = array<i32: 3, 1>} : memref<576x128xf32, #tpu.memory_space<vmem>>, vector<8x128xf32>
    %60 = arith.maximumf %58, %59 : vector<8x128xf32>
    %c192 = arith.constant 192 : index
    %c0_39 = arith.constant 0 : index
    %61 = tpu.strided_load %arg15[%c192, %c0_39] {strides = array<i32: 3, 1>} : memref<576x128xf32, #tpu.memory_space<vmem>>, vector<8x128xf32>
    %62 = arith.maximumf %60, %61 : vector<8x128xf32>
    %c193 = arith.constant 193 : index
    %c0_40 = arith.constant 0 : index
    %63 = tpu.strided_load %arg15[%c193, %c0_40] {strides = array<i32: 3, 1>} : memref<576x128xf32, #tpu.memory_space<vmem>>, vector<8x128xf32>
    %64 = arith.maximumf %62, %63 : vector<8x128xf32>
    %c194 = arith.constant 194 : index
    %c0_41 = arith.constant 0 : index
    %65 = tpu.strided_load %arg15[%c194, %c0_41] {strides = array<i32: 3, 1>} : memref<576x128xf32, #tpu.memory_space<vmem>>, vector<8x128xf32>
    %66 = arith.maximumf %64, %65 : vector<8x128xf32>
    %67 = arith.truncf %66 : vector<8x128xf32> to vector<8x128xbf16>
    %c76 = arith.constant 76 : index
    %c0_42 = arith.constant 0 : index
    %68 = vector.load %arg16[%c76, %c0_42] : memref<196x128xbf16, #tpu.memory_space<vmem>>, vector<8x128xbf16>
    tpu.vector_store %arg16[%c76, %c0_42], %67 {strides = array<i32>} : memref<196x128xbf16, #tpu.memory_space<vmem>>, vector<8x128xbf16>,
    %c216 = arith.constant 216 : index
    %c0_43 = arith.constant 0 : index
    %69 = tpu.strided_load %arg15[%c216, %c0_43] {strides = array<i32: 3, 1>} : memref<576x128xf32, #tpu.memory_space<vmem>>, vector<8x128xf32>
    %c217 = arith.constant 217 : index
    %c0_44 = arith.constant 0 : index
    %70 = tpu.strided_load %arg15[%c217, %c0_44] {strides = array<i32: 3, 1>} : memref<576x128xf32, #tpu.memory_space<vmem>>, vector<8x128xf32>
    %71 = arith.maximumf %69, %70 : vector<8x128xf32>
    %c218 = arith.constant 218 : index
    %c0_45 = arith.constant 0 : index
    %72 = tpu.strided_load %arg15[%c218, %c0_45] {strides = array<i32: 3, 1>} : memref<576x128xf32, #tpu.memory_space<vmem>>, vector<8x128xf32>
    %73 = arith.maximumf %71, %72 : vector<8x128xf32>
    %c240 = arith.constant 240 : index
    %c0_46 = arith.constant 0 : index
    %74 = tpu.strided_load %arg15[%c240, %c0_46] {strides = array<i32: 3, 1>} : memref<576x128xf32, #tpu.memory_space<vmem>>, vector<8x128xf32>
    %75 = arith.maximumf %73, %74 : vector<8x128xf32>
    %c241 = arith.constant 241 : index
    %c0_47 = arith.constant 0 : index
    %76 = tpu.strided_load %arg15[%c241, %c0_47] {strides = array<i32: 3, 1>} : memref<576x128xf32, #tpu.memory_space<vmem>>, vector<8x128xf32>
    %77 = arith.maximumf %75, %76 : vector<8x128xf32>
    %c242 = arith.constant 242 : index
    %c0_48 = arith.constant 0 : index
    %78 = tpu.strided_load %arg15[%c242, %c0_48] {strides = array<i32: 3, 1>} : memref<576x128xf32, #tpu.memory_space<vmem>>, vector<8x128xf32>
    %79 = arith.maximumf %77, %78 : vector<8x128xf32>
    %c264 = arith.constant 264 : index
    %c0_49 = arith.constant 0 : index
    %80 = tpu.strided_load %arg15[%c264, %c0_49] {strides = array<i32: 3, 1>} : memref<576x128xf32, #tpu.memory_space<vmem>>, vector<8x128xf32>
    %81 = arith.maximumf %79, %80 : vector<8x128xf32>
    %c265 = arith.constant 265 : index
    %c0_50 = arith.constant 0 : index
    %82 = tpu.strided_load %arg15[%c265, %c0_50] {strides = array<i32: 3, 1>} : memref<576x128xf32, #tpu.memory_space<vmem>>, vector<8x128xf32>
    %83 = arith.maximumf %81, %82 : vector<8x128xf32>
    %c266 = arith.constant 266 : index
    %c0_51 = arith.constant 0 : index
    %84 = tpu.strided_load %arg15[%c266, %c0_51] {strides = array<i32: 3, 1>} : memref<576x128xf32, #tpu.memory_space<vmem>>, vector<8x128xf32>
    %85 = arith.maximumf %83, %84 : vector<8x128xf32>
    %86 = arith.truncf %85 : vector<8x128xf32> to vector<8x128xbf16>
    %c88 = arith.constant 88 : index
    %c0_52 = arith.constant 0 : index
    %87 = vector.load %arg16[%c88, %c0_52] : memref<196x128xbf16, #tpu.memory_space<vmem>>, vector<8x128xbf16>
    tpu.vector_store %arg16[%c88, %c0_52], %86 {strides = array<i32>} : memref<196x128xbf16, #tpu.memory_space<vmem>>, vector<8x128xbf16>,
    %c288 = arith.constant 288 : index
    %c0_53 = arith.constant 0 : index
    %88 = tpu.strided_load %arg15[%c288, %c0_53] {strides = array<i32: 3, 1>} : memref<576x128xf32, #tpu.memory_space<vmem>>, vector<8x128xf32>
    %c289 = arith.constant 289 : index
    %c0_54 = arith.constant 0 : index
    %89 = tpu.strided_load %arg15[%c289, %c0_54] {strides = array<i32: 3, 1>} : memref<576x128xf32, #tpu.memory_space<vmem>>, vector<8x128xf32>
    %90 = arith.maximumf %88, %89 : vector<8x128xf32>
    %c290 = arith.constant 290 : index
    %c0_55 = arith.constant 0 : index
    %91 = tpu.strided_load %arg15[%c290, %c0_55] {strides = array<i32: 3, 1>} : memref<576x128xf32, #tpu.memory_space<vmem>>, vector<8x128xf32>
    %92 = arith.maximumf %90, %91 : vector<8x128xf32>
    %c312 = arith.constant 312 : index
    %c0_56 = arith.constant 0 : index
    %93 = tpu.strided_load %arg15[%c312, %c0_56] {strides = array<i32: 3, 1>} : memref<576x128xf32, #tpu.memory_space<vmem>>, vector<8x128xf32>
    %94 = arith.maximumf %92, %93 : vector<8x128xf32>
    %c313 = arith.constant 313 : index
    %c0_57 = arith.constant 0 : index
    %95 = tpu.strided_load %arg15[%c313, %c0_57] {strides = array<i32: 3, 1>} : memref<576x128xf32, #tpu.memory_space<vmem>>, vector<8x128xf32>
    %96 = arith.maximumf %94, %95 : vector<8x128xf32>
    %c314 = arith.constant 314 : index
    %c0_58 = arith.constant 0 : index
    %97 = tpu.strided_load %arg15[%c314, %c0_58] {strides = array<i32: 3, 1>} : memref<576x128xf32, #tpu.memory_space<vmem>>, vector<8x128xf32>
    %98 = arith.maximumf %96, %97 : vector<8x128xf32>
    %c336 = arith.constant 336 : index
    %c0_59 = arith.constant 0 : index
    %99 = tpu.strided_load %arg15[%c336, %c0_59] {strides = array<i32: 3, 1>} : memref<576x128xf32, #tpu.memory_space<vmem>>, vector<8x128xf32>
    %100 = arith.maximumf %98, %99 : vector<8x128xf32>
    %c337 = arith.constant 337 : index
    %c0_60 = arith.constant 0 : index
    %101 = tpu.strided_load %arg15[%c337, %c0_60] {strides = array<i32: 3, 1>} : memref<576x128xf32, #tpu.memory_space<vmem>>, vector<8x128xf32>
    %102 = arith.maximumf %100, %101 : vector<8x128xf32>
    %c338 = arith.constant 338 : index
    %c0_61 = arith.constant 0 : index
    %103 = tpu.strided_load %arg15[%c338, %c0_61] {strides = array<i32: 3, 1>} : memref<576x128xf32, #tpu.memory_space<vmem>>, vector<8x128xf32>
    %104 = arith.maximumf %102, %103 : vector<8x128xf32>
    %105 = arith.truncf %104 : vector<8x128xf32> to vector<8x128xbf16>
    %c100 = arith.constant 100 : index
    %c0_62 = arith.constant 0 : index
    %106 = vector.load %arg16[%c100, %c0_62] : memref<196x128xbf16, #tpu.memory_space<vmem>>, vector<8x128xbf16>
    tpu.vector_store %arg16[%c100, %c0_62], %105 {strides = array<i32>} : memref<196x128xbf16, #tpu.memory_space<vmem>>, vector<8x128xbf16>,
    %c360 = arith.constant 360 : index
    %c0_63 = arith.constant 0 : index
    %107 = tpu.strided_load %arg15[%c360, %c0_63] {strides = array<i32: 3, 1>} : memref<576x128xf32, #tpu.memory_space<vmem>>, vector<8x128xf32>
    %c361 = arith.constant 361 : index
    %c0_64 = arith.constant 0 : index
    %108 = tpu.strided_load %arg15[%c361, %c0_64] {strides = array<i32: 3, 1>} : memref<576x128xf32, #tpu.memory_space<vmem>>, vector<8x128xf32>
    %109 = arith.maximumf %107, %108 : vector<8x128xf32>
    %c362 = arith.constant 362 : index
    %c0_65 = arith.constant 0 : index
    %110 = tpu.strided_load %arg15[%c362, %c0_65] {strides = array<i32: 3, 1>} : memref<576x128xf32, #tpu.memory_space<vmem>>, vector<8x128xf32>
    %111 = arith.maximumf %109, %110 : vector<8x128xf32>
    %c384 = arith.constant 384 : index
    %c0_66 = arith.constant 0 : index
    %112 = tpu.strided_load %arg15[%c384, %c0_66] {strides = array<i32: 3, 1>} : memref<576x128xf32, #tpu.memory_space<vmem>>, vector<8x128xf32>
    %113 = arith.maximumf %111, %112 : vector<8x128xf32>
    %c385 = arith.constant 385 : index
    %c0_67 = arith.constant 0 : index
    %114 = tpu.strided_load %arg15[%c385, %c0_67] {strides = array<i32: 3, 1>} : memref<576x128xf32, #tpu.memory_space<vmem>>, vector<8x128xf32>
    %115 = arith.maximumf %113, %114 : vector<8x128xf32>
    %c386 = arith.constant 386 : index
    %c0_68 = arith.constant 0 : index
    %116 = tpu.strided_load %arg15[%c386, %c0_68] {strides = array<i32: 3, 1>} : memref<576x128xf32, #tpu.memory_space<vmem>>, vector<8x128xf32>
    %117 = arith.maximumf %115, %116 : vector<8x128xf32>
    %c408 = arith.constant 408 : index
    %c0_69 = arith.constant 0 : index
    %118 = tpu.strided_load %arg15[%c408, %c0_69] {strides = array<i32: 3, 1>} : memref<576x128xf32, #tpu.memory_space<vmem>>, vector<8x128xf32>
    %119 = arith.maximumf %117, %118 : vector<8x128xf32>
    %c409 = arith.constant 409 : index
    %c0_70 = arith.constant 0 : index
    %120 = tpu.strided_load %arg15[%c409, %c0_70] {strides = array<i32: 3, 1>} : memref<576x128xf32, #tpu.memory_space<vmem>>, vector<8x128xf32>
    %121 = arith.maximumf %119, %120 : vector<8x128xf32>
    %c410 = arith.constant 410 : index
    %c0_71 = arith.constant 0 : index
    %122 = tpu.strided_load %arg15[%c410, %c0_71] {strides = array<i32: 3, 1>} : memref<576x128xf32, #tpu.memory_space<vmem>>, vector<8x128xf32>
    %123 = arith.maximumf %121, %122 : vector<8x128xf32>
    %124 = arith.truncf %123 : vector<8x128xf32> to vector<8x128xbf16>
    %c112 = arith.constant 112 : index
    %c0_72 = arith.constant 0 : index
    %125 = vector.load %arg16[%c112, %c0_72] : memref<196x128xbf16, #tpu.memory_space<vmem>>, vector<8x128xbf16>
    tpu.vector_store %arg16[%c112, %c0_72], %124 {strides = array<i32>} : memref<196x128xbf16, #tpu.memory_space<vmem>>, vector<8x128xbf16>,
    %c432 = arith.constant 432 : index
    %c0_73 = arith.constant 0 : index
    %126 = tpu.strided_load %arg15[%c432, %c0_73] {strides = array<i32: 3, 1>} : memref<576x128xf32, #tpu.memory_space<vmem>>, vector<8x128xf32>
    %c433 = arith.constant 433 : index
    %c0_74 = arith.constant 0 : index
    %127 = tpu.strided_load %arg15[%c433, %c0_74] {strides = array<i32: 3, 1>} : memref<576x128xf32, #tpu.memory_space<vmem>>, vector<8x128xf32>
    %128 = arith.maximumf %126, %127 : vector<8x128xf32>
    %c434 = arith.constant 434 : index
    %c0_75 = arith.constant 0 : index
    %129 = tpu.strided_load %arg15[%c434, %c0_75] {strides = array<i32: 3, 1>} : memref<576x128xf32, #tpu.memory_space<vmem>>, vector<8x128xf32>
    %130 = arith.maximumf %128, %129 : vector<8x128xf32>
    %c456 = arith.constant 456 : index
    %c0_76 = arith.constant 0 : index
    %131 = tpu.strided_load %arg15[%c456, %c0_76] {strides = array<i32: 3, 1>} : memref<576x128xf32, #tpu.memory_space<vmem>>, vector<8x128xf32>
    %132 = arith.maximumf %130, %131 : vector<8x128xf32>
    %c457 = arith.constant 457 : index
    %c0_77 = arith.constant 0 : index
    %133 = tpu.strided_load %arg15[%c457, %c0_77] {strides = array<i32: 3, 1>} : memref<576x128xf32, #tpu.memory_space<vmem>>, vector<8x128xf32>
    %134 = arith.maximumf %132, %133 : vector<8x128xf32>
    %c458 = arith.constant 458 : index
    %c0_78 = arith.constant 0 : index
    %135 = tpu.strided_load %arg15[%c458, %c0_78] {strides = array<i32: 3, 1>} : memref<576x128xf32, #tpu.memory_space<vmem>>, vector<8x128xf32>
    %136 = arith.maximumf %134, %135 : vector<8x128xf32>
    %c480 = arith.constant 480 : index
    %c0_79 = arith.constant 0 : index
    %137 = tpu.strided_load %arg15[%c480, %c0_79] {strides = array<i32: 3, 1>} : memref<576x128xf32, #tpu.memory_space<vmem>>, vector<8x128xf32>
    %138 = arith.maximumf %136, %137 : vector<8x128xf32>
    %c481 = arith.constant 481 : index
    %c0_80 = arith.constant 0 : index
    %139 = tpu.strided_load %arg15[%c481, %c0_80] {strides = array<i32: 3, 1>} : memref<576x128xf32, #tpu.memory_space<vmem>>, vector<8x128xf32>
    %140 = arith.maximumf %138, %139 : vector<8x128xf32>
    %c482 = arith.constant 482 : index
    %c0_81 = arith.constant 0 : index
    %141 = tpu.strided_load %arg15[%c482, %c0_81] {strides = array<i32: 3, 1>} : memref<576x128xf32, #tpu.memory_space<vmem>>, vector<8x128xf32>
    %142 = arith.maximumf %140, %141 : vector<8x128xf32>
    %143 = arith.truncf %142 : vector<8x128xf32> to vector<8x128xbf16>
    %c124 = arith.constant 124 : index
    %c0_82 = arith.constant 0 : index
    %144 = vector.load %arg16[%c124, %c0_82] : memref<196x128xbf16, #tpu.memory_space<vmem>>, vector<8x128xbf16>
    tpu.vector_store %arg16[%c124, %c0_82], %143 {strides = array<i32>} : memref<196x128xbf16, #tpu.memory_space<vmem>>, vector<8x128xbf16>,
    %c504 = arith.constant 504 : index
    %c0_83 = arith.constant 0 : index
    %145 = tpu.strided_load %arg15[%c504, %c0_83] {strides = array<i32: 3, 1>} : memref<576x128xf32, #tpu.memory_space<vmem>>, vector<8x128xf32>
    %c505 = arith.constant 505 : index
    %c0_84 = arith.constant 0 : index
    %146 = tpu.strided_load %arg15[%c505, %c0_84] {strides = array<i32: 3, 1>} : memref<576x128xf32, #tpu.memory_space<vmem>>, vector<8x128xf32>
    %147 = arith.maximumf %145, %146 : vector<8x128xf32>
    %c506 = arith.constant 506 : index
    %c0_85 = arith.constant 0 : index
    %148 = tpu.strided_load %arg15[%c506, %c0_85] {strides = array<i32: 3, 1>} : memref<576x128xf32, #tpu.memory_space<vmem>>, vector<8x128xf32>
    %149 = arith.maximumf %147, %148 : vector<8x128xf32>
    %c528 = arith.constant 528 : index
    %c0_86 = arith.constant 0 : index
    %150 = tpu.strided_load %arg15[%c528, %c0_86] {strides = array<i32: 3, 1>} : memref<576x128xf32, #tpu.memory_space<vmem>>, vector<8x128xf32>
    %151 = arith.maximumf %149, %150 : vector<8x128xf32>
    %c529 = arith.constant 529 : index
    %c0_87 = arith.constant 0 : index
    %152 = tpu.strided_load %arg15[%c529, %c0_87] {strides = array<i32: 3, 1>} : memref<576x128xf32, #tpu.memory_space<vmem>>, vector<8x128xf32>
    %153 = arith.maximumf %151, %152 : vector<8x128xf32>
    %c530 = arith.constant 530 : index
    %c0_88 = arith.constant 0 : index
    %154 = tpu.strided_load %arg15[%c530, %c0_88] {strides = array<i32: 3, 1>} : memref<576x128xf32, #tpu.memory_space<vmem>>, vector<8x128xf32>
    %155 = arith.maximumf %153, %154 : vector<8x128xf32>
    %c552 = arith.constant 552 : index
    %c0_89 = arith.constant 0 : index
    %156 = tpu.strided_load %arg15[%c552, %c0_89] {strides = array<i32: 3, 1>} : memref<576x128xf32, #tpu.memory_space<vmem>>, vector<8x128xf32>
    %157 = arith.maximumf %155, %156 : vector<8x128xf32>
    %c553 = arith.constant 553 : index
    %c0_90 = arith.constant 0 : index
    %158 = tpu.strided_load %arg15[%c553, %c0_90] {strides = array<i32: 3, 1>} : memref<576x128xf32, #tpu.memory_space<vmem>>, vector<8x128xf32>
    %159 = arith.maximumf %157, %158 : vector<8x128xf32>
    %c554 = arith.constant 554 : index
    %c0_91 = arith.constant 0 : index
    %160 = tpu.strided_load %arg15[%c554, %c0_91] {strides = array<i32: 3, 1>} : memref<576x128xf32, #tpu.memory_space<vmem>>, vector<8x128xf32>
    %161 = arith.maximumf %159, %160 : vector<8x128xf32>
    %162 = arith.truncf %161 : vector<8x128xf32> to vector<8x128xbf16>
    %c136 = arith.constant 136 : index
    %c0_92 = arith.constant 0 : index
    %163 = vector.load %arg16[%c136, %c0_92] : memref<196x128xbf16, #tpu.memory_space<vmem>>, vector<8x128xbf16>
    tpu.vector_store %arg16[%c136, %c0_92], %162 {strides = array<i32>} : memref<196x128xbf16, #tpu.memory_space<vmem>>, vector<8x128xbf16>,
    %c0_93 = arith.constant 0 : index
    %c0_94 = arith.constant 0 : index
    %164 = vector.load %arg16[%c0_93, %c0_94] : memref<196x128xbf16, #tpu.memory_space<vmem>>, vector<144x128xbf16>
    %c1_95 = arith.constant 1 : index
    %c0_96 = arith.constant 0 : index
    %165 = vector.load %arg16[%c1_95, %c0_96] : memref<196x128xbf16, #tpu.memory_space<vmem>>, vector<144x128xbf16>
    %c2_97 = arith.constant 2 : index
    %c0_98 = arith.constant 0 : index
    %166 = vector.load %arg16[%c2_97, %c0_98] : memref<196x128xbf16, #tpu.memory_space<vmem>>, vector<144x128xbf16>
    %c3 = arith.constant 3 : index
    %c0_99 = arith.constant 0 : index
    %167 = vector.load %arg16[%c3, %c0_99] : memref<196x128xbf16, #tpu.memory_space<vmem>>, vector<144x128xbf16>
    %c4 = arith.constant 4 : index
    %c0_100 = arith.constant 0 : index
    %168 = vector.load %arg16[%c4, %c0_100] : memref<196x128xbf16, #tpu.memory_space<vmem>>, vector<144x128xbf16>
    %c12 = arith.constant 12 : index
    %c0_101 = arith.constant 0 : index
    %169 = vector.load %arg16[%c12, %c0_101] : memref<196x128xbf16, #tpu.memory_space<vmem>>, vector<144x128xbf16>
    %c13 = arith.constant 13 : index
    %c0_102 = arith.constant 0 : index
    %170 = vector.load %arg16[%c13, %c0_102] : memref<196x128xbf16, #tpu.memory_space<vmem>>, vector<144x128xbf16>
    %c14 = arith.constant 14 : index
    %c0_103 = arith.constant 0 : index
    %171 = vector.load %arg16[%c14, %c0_103] : memref<196x128xbf16, #tpu.memory_space<vmem>>, vector<144x128xbf16>
    %c15 = arith.constant 15 : index
    %c0_104 = arith.constant 0 : index
    %172 = vector.load %arg16[%c15, %c0_104] : memref<196x128xbf16, #tpu.memory_space<vmem>>, vector<144x128xbf16>
    %c16 = arith.constant 16 : index
    %c0_105 = arith.constant 0 : index
    %173 = vector.load %arg16[%c16, %c0_105] : memref<196x128xbf16, #tpu.memory_space<vmem>>, vector<144x128xbf16>
    %c24_106 = arith.constant 24 : index
    %c0_107 = arith.constant 0 : index
    %174 = vector.load %arg16[%c24_106, %c0_107] : memref<196x128xbf16, #tpu.memory_space<vmem>>, vector<144x128xbf16>
    %c25_108 = arith.constant 25 : index
    %c0_109 = arith.constant 0 : index
    %175 = vector.load %arg16[%c25_108, %c0_109] : memref<196x128xbf16, #tpu.memory_space<vmem>>, vector<144x128xbf16>
    %c26_110 = arith.constant 26 : index
    %c0_111 = arith.constant 0 : index
    %176 = vector.load %arg16[%c26_110, %c0_111] : memref<196x128xbf16, #tpu.memory_space<vmem>>, vector<144x128xbf16>
    %c27 = arith.constant 27 : index
    %c0_112 = arith.constant 0 : index
    %177 = vector.load %arg16[%c27, %c0_112] : memref<196x128xbf16, #tpu.memory_space<vmem>>, vector<144x128xbf16>
    %c28 = arith.constant 28 : index
    %c0_113 = arith.constant 0 : index
    %178 = vector.load %arg16[%c28, %c0_113] : memref<196x128xbf16, #tpu.memory_space<vmem>>, vector<144x128xbf16>
    %c36 = arith.constant 36 : index
    %c0_114 = arith.constant 0 : index
    %179 = vector.load %arg16[%c36, %c0_114] : memref<196x128xbf16, #tpu.memory_space<vmem>>, vector<144x128xbf16>
    %c37 = arith.constant 37 : index
    %c0_115 = arith.constant 0 : index
    %180 = vector.load %arg16[%c37, %c0_115] : memref<196x128xbf16, #tpu.memory_space<vmem>>, vector<144x128xbf16>
    %c38 = arith.constant 38 : index
    %c0_116 = arith.constant 0 : index
    %181 = vector.load %arg16[%c38, %c0_116] : memref<196x128xbf16, #tpu.memory_space<vmem>>, vector<144x128xbf16>
    %c39 = arith.constant 39 : index
    %c0_117 = arith.constant 0 : index
    %182 = vector.load %arg16[%c39, %c0_117] : memref<196x128xbf16, #tpu.memory_space<vmem>>, vector<144x128xbf16>
    %c40 = arith.constant 40 : index
    %c0_118 = arith.constant 0 : index
    %183 = vector.load %arg16[%c40, %c0_118] : memref<196x128xbf16, #tpu.memory_space<vmem>>, vector<144x128xbf16>
    %c48_119 = arith.constant 48 : index
    %c0_120 = arith.constant 0 : index
    %184 = vector.load %arg16[%c48_119, %c0_120] : memref<196x128xbf16, #tpu.memory_space<vmem>>, vector<144x128xbf16>
    %c49_121 = arith.constant 49 : index
    %c0_122 = arith.constant 0 : index
    %185 = vector.load %arg16[%c49_121, %c0_122] : memref<196x128xbf16, #tpu.memory_space<vmem>>, vector<144x128xbf16>
    %c50_123 = arith.constant 50 : index
    %c0_124 = arith.constant 0 : index
    %186 = vector.load %arg16[%c50_123, %c0_124] : memref<196x128xbf16, #tpu.memory_space<vmem>>, vector<144x128xbf16>
    %c51 = arith.constant 51 : index
    %c0_125 = arith.constant 0 : index
    %187 = vector.load %arg16[%c51, %c0_125] : memref<196x128xbf16, #tpu.memory_space<vmem>>, vector<144x128xbf16>
    %c52_126 = arith.constant 52 : index
    %c0_127 = arith.constant 0 : index
    %188 = vector.load %arg16[%c52_126, %c0_127] : memref<196x128xbf16, #tpu.memory_space<vmem>>, vector<144x128xbf16>
    %189 = tpu.concatenate %164, %165, %166, %167, %168, %169, %170, %171, %172, %173, %174, %175, %176, %177, %178, %179 in 1 : vector<144x128xbf16>, vector<144x128xbf16>, vector<144x128xbf16>, vector<144x128xbf16>, vector<144x128xbf16>, vector<144x128xbf16>, vector<144x128xbf16>, vector<144x128xbf16>, vector<144x128xbf16>, vector<144x128xbf16>, vector<144x128xbf16>, vector<144x128xbf16>, vector<144x128xbf16>, vector<144x128xbf16>, vector<144x128xbf16>, vector<144x128xbf16> -> vector<144x2048xbf16>
    %190 = tpu.concatenate %180, %181, %182, %183, %184, %185, %186, %187, %188 in 1 : vector<144x128xbf16>, vector<144x128xbf16>, vector<144x128xbf16>, vector<144x128xbf16>, vector<144x128xbf16>, vector<144x128xbf16>, vector<144x128xbf16>, vector<144x128xbf16>, vector<144x128xbf16> -> vector<144x1152xbf16>
    %191 = tpu.concatenate %189, %190 in 1 : vector<144x2048xbf16>, vector<144x1152xbf16> -> vector<144x3200xbf16>
    %c0_128 = arith.constant 0 : index
    %c0_129 = arith.constant 0 : index
    %192 = vector.load %arg4[%c0_128, %c0_129] : memref<3200x128xbf16, #tpu.memory_space<vmem>>, vector<3200x128xbf16>
    %cst_130 = arith.constant dense<0.000000e+00> : vector<144x128xf32>
    %193 = tpu.matmul %191, %192, %cst_130 {dimension_numbers = #tpu.dot_dimension_numbers<[1], [0], [0], [1], [0, 0, 1, 1], [], []>} : vector<144x3200xbf16>, vector<3200x128xbf16>, vector<144x128xf32> -> vector<144x128xf32>
    %c0_131 = arith.constant 0 : index
    %c0_132 = arith.constant 0 : index
    %194 = vector.load %arg5[%c0_131, %c0_132] : memref<1x128xf32, #tpu.memory_space<vmem>>, vector<1x128xf32>
    %195 = vector.broadcast %194 : vector<1x128xf32> to vector<144x128xf32>
    %196 = arith.addf %193, %195 : vector<144x128xf32>
    %cst_133 = arith.constant 0.000000e+00 : f32
    %197 = vector.broadcast %cst_133 : f32 to vector<144x128xf32>
    %198 = arith.maximumf %196, %197 : vector<144x128xf32>
    %c0_134 = arith.constant 0 : index
    %c0_135 = arith.constant 0 : index
    %199 = vector.load %arg17[%c0_134, %c0_135] : memref<144x128xf32, #tpu.memory_space<vmem>>, vector<144x128xf32>
    tpu.vector_store %arg17[%c0_134, %c0_135], %198 {strides = array<i32>} : memref<144x128xf32, #tpu.memory_space<vmem>>, vector<144x128xf32>,
    %c26_136 = arith.constant 26 : index
    %c0_137 = arith.constant 0 : index
    %200 = vector.load %arg17[%c26_136, %c0_137] : memref<144x128xf32, #tpu.memory_space<vmem>>, vector<1x128xf32>
    %c27_138 = arith.constant 27 : index
    %c0_139 = arith.constant 0 : index
    %201 = vector.load %arg17[%c27_138, %c0_139] : memref<144x128xf32, #tpu.memory_space<vmem>>, vector<1x128xf32>
    %202 = arith.maximumf %200, %201 : vector<1x128xf32>
    %c38_140 = arith.constant 38 : index
    %c0_141 = arith.constant 0 : index
    %203 = vector.load %arg17[%c38_140, %c0_141] : memref<144x128xf32, #tpu.memory_space<vmem>>, vector<1x128xf32>
    %204 = arith.maximumf %202, %203 : vector<1x128xf32>
    %c39_142 = arith.constant 39 : index
    %c0_143 = arith.constant 0 : index
    %205 = vector.load %arg17[%c39_142, %c0_143] : memref<144x128xf32, #tpu.memory_space<vmem>>, vector<1x128xf32>
    %206 = arith.maximumf %204, %205 : vector<1x128xf32>
    %c28_144 = arith.constant 28 : index
    %c0_145 = arith.constant 0 : index
    %207 = vector.load %arg17[%c28_144, %c0_145] : memref<144x128xf32, #tpu.memory_space<vmem>>, vector<1x128xf32>
    %c29 = arith.constant 29 : index
    %c0_146 = arith.constant 0 : index
    %208 = vector.load %arg17[%c29, %c0_146] : memref<144x128xf32, #tpu.memory_space<vmem>>, vector<1x128xf32>
    %209 = arith.maximumf %207, %208 : vector<1x128xf32>
    %c40_147 = arith.constant 40 : index
    %c0_148 = arith.constant 0 : index
    %210 = vector.load %arg17[%c40_147, %c0_148] : memref<144x128xf32, #tpu.memory_space<vmem>>, vector<1x128xf32>
    %211 = arith.maximumf %209, %210 : vector<1x128xf32>
    %c41 = arith.constant 41 : index
    %c0_149 = arith.constant 0 : index
    %212 = vector.load %arg17[%c41, %c0_149] : memref<144x128xf32, #tpu.memory_space<vmem>>, vector<1x128xf32>
    %213 = arith.maximumf %211, %212 : vector<1x128xf32>
    %c30 = arith.constant 30 : index
    %c0_150 = arith.constant 0 : index
    %214 = vector.load %arg17[%c30, %c0_150] : memref<144x128xf32, #tpu.memory_space<vmem>>, vector<1x128xf32>
    %c31 = arith.constant 31 : index
    %c0_151 = arith.constant 0 : index
    %215 = vector.load %arg17[%c31, %c0_151] : memref<144x128xf32, #tpu.memory_space<vmem>>, vector<1x128xf32>
    %216 = arith.maximumf %214, %215 : vector<1x128xf32>
    %c42 = arith.constant 42 : index
    %c0_152 = arith.constant 0 : index
    %217 = vector.load %arg17[%c42, %c0_152] : memref<144x128xf32, #tpu.memory_space<vmem>>, vector<1x128xf32>
    %218 = arith.maximumf %216, %217 : vector<1x128xf32>
    %c43 = arith.constant 43 : index
    %c0_153 = arith.constant 0 : index
    %219 = vector.load %arg17[%c43, %c0_153] : memref<144x128xf32, #tpu.memory_space<vmem>>, vector<1x128xf32>
    %220 = arith.maximumf %218, %219 : vector<1x128xf32>
    %c32 = arith.constant 32 : index
    %c0_154 = arith.constant 0 : index
    %221 = vector.load %arg17[%c32, %c0_154] : memref<144x128xf32, #tpu.memory_space<vmem>>, vector<1x128xf32>
    %c33 = arith.constant 33 : index
    %c0_155 = arith.constant 0 : index
    %222 = vector.load %arg17[%c33, %c0_155] : memref<144x128xf32, #tpu.memory_space<vmem>>, vector<1x128xf32>
    %223 = arith.maximumf %221, %222 : vector<1x128xf32>
    %c44 = arith.constant 44 : index
    %c0_156 = arith.constant 0 : index
    %224 = vector.load %arg17[%c44, %c0_156] : memref<144x128xf32, #tpu.memory_space<vmem>>, vector<1x128xf32>
    %225 = arith.maximumf %223, %224 : vector<1x128xf32>
    %c45 = arith.constant 45 : index
    %c0_157 = arith.constant 0 : index
    %226 = vector.load %arg17[%c45, %c0_157] : memref<144x128xf32, #tpu.memory_space<vmem>>, vector<1x128xf32>
    %227 = arith.maximumf %225, %226 : vector<1x128xf32>
    %c50_158 = arith.constant 50 : index
    %c0_159 = arith.constant 0 : index
    %228 = vector.load %arg17[%c50_158, %c0_159] : memref<144x128xf32, #tpu.memory_space<vmem>>, vector<1x128xf32>
    %c51_160 = arith.constant 51 : index
    %c0_161 = arith.constant 0 : index
    %229 = vector.load %arg17[%c51_160, %c0_161] : memref<144x128xf32, #tpu.memory_space<vmem>>, vector<1x128xf32>
    %230 = arith.maximumf %228, %229 : vector<1x128xf32>
    %c62 = arith.constant 62 : index
    %c0_162 = arith.constant 0 : index
    %231 = vector.load %arg17[%c62, %c0_162] : memref<144x128xf32, #tpu.memory_space<vmem>>, vector<1x128xf32>
    %232 = arith.maximumf %230, %231 : vector<1x128xf32>
    %c63 = arith.constant 63 : index
    %c0_163 = arith.constant 0 : index
    %233 = vector.load %arg17[%c63, %c0_163] : memref<144x128xf32, #tpu.memory_space<vmem>>, vector<1x128xf32>
    %234 = arith.maximumf %232, %233 : vector<1x128xf32>
    %c52_164 = arith.constant 52 : index
    %c0_165 = arith.constant 0 : index
    %235 = vector.load %arg17[%c52_164, %c0_165] : memref<144x128xf32, #tpu.memory_space<vmem>>, vector<1x128xf32>
    %c53 = arith.constant 53 : index
    %c0_166 = arith.constant 0 : index
    %236 = vector.load %arg17[%c53, %c0_166] : memref<144x128xf32, #tpu.memory_space<vmem>>, vector<1x128xf32>
    %237 = arith.maximumf %235, %236 : vector<1x128xf32>
    %c64_167 = arith.constant 64 : index
    %c0_168 = arith.constant 0 : index
    %238 = vector.load %arg17[%c64_167, %c0_168] : memref<144x128xf32, #tpu.memory_space<vmem>>, vector<1x128xf32>
    %239 = arith.maximumf %237, %238 : vector<1x128xf32>
    %c65 = arith.constant 65 : index
    %c0_169 = arith.constant 0 : index
    %240 = vector.load %arg17[%c65, %c0_169] : memref<144x128xf32, #tpu.memory_space<vmem>>, vector<1x128xf32>
    %241 = arith.maximumf %239, %240 : vector<1x128xf32>
    %c54 = arith.constant 54 : index
    %c0_170 = arith.constant 0 : index
    %242 = vector.load %arg17[%c54, %c0_170] : memref<144x128xf32, #tpu.memory_space<vmem>>, vector<1x128xf32>
    %c55 = arith.constant 55 : index
    %c0_171 = arith.constant 0 : index
    %243 = vector.load %arg17[%c55, %c0_171] : memref<144x128xf32, #tpu.memory_space<vmem>>, vector<1x128xf32>
    %244 = arith.maximumf %242, %243 : vector<1x128xf32>
    %c66 = arith.constant 66 : index
    %c0_172 = arith.constant 0 : index
    %245 = vector.load %arg17[%c66, %c0_172] : memref<144x128xf32, #tpu.memory_space<vmem>>, vector<1x128xf32>
    %246 = arith.maximumf %244, %245 : vector<1x128xf32>
    %c67 = arith.constant 67 : index
    %c0_173 = arith.constant 0 : index
    %247 = vector.load %arg17[%c67, %c0_173] : memref<144x128xf32, #tpu.memory_space<vmem>>, vector<1x128xf32>
    %248 = arith.maximumf %246, %247 : vector<1x128xf32>
    %c56 = arith.constant 56 : index
    %c0_174 = arith.constant 0 : index
    %249 = vector.load %arg17[%c56, %c0_174] : memref<144x128xf32, #tpu.memory_space<vmem>>, vector<1x128xf32>
    %c57 = arith.constant 57 : index
    %c0_175 = arith.constant 0 : index
    %250 = vector.load %arg17[%c57, %c0_175] : memref<144x128xf32, #tpu.memory_space<vmem>>, vector<1x128xf32>
    %251 = arith.maximumf %249, %250 : vector<1x128xf32>
    %c68 = arith.constant 68 : index
    %c0_176 = arith.constant 0 : index
    %252 = vector.load %arg17[%c68, %c0_176] : memref<144x128xf32, #tpu.memory_space<vmem>>, vector<1x128xf32>
    %253 = arith.maximumf %251, %252 : vector<1x128xf32>
    %c69 = arith.constant 69 : index
    %c0_177 = arith.constant 0 : index
    %254 = vector.load %arg17[%c69, %c0_177] : memref<144x128xf32, #tpu.memory_space<vmem>>, vector<1x128xf32>
    %255 = arith.maximumf %253, %254 : vector<1x128xf32>
    %c74_178 = arith.constant 74 : index
    %c0_179 = arith.constant 0 : index
    %256 = vector.load %arg17[%c74_178, %c0_179] : memref<144x128xf32, #tpu.memory_space<vmem>>, vector<1x128xf32>
    %c75 = arith.constant 75 : index
    %c0_180 = arith.constant 0 : index
    %257 = vector.load %arg17[%c75, %c0_180] : memref<144x128xf32, #tpu.memory_space<vmem>>, vector<1x128xf32>
    %258 = arith.maximumf %256, %257 : vector<1x128xf32>
    %c86 = arith.constant 86 : index
    %c0_181 = arith.constant 0 : index
    %259 = vector.load %arg17[%c86, %c0_181] : memref<144x128xf32, #tpu.memory_space<vmem>>, vector<1x128xf32>
    %260 = arith.maximumf %258, %259 : vector<1x128xf32>
    %c87 = arith.constant 87 : index
    %c0_182 = arith.constant 0 : index
    %261 = vector.load %arg17[%c87, %c0_182] : memref<144x128xf32, #tpu.memory_space<vmem>>, vector<1x128xf32>
    %262 = arith.maximumf %260, %261 : vector<1x128xf32>
    %c76_183 = arith.constant 76 : index
    %c0_184 = arith.constant 0 : index
    %263 = vector.load %arg17[%c76_183, %c0_184] : memref<144x128xf32, #tpu.memory_space<vmem>>, vector<1x128xf32>
    %c77 = arith.constant 77 : index
    %c0_185 = arith.constant 0 : index
    %264 = vector.load %arg17[%c77, %c0_185] : memref<144x128xf32, #tpu.memory_space<vmem>>, vector<1x128xf32>
    %265 = arith.maximumf %263, %264 : vector<1x128xf32>
    %c88_186 = arith.constant 88 : index
    %c0_187 = arith.constant 0 : index
    %266 = vector.load %arg17[%c88_186, %c0_187] : memref<144x128xf32, #tpu.memory_space<vmem>>, vector<1x128xf32>
    %267 = arith.maximumf %265, %266 : vector<1x128xf32>
    %c89 = arith.constant 89 : index
    %c0_188 = arith.constant 0 : index
    %268 = vector.load %arg17[%c89, %c0_188] : memref<144x128xf32, #tpu.memory_space<vmem>>, vector<1x128xf32>
    %269 = arith.maximumf %267, %268 : vector<1x128xf32>
    %c78 = arith.constant 78 : index
    %c0_189 = arith.constant 0 : index
    %270 = vector.load %arg17[%c78, %c0_189] : memref<144x128xf32, #tpu.memory_space<vmem>>, vector<1x128xf32>
    %c79 = arith.constant 79 : index
    %c0_190 = arith.constant 0 : index
    %271 = vector.load %arg17[%c79, %c0_190] : memref<144x128xf32, #tpu.memory_space<vmem>>, vector<1x128xf32>
    %272 = arith.maximumf %270, %271 : vector<1x128xf32>
    %c90 = arith.constant 90 : index
    %c0_191 = arith.constant 0 : index
    %273 = vector.load %arg17[%c90, %c0_191] : memref<144x128xf32, #tpu.memory_space<vmem>>, vector<1x128xf32>
    %274 = arith.maximumf %272, %273 : vector<1x128xf32>
    %c91 = arith.constant 91 : index
    %c0_192 = arith.constant 0 : index
    %275 = vector.load %arg17[%c91, %c0_192] : memref<144x128xf32, #tpu.memory_space<vmem>>, vector<1x128xf32>
    %276 = arith.maximumf %274, %275 : vector<1x128xf32>
    %c80 = arith.constant 80 : index
    %c0_193 = arith.constant 0 : index
    %277 = vector.load %arg17[%c80, %c0_193] : memref<144x128xf32, #tpu.memory_space<vmem>>, vector<1x128xf32>
    %c81 = arith.constant 81 : index
    %c0_194 = arith.constant 0 : index
    %278 = vector.load %arg17[%c81, %c0_194] : memref<144x128xf32, #tpu.memory_space<vmem>>, vector<1x128xf32>
    %279 = arith.maximumf %277, %278 : vector<1x128xf32>
    %c92 = arith.constant 92 : index
    %c0_195 = arith.constant 0 : index
    %280 = vector.load %arg17[%c92, %c0_195] : memref<144x128xf32, #tpu.memory_space<vmem>>, vector<1x128xf32>
    %281 = arith.maximumf %279, %280 : vector<1x128xf32>
    %c93 = arith.constant 93 : index
    %c0_196 = arith.constant 0 : index
    %282 = vector.load %arg17[%c93, %c0_196] : memref<144x128xf32, #tpu.memory_space<vmem>>, vector<1x128xf32>
    %283 = arith.maximumf %281, %282 : vector<1x128xf32>
    %c98_197 = arith.constant 98 : index
    %c0_198 = arith.constant 0 : index
    %284 = vector.load %arg17[%c98_197, %c0_198] : memref<144x128xf32, #tpu.memory_space<vmem>>, vector<1x128xf32>
    %c99 = arith.constant 99 : index
    %c0_199 = arith.constant 0 : index
    %285 = vector.load %arg17[%c99, %c0_199] : memref<144x128xf32, #tpu.memory_space<vmem>>, vector<1x128xf32>
    %286 = arith.maximumf %284, %285 : vector<1x128xf32>
    %c110 = arith.constant 110 : index
    %c0_200 = arith.constant 0 : index
    %287 = vector.load %arg17[%c110, %c0_200] : memref<144x128xf32, #tpu.memory_space<vmem>>, vector<1x128xf32>
    %288 = arith.maximumf %286, %287 : vector<1x128xf32>
    %c111 = arith.constant 111 : index
    %c0_201 = arith.constant 0 : index
    %289 = vector.load %arg17[%c111, %c0_201] : memref<144x128xf32, #tpu.memory_space<vmem>>, vector<1x128xf32>
    %290 = arith.maximumf %288, %289 : vector<1x128xf32>
    %c100_202 = arith.constant 100 : index
    %c0_203 = arith.constant 0 : index
    %291 = vector.load %arg17[%c100_202, %c0_203] : memref<144x128xf32, #tpu.memory_space<vmem>>, vector<1x128xf32>
    %c101 = arith.constant 101 : index
    %c0_204 = arith.constant 0 : index
    %292 = vector.load %arg17[%c101, %c0_204] : memref<144x128xf32, #tpu.memory_space<vmem>>, vector<1x128xf32>
    %293 = arith.maximumf %291, %292 : vector<1x128xf32>
    %c112_205 = arith.constant 112 : index
    %c0_206 = arith.constant 0 : index
    %294 = vector.load %arg17[%c112_205, %c0_206] : memref<144x128xf32, #tpu.memory_space<vmem>>, vector<1x128xf32>
    %295 = arith.maximumf %293, %294 : vector<1x128xf32>
    %c113 = arith.constant 113 : index
    %c0_207 = arith.constant 0 : index
    %296 = vector.load %arg17[%c113, %c0_207] : memref<144x128xf32, #tpu.memory_space<vmem>>, vector<1x128xf32>
    %297 = arith.maximumf %295, %296 : vector<1x128xf32>
    %c102 = arith.constant 102 : index
    %c0_208 = arith.constant 0 : index
    %298 = vector.load %arg17[%c102, %c0_208] : memref<144x128xf32, #tpu.memory_space<vmem>>, vector<1x128xf32>
    %c103 = arith.constant 103 : index
    %c0_209 = arith.constant 0 : index
    %299 = vector.load %arg17[%c103, %c0_209] : memref<144x128xf32, #tpu.memory_space<vmem>>, vector<1x128xf32>
    %300 = arith.maximumf %298, %299 : vector<1x128xf32>
    %c114 = arith.constant 114 : index
    %c0_210 = arith.constant 0 : index
    %301 = vector.load %arg17[%c114, %c0_210] : memref<144x128xf32, #tpu.memory_space<vmem>>, vector<1x128xf32>
    %302 = arith.maximumf %300, %301 : vector<1x128xf32>
    %c115 = arith.constant 115 : index
    %c0_211 = arith.constant 0 : index
    %303 = vector.load %arg17[%c115, %c0_211] : memref<144x128xf32, #tpu.memory_space<vmem>>, vector<1x128xf32>
    %304 = arith.maximumf %302, %303 : vector<1x128xf32>
    %c104 = arith.constant 104 : index
    %c0_212 = arith.constant 0 : index
    %305 = vector.load %arg17[%c104, %c0_212] : memref<144x128xf32, #tpu.memory_space<vmem>>, vector<1x128xf32>
    %c105 = arith.constant 105 : index
    %c0_213 = arith.constant 0 : index
    %306 = vector.load %arg17[%c105, %c0_213] : memref<144x128xf32, #tpu.memory_space<vmem>>, vector<1x128xf32>
    %307 = arith.maximumf %305, %306 : vector<1x128xf32>
    %c116 = arith.constant 116 : index
    %c0_214 = arith.constant 0 : index
    %308 = vector.load %arg17[%c116, %c0_214] : memref<144x128xf32, #tpu.memory_space<vmem>>, vector<1x128xf32>
    %309 = arith.maximumf %307, %308 : vector<1x128xf32>
    %c117 = arith.constant 117 : index
    %c0_215 = arith.constant 0 : index
    %310 = vector.load %arg17[%c117, %c0_215] : memref<144x128xf32, #tpu.memory_space<vmem>>, vector<1x128xf32>
    %311 = arith.maximumf %309, %310 : vector<1x128xf32>
    %312 = tpu.concatenate %206, %213, %220, %227, %234, %241, %248, %255, %262, %269, %276, %283, %290, %297, %304, %311 in 1 : vector<1x128xf32>, vector<1x128xf32>, vector<1x128xf32>, vector<1x128xf32>, vector<1x128xf32>, vector<1x128xf32>, vector<1x128xf32>, vector<1x128xf32>, vector<1x128xf32>, vector<1x128xf32>, vector<1x128xf32>, vector<1x128xf32>, vector<1x128xf32>, vector<1x128xf32>, vector<1x128xf32>, vector<1x128xf32> -> vector<1x2048xf32>
    %313 = arith.truncf %312 : vector<1x2048xf32> to vector<1x2048xbf16>
    %c0_216 = arith.constant 0 : index
    %c0_217 = arith.constant 0 : index
    %314 = vector.load %arg6[%c0_216, %c0_217] : memref<2048x128xbf16, #tpu.memory_space<vmem>>, vector<2048x128xbf16>
    %cst_218 = arith.constant dense<0.000000e+00> : vector<1x128xf32>
    %315 = tpu.matmul %313, %314, %cst_218 {dimension_numbers = #tpu.dot_dimension_numbers<[1], [0], [0], [1], [0, 0, 1, 1], [], []>} : vector<1x2048xbf16>, vector<2048x128xbf16>, vector<1x128xf32> -> vector<1x128xf32>
    %c0_219 = arith.constant 0 : index
    %c0_220 = arith.constant 0 : index
    %316 = vector.load %arg7[%c0_219, %c0_220] : memref<1x128xf32, #tpu.memory_space<vmem>>, vector<1x128xf32>
    %317 = arith.addf %315, %316 : vector<1x128xf32>
    %cst_221 = arith.constant 0.000000e+00 : f32
    %318 = vector.broadcast %cst_221 : f32 to vector<1x128xf32>
    %319 = arith.maximumf %317, %318 : vector<1x128xf32>
    %320 = arith.truncf %319 : vector<1x128xf32> to vector<1x128xbf16>
    %c0_222 = arith.constant 0 : index
    %c0_223 = arith.constant 0 : index
    %321 = vector.load %arg8[%c0_222, %c0_223] : memref<128x128xbf16, #tpu.memory_space<vmem>>, vector<128x128xbf16>
    %cst_224 = arith.constant dense<0.000000e+00> : vector<1x128xf32>
    %322 = tpu.matmul %320, %321, %cst_224 {dimension_numbers = #tpu.dot_dimension_numbers<[1], [0], [0], [1], [0, 0, 1, 1], [], []>} : vector<1x128xbf16>, vector<128x128xbf16>, vector<1x128xf32> -> vector<1x128xf32>
    %c0_225 = arith.constant 0 : index
    %c0_226 = arith.constant 0 : index
    %323 = vector.load %arg9[%c0_225, %c0_226] : memref<1x128xf32, #tpu.memory_space<vmem>>, vector<1x128xf32>
    %324 = arith.addf %322, %323 : vector<1x128xf32>
    %cst_227 = arith.constant 0.000000e+00 : f32
    %325 = vector.broadcast %cst_227 : f32 to vector<1x128xf32>
    %326 = arith.maximumf %324, %325 : vector<1x128xf32>
    %327 = arith.truncf %326 : vector<1x128xf32> to vector<1x128xbf16>
    %c0_228 = arith.constant 0 : index
    %c0_229 = arith.constant 0 : index
    %328 = vector.load %arg10[%c0_228, %c0_229] : memref<128x128xbf16, #tpu.memory_space<vmem>>, vector<128x128xbf16>
    %cst_230 = arith.constant dense<0.000000e+00> : vector<1x128xf32>
    %329 = tpu.matmul %327, %328, %cst_230 {dimension_numbers = #tpu.dot_dimension_numbers<[1], [0], [0], [1], [0, 0, 1, 1], [], []>} : vector<1x128xbf16>, vector<128x128xbf16>, vector<1x128xf32> -> vector<1x128xf32>
    %c0_231 = arith.constant 0 : index
    %c0_232 = arith.constant 0 : index
    %330 = vector.load %arg11[%c0_231, %c0_232] : memref<1x128xf32, #tpu.memory_space<vmem>>, vector<1x128xf32>
    %331 = arith.addf %329, %330 : vector<1x128xf32>
    %cst_233 = arith.constant 0.000000e+00 : f32
    %332 = vector.broadcast %cst_233 : f32 to vector<1x128xf32>
    %333 = arith.maximumf %331, %332 : vector<1x128xf32>
    %334 = arith.truncf %333 : vector<1x128xf32> to vector<1x128xbf16>
    %c0_234 = arith.constant 0 : index
    %c0_235 = arith.constant 0 : index
    %335 = vector.load %arg12[%c0_234, %c0_235] : memref<128x128xbf16, #tpu.memory_space<vmem>>, vector<128x128xbf16>
    %cst_236 = arith.constant dense<0.000000e+00> : vector<1x128xf32>
    %336 = tpu.matmul %334, %335, %cst_236 {dimension_numbers = #tpu.dot_dimension_numbers<[1], [0], [0], [1], [0, 0, 1, 1], [], []>} : vector<1x128xbf16>, vector<128x128xbf16>, vector<1x128xf32> -> vector<1x128xf32>
    %c0_237 = arith.constant 0 : index
    %c0_238 = arith.constant 0 : index
    %337 = vector.load %arg13[%c0_237, %c0_238] : memref<1x128xf32, #tpu.memory_space<vmem>>, vector<1x128xf32>
    %338 = arith.addf %336, %337 : vector<1x128xf32>
    %c0_239 = arith.constant 0 : index
    %c0_240 = arith.constant 0 : index
    %c0_241 = arith.constant 0 : index
    %339 = vector.load %arg14[%c0_239, %c0_240, %c0_241] : memref<1x1x128xf32, #tpu.memory_space<vmem>>, vector<1x1x128xf32>
    %340 = vector.shape_cast %339 : vector<1x1x128xf32> to vector<1x128xf32>
    %341 = vector.shape_cast %338 : vector<1x128xf32> to vector<1x1x128xf32>
    tpu.vector_store %arg14[%c0_239, %c0_240, %c0_241], %341 {strides = array<i32>} : memref<1x1x128xf32, #tpu.memory_space<vmem>>, vector<1x1x128xf32>,
    return
  }
  func.func @transform_0(%arg0: i32) -> (i32, i32, i32) {
    %c0_i32 = arith.constant 0 : i32
    %c0_i32_0 = arith.constant 0 : i32
    %c0_i32_1 = arith.constant 0 : i32
    return %arg0, %c0_i32, %c0_i32_0 : i32, i32, i32
  }
  func.func @transform_1(%arg0: i32) -> (i32, i32) {
    %c0_i32 = arith.constant 0 : i32
    %c0_i32_0 = arith.constant 0 : i32
    %c0_i32_1 = arith.constant 0 : i32
    return %c0_i32, %c0_i32_0 : i32, i32
  }
  func.func @transform_2(%arg0: i32) -> (i32, i32) {
    %c0_i32 = arith.constant 0 : i32
    %c0_i32_0 = arith.constant 0 : i32
    %c0_i32_1 = arith.constant 0 : i32
    return %c0_i32, %c0_i32_0 : i32, i32
  }
  func.func @transform_3(%arg0: i32) -> (i32, i32) {
    %c0_i32 = arith.constant 0 : i32
    %c0_i32_0 = arith.constant 0 : i32
    %c0_i32_1 = arith.constant 0 : i32
    return %c0_i32, %c0_i32_0 : i32, i32
  }
  func.func @transform_4(%arg0: i32) -> (i32, i32) {
    %c0_i32 = arith.constant 0 : i32
    %c0_i32_0 = arith.constant 0 : i32
    %c0_i32_1 = arith.constant 0 : i32
    return %c0_i32, %c0_i32_0 : i32, i32
  }
  func.func @transform_5(%arg0: i32) -> (i32, i32) {
    %c0_i32 = arith.constant 0 : i32
    %c0_i32_0 = arith.constant 0 : i32
    %c0_i32_1 = arith.constant 0 : i32
    return %c0_i32, %c0_i32_0 : i32, i32
  }
  func.func @transform_6(%arg0: i32) -> (i32, i32) {
    %c0_i32 = arith.constant 0 : i32
    %c0_i32_0 = arith.constant 0 : i32
    %c0_i32_1 = arith.constant 0 : i32
    return %c0_i32, %c0_i32_0 : i32, i32
  }
  func.func @transform_7(%arg0: i32) -> (i32, i32) {
    %c0_i32 = arith.constant 0 : i32
    %c0_i32_0 = arith.constant 0 : i32
    %c0_i32_1 = arith.constant 0 : i32
    return %c0_i32, %c0_i32_0 : i32, i32
  }
  func.func @transform_8(%arg0: i32) -> (i32, i32) {
    %c0_i32 = arith.constant 0 : i32
    %c0_i32_0 = arith.constant 0 : i32
    %c0_i32_1 = arith.constant 0 : i32
    return %c0_i32, %c0_i32_0 : i32, i32
  }
  func.func @transform_9(%arg0: i32) -> (i32, i32) {
    %c0_i32 = arith.constant 0 : i32
    %c0_i32_0 = arith.constant 0 : i32
    %c0_i32_1 = arith.constant 0 : i32
    return %c0_i32, %c0_i32_0 : i32, i32
  }
  func.func @transform_10(%arg0: i32) -> (i32, i32) {
    %c0_i32 = arith.constant 0 : i32
    %c0_i32_0 = arith.constant 0 : i32
    %c0_i32_1 = arith.constant 0 : i32
    return %c0_i32, %c0_i32_0 : i32, i32
  }
  func.func @transform_11(%arg0: i32) -> (i32, i32) {
    %c0_i32 = arith.constant 0 : i32
    %c0_i32_0 = arith.constant 0 : i32
    %c0_i32_1 = arith.constant 0 : i32
    return %c0_i32, %c0_i32_0 : i32, i32
  }
  func.func @transform_12(%arg0: i32) -> (i32, i32) {
    %c0_i32 = arith.constant 0 : i32
    %c0_i32_0 = arith.constant 0 : i32
    %c0_i32_1 = arith.constant 0 : i32
    return %c0_i32, %c0_i32_0 : i32, i32
  }
  func.func @transform_13(%arg0: i32) -> (i32, i32, i32) {
    %c0_i32 = arith.constant 0 : i32
    %c0_i32_0 = arith.constant 0 : i32
    %c0_i32_1 = arith.constant 0 : i32
    return %arg0, %c0_i32, %c0_i32_0 : i32, i32, i32
  }
}

</mosaic_0001>

<llo_original>
// kernel: convnet_forward.1
$region0: #{convnet_forward.1}
  #allocation0 [shape = 'u32[]', space=smem, size = 0x4, offset = 0x4, fixed_abs, tag = 'smem constant byte address 0x4 - core index']
  #allocation1 [shape = 'u32[144,128]{1,0:T(1,128)}', space=vmem, size = 0x12000, scoped, tag = 'internal scratch']
  #allocation2 [shape = 'f32[576,128]{1,0:T(8,128)}', space=vmem, size = 0x48000, scoped, tag = 'scratch operand']
  #allocation3 [shape = 'bf16[196,128]{1,0:T(8,128)(2,1)}', space=vmem, size = 0xc800, scoped, tag = 'scratch operand']
  #allocation4 [shape = 'f32[144,128]{1,0:T(8,128)}', space=vmem, size = 0x12000, scoped, tag = 'scratch operand']
  %s0 = inlined_call_operand.vmem [shape: bf16[2,576,32], index: 0, kind: input, shape index: {}]
  %s1 = inlined_call_operand.vmem [shape: bf16[32,128], index: 1, kind: input, shape index: {}]
  %s2 = inlined_call_operand.vmem [shape: f32[1,128], index: 2, kind: input, shape index: {}]
  %s3 = inlined_call_operand.vmem [shape: bf16[3200,128], index: 3, kind: input, shape index: {}]
  %s4 = inlined_call_operand.vmem [shape: f32[1,128], index: 4, kind: input, shape index: {}]
  %s5 = inlined_call_operand.vmem [shape: bf16[2048,128], index: 5, kind: input, shape index: {}]
  %s6 = inlined_call_operand.vmem [shape: f32[1,128], index: 6, kind: input, shape index: {}]
  %s7 = inlined_call_operand.vmem [shape: bf16[128,128], index: 7, kind: input, shape index: {}]
  %s8 = inlined_call_operand.vmem [shape: f32[1,128], index: 8, kind: input, shape index: {}]
  %s9 = inlined_call_operand.vmem [shape: bf16[128,128], index: 9, kind: input, shape index: {}]
  %s10 = inlined_call_operand.vmem [shape: f32[1,128], index: 10, kind: input, shape index: {}]
  %s11 = inlined_call_operand.vmem [shape: bf16[128,128], index: 11, kind: input, shape index: {}]
  %s12 = inlined_call_operand.vmem [shape: f32[1,128], index: 12, kind: input, shape index: {}]
  %s13 = inlined_call_operand.hbm [shape: f32[2,1,128], index: 13, kind: output, shape index: {}]
  %s14 = sld [smem:[#allocation0]]
  $region85: #{convnet_forward.1} parent=0
    _
  %s16 = ssub.s32 1, %s14
  %s17 = scalar_select 0, %s16, %s14
  $region1: #{convnet_forward.1} parent=0
    #allocation5 [shape = 'u8[1024]{0}', space=vmem, size = 0x400, scoped, tag = 'output window, operand 0']
    #allocation6 [shape = 's32[2]{0}', space=sflag, size = 0x8, scoped, tag = 'scoped memory for convnet_forward.1']
    %18 = vsyncpa [#allocation6], 0
    %s19 = scalar_lea.sflag [#allocation6], 1
    %20 = vsyncpa %s19, 0
    loop: start=0, step=1, limit=4
    $region2: #{convnet_forward.1} parent=1 // loop_pre_header
      _
    $region3: #{convnet_forward.1} parent=1 // loop_header
      %s22 = sphi 0, %s26
      %p23 = scmp.ge.s32.totalorder %s22, 4
      %s32 = sphi 0, %s34
      %s35 = sphi 0, %s32
      %s36 = sphi 0, %s35
      %s52 = sphi 0, %s36
      %s56 = sphi 0, %s56
      %s58 = sphi 0, %s56
      %s59 = sphi 0, %s58
      %s73 = sphi 0, %s59
      %s77 = sphi 0, %s77
      %s79 = sphi 0, %s77
      %s80 = sphi 0, %s79
      %s94 = sphi 0, %s80
      %s98 = sphi 0, %s98
      %s100 = sphi 0, %s98
      %s101 = sphi 0, %s100
      %s115 = sphi 0, %s101
      %s119 = sphi 0, %s119
      %s121 = sphi 0, %s119
      %s122 = sphi 0, %s121
      %s136 = sphi 0, %s122
      %s140 = sphi 0, %s140
      %s142 = sphi 0, %s140
      %s143 = sphi 0, %s142
      %s157 = sphi 0, %s143
      %s161 = sphi 0, %s161
      %s163 = sphi 0, %s161
      %s164 = sphi 0, %s163
      %s178 = sphi 0, %s164
      %s182 = sphi 0, %s182
      %s184 = sphi 0, %s182
      %s185 = sphi 0, %s184
      %s199 = sphi 0, %s185
      %s203 = sphi 0, %s203
      %s205 = sphi 0, %s203
      %s206 = sphi 0, %s205
      %s220 = sphi 0, %s206
      %s224 = sphi 0, %s224
      %s226 = sphi 0, %s224
      %s227 = sphi 0, %s226
      %s241 = sphi 0, %s227
      %s245 = sphi 0, %s245
      %s247 = sphi 0, %s245
      %s248 = sphi 0, %s247
      %s262 = sphi 0, %s248
      %s266 = sphi 0, %s266
      %s268 = sphi 0, %s266
      %s269 = sphi 0, %s268
      %s283 = sphi 0, %s269
      %s287 = sphi 0, %s287
      %s289 = sphi 0, %s287
      %s290 = sphi 0, %s289
      %s304 = sphi 0, %s290
      %s310 = sphi 0, %s312
      %s313 = sphi 0, %s310
      %s314 = sphi 0, %s313
      %s330 = sphi 0, %s314
    $region4: #{convnet_forward.1} parent=1 // loop_header_branch
      %25 = sbr.rel (%p23) target = $region8
    $region5: #{convnet_forward.1} parent=1 // loop_body
      %s27 = ssub.s32 %s22, 1
      %s28 = ssub.s32 %s22, 2
      %s29 = sadd.s32 %s22, 1
      %s30 = ssub.s32 %s22, %s29
      %p31 = scmp.eq.s32.totalorder %s30, 0
      %s33 = sadd.s32 %s32, 1
      %s34 = scalar_select %p31, %s32, %s33
      %p37 = pneg %p31
      %p38 = scmp.eq.s32.totalorder %s22, 1
      %p39 = por %p37, %p38
      %p40 = scmp.ne.s32.totalorder %s32, %s35
      %p41 = scmp.eq.s32.totalorder %s22, 0
      %p42 = por %p40, %p41
      %p43 = scmp.ne.s32.totalorder %s32, %s35
      %p44 = scmp.eq.s32.totalorder %s27, 1
      %p45 = por %p43, %p44
      %p46 = scmp.ne.s32.totalorder %s35, %s36
      %p47 = scmp.eq.s32.totalorder %s27, 0
      %p48 = por %p46, %p47
      %p49 = scmp.ne.s32.totalorder %s35, %s36
      %p50 = scmp.eq.s32.totalorder %s28, 1
      %p51 = por %p49, %p50
      %p53 = scmp.ne.s32.totalorder %s36, %s52
      %p54 = scmp.eq.s32.totalorder %s28, 0
      %p55 = por %p53, %p54
      %s57 = sadd.s32 %s56, 1
      %p60 = scmp.eq.s32.totalorder %s22, 1
      %p61 = scmp.ne.s32.totalorder %s56, %s58
      %p62 = scmp.eq.s32.totalorder %s22, 0
      %p63 = por %p61, %p62
      %p64 = scmp.ne.s32.totalorder %s56, %s58
      %p65 = scmp.eq.s32.totalorder %s27, 1
      %p66 = por %p64, %p65
      %p67 = scmp.ne.s32.totalorder %s58, %s59
      %p68 = scmp.eq.s32.totalorder %s27, 0
      %p69 = por %p67, %p68
      %p70 = scmp.ne.s32.totalorder %s58, %s59
      %p71 = scmp.eq.s32.totalorder %s28, 1
      %p72 = por %p70, %p71
      %p74 = scmp.ne.s32.totalorder %s59, %s73
      %p75 = scmp.eq.s32.totalorder %s28, 0
      %p76 = por %p74, %p75
      %s78 = sadd.s32 %s77, 1
      %p81 = scmp.eq.s32.totalorder %s22, 1
      %p82 = scmp.ne.s32.totalorder %s77, %s79
      %p83 = scmp.eq.s32.totalorder %s22, 0
      %p84 = por %p82, %p83
      %p85 = scmp.ne.s32.totalorder %s77, %s79
      %p86 = scmp.eq.s32.totalorder %s27, 1
      %p87 = por %p85, %p86
      %p88 = scmp.ne.s32.totalorder %s79, %s80
      %p89 = scmp.eq.s32.totalorder %s27, 0
      %p90 = por %p88, %p89
      %p91 = scmp.ne.s32.totalorder %s79, %s80
      %p92 = scmp.eq.s32.totalorder %s28, 1
      %p93 = por %p91, %p92
      %p95 = scmp.ne.s32.totalorder %s80, %s94
      %p96 = scmp.eq.s32.totalorder %s28, 0
      %p97 = por %p95, %p96
      %s99 = sadd.s32 %s98, 1
      %p102 = scmp.eq.s32.totalorder %s22, 1
      %p103 = scmp.ne.s32.totalorder %s98, %s100
      %p104 = scmp.eq.s32.totalorder %s22, 0
      %p105 = por %p103, %p104
      %p106 = scmp.ne.s32.totalorder %s98, %s100
      %p107 = scmp.eq.s32.totalorder %s27, 1
      %p108 = por %p106, %p107
      %p109 = scmp.ne.s32.totalorder %s100, %s101
      %p110 = scmp.eq.s32.totalorder %s27, 0
      %p111 = por %p109, %p110
      %p112 = scmp.ne.s32.totalorder %s100, %s101
      %p113 = scmp.eq.s32.totalorder %s28, 1
      %p114 = por %p112, %p113
      %p116 = scmp.ne.s32.totalorder %s101, %s115
      %p117 = scmp.eq.s32.totalorder %s28, 0
      %p118 = por %p116, %p117
      %s120 = sadd.s32 %s119, 1
      %p123 = scmp.eq.s32.totalorder %s22, 1
      %p124 = scmp.ne.s32.totalorder %s119, %s121
      %p125 = scmp.eq.s32.totalorder %s22, 0
      %p126 = por %p124, %p125
      %p127 = scmp.ne.s32.totalorder %s119, %s121
      %p128 = scmp.eq.s32.totalorder %s27, 1
      %p129 = por %p127, %p128
      %p130 = scmp.ne.s32.totalorder %s121, %s122
      %p131 = scmp.eq.s32.totalorder %s27, 0
      %p132 = por %p130, %p131
      %p133 = scmp.ne.s32.totalorder %s121, %s122
      %p134 = scmp.eq.s32.totalorder %s28, 1
      %p135 = por %p133, %p134
      %p137 = scmp.ne.s32.totalorder %s122, %s136
      %p138 = scmp.eq.s32.totalorder %s28, 0
      %p139 = por %p137, %p138
      %s141 = sadd.s32 %s140, 1
      %p144 = scmp.eq.s32.totalorder %s22, 1
      %p145 = scmp.ne.s32.totalorder %s140, %s142
      %p146 = scmp.eq.s32.totalorder %s22, 0
      %p147 = por %p145, %p146
      %p148 = scmp.ne.s32.totalorder %s140, %s142
      %p149 = scmp.eq.s32.totalorder %s27, 1
      %p150 = por %p148, %p149
      %p151 = scmp.ne.s32.totalorder %s142, %s143
      %p152 = scmp.eq.s32.totalorder %s27, 0
      %p153 = por %p151, %p152
      %p154 = scmp.ne.s32.totalorder %s142, %s143
      %p155 = scmp.eq.s32.totalorder %s28, 1
      %p156 = por %p154, %p155
      %p158 = scmp.ne.s32.totalorder %s143, %s157
      %p159 = scmp.eq.s32.totalorder %s28, 0
      %p160 = por %p158, %p159
      %s162 = sadd.s32 %s161, 1
      %p165 = scmp.eq.s32.totalorder %s22, 1
      %p166 = scmp.ne.s32.totalorder %s161, %s163
      %p167 = scmp.eq.s32.totalorder %s22, 0
      %p168 = por %p166, %p167
      %p169 = scmp.ne.s32.totalorder %s161, %s163
      %p170 = scmp.eq.s32.totalorder %s27, 1
      %p171 = por %p169, %p170
      %p172 = scmp.ne.s32.totalorder %s163, %s164
      %p173 = scmp.eq.s32.totalorder %s27, 0
      %p174 = por %p172, %p173
      %p175 = scmp.ne.s32.totalorder %s163, %s164
      %p176 = scmp.eq.s32.totalorder %s28, 1
      %p177 = por %p175, %p176
      %p179 = scmp.ne.s32.totalorder %s164, %s178
      %p180 = scmp.eq.s32.totalorder %s28, 0
      %p181 = por %p179, %p180
      %s183 = sadd.s32 %s182, 1
      %p186 = scmp.eq.s32.totalorder %s22, 1
      %p187 = scmp.ne.s32.totalorder %s182, %s184
      %p188 = scmp.eq.s32.totalorder %s22, 0
      %p189 = por %p187, %p188
      %p190 = scmp.ne.s32.totalorder %s182, %s184
      %p191 = scmp.eq.s32.totalorder %s27, 1
      %p192 = por %p190, %p191
      %p193 = scmp.ne.s32.totalorder %s184, %s185
      %p194 = scmp.eq.s32.totalorder %s27, 0
      %p195 = por %p193, %p194
      %p196 = scmp.ne.s32.totalorder %s184, %s185
      %p197 = scmp.eq.s32.totalorder %s28, 1
      %p198 = por %p196, %p197
      %p200 = scmp.ne.s32.totalorder %s185, %s199
      %p201 = scmp.eq.s32.totalorder %s28, 0
      %p202 = por %p200, %p201
      %s204 = sadd.s32 %s203, 1
      %p207 = scmp.eq.s32.totalorder %s22, 1
      %p208 = scmp.ne.s32.totalorder %s203, %s205
      %p209 = scmp.eq.s32.totalorder %s22, 0
      %p210 = por %p208, %p209
      %p211 = scmp.ne.s32.totalorder %s203, %s205
      %p212 = scmp.eq.s32.totalorder %s27, 1
      %p213 = por %p211, %p212
      %p214 = scmp.ne.s32.totalorder %s205, %s206
      %p215 = scmp.eq.s32.totalorder %s27, 0
      %p216 = por %p214, %p215
      %p217 = scmp.ne.s32.totalorder %s205, %s206
      %p218 = scmp.eq.s32.totalorder %s28, 1
      %p219 = por %p217, %p218
      %p221 = scmp.ne.s32.totalorder %s206, %s220
      %p222 = scmp.eq.s32.totalorder %s28, 0
      %p223 = por %p221, %p222
      %s225 = sadd.s32 %s224, 1
      %p228 = scmp.eq.s32.totalorder %s22, 1
      %p229 = scmp.ne.s32.totalorder %s224, %s226
      %p230 = scmp.eq.s32.totalorder %s22, 0
      %p231 = por %p229, %p230
      %p232 = scmp.ne.s32.totalorder %s224, %s226
      %p233 = scmp.eq.s32.totalorder %s27, 1
      %p234 = por %p232, %p233
      %p235 = scmp.ne.s32.totalorder %s226, %s227
      %p236 = scmp.eq.s32.totalorder %s27, 0
      %p237 = por %p235, %p236
      %p238 = scmp.ne.s32.totalorder %s226, %s227
      %p239 = scmp.eq.s32.totalorder %s28, 1
      %p240 = por %p238, %p239
      %p242 = scmp.ne.s32.totalorder %s227, %s241
      %p243 = scmp.eq.s32.totalorder %s28, 0
      %p244 = por %p242, %p243
      %s246 = sadd.s32 %s245, 1
      %p249 = scmp.eq.s32.totalorder %s22, 1
      %p250 = scmp.ne.s32.totalorder %s245, %s247
      %p251 = scmp.eq.s32.totalorder %s22, 0
      %p252 = por %p250, %p251
      %p253 = scmp.ne.s32.totalorder %s245, %s247
      %p254 = scmp.eq.s32.totalorder %s27, 1
      %p255 = por %p253, %p254
      %p256 = scmp.ne.s32.totalorder %s247, %s248
      %p257 = scmp.eq.s32.totalorder %s27, 0
      %p258 = por %p256, %p257
      %p259 = scmp.ne.s32.totalorder %s247, %s248
      %p260 = scmp.eq.s32.totalorder %s28, 1
      %p261 = por %p259, %p260
      %p263 = scmp.ne.s32.totalorder %s248, %s262
      %p264 = scmp.eq.s32.totalorder %s28, 0
      %p265 = por %p263, %p264
      %s267 = sadd.s32 %s266, 1
      %p270 = scmp.eq.s32.totalorder %s22, 1
      %p271 = scmp.ne.s32.totalorder %s266, %s268
      %p272 = scmp.eq.s32.totalorder %s22, 0
      %p273 = por %p271, %p272
      %p274 = scmp.ne.s32.totalorder %s266, %s268
      %p275 = scmp.eq.s32.totalorder %s27, 1
      %p276 = por %p274, %p275
      %p277 = scmp.ne.s32.totalorder %s268, %s269
      %p278 = scmp.eq.s32.totalorder %s27, 0
      %p279 = por %p277, %p278
      %p280 = scmp.ne.s32.totalorder %s268, %s269
      %p281 = scmp.eq.s32.totalorder %s28, 1
      %p282 = por %p280, %p281
      %p284 = scmp.ne.s32.totalorder %s269, %s283
      %p285 = scmp.eq.s32.totalorder %s28, 0
      %p286 = por %p284, %p285
      %s288 = sadd.s32 %s287, 1
      %p291 = scmp.eq.s32.totalorder %s22, 1
      %p292 = scmp.ne.s32.totalorder %s287, %s289
      %p293 = scmp.eq.s32.totalorder %s22, 0
      %p294 = por %p292, %p293
      %p295 = scmp.ne.s32.totalorder %s287, %s289
      %p296 = scmp.eq.s32.totalorder %s27, 1
      %p297 = por %p295, %p296
      %p298 = scmp.ne.s32.totalorder %s289, %s290
      %p299 = scmp.eq.s32.totalorder %s27, 0
      %p300 = por %p298, %p299
      %p301 = scmp.ne.s32.totalorder %s289, %s290
      %p302 = scmp.eq.s32.totalorder %s28, 1
      %p303 = por %p301, %p302
      %p305 = scmp.ne.s32.totalorder %s290, %s304
      %p306 = scmp.eq.s32.totalorder %s28, 0
      %p307 = por %p305, %p306
      %s308 = ssub.s32 %s22, %s29
      %p309 = scmp.eq.s32.totalorder %s308, 0
      %s311 = sadd.s32 %s310, 1
      %s312 = scalar_select %p309, %s310, %s311
      %p315 = pneg %p309
      %p316 = scmp.eq.s32.totalorder %s22, 1
      %p317 = por %p315, %p316
      %p318 = scmp.ne.s32.totalorder %s310, %s313
      %p319 = scmp.eq.s32.totalorder %s22, 0
      %p320 = por %p318, %p319
      %p321 = scmp.ne.s32.totalorder %s310, %s313
      %p322 = scmp.eq.s32.totalorder %s27, 1
      %p323 = por %p321, %p322
      %p324 = scmp.ne.s32.totalorder %s313, %s314
      %p325 = scmp.eq.s32.totalorder %s27, 0
      %p326 = por %p324, %p325
      %p327 = scmp.ne.s32.totalorder %s313, %s314
      %p328 = scmp.eq.s32.totalorder %s28, 1
      %p329 = por %p327, %p328
      %p331 = scmp.ne.s32.totalorder %s314, %s330
      %p332 = scmp.eq.s32.totalorder %s28, 0
      %p333 = por %p331, %p332
      %p334 = scmp.le.s32.totalorder 1, %s22
      %p335 = scmp.lt.s32.totalorder %s22, 3
      %p336 = pnand %p334, %p335
      %p337 = pneg %p336
      // Predicated region
      $region9: #{convnet_forward.1} parent=5 // pred_check
        _
      $region10: #{convnet_forward.1} parent=5 // pred_check_branch
        %339 = sbr.rel (%p336) target = $region12
      $region11: #{convnet_forward.1} parent=5 // pred_region
        %s340 = ssub.s32 %s22, 1
        // Predicated region
        $region13: #{convnet_forward.1} parent=11 // pred_check
          %p341 = pneg %p69
        $region14: #{convnet_forward.1} parent=11 // pred_check_branch
          %343 = sbr.rel (%p341) target = $region16
        $region15: #{convnet_forward.1} parent=11 // pred_region
          _
        $region16: #{convnet_forward.1} parent=11 // pred_fallthru
          _
        // Predicated region
        $region17: #{convnet_forward.1} parent=11 // pred_check
          %p344 = pneg %p90
        $region18: #{convnet_forward.1} parent=11 // pred_check_branch
          %346 = sbr.rel (%p344) target = $region20
        $region19: #{convnet_forward.1} parent=11 // pred_region
          _
        $region20: #{convnet_forward.1} parent=11 // pred_fallthru
          _
        // Predicated region
        $region21: #{convnet_forward.1} parent=11 // pred_check
          %p347 = pneg %p111
        $region22: #{convnet_forward.1} parent=11 // pred_check_branch
          %349 = sbr.rel (%p347) target = $region24
        $region23: #{convnet_forward.1} parent=11 // pred_region
          _
        $region24: #{convnet_forward.1} parent=11 // pred_fallthru
          _
        // Predicated region
        $region25: #{convnet_forward.1} parent=11 // pred_check
          %p350 = pneg %p132
        $region26: #{convnet_forward.1} parent=11 // pred_check_branch
          %352 = sbr.rel (%p350) target = $region28
        $region27: #{convnet_forward.1} parent=11 // pred_region
          _
        $region28: #{convnet_forward.1} parent=11 // pred_fallthru
          _
        // Predicated region
        $region29: #{convnet_forward.1} parent=11 // pred_check
          %p353 = pneg %p153
        $region30: #{convnet_forward.1} parent=11 // pred_check_branch
          %355 = sbr.rel (%p353) target = $region32
        $region31: #{convnet_forward.1} parent=11 // pred_region
          _
        $region32: #{convnet_forward.1} parent=11 // pred_fallthru
          _
        // Predicated region
        $region33: #{convnet_forward.1} parent=11 // pred_check
          %p356 = pneg %p174
        $region34: #{convnet_forward.1} parent=11 // pred_check_branch
          %358 = sbr.rel (%p356) target = $region36
        $region35: #{convnet_forward.1} parent=11 // pred_region
          _
        $region36: #{convnet_forward.1} parent=11 // pred_fallthru
          _
        // Predicated region
        $region37: #{convnet_forward.1} parent=11 // pred_check
          %p359 = pneg %p195
        $region38: #{convnet_forward.1} parent=11 // pred_check_branch
          %361 = sbr.rel (%p359) target = $region40
        $region39: #{convnet_forward.1} parent=11 // pred_region
          _
        $region40: #{convnet_forward.1} parent=11 // pred_fallthru
          _
        // Predicated region
        $region41: #{convnet_forward.1} parent=11 // pred_check
          %p362 = pneg %p216
        $region42: #{convnet_forward.1} parent=11 // pred_check_branch
          %364 = sbr.rel (%p362) target = $region44
        $region43: #{convnet_forward.1} parent=11 // pred_region
          _
        $region44: #{convnet_forward.1} parent=11 // pred_fallthru
          _
        // Predicated region
        $region45: #{convnet_forward.1} parent=11 // pred_check
          %p365 = pneg %p237
        $region46: #{convnet_forward.1} parent=11 // pred_check_branch
          %367 = sbr.rel (%p365) target = $region48
        $region47: #{convnet_forward.1} parent=11 // pred_region
          _
        $region48: #{convnet_forward.1} parent=11 // pred_fallthru
          _
        // Predicated region
        $region49: #{convnet_forward.1} parent=11 // pred_check
          %p368 = pneg %p258
        $region50: #{convnet_forward.1} parent=11 // pred_check_branch
          %370 = sbr.rel (%p368) target = $region52
        $region51: #{convnet_forward.1} parent=11 // pred_region
          _
        $region52: #{convnet_forward.1} parent=11 // pred_fallthru
          _
        // Predicated region
        $region53: #{convnet_forward.1} parent=11 // pred_check
          %p371 = pneg %p279
        $region54: #{convnet_forward.1} parent=11 // pred_check_branch
          %373 = sbr.rel (%p371) target = $region56
        $region55: #{convnet_forward.1} parent=11 // pred_region
          _
        $region56: #{convnet_forward.1} parent=11 // pred_fallthru
          _
        // Predicated region
        $region57: #{convnet_forward.1} parent=11 // pred_check
          %p374 = pneg %p300
        $region58: #{convnet_forward.1} parent=11 // pred_check_branch
          %376 = sbr.rel (%p374) target = $region60
        $region59: #{convnet_forward.1} parent=11 // pred_region
          _
        $region60: #{convnet_forward.1} parent=11 // pred_fallthru
          _
      $region12: #{convnet_forward.1} parent=5 // pred_fallthru
        _
      %p377 = scmp.lt.s32.totalorder %s22, 2
      // Predicated region
      $region61: #{convnet_forward.1} parent=5 // pred_check
        %p378 = pneg %p377
      $region62: #{convnet_forward.1} parent=5 // pred_check_branch
        %380 = sbr.rel (%p378) target = $region64
      $region63: #{convnet_forward.1} parent=5 // pred_region
        // Predicated region
        $region65: #{convnet_forward.1} parent=63 // pred_check
          %p381 = pneg %p42
        $region66: #{convnet_forward.1} parent=63 // pred_check_branch
          %383 = sbr.rel (%p381) target = $region68
        $region67: #{convnet_forward.1} parent=63 // pred_region
          %p384 = scmp.lt.s32.totalorder %s22, 1
          %s385 = scalar_select %p384, %s22, 1
          %s386 = smul.addr %s385, 72
          %s387 = smul.addr %s386, 4
          %s388 = scalar_lea.vmem %s0, %s387
        $region68: #{convnet_forward.1} parent=63 // pred_fallthru
          _
      $region64: #{convnet_forward.1} parent=5 // pred_fallthru
        _
      %p389 = scmp.le.s32.totalorder 1, %s22
      %p390 = scmp.lt.s32.totalorder %s22, 3
      %p391 = pnand %p389, %p390
      %p392 = pneg %p391
      // Predicated region
      $region69: #{convnet_forward.1} parent=5 // pred_check
        _
      $region70: #{convnet_forward.1} parent=5 // pred_check_branch
        %394 = sbr.rel (%p391) target = $region72
      $region71: #{convnet_forward.1} parent=5 // pred_region
        %s395 = ssub.s32 %s22, 1
        %p396 = scmp.lt.s32.totalorder %s27, 1
        %s397 = scalar_select %p396, %s27, 1
        %s398 = smul.addr %s397, 72
        %s399 = smul.addr %s398, 4
        %s400 = scalar_lea.vmem %s0, %s399
        %p401 = pneg %p48
        %p402 = pneg %p45
        %p403 = pneg %p69
        %p404 = pneg %p66
        %p405 = pneg %p90
        %p406 = pneg %p87
        %p407 = pneg %p111
        %p408 = pneg %p108
        %p409 = pneg %p132
        %p410 = pneg %p129
        %p411 = pneg %p153
        %p412 = pneg %p150
        %p413 = pneg %p174
        %p414 = pneg %p171
        %p415 = pneg %p195
        %p416 = pneg %p192
        %p417 = pneg %p216
        %p418 = pneg %p213
        %p419 = pneg %p237
        %p420 = pneg %p234
        %p421 = pneg %p258
        %p422 = pneg %p255
        %p423 = pneg %p279
        %p424 = pneg %p276
        %p425 = pneg %p300
        %p426 = pneg %p297
        %p427 = pneg %p326
        %p428 = pneg %p323
        %s429 = sand.u32 %s313, 1
        %s430 = scalar_lea.sflag [#allocation6], %s429
        %s431 = sand.u32 %s313, 1
        %s432 = scalar_lea.vmem [#allocation5], %s431
        %p433 = scmp.lt.s32.totalorder %s27, 1
        %s434 = scalar_select %p433, %s27, 1
        %s435 = smul.addr %s434, 72
        %s436 = smul.addr %s435, 4
        %s437 = scalar_lea.vmem %s0, %s436
        %439 = vst [vmem:[#allocation3] sm:$0xf] 0
        %440 = vst [vmem:[#allocation3 + $0x4] sm:$0xf] 0
        %441 = vst [vmem:[#allocation3 + $0x8] sm:$0xf] 0
        %442 = vst [vmem:[#allocation3 + $0xc] sm:$0xf] 0
        %443 = vst [vmem:[#allocation3 + $0x10] sm:$0xf] 0
        %444 = vst [vmem:[#allocation3 + $0x14] sm:$0xf] 0
        %445 = vst [vmem:[#allocation3 + $0x18] sm:$0xf] 0
        %446 = vst [vmem:[#allocation3 + $0x1c] sm:$0xf] 0
        %447 = vst [vmem:[#allocation3 + $0x20] sm:$0xf] 0
        %448 = vst [vmem:[#allocation3 + $0x24] sm:$0xf] 0
        %449 = vst [vmem:[#allocation3 + $0x28] sm:$0xf] 0
        %450 = vst [vmem:[#allocation3 + $0x2c] sm:$0xf] 0
        %451 = vst [vmem:[#allocation3 + $0x30] sm:$0xf] 0
        %452 = vst [vmem:[#allocation3 + $0x34] sm:$0xf] 0
        %453 = vst [vmem:[#allocation3 + $0x38] sm:$0xf] 0
        %454 = vst [vmem:[#allocation3 + $0x3c] sm:$0xf] 0
        %455 = vst [vmem:[#allocation3 + $0x40] sm:$0xf] 0
        %456 = vst [vmem:[#allocation3 + $0x44] sm:$0xf] 0
        %457 = vst [vmem:[#allocation3 + $0x48] sm:$0xf] 0
        %458 = vst [vmem:[#allocation3 + $0x4c] sm:$0xf] 0
        %459 = vst [vmem:[#allocation3 + $0x50] sm:$0xf] 0
        %460 = vst [vmem:[#allocation3 + $0x54] sm:$0xf] 0
        %461 = vst [vmem:[#allocation3 + $0x58] sm:$0xf] 0
        %462 = vst [vmem:[#allocation3 + $0x5c] sm:$0xf] 0
        %463 = vst [vmem:[#allocation3 + $0x60] sm:$0x3] 0
        %v464 = vld [vmem:[%s437] sm:$0xf]
        %v465 = vld [vmem:[%s437 + $0x4] sm:$0xf]
        %v466 = vld [vmem:[%s437 + $0x8] sm:$0xf]
        %v467 = vld [vmem:[%s437 + $0xc] sm:$0xf]
        %v468 = vld [vmem:[%s437 + $0x10] sm:$0xf]
        %v469 = vld [vmem:[%s437 + $0x14] sm:$0xf]
        %v470 = vld [vmem:[%s437 + $0x18] sm:$0xf]
        %v471 = vld [vmem:[%s437 + $0x1c] sm:$0xf]
        %v472 = vld [vmem:[%s437 + $0x20] sm:$0xf]
        %v473 = vld [vmem:[%s437 + $0x24] sm:$0xf]
        %v474 = vld [vmem:[%s437 + $0x28] sm:$0xf]
        %v475 = vld [vmem:[%s437 + $0x2c] sm:$0xf]
        %v476 = vld [vmem:[%s437 + $0x30] sm:$0xf]
        %v477 = vld [vmem:[%s437 + $0x34] sm:$0xf]
        %v478 = vld [vmem:[%s437 + $0x38] sm:$0xf]
        %v479 = vld [vmem:[%s437 + $0x3c] sm:$0xf]
        %v480 = vld [vmem:[%s437 + $0x40] sm:$0xf]
        %v481 = vld [vmem:[%s437 + $0x44] sm:$0xf]
        %v482 = vld [vmem:[%s437 + $0x48] sm:$0xf]
        %v483 = vld [vmem:[%s437 + $0x4c] sm:$0xf]
        %v484 = vld [vmem:[%s437 + $0x50] sm:$0xf]
        %v485 = vld [vmem:[%s437 + $0x54] sm:$0xf]
        %v486 = vld [vmem:[%s437 + $0x58] sm:$0xf]
        %v487 = vld [vmem:[%s437 + $0x5c] sm:$0xf]
        %v488 = vld [vmem:[%s437 + $0x60] sm:$0xf]
        %v489 = vld [vmem:[%s437 + $0x64] sm:$0xf]
        %v490 = vld [vmem:[%s437 + $0x68] sm:$0xf]
        %v491 = vld [vmem:[%s437 + $0x6c] sm:$0xf]
        %v492 = vld [vmem:[%s437 + $0x70] sm:$0xf]
        %v493 = vld [vmem:[%s437 + $0x74] sm:$0xf]
        %v494 = vld [vmem:[%s437 + $0x78] sm:$0xf]
        %v495 = vld [vmem:[%s437 + $0x7c] sm:$0xf]
        %v496 = vld [vmem:[%s437 + $0x80] sm:$0xf]
        %v497 = vld [vmem:[%s437 + $0x84] sm:$0xf]
        %v498 = vld [vmem:[%s437 + $0x88] sm:$0xf]
        %v499 = vld [vmem:[%s437 + $0x8c] sm:$0xf]
        %v500 = vld [vmem:[%s437 + $0x90] sm:$0xf]
        %v501 = vld [vmem:[%s437 + $0x94] sm:$0xf]
        %v502 = vld [vmem:[%s437 + $0x98] sm:$0xf]
        %v503 = vld [vmem:[%s437 + $0x9c] sm:$0xf]
        %v504 = vld [vmem:[%s437 + $0xa0] sm:$0xf]
        %v505 = vld [vmem:[%s437 + $0xa4] sm:$0xf]
        %v506 = vld [vmem:[%s437 + $0xa8] sm:$0xf]
        %v507 = vld [vmem:[%s437 + $0xac] sm:$0xf]
        %v508 = vld [vmem:[%s437 + $0xb0] sm:$0xf]
        %v509 = vld [vmem:[%s437 + $0xb4] sm:$0xf]
        %v510 = vld [vmem:[%s437 + $0xb8] sm:$0xf]
        %v511 = vld [vmem:[%s437 + $0xbc] sm:$0xf]
        %v512 = vld [vmem:[%s437 + $0xc0] sm:$0xf]
        %v513 = vld [vmem:[%s437 + $0xc4] sm:$0xf]
        %v514 = vld [vmem:[%s437 + $0xc8] sm:$0xf]
        %v515 = vld [vmem:[%s437 + $0xcc] sm:$0xf]
        %v516 = vld [vmem:[%s437 + $0xd0] sm:$0xf]
        %v517 = vld [vmem:[%s437 + $0xd4] sm:$0xf]
        %v518 = vld [vmem:[%s437 + $0xd8] sm:$0xf]
        %v519 = vld [vmem:[%s437 + $0xdc] sm:$0xf]
        %v520 = vld [vmem:[%s437 + $0xe0] sm:$0xf]
        %v521 = vld [vmem:[%s437 + $0xe4] sm:$0xf]
        %v522 = vld [vmem:[%s437 + $0xe8] sm:$0xf]
        %v523 = vld [vmem:[%s437 + $0xec] sm:$0xf]
        %v524 = vld [vmem:[%s437 + $0xf0] sm:$0xf]
        %v525 = vld [vmem:[%s437 + $0xf4] sm:$0xf]
        %v526 = vld [vmem:[%s437 + $0xf8] sm:$0xf]
        %v527 = vld [vmem:[%s437 + $0xfc] sm:$0xf]
        %v528 = vld [vmem:[%s437 + $0x100] sm:$0xf]
        %v529 = vld [vmem:[%s437 + $0x104] sm:$0xf]
        %v530 = vld [vmem:[%s437 + $0x108] sm:$0xf]
        %v531 = vld [vmem:[%s437 + $0x10c] sm:$0xf]
        %v532 = vld [vmem:[%s437 + $0x110] sm:$0xf]
        %v533 = vld [vmem:[%s437 + $0x114] sm:$0xf]
        %v534 = vld [vmem:[%s437 + $0x118] sm:$0xf]
        %v535 = vld [vmem:[%s437 + $0x11c] sm:$0xf]
        %v536 = vld [vmem:[%s1] sm:$0xf]
        %v537 = vld [vmem:[%s1 + $0x4] sm:$0xf]
        %v538 = vld [vmem:[%s1 + $0x8] sm:$0xf]
        %v539 = vld [vmem:[%s1 + $0xc] sm:$0xf]
        %v540 = vld [vmem:[%s2] sm:$0x1]
        %v542 = vlaneseq
        %v543 = vshrl.u32 %v542, 7
        %v544 = vsub.s32 0, %v543
        %v545 = vrot.slane %v540, %v544
        %v619 = vunpack.c.l.b16 %v464
        %v620 = vunpack.c.l.b16 %v465
        %v621 = vunpack.c.l.b16 %v466
        %v622 = vunpack.c.l.b16 %v467
        %v623 = vunpack.c.l.b16 %v468
        %v624 = vunpack.c.l.b16 %v469
        %v625 = vunpack.c.l.b16 %v470
        %v626 = vunpack.c.l.b16 %v471
        %v627 = vunpack.c.l.b16 %v472
        %v628 = vunpack.c.l.b16 %v473
        %v629 = vunpack.c.l.b16 %v474
        %v630 = vunpack.c.l.b16 %v475
        %v631 = vunpack.c.l.b16 %v476
        %v632 = vunpack.c.l.b16 %v477
        %v633 = vunpack.c.l.b16 %v478
        %v634 = vunpack.c.l.b16 %v479
        %v635 = vunpack.c.l.b16 %v480
        %v636 = vunpack.c.l.b16 %v481
        %v637 = vunpack.c.l.b16 %v482
        %v638 = vunpack.c.l.b16 %v483
        %v639 = vunpack.c.l.b16 %v484
        %v640 = vunpack.c.l.b16 %v485
        %v641 = vunpack.c.l.b16 %v486
        %v642 = vunpack.c.l.b16 %v487
        %v643 = vunpack.c.l.b16 %v488
        %v644 = vunpack.c.l.b16 %v489
        %v645 = vunpack.c.l.b16 %v490
        %v646 = vunpack.c.l.b16 %v491
        %v647 = vunpack.c.l.b16 %v492
        %v648 = vunpack.c.l.b16 %v493
        %v649 = vunpack.c.l.b16 %v494
        %v650 = vunpack.c.l.b16 %v495
        %v651 = vunpack.c.l.b16 %v496
        %v652 = vunpack.c.l.b16 %v497
        %v653 = vunpack.c.l.b16 %v498
        %v654 = vunpack.c.l.b16 %v499
        %v655 = vunpack.c.l.b16 %v500
        %v656 = vunpack.c.l.b16 %v501
        %v657 = vunpack.c.l.b16 %v502
        %v658 = vunpack.c.l.b16 %v503
        %v659 = vunpack.c.l.b16 %v504
        %v660 = vunpack.c.l.b16 %v505
        %v661 = vunpack.c.l.b16 %v506
        %v662 = vunpack.c.l.b16 %v507
        %v663 = vunpack.c.l.b16 %v508
        %v664 = vunpack.c.l.b16 %v509
        %v665 = vunpack.c.l.b16 %v510
        %v666 = vunpack.c.l.b16 %v511
        %v667 = vunpack.c.l.b16 %v512
        %v668 = vunpack.c.l.b16 %v513
        %v669 = vunpack.c.l.b16 %v514
        %v670 = vunpack.c.l.b16 %v515
        %v671 = vunpack.c.l.b16 %v516
        %v672 = vunpack.c.l.b16 %v517
        %v673 = vunpack.c.l.b16 %v518
        %v674 = vunpack.c.l.b16 %v519
        %v675 = vunpack.c.l.b16 %v520
        %v676 = vunpack.c.l.b16 %v521
        %v677 = vunpack.c.l.b16 %v522
        %v678 = vunpack.c.l.b16 %v523
        %v679 = vunpack.c.l.b16 %v524
        %v680 = vunpack.c.l.b16 %v525
        %v681 = vunpack.c.l.b16 %v526
        %v682 = vunpack.c.l.b16 %v527
        %v683 = vunpack.c.l.b16 %v528
        %v684 = vunpack.c.l.b16 %v529
        %v685 = vunpack.c.l.b16 %v530
        %v686 = vunpack.c.l.b16 %v531
        %v687 = vunpack.c.l.b16 %v532
        %v688 = vunpack.c.l.b16 %v533
        %v689 = vunpack.c.l.b16 %v534
        %v690 = vunpack.c.l.b16 %v535
        %v691 = vpack.c.b16 %v620, %v619
        %v692 = vpack.c.b16 %v622, %v621
        %v693 = vpack.c.b16 %v624, %v623
        %v694 = vpack.c.b16 %v626, %v625
        %v695 = vpack.c.b16 %v628, %v627
        %v696 = vpack.c.b16 %v630, %v629
        %v697 = vpack.c.b16 %v632, %v631
        %v698 = vpack.c.b16 %v634, %v633
        %v699 = vpack.c.b16 %v636, %v635
        %v700 = vpack.c.b16 %v638, %v637
        %v701 = vpack.c.b16 %v640, %v639
        %v702 = vpack.c.b16 %v642, %v641
        %v703 = vpack.c.b16 %v644, %v643
        %v704 = vpack.c.b16 %v646, %v645
        %v705 = vpack.c.b16 %v648, %v647
        %v706 = vpack.c.b16 %v650, %v649
        %v707 = vpack.c.b16 %v652, %v651
        %v708 = vpack.c.b16 %v654, %v653
        %v709 = vpack.c.b16 %v656, %v655
        %v710 = vpack.c.b16 %v658, %v657
        %v711 = vpack.c.b16 %v660, %v659
        %v712 = vpack.c.b16 %v662, %v661
        %v713 = vpack.c.b16 %v664, %v663
        %v714 = vpack.c.b16 %v666, %v665
        %v715 = vpack.c.b16 %v668, %v667
        %v716 = vpack.c.b16 %v670, %v669
        %v717 = vpack.c.b16 %v672, %v671
        %v718 = vpack.c.b16 %v674, %v673
        %v719 = vpack.c.b16 %v676, %v675
        %v720 = vpack.c.b16 %v678, %v677
        %v721 = vpack.c.b16 %v680, %v679
        %v722 = vpack.c.b16 %v682, %v681
        %v723 = vpack.c.b16 %v684, %v683
        %v724 = vpack.c.b16 %v686, %v685
        %v725 = vpack.c.b16 %v688, %v687
        %v726 = vpack.c.b16 %v690, %v689
        %v731 = vunpack.c.l.b16 %v536
        %v732 = vunpack.c.l.b16 %v537
        %v733 = vunpack.c.l.b16 %v538
        %v734 = vunpack.c.l.b16 %v539
        %v735 = vpack.c.b16 %v732, %v731
        %v736 = vpack.c.b16 %v734, %v733
        %vm739 = vcmask 261120
        %v741 = vsel %vm739, %v691, 0
        %v744 = vsel %vm739, %v692, 0
        %v747 = vsel %vm739, %v693, 0
        %v750 = vsel %vm739, %v694, 0
        %v753 = vsel %vm739, %v695, 0
        %v756 = vsel %vm739, %v696, 0
        %v759 = vsel %vm739, %v697, 0
        %v762 = vsel %vm739, %v698, 0
        %v765 = vsel %vm739, %v699, 0
        %v768 = vsel %vm739, %v700, 0
        %v771 = vsel %vm739, %v701, 0
        %v774 = vsel %vm739, %v702, 0
        %v777 = vsel %vm739, %v703, 0
        %v780 = vsel %vm739, %v704, 0
        %v783 = vsel %vm739, %v705, 0
        %v786 = vsel %vm739, %v706, 0
        %v789 = vsel %vm739, %v707, 0
        %v792 = vsel %vm739, %v708, 0
        %v795 = vsel %vm739, %v709, 0
        %v798 = vsel %vm739, %v710, 0
        %v801 = vsel %vm739, %v711, 0
        %v804 = vsel %vm739, %v712, 0
        %v807 = vsel %vm739, %v713, 0
        %v810 = vsel %vm739, %v714, 0
        %v813 = vsel %vm739, %v715, 0
        %v816 = vsel %vm739, %v716, 0
        %v819 = vsel %vm739, %v717, 0
        %v822 = vsel %vm739, %v718, 0
        %v825 = vsel %vm739, %v719, 0
        %v828 = vsel %vm739, %v720, 0
        %v831 = vsel %vm739, %v721, 0
        %v834 = vsel %vm739, %v722, 0
        %v837 = vsel %vm739, %v723, 0
        %v840 = vsel %vm739, %v724, 0
        %v843 = vsel %vm739, %v725, 0
        %v846 = vsel %vm739, %v726, 0
        %848 = vmatprep.subr.bf16.mxu0 0
        %849 = vmatpush1.bf16.msra.mxu0 %v735
        %850 = vmatprep.subr.bf16.mxu0 0
        %851 = vmatpush1.bf16.msra.mxu0 %v736
        %852 = vmatprep.subr.bf16.mxu0 0
        %853 = vmatpush1.bf16.msra.mxu0 0
        %854 = vmatprep.subr.bf16.mxu0 0
        %855 = vmatpush1.bf16.msra.mxu0 0
        %856 = vmatprep.subr.bf16.mxu0 0
        %857 = vmatpush1.bf16.msra.mxu0 0
        %858 = vmatprep.subr.bf16.mxu0 0
        %859 = vmatpush1.bf16.msra.mxu0 0
        %860 = vmatprep.subr.bf16.mxu0 0
        %861 = vmatpush1.bf16.msra.mxu0 0
        %862 = vmatprep.subr.bf16.mxu0 0
        %863 = vmatpush1.bf16.msra.mxu0 0
        %864 = vmatprep.subr.bf16.mxu0 0
        %865 = vmatpush1.bf16.msra.mxu0 0
        %866 = vmatprep.subr.bf16.mxu0 0
        %867 = vmatpush1.bf16.msra.mxu0 0
        %868 = vmatprep.subr.bf16.mxu0 0
        %869 = vmatpush1.bf16.msra.mxu0 0
        %870 = vmatprep.subr.bf16.mxu0 0
        %871 = vmatpush1.bf16.msra.mxu0 0
        %872 = vmatprep.subr.bf16.mxu0 0
        %873 = vmatpush1.bf16.msra.mxu0 0
        %874 = vmatprep.subr.bf16.mxu0 0
        %875 = vmatpush1.bf16.msra.mxu0 0
        %876 = vmatprep.subr.bf16.mxu0 0
        %877 = vmatpush1.bf16.msra.mxu0 0
        %878 = vmatprep.subr.bf16.mxu0 0
        %879 = vmatpush1.bf16.msra.mxu0 0
        %880 = vmatprep.mubr.bf16.mxu0 0
        %881 = vmatmul.mubr.bf16.gmra.mrb[0].mxu0 %v741
        %v882 = vpop.f32.mrb[0].mxu0
        %v883 = vadd.f32 %v545, %v882
        %v884 = vpop.f32.mrb[0].mxu0
        %v885 = vpop.f32.mrb[0].mxu0
        %v886 = vadd.f32 %v545, %v885
        %v887 = vpop.f32.mrb[0].mxu0
        %888 = vmatprep.mubr.bf16.mxu0 0
        %889 = vmatmul.mubr.bf16.gmra.mrb[0].mxu0 %v744
        %v890 = vpop.f32.mrb[0].mxu0
        %v891 = vadd.f32 %v545, %v890
        %v892 = vpop.f32.mrb[0].mxu0
        %v893 = vpop.f32.mrb[0].mxu0
        %v894 = vadd.f32 %v545, %v893
        %v895 = vpop.f32.mrb[0].mxu0
        %896 = vmatprep.mubr.bf16.mxu0 0
        %897 = vmatmul.mubr.bf16.gmra.mrb[0].mxu0 %v747
        %v898 = vpop.f32.mrb[0].mxu0
        %v899 = vadd.f32 %v545, %v898
        %v900 = vpop.f32.mrb[0].mxu0
        %v901 = vpop.f32.mrb[0].mxu0
        %v902 = vadd.f32 %v545, %v901
        %v903 = vpop.f32.mrb[0].mxu0
        %904 = vmatprep.mubr.bf16.mxu0 0
        %905 = vmatmul.mubr.bf16.gmra.mrb[0].mxu0 %v750
        %v906 = vpop.f32.mrb[0].mxu0
        %v907 = vadd.f32 %v545, %v906
        %v908 = vpop.f32.mrb[0].mxu0
        %v909 = vpop.f32.mrb[0].mxu0
        %v910 = vadd.f32 %v545, %v909
        %v911 = vpop.f32.mrb[0].mxu0
        %912 = vmatprep.mubr.bf16.mxu0 0
        %913 = vmatmul.mubr.bf16.gmra.mrb[0].mxu0 %v753
        %v914 = vpop.f32.mrb[0].mxu0
        %v915 = vadd.f32 %v545, %v914
        %v916 = vpop.f32.mrb[0].mxu0
        %v917 = vpop.f32.mrb[0].mxu0
        %v918 = vadd.f32 %v545, %v917
        %v919 = vpop.f32.mrb[0].mxu0
        %920 = vmatprep.mubr.bf16.mxu0 0
        %921 = vmatmul.mubr.bf16.gmra.mrb[0].mxu0 %v756
        %v922 = vpop.f32.mrb[0].mxu0
        %v923 = vadd.f32 %v545, %v922
        %v924 = vpop.f32.mrb[0].mxu0
        %v925 = vpop.f32.mrb[0].mxu0
        %v926 = vadd.f32 %v545, %v925
        %v927 = vpop.f32.mrb[0].mxu0
        %928 = vmatprep.mubr.bf16.mxu0 0
        %929 = vmatmul.mubr.bf16.gmra.mrb[0].mxu0 %v759
        %v930 = vpop.f32.mrb[0].mxu0
        %v931 = vadd.f32 %v545, %v930
        %v932 = vpop.f32.mrb[0].mxu0
        %v933 = vpop.f32.mrb[0].mxu0
        %v934 = vadd.f32 %v545, %v933
        %v935 = vpop.f32.mrb[0].mxu0
        %936 = vmatprep.mubr.bf16.mxu0 0
        %937 = vmatmul.mubr.bf16.gmra.mrb[0].mxu0 %v762
        %v938 = vpop.f32.mrb[0].mxu0
        %v939 = vadd.f32 %v545, %v938
        %v940 = vpop.f32.mrb[0].mxu0
        %v941 = vpop.f32.mrb[0].mxu0
        %v942 = vadd.f32 %v545, %v941
        %v943 = vpop.f32.mrb[0].mxu0
        %944 = vmatprep.mubr.bf16.mxu0 0
        %945 = vmatmul.mubr.bf16.gmra.mrb[0].mxu0 %v765
        %v946 = vpop.f32.mrb[0].mxu0
        %v947 = vadd.f32 %v545, %v946
        %v948 = vpop.f32.mrb[0].mxu0
        %v949 = vpop.f32.mrb[0].mxu0
        %v950 = vadd.f32 %v545, %v949
        %v951 = vpop.f32.mrb[0].mxu0
        %952 = vmatprep.mubr.bf16.mxu0 0
        %953 = vmatmul.mubr.bf16.gmra.mrb[0].mxu0 %v768
        %v954 = vpop.f32.mrb[0].mxu0
        %v955 = vadd.f32 %v545, %v954
        %v956 = vpop.f32.mrb[0].mxu0
        %v957 = vpop.f32.mrb[0].mxu0
        %v958 = vadd.f32 %v545, %v957
        %v959 = vpop.f32.mrb[0].mxu0
        %960 = vmatprep.mubr.bf16.mxu0 0
        %961 = vmatmul.mubr.bf16.gmra.mrb[0].mxu0 %v771
        %v962 = vpop.f32.mrb[0].mxu0
        %v963 = vadd.f32 %v545, %v962
        %v964 = vpop.f32.mrb[0].mxu0
        %v965 = vpop.f32.mrb[0].mxu0
        %v966 = vadd.f32 %v545, %v965
        %v967 = vpop.f32.mrb[0].mxu0
        %968 = vmatprep.mubr.bf16.mxu0 0
        %969 = vmatmul.mubr.bf16.gmra.mrb[0].mxu0 %v774
        %v970 = vpop.f32.mrb[0].mxu0
        %v971 = vadd.f32 %v545, %v970
        %v972 = vpop.f32.mrb[0].mxu0
        %v973 = vpop.f32.mrb[0].mxu0
        %v974 = vadd.f32 %v545, %v973
        %v975 = vpop.f32.mrb[0].mxu0
        %976 = vmatprep.mubr.bf16.mxu0 0
        %977 = vmatmul.mubr.bf16.gmra.mrb[0].mxu0 %v777
        %v978 = vpop.f32.mrb[0].mxu0
        %v979 = vadd.f32 %v545, %v978
        %v980 = vpop.f32.mrb[0].mxu0
        %v981 = vpop.f32.mrb[0].mxu0
        %v982 = vadd.f32 %v545, %v981
        %v983 = vpop.f32.mrb[0].mxu0
        %984 = vmatprep.mubr.bf16.mxu0 0
        %985 = vmatmul.mubr.bf16.gmra.mrb[0].mxu0 %v780
        %v986 = vpop.f32.mrb[0].mxu0
        %v987 = vadd.f32 %v545, %v986
        %v988 = vpop.f32.mrb[0].mxu0
        %v989 = vpop.f32.mrb[0].mxu0
        %v990 = vadd.f32 %v545, %v989
        %v991 = vpop.f32.mrb[0].mxu0
        %992 = vmatprep.mubr.bf16.mxu0 0
        %993 = vmatmul.mubr.bf16.gmra.mrb[0].mxu0 %v783
        %v994 = vpop.f32.mrb[0].mxu0
        %v995 = vadd.f32 %v545, %v994
        %v996 = vpop.f32.mrb[0].mxu0
        %v997 = vpop.f32.mrb[0].mxu0
        %v998 = vadd.f32 %v545, %v997
        %v999 = vpop.f32.mrb[0].mxu0
        %1000 = vmatprep.mubr.bf16.mxu0 0
        %1001 = vmatmul.mubr.bf16.gmra.mrb[0].mxu0 %v786
        %v1002 = vpop.f32.mrb[0].mxu0
        %v1003 = vadd.f32 %v545, %v1002
        %v1004 = vpop.f32.mrb[0].mxu0
        %v1005 = vpop.f32.mrb[0].mxu0
        %v1006 = vadd.f32 %v545, %v1005
        %v1007 = vpop.f32.mrb[0].mxu0
        %1008 = vmatprep.mubr.bf16.mxu0 0
        %1009 = vmatmul.mubr.bf16.gmra.mrb[0].mxu0 %v789
        %v1010 = vpop.f32.mrb[0].mxu0
        %v1011 = vadd.f32 %v545, %v1010
        %v1012 = vpop.f32.mrb[0].mxu0
        %v1013 = vpop.f32.mrb[0].mxu0
        %v1014 = vadd.f32 %v545, %v1013
        %v1015 = vpop.f32.mrb[0].mxu0
        %1016 = vmatprep.mubr.bf16.mxu0 0
        %1017 = vmatmul.mubr.bf16.gmra.mrb[0].mxu0 %v792
        %v1018 = vpop.f32.mrb[0].mxu0
        %v1019 = vadd.f32 %v545, %v1018
        %v1020 = vpop.f32.mrb[0].mxu0
        %v1021 = vpop.f32.mrb[0].mxu0
        %v1022 = vadd.f32 %v545, %v1021
        %v1023 = vpop.f32.mrb[0].mxu0
        %1024 = vmatprep.mubr.bf16.mxu0 0
        %1025 = vmatmul.mubr.bf16.gmra.mrb[0].mxu0 %v795
        %v1026 = vpop.f32.mrb[0].mxu0
        %v1027 = vadd.f32 %v545, %v1026
        %v1028 = vpop.f32.mrb[0].mxu0
        %v1029 = vpop.f32.mrb[0].mxu0
        %v1030 = vadd.f32 %v545, %v1029
        %v1031 = vpop.f32.mrb[0].mxu0
        %1032 = vmatprep.mubr.bf16.mxu0 0
        %1033 = vmatmul.mubr.bf16.gmra.mrb[0].mxu0 %v798
        %v1034 = vpop.f32.mrb[0].mxu0
        %v1035 = vadd.f32 %v545, %v1034
        %v1036 = vpop.f32.mrb[0].mxu0
        %v1037 = vpop.f32.mrb[0].mxu0
        %v1038 = vadd.f32 %v545, %v1037
        %v1039 = vpop.f32.mrb[0].mxu0
        %1040 = vmatprep.mubr.bf16.mxu0 0
        %1041 = vmatmul.mubr.bf16.gmra.mrb[0].mxu0 %v801
        %v1042 = vpop.f32.mrb[0].mxu0
        %v1043 = vadd.f32 %v545, %v1042
        %v1044 = vpop.f32.mrb[0].mxu0
        %v1045 = vpop.f32.mrb[0].mxu0
        %v1046 = vadd.f32 %v545, %v1045
        %v1047 = vpop.f32.mrb[0].mxu0
        %1048 = vmatprep.mubr.bf16.mxu0 0
        %1049 = vmatmul.mubr.bf16.gmra.mrb[0].mxu0 %v804
        %v1050 = vpop.f32.mrb[0].mxu0
        %v1051 = vadd.f32 %v545, %v1050
        %v1052 = vpop.f32.mrb[0].mxu0
        %v1053 = vpop.f32.mrb[0].mxu0
        %v1054 = vadd.f32 %v545, %v1053
        %v1055 = vpop.f32.mrb[0].mxu0
        %1056 = vmatprep.mubr.bf16.mxu0 0
        %1057 = vmatmul.mubr.bf16.gmra.mrb[0].mxu0 %v807
        %v1058 = vpop.f32.mrb[0].mxu0
        %v1059 = vadd.f32 %v545, %v1058
        %v1060 = vpop.f32.mrb[0].mxu0
        %v1061 = vpop.f32.mrb[0].mxu0
        %v1062 = vadd.f32 %v545, %v1061
        %v1063 = vpop.f32.mrb[0].mxu0
        %1064 = vmatprep.mubr.bf16.mxu0 0
        %1065 = vmatmul.mubr.bf16.gmra.mrb[0].mxu0 %v810
        %v1066 = vpop.f32.mrb[0].mxu0
        %v1067 = vadd.f32 %v545, %v1066
        %v1068 = vpop.f32.mrb[0].mxu0
        %v1069 = vpop.f32.mrb[0].mxu0
        %v1070 = vadd.f32 %v545, %v1069
        %v1071 = vpop.f32.mrb[0].mxu0
        %1072 = vmatprep.mubr.bf16.mxu0 0
        %1073 = vmatmul.mubr.bf16.gmra.mrb[0].mxu0 %v813
        %v1074 = vpop.f32.mrb[0].mxu0
        %v1075 = vadd.f32 %v545, %v1074
        %v1076 = vpop.f32.mrb[0].mxu0
        %v1077 = vpop.f32.mrb[0].mxu0
        %v1078 = vadd.f32 %v545, %v1077
        %v1079 = vpop.f32.mrb[0].mxu0
        %1080 = vmatprep.mubr.bf16.mxu0 0
        %1081 = vmatmul.mubr.bf16.gmra.mrb[0].mxu0 %v816
        %v1082 = vpop.f32.mrb[0].mxu0
        %v1083 = vadd.f32 %v545, %v1082
        %v1084 = vpop.f32.mrb[0].mxu0
        %v1085 = vpop.f32.mrb[0].mxu0
        %v1086 = vadd.f32 %v545, %v1085
        %v1087 = vpop.f32.mrb[0].mxu0
        %1088 = vmatprep.mubr.bf16.mxu0 0
        %1089 = vmatmul.mubr.bf16.gmra.mrb[0].mxu0 %v819
        %v1090 = vpop.f32.mrb[0].mxu0
        %v1091 = vadd.f32 %v545, %v1090
        %v1092 = vpop.f32.mrb[0].mxu0
        %v1093 = vpop.f32.mrb[0].mxu0
        %v1094 = vadd.f32 %v545, %v1093
        %v1095 = vpop.f32.mrb[0].mxu0
        %1096 = vmatprep.mubr.bf16.mxu0 0
        %1097 = vmatmul.mubr.bf16.gmra.mrb[0].mxu0 %v822
        %v1098 = vpop.f32.mrb[0].mxu0
        %v1099 = vadd.f32 %v545, %v1098
        %v1100 = vpop.f32.mrb[0].mxu0
        %v1101 = vpop.f32.mrb[0].mxu0
        %v1102 = vadd.f32 %v545, %v1101
        %v1103 = vpop.f32.mrb[0].mxu0
        %1104 = vmatprep.mubr.bf16.mxu0 0
        %1105 = vmatmul.mubr.bf16.gmra.mrb[0].mxu0 %v825
        %v1106 = vpop.f32.mrb[0].mxu0
        %v1107 = vadd.f32 %v545, %v1106
        %v1108 = vpop.f32.mrb[0].mxu0
        %v1109 = vpop.f32.mrb[0].mxu0
        %v1110 = vadd.f32 %v545, %v1109
        %v1111 = vpop.f32.mrb[0].mxu0
        %1112 = vmatprep.mubr.bf16.mxu0 0
        %1113 = vmatmul.mubr.bf16.gmra.mrb[0].mxu0 %v828
        %v1114 = vpop.f32.mrb[0].mxu0
        %v1115 = vadd.f32 %v545, %v1114
        %v1116 = vpop.f32.mrb[0].mxu0
        %v1117 = vpop.f32.mrb[0].mxu0
        %v1118 = vadd.f32 %v545, %v1117
        %v1119 = vpop.f32.mrb[0].mxu0
        %1120 = vmatprep.mubr.bf16.mxu0 0
        %1121 = vmatmul.mubr.bf16.gmra.mrb[0].mxu0 %v831
        %v1122 = vpop.f32.mrb[0].mxu0
        %v1123 = vadd.f32 %v545, %v1122
        %v1124 = vpop.f32.mrb[0].mxu0
        %v1125 = vpop.f32.mrb[0].mxu0
        %v1126 = vadd.f32 %v545, %v1125
        %v1127 = vpop.f32.mrb[0].mxu0
        %1128 = vmatprep.mubr.bf16.mxu0 0
        %1129 = vmatmul.mubr.bf16.gmra.mrb[0].mxu0 %v834
        %v1130 = vpop.f32.mrb[0].mxu0
        %v1131 = vadd.f32 %v545, %v1130
        %v1132 = vpop.f32.mrb[0].mxu0
        %v1133 = vpop.f32.mrb[0].mxu0
        %v1134 = vadd.f32 %v545, %v1133
        %v1135 = vpop.f32.mrb[0].mxu0
        %1136 = vmatprep.mubr.bf16.mxu0 0
        %1137 = vmatmul.mubr.bf16.gmra.mrb[0].mxu0 %v837
        %v1138 = vpop.f32.mrb[0].mxu0
        %v1139 = vadd.f32 %v545, %v1138
        %v1140 = vpop.f32.mrb[0].mxu0
        %v1141 = vpop.f32.mrb[0].mxu0
        %v1142 = vadd.f32 %v545, %v1141
        %v1143 = vpop.f32.mrb[0].mxu0
        %1144 = vmatprep.mubr.bf16.mxu0 0
        %1145 = vmatmul.mubr.bf16.gmra.mrb[0].mxu0 %v840
        %v1146 = vpop.f32.mrb[0].mxu0
        %v1147 = vadd.f32 %v545, %v1146
        %v1148 = vpop.f32.mrb[0].mxu0
        %v1149 = vpop.f32.mrb[0].mxu0
        %v1150 = vadd.f32 %v545, %v1149
        %v1151 = vpop.f32.mrb[0].mxu0
        %1152 = vmatprep.mubr.bf16.mxu0 0
        %1153 = vmatmul.mubr.bf16.gmra.mrb[0].mxu0 %v843
        %v1154 = vpop.f32.mrb[0].mxu0
        %v1155 = vadd.f32 %v545, %v1154
        %v1156 = vpop.f32.mrb[0].mxu0
        %v1157 = vpop.f32.mrb[0].mxu0
        %v1158 = vadd.f32 %v545, %v1157
        %v1159 = vpop.f32.mrb[0].mxu0
        %1160 = vmatprep.mubr.bf16.mxu0 0
        %1161 = vmatmul.mubr.bf16.gmra.mrb[0].mxu0 %v846
        %v1162 = vpop.f32.mrb[0].mxu0
        %v1163 = vadd.f32 %v545, %v1162
        %v1164 = vpop.f32.mrb[0].mxu0
        %v1165 = vpop.f32.mrb[0].mxu0
        %v1166 = vadd.f32 %v545, %v1165
        %v1167 = vpop.f32.mrb[0].mxu0
        %1168 = vdwg.mxu0
        %v1169 = vmax.f32 %v883, 0.0
        %v1170 = vmax.f32 %v886, 0.0
        %v1171 = vmax.f32 %v891, 0.0
        %v1172 = vmax.f32 %v894, 0.0
        %v1173 = vmax.f32 %v899, 0.0
        %v1174 = vmax.f32 %v902, 0.0
        %v1175 = vmax.f32 %v907, 0.0
        %v1176 = vmax.f32 %v910, 0.0
        %v1177 = vmax.f32 %v915, 0.0
        %v1178 = vmax.f32 %v918, 0.0
        %v1179 = vmax.f32 %v923, 0.0
        %v1180 = vmax.f32 %v926, 0.0
        %v1181 = vmax.f32 %v931, 0.0
        %v1182 = vmax.f32 %v934, 0.0
        %v1183 = vmax.f32 %v939, 0.0
        %v1184 = vmax.f32 %v942, 0.0
        %v1185 = vmax.f32 %v947, 0.0
        %v1186 = vmax.f32 %v950, 0.0
        %v1187 = vmax.f32 %v955, 0.0
        %v1188 = vmax.f32 %v958, 0.0
        %v1189 = vmax.f32 %v963, 0.0
        %v1190 = vmax.f32 %v966, 0.0
        %v1191 = vmax.f32 %v971, 0.0
        %v1192 = vmax.f32 %v974, 0.0
        %v1193 = vmax.f32 %v979, 0.0
        %v1194 = vmax.f32 %v982, 0.0
        %v1195 = vmax.f32 %v987, 0.0
        %v1196 = vmax.f32 %v990, 0.0
        %v1197 = vmax.f32 %v995, 0.0
        %v1198 = vmax.f32 %v998, 0.0
        %v1199 = vmax.f32 %v1003, 0.0
        %v1200 = vmax.f32 %v1006, 0.0
        %v1201 = vmax.f32 %v1011, 0.0
        %v1202 = vmax.f32 %v1014, 0.0
        %v1203 = vmax.f32 %v1019, 0.0
        %v1204 = vmax.f32 %v1022, 0.0
        %v1205 = vmax.f32 %v1027, 0.0
        %v1206 = vmax.f32 %v1030, 0.0
        %v1207 = vmax.f32 %v1035, 0.0
        %v1208 = vmax.f32 %v1038, 0.0
        %v1209 = vmax.f32 %v1043, 0.0
        %v1210 = vmax.f32 %v1046, 0.0
        %v1211 = vmax.f32 %v1051, 0.0
        %v1212 = vmax.f32 %v1054, 0.0
        %v1213 = vmax.f32 %v1059, 0.0
        %v1214 = vmax.f32 %v1062, 0.0
        %v1215 = vmax.f32 %v1067, 0.0
        %v1216 = vmax.f32 %v1070, 0.0
        %v1217 = vmax.f32 %v1075, 0.0
        %v1218 = vmax.f32 %v1078, 0.0
        %v1219 = vmax.f32 %v1083, 0.0
        %v1220 = vmax.f32 %v1086, 0.0
        %v1221 = vmax.f32 %v1091, 0.0
        %v1222 = vmax.f32 %v1094, 0.0
        %v1223 = vmax.f32 %v1099, 0.0
        %v1224 = vmax.f32 %v1102, 0.0
        %v1225 = vmax.f32 %v1107, 0.0
        %v1226 = vmax.f32 %v1110, 0.0
        %v1227 = vmax.f32 %v1115, 0.0
        %v1228 = vmax.f32 %v1118, 0.0
        %v1229 = vmax.f32 %v1123, 0.0
        %v1230 = vmax.f32 %v1126, 0.0
        %v1231 = vmax.f32 %v1131, 0.0
        %v1232 = vmax.f32 %v1134, 0.0
        %v1233 = vmax.f32 %v1139, 0.0
        %v1234 = vmax.f32 %v1142, 0.0
        %v1235 = vmax.f32 %v1147, 0.0
        %v1236 = vmax.f32 %v1150, 0.0
        %v1237 = vmax.f32 %v1155, 0.0
        %v1238 = vmax.f32 %v1158, 0.0
        %v1239 = vmax.f32 %v1163, 0.0
        %v1240 = vmax.f32 %v1166, 0.0
        %1241 = vst [vmem:[#allocation2] sm:$0xff] %v1169
        %1242 = vst [vmem:[#allocation2 + $0x8] sm:$0xff] %v1170
        %1243 = vst [vmem:[#allocation2 + $0x10] sm:$0xff] %v1171
        %1244 = vst [vmem:[#allocation2 + $0x18] sm:$0xff] %v1172
        %1245 = vst [vmem:[#allocation2 + $0x20] sm:$0xff] %v1173
        %1246 = vst [vmem:[#allocation2 + $0x28] sm:$0xff] %v1174
        %1247 = vst [vmem:[#allocation2 + $0x30] sm:$0xff] %v1175
        %1248 = vst [vmem:[#allocation2 + $0x38] sm:$0xff] %v1176
        %1249 = vst [vmem:[#allocation2 + $0x40] sm:$0xff] %v1177
        %1250 = vst [vmem:[#allocation2 + $0x48] sm:$0xff] %v1178
        %1251 = vst [vmem:[#allocation2 + $0x50] sm:$0xff] %v1179
        %1252 = vst [vmem:[#allocation2 + $0x58] sm:$0xff] %v1180
        %1253 = vst [vmem:[#allocation2 + $0x60] sm:$0xff] %v1181
        %1254 = vst [vmem:[#allocation2 + $0x68] sm:$0xff] %v1182
        %1255 = vst [vmem:[#allocation2 + $0x70] sm:$0xff] %v1183
        %1256 = vst [vmem:[#allocation2 + $0x78] sm:$0xff] %v1184
        %1257 = vst [vmem:[#allocation2 + $0x80] sm:$0xff] %v1185
        %1258 = vst [vmem:[#allocation2 + $0x88] sm:$0xff] %v1186
        %1259 = vst [vmem:[#allocation2 + $0x90] sm:$0xff] %v1187
        %1260 = vst [vmem:[#allocation2 + $0x98] sm:$0xff] %v1188
        %1261 = vst [vmem:[#allocation2 + $0xa0] sm:$0xff] %v1189
        %1262 = vst [vmem:[#allocation2 + $0xa8] sm:$0xff] %v1190
        %1263 = vst [vmem:[#allocation2 + $0xb0] sm:$0xff] %v1191
        %1264 = vst [vmem:[#allocation2 + $0xb8] sm:$0xff] %v1192
        %1265 = vst [vmem:[#allocation2 + $0xc0] sm:$0xff] %v1193
        %1266 = vst [vmem:[#allocation2 + $0xc8] sm:$0xff] %v1194
        %1267 = vst [vmem:[#allocation2 + $0xd0] sm:$0xff] %v1195
        %1268 = vst [vmem:[#allocation2 + $0xd8] sm:$0xff] %v1196
        %1269 = vst [vmem:[#allocation2 + $0xe0] sm:$0xff] %v1197
        %1270 = vst [vmem:[#allocation2 + $0xe8] sm:$0xff] %v1198
        %1271 = vst [vmem:[#allocation2 + $0xf0] sm:$0xff] %v1199
        %1272 = vst [vmem:[#allocation2 + $0xf8] sm:$0xff] %v1200
        %1273 = vst [vmem:[#allocation2 + $0x100] sm:$0xff] %v1201
        %1274 = vst [vmem:[#allocation2 + $0x108] sm:$0xff] %v1202
        %1275 = vst [vmem:[#allocation2 + $0x110] sm:$0xff] %v1203
        %1276 = vst [vmem:[#allocation2 + $0x118] sm:$0xff] %v1204
        %1277 = vst [vmem:[#allocation2 + $0x120] sm:$0xff] %v1205
        %1278 = vst [vmem:[#allocation2 + $0x128] sm:$0xff] %v1206
        %1279 = vst [vmem:[#allocation2 + $0x130] sm:$0xff] %v1207
        %1280 = vst [vmem:[#allocation2 + $0x138] sm:$0xff] %v1208
        %1281 = vst [vmem:[#allocation2 + $0x140] sm:$0xff] %v1209
        %1282 = vst [vmem:[#allocation2 + $0x148] sm:$0xff] %v1210
        %1283 = vst [vmem:[#allocation2 + $0x150] sm:$0xff] %v1211
        %1284 = vst [vmem:[#allocation2 + $0x158] sm:$0xff] %v1212
        %1285 = vst [vmem:[#allocation2 + $0x160] sm:$0xff] %v1213
        %1286 = vst [vmem:[#allocation2 + $0x168] sm:$0xff] %v1214
        %1287 = vst [vmem:[#allocation2 + $0x170] sm:$0xff] %v1215
        %1288 = vst [vmem:[#allocation2 + $0x178] sm:$0xff] %v1216
        %1289 = vst [vmem:[#allocation2 + $0x180] sm:$0xff] %v1217
        %1290 = vst [vmem:[#allocation2 + $0x188] sm:$0xff] %v1218
        %1291 = vst [vmem:[#allocation2 + $0x190] sm:$0xff] %v1219
        %1292 = vst [vmem:[#allocation2 + $0x198] sm:$0xff] %v1220
        %1293 = vst [vmem:[#allocation2 + $0x1a0] sm:$0xff] %v1221
        %1294 = vst [vmem:[#allocation2 + $0x1a8] sm:$0xff] %v1222
        %1295 = vst [vmem:[#allocation2 + $0x1b0] sm:$0xff] %v1223
        %1296 = vst [vmem:[#allocation2 + $0x1b8] sm:$0xff] %v1224
        %1297 = vst [vmem:[#allocation2 + $0x1c0] sm:$0xff] %v1225
        %1298 = vst [vmem:[#allocation2 + $0x1c8] sm:$0xff] %v1226
        %1299 = vst [vmem:[#allocation2 + $0x1d0] sm:$0xff] %v1227
        %1300 = vst [vmem:[#allocation2 + $0x1d8] sm:$0xff] %v1228
        %1301 = vst [vmem:[#allocation2 + $0x1e0] sm:$0xff] %v1229
        %1302 = vst [vmem:[#allocation2 + $0x1e8] sm:$0xff] %v1230
        %1303 = vst [vmem:[#allocation2 + $0x1f0] sm:$0xff] %v1231
        %1304 = vst [vmem:[#allocation2 + $0x1f8] sm:$0xff] %v1232
        %1305 = vst [vmem:[#allocation2 + $0x200] sm:$0xff] %v1233
        %1306 = vst [vmem:[#allocation2 + $0x208] sm:$0xff] %v1234
        %1307 = vst [vmem:[#allocation2 + $0x210] sm:$0xff] %v1235
        %1308 = vst [vmem:[#allocation2 + $0x218] sm:$0xff] %v1236
        %1309 = vst [vmem:[#allocation2 + $0x220] sm:$0xff] %v1237
        %1310 = vst [vmem:[#allocation2 + $0x228] sm:$0xff] %v1238
        %1311 = vst [vmem:[#allocation2 + $0x230] sm:$0xff] %v1239
        %1312 = vst [vmem:[#allocation2 + $0x238] sm:$0xff] %v1240
        %v1313 = vld [vmem:[#allocation2] ss:$3 sm:$0xff]
        %s1314 = scalar_lea.vmem [#allocation2], 1
        %v1315 = vld [vmem:[%s1314] ss:$3 sm:$0xff]
        %v1316 = vmax.f32 %v1313, %v1315
        %s1317 = scalar_lea.vmem [#allocation2], 2
        %v1318 = vld [vmem:[%s1317] ss:$3 sm:$0xff]
        %v1319 = vmax.f32 %v1316, %v1318
        %s1320 = scalar_lea.vmem [#allocation2], 24
        %v1321 = vld [vmem:[%s1320] ss:$3 sm:$0xff]
        %v1322 = vmax.f32 %v1319, %v1321
        %s1323 = scalar_lea.vmem [#allocation2], 25
        %v1324 = vld [vmem:[%s1323] ss:$3 sm:$0xff]
        %v1325 = vmax.f32 %v1322, %v1324
        %s1326 = scalar_lea.vmem [#allocation2], 26
        %v1327 = vld [vmem:[%s1326] ss:$3 sm:$0xff]
        %v1328 = vmax.f32 %v1325, %v1327
        %s1329 = scalar_lea.vmem [#allocation2], 48
        %v1330 = vld [vmem:[%s1329] ss:$3 sm:$0xff]
        %v1331 = vmax.f32 %v1328, %v1330
        %s1332 = scalar_lea.vmem [#allocation2], 49
        %v1333 = vld [vmem:[%s1332] ss:$3 sm:$0xff]
        %v1334 = vmax.f32 %v1331, %v1333
        %s1335 = scalar_lea.vmem [#allocation2], 50
        %v1336 = vld [vmem:[%s1335] ss:$3 sm:$0xff]
        %v1337 = vmax.f32 %v1334, %v1336
        %v1338 = vpack.c.bf16 %v1337, %v1337
        %v1340 = vunpack.c.l.b16 %v1338
        %v1341 = vpack.c.b16 %v1340, %v1340
        %v1342 = vrot.slane %v1341, 6
        %v1343 = vrot.slane %v1342, 4
        %1346 = vst [vmem:[#allocation3 + $0x18] sm:$0xc] %v1342
        %1347 = vst [vmem:[#allocation3 + $0x1c] sm:$0x3] %v1343
        %s1348 = scalar_lea.vmem [#allocation2], 72
        %v1349 = vld [vmem:[%s1348] ss:$3 sm:$0xff]
        %s1350 = scalar_lea.vmem [#allocation2], 73
        %v1351 = vld [vmem:[%s1350] ss:$3 sm:$0xff]
        %v1352 = vmax.f32 %v1349, %v1351
        %s1353 = scalar_lea.vmem [#allocation2], 74
        %v1354 = vld [vmem:[%s1353] ss:$3 sm:$0xff]
        %v1355 = vmax.f32 %v1352, %v1354
        %s1356 = scalar_lea.vmem [#allocation2], 96
        %v1357 = vld [vmem:[%s1356] ss:$3 sm:$0xff]
        %v1358 = vmax.f32 %v1355, %v1357
        %s1359 = scalar_lea.vmem [#allocation2], 97
        %v1360 = vld [vmem:[%s1359] ss:$3 sm:$0xff]
        %v1361 = vmax.f32 %v1358, %v1360
        %s1362 = scalar_lea.vmem [#allocation2], 98
        %v1363 = vld [vmem:[%s1362] ss:$3 sm:$0xff]
        %v1364 = vmax.f32 %v1361, %v1363
        %s1365 = scalar_lea.vmem [#allocation2], 120
        %v1366 = vld [vmem:[%s1365] ss:$3 sm:$0xff]
        %v1367 = vmax.f32 %v1364, %v1366
        %s1368 = scalar_lea.vmem [#allocation2], 121
        %v1369 = vld [vmem:[%s1368] ss:$3 sm:$0xff]
        %v1370 = vmax.f32 %v1367, %v1369
        %s1371 = scalar_lea.vmem [#allocation2], 122
        %v1372 = vld [vmem:[%s1371] ss:$3 sm:$0xff]
        %v1373 = vmax.f32 %v1370, %v1372
        %v1374 = vpack.c.bf16 %v1373, %v1373
        %1375 = vst [vmem:[#allocation3 + $0x20] sm:$0xf] %v1374
        %s1376 = scalar_lea.vmem [#allocation2], 144
        %v1377 = vld [vmem:[%s1376] ss:$3 sm:$0xff]
        %s1378 = scalar_lea.vmem [#allocation2], 145
        %v1379 = vld [vmem:[%s1378] ss:$3 sm:$0xff]
        %v1380 = vmax.f32 %v1377, %v1379
        %s1381 = scalar_lea.vmem [#allocation2], 146
        %v1382 = vld [vmem:[%s1381] ss:$3 sm:$0xff]
        %v1383 = vmax.f32 %v1380, %v1382
        %s1384 = scalar_lea.vmem [#allocation2], 168
        %v1385 = vld [vmem:[%s1384] ss:$3 sm:$0xff]
        %v1386 = vmax.f32 %v1383, %v1385
        %s1387 = scalar_lea.vmem [#allocation2], 169
        %v1388 = vld [vmem:[%s1387] ss:$3 sm:$0xff]
        %v1389 = vmax.f32 %v1386, %v1388
        %s1390 = scalar_lea.vmem [#allocation2], 170
        %v1391 = vld [vmem:[%s1390] ss:$3 sm:$0xff]
        %v1392 = vmax.f32 %v1389, %v1391
        %s1393 = scalar_lea.vmem [#allocation2], 192
        %v1394 = vld [vmem:[%s1393] ss:$3 sm:$0xff]
        %v1395 = vmax.f32 %v1392, %v1394
        %s1396 = scalar_lea.vmem [#allocation2], 193
        %v1397 = vld [vmem:[%s1396] ss:$3 sm:$0xff]
        %v1398 = vmax.f32 %v1395, %v1397
        %s1399 = scalar_lea.vmem [#allocation2], 194
        %v1400 = vld [vmem:[%s1399] ss:$3 sm:$0xff]
        %v1401 = vmax.f32 %v1398, %v1400
        %v1402 = vpack.c.bf16 %v1401, %v1401
        %v1404 = vunpack.c.l.b16 %v1402
        %v1405 = vpack.c.b16 %v1404, %v1404
        %v1406 = vrot.slane %v1405, 6
        %v1407 = vrot.slane %v1406, 4
        %1410 = vst [vmem:[#allocation3 + $0x24] sm:$0xc] %v1406
        %1411 = vst [vmem:[#allocation3 + $0x28] sm:$0x3] %v1407
        %s1412 = scalar_lea.vmem [#allocation2], 216
        %v1413 = vld [vmem:[%s1412] ss:$3 sm:$0xff]
        %s1414 = scalar_lea.vmem [#allocation2], 217
        %v1415 = vld [vmem:[%s1414] ss:$3 sm:$0xff]
        %v1416 = vmax.f32 %v1413, %v1415
        %s1417 = scalar_lea.vmem [#allocation2], 218
        %v1418 = vld [vmem:[%s1417] ss:$3 sm:$0xff]
        %v1419 = vmax.f32 %v1416, %v1418
        %s1420 = scalar_lea.vmem [#allocation2], 240
        %v1421 = vld [vmem:[%s1420] ss:$3 sm:$0xff]
        %v1422 = vmax.f32 %v1419, %v1421
        %s1423 = scalar_lea.vmem [#allocation2], 241
        %v1424 = vld [vmem:[%s1423] ss:$3 sm:$0xff]
        %v1425 = vmax.f32 %v1422, %v1424
        %s1426 = scalar_lea.vmem [#allocation2], 242
        %v1427 = vld [vmem:[%s1426] ss:$3 sm:$0xff]
        %v1428 = vmax.f32 %v1425, %v1427
        %s1429 = scalar_lea.vmem [#allocation2], 264
        %v1430 = vld [vmem:[%s1429] ss:$3 sm:$0xff]
        %v1431 = vmax.f32 %v1428, %v1430
        %s1432 = scalar_lea.vmem [#allocation2], 265
        %v1433 = vld [vmem:[%s1432] ss:$3 sm:$0xff]
        %v1434 = vmax.f32 %v1431, %v1433
        %s1435 = scalar_lea.vmem [#allocation2], 266
        %v1436 = vld [vmem:[%s1435] ss:$3 sm:$0xff]
        %v1437 = vmax.f32 %v1434, %v1436
        %v1438 = vpack.c.bf16 %v1437, %v1437
        %1439 = vst [vmem:[#allocation3 + $0x2c] sm:$0xf] %v1438
        %s1440 = scalar_lea.vmem [#allocation2], 288
        %v1441 = vld [vmem:[%s1440] ss:$3 sm:$0xff]
        %s1442 = scalar_lea.vmem [#allocation2], 289
        %v1443 = vld [vmem:[%s1442] ss:$3 sm:$0xff]
        %v1444 = vmax.f32 %v1441, %v1443
        %s1445 = scalar_lea.vmem [#allocation2], 290
        %v1446 = vld [vmem:[%s1445] ss:$3 sm:$0xff]
        %v1447 = vmax.f32 %v1444, %v1446
        %s1448 = scalar_lea.vmem [#allocation2], 312
        %v1449 = vld [vmem:[%s1448] ss:$3 sm:$0xff]
        %v1450 = vmax.f32 %v1447, %v1449
        %s1451 = scalar_lea.vmem [#allocation2], 313
        %v1452 = vld [vmem:[%s1451] ss:$3 sm:$0xff]
        %v1453 = vmax.f32 %v1450, %v1452
        %s1454 = scalar_lea.vmem [#allocation2], 314
        %v1455 = vld [vmem:[%s1454] ss:$3 sm:$0xff]
        %v1456 = vmax.f32 %v1453, %v1455
        %s1457 = scalar_lea.vmem [#allocation2], 336
        %v1458 = vld [vmem:[%s1457] ss:$3 sm:$0xff]
        %v1459 = vmax.f32 %v1456, %v1458
        %s1460 = scalar_lea.vmem [#allocation2], 337
        %v1461 = vld [vmem:[%s1460] ss:$3 sm:$0xff]
        %v1462 = vmax.f32 %v1459, %v1461
        %s1463 = scalar_lea.vmem [#allocation2], 338
        %v1464 = vld [vmem:[%s1463] ss:$3 sm:$0xff]
        %v1465 = vmax.f32 %v1462, %v1464
        %v1466 = vpack.c.bf16 %v1465, %v1465
        %v1468 = vunpack.c.l.b16 %v1466
        %v1469 = vpack.c.b16 %v1468, %v1468
        %v1470 = vrot.slane %v1469, 6
        %v1471 = vrot.slane %v1470, 4
        %1474 = vst [vmem:[#allocation3 + $0x30] sm:$0xc] %v1470
        %1475 = vst [vmem:[#allocation3 + $0x34] sm:$0x3] %v1471
        %s1476 = scalar_lea.vmem [#allocation2], 360
        %v1477 = vld [vmem:[%s1476] ss:$3 sm:$0xff]
        %s1478 = scalar_lea.vmem [#allocation2], 361
        %v1479 = vld [vmem:[%s1478] ss:$3 sm:$0xff]
        %v1480 = vmax.f32 %v1477, %v1479
        %s1481 = scalar_lea.vmem [#allocation2], 362
        %v1482 = vld [vmem:[%s1481] ss:$3 sm:$0xff]
        %v1483 = vmax.f32 %v1480, %v1482
        %s1484 = scalar_lea.vmem [#allocation2], 384
        %v1485 = vld [vmem:[%s1484] ss:$3 sm:$0xff]
        %v1486 = vmax.f32 %v1483, %v1485
        %s1487 = scalar_lea.vmem [#allocation2], 385
        %v1488 = vld [vmem:[%s1487] ss:$3 sm:$0xff]
        %v1489 = vmax.f32 %v1486, %v1488
        %s1490 = scalar_lea.vmem [#allocation2], 386
        %v1491 = vld [vmem:[%s1490] ss:$3 sm:$0xff]
        %v1492 = vmax.f32 %v1489, %v1491
        %s1493 = scalar_lea.vmem [#allocation2], 408
        %v1494 = vld [vmem:[%s1493] ss:$3 sm:$0xff]
        %v1495 = vmax.f32 %v1492, %v1494
        %s1496 = scalar_lea.vmem [#allocation2], 409
        %v1497 = vld [vmem:[%s1496] ss:$3 sm:$0xff]
        %v1498 = vmax.f32 %v1495, %v1497
        %s1499 = scalar_lea.vmem [#allocation2], 410
        %v1500 = vld [vmem:[%s1499] ss:$3 sm:$0xff]
        %v1501 = vmax.f32 %v1498, %v1500
        %v1502 = vpack.c.bf16 %v1501, %v1501
        %1503 = vst [vmem:[#allocation3 + $0x38] sm:$0xf] %v1502
        %s1504 = scalar_lea.vmem [#allocation2], 432
        %v1505 = vld [vmem:[%s1504] ss:$3 sm:$0xff]
        %s1506 = scalar_lea.vmem [#allocation2], 433
        %v1507 = vld [vmem:[%s1506] ss:$3 sm:$0xff]
        %v1508 = vmax.f32 %v1505, %v1507
        %s1509 = scalar_lea.vmem [#allocation2], 434
        %v1510 = vld [vmem:[%s1509] ss:$3 sm:$0xff]
        %v1511 = vmax.f32 %v1508, %v1510
        %s1512 = scalar_lea.vmem [#allocation2], 456
        %v1513 = vld [vmem:[%s1512] ss:$3 sm:$0xff]
        %v1514 = vmax.f32 %v1511, %v1513
        %s1515 = scalar_lea.vmem [#allocation2], 457
        %v1516 = vld [vmem:[%s1515] ss:$3 sm:$0xff]
        %v1517 = vmax.f32 %v1514, %v1516
        %s1518 = scalar_lea.vmem [#allocation2], 458
        %v1519 = vld [vmem:[%s1518] ss:$3 sm:$0xff]
        %v1520 = vmax.f32 %v1517, %v1519
        %s1521 = scalar_lea.vmem [#allocation2], 480
        %v1522 = vld [vmem:[%s1521] ss:$3 sm:$0xff]
        %v1523 = vmax.f32 %v1520, %v1522
        %s1524 = scalar_lea.vmem [#allocation2], 481
        %v1525 = vld [vmem:[%s1524] ss:$3 sm:$0xff]
        %v1526 = vmax.f32 %v1523, %v1525
        %s1527 = scalar_lea.vmem [#allocation2], 482
        %v1528 = vld [vmem:[%s1527] ss:$3 sm:$0xff]
        %v1529 = vmax.f32 %v1526, %v1528
        %v1530 = vpack.c.bf16 %v1529, %v1529
        %v1532 = vunpack.c.l.b16 %v1530
        %v1533 = vpack.c.b16 %v1532, %v1532
        %v1534 = vrot.slane %v1533, 6
        %v1535 = vrot.slane %v1534, 4
        %1538 = vst [vmem:[#allocation3 + $0x3c] sm:$0xc] %v1534
        %1539 = vst [vmem:[#allocation3 + $0x40] sm:$0x3] %v1535
        %s1540 = scalar_lea.vmem [#allocation2], 504
        %v1541 = vld [vmem:[%s1540] ss:$3 sm:$0xff]
        %s1542 = scalar_lea.vmem [#allocation2], 505
        %v1543 = vld [vmem:[%s1542] ss:$3 sm:$0xff]
        %v1544 = vmax.f32 %v1541, %v1543
        %s1545 = scalar_lea.vmem [#allocation2], 506
        %v1546 = vld [vmem:[%s1545] ss:$3 sm:$0xff]
        %v1547 = vmax.f32 %v1544, %v1546
        %s1548 = scalar_lea.vmem [#allocation2], 528
        %v1549 = vld [vmem:[%s1548] ss:$3 sm:$0xff]
        %v1550 = vmax.f32 %v1547, %v1549
        %s1551 = scalar_lea.vmem [#allocation2], 529
        %v1552 = vld [vmem:[%s1551] ss:$3 sm:$0xff]
        %v1553 = vmax.f32 %v1550, %v1552
        %s1554 = scalar_lea.vmem [#allocation2], 530
        %v1555 = vld [vmem:[%s1554] ss:$3 sm:$0xff]
        %v1556 = vmax.f32 %v1553, %v1555
        %s1557 = scalar_lea.vmem [#allocation2], 552
        %v1558 = vld [vmem:[%s1557] ss:$3 sm:$0xff]
        %v1559 = vmax.f32 %v1556, %v1558
        %s1560 = scalar_lea.vmem [#allocation2], 553
        %v1561 = vld [vmem:[%s1560] ss:$3 sm:$0xff]
        %v1562 = vmax.f32 %v1559, %v1561
        %s1563 = scalar_lea.vmem [#allocation2], 554
        %v1564 = vld [vmem:[%s1563] ss:$3 sm:$0xff]
        %v1565 = vmax.f32 %v1562, %v1564
        %v1566 = vpack.c.bf16 %v1565, %v1565
        %1567 = vst [vmem:[#allocation3 + $0x44] sm:$0xf] %v1566
        %v1568 = vld [vmem:[#allocation3] sm:$0xf]
        %v1569 = vld [vmem:[#allocation3 + $0x4] sm:$0xf]
        %v1570 = vld [vmem:[#allocation3 + $0x8] sm:$0xf]
        %v1571 = vld [vmem:[#allocation3 + $0xc] sm:$0xf]
        %v1572 = vld [vmem:[#allocation3 + $0x10] sm:$0xf]
        %v1573 = vld [vmem:[#allocation3 + $0x14] sm:$0xf]
        %v1574 = vld [vmem:[#allocation3 + $0x18] sm:$0xf]
        %v1575 = vld [vmem:[#allocation3 + $0x1c] sm:$0xf]
        %v1576 = vld [vmem:[#allocation3 + $0x20] sm:$0xf]
        %v1577 = vld [vmem:[#allocation3 + $0x24] sm:$0xf]
        %v1578 = vld [vmem:[#allocation3 + $0x28] sm:$0xf]
        %v1579 = vld [vmem:[#allocation3 + $0x2c] sm:$0xf]
        %v1580 = vld [vmem:[#allocation3 + $0x30] sm:$0xf]
        %v1581 = vld [vmem:[#allocation3 + $0x34] sm:$0xf]
        %v1582 = vld [vmem:[#allocation3 + $0x38] sm:$0xf]
        %v1583 = vld [vmem:[#allocation3 + $0x3c] sm:$0xf]
        %v1584 = vld [vmem:[#allocation3 + $0x40] sm:$0xf]
        %v1585 = vld [vmem:[#allocation3 + $0x44] sm:$0xf]
        %v1586 = vld [vmem:[#allocation3 + $0x48] sm:$0x1]
        %v1587 = vld [vmem:[#allocation3] sm:$0xe]
        %v1588 = vld [vmem:[#allocation3 + $0x48] sm:$0x3]
        %v1589 = vld [vmem:[#allocation3] sm:$0xc]
        %v1590 = vld [vmem:[#allocation3 + $0x4] sm:$0xc]
        %v1591 = vld [vmem:[#allocation3 + $0x48] sm:$0xf]
        %v1592 = vld [vmem:[#allocation3 + $0x4c] sm:$0x3]
        %v1593 = vld [vmem:[#allocation3 + $0x4c] sm:$0x7]
        %v1594 = vld [vmem:[#allocation3 + $0x4] sm:$0x8]
        %v1595 = vld [vmem:[#allocation3 + $0x4c] sm:$0xf]
        %v1596 = vld [vmem:[#allocation3 + $0x50] sm:$0xf]
        %v1597 = vld [vmem:[#allocation3 + $0x54] sm:$0x1]
        %v1598 = vld [vmem:[#allocation3 + $0xc] sm:$0xe]
        %v1599 = vld [vmem:[#allocation3 + $0x54] sm:$0x3]
        %v1600 = vld [vmem:[#allocation3 + $0xc] sm:$0xc]
        %v1601 = vld [vmem:[#allocation3 + $0x10] sm:$0xc]
        %v1602 = vld [vmem:[#allocation3 + $0x54] sm:$0xf]
        %v1603 = vld [vmem:[#allocation3 + $0x58] sm:$0x3]
        %v1604 = vld [vmem:[#allocation3 + $0x58] sm:$0x7]
        %v1605 = vld [vmem:[#allocation3 + $0x10] sm:$0x8]
        %v1606 = vld [vmem:[#allocation3 + $0x58] sm:$0xf]
        %v1607 = vld [vmem:[#allocation3 + $0x5c] sm:$0xf]
        %v1608 = vld [vmem:[#allocation3 + $0x60] sm:$0x1]
        %v1609 = vld [vmem:[#allocation3 + $0x18] sm:$0xe]
        %v1610 = vld [vmem:[#allocation3 + $0x60] sm:$0x3]
        %v1611 = vld [vmem:[#allocation3 + $0x18] sm:$0xc]
        %v1630 = vunpack.c.l.b16 %v1568
        %v1631 = vunpack.c.l.b16 %v1569
        %v1632 = vunpack.c.l.b16 %v1570
        %v1633 = vunpack.c.l.b16 %v1571
        %v1634 = vunpack.c.l.b16 %v1572
        %v1635 = vunpack.c.l.b16 %v1573
        %v1636 = vunpack.c.l.b16 %v1574
        %v1637 = vunpack.c.l.b16 %v1575
        %v1638 = vunpack.c.l.b16 %v1576
        %v1639 = vunpack.c.l.b16 %v1577
        %v1640 = vunpack.c.l.b16 %v1578
        %v1641 = vunpack.c.l.b16 %v1579
        %v1642 = vunpack.c.l.b16 %v1580
        %v1643 = vunpack.c.l.b16 %v1581
        %v1644 = vunpack.c.l.b16 %v1582
        %v1645 = vunpack.c.l.b16 %v1583
        %v1646 = vunpack.c.l.b16 %v1584
        %v1647 = vunpack.c.l.b16 %v1585
        %v1648 = vpack.c.b16 %v1631, %v1630
        %v1649 = vpack.c.b16 %v1633, %v1632
        %v1650 = vpack.c.b16 %v1635, %v1634
        %v1651 = vpack.c.b16 %v1637, %v1636
        %v1652 = vpack.c.b16 %v1639, %v1638
        %v1653 = vpack.c.b16 %v1641, %v1640
        %v1654 = vpack.c.b16 %v1643, %v1642
        %v1655 = vpack.c.b16 %v1645, %v1644
        %v1656 = vpack.c.b16 %v1647, %v1646
        %v1667 = vunpack.c.l.b16 %v1586
        %v1668 = vpack.c.b16 %v1667, %v1667
        %vm1669 = vsmask.f32 7424
        %v1671 = vshrl.u32 %v1648, 16
        %v1673 = vshll.u32 %v1648, 16
        %v1675 = vrot.slane %v1673, 1
        %v1676 = vor.u32 %v1671, %v1675
        %v1678 = vshll.u32 %v1649, 16
        %v1680 = vrot.slane %v1678, 1
        %v1681 = vsel %vm1669, %v1676, %v1680
        %v1682 = vshrl.u32 %v1649, 16
        %v1684 = vor.u32 %v1682, %v1680
        %v1686 = vshll.u32 %v1650, 16
        %v1688 = vrot.slane %v1686, 1
        %v1689 = vsel %vm1669, %v1684, %v1688
        %v1690 = vshrl.u32 %v1650, 16
        %v1692 = vor.u32 %v1690, %v1688
        %v1694 = vshll.u32 %v1651, 16
        %v1696 = vrot.slane %v1694, 1
        %v1697 = vsel %vm1669, %v1692, %v1696
        %v1698 = vshrl.u32 %v1651, 16
        %v1700 = vor.u32 %v1698, %v1696
        %v1702 = vshll.u32 %v1652, 16
        %v1704 = vrot.slane %v1702, 1
        %v1705 = vsel %vm1669, %v1700, %v1704
        %v1706 = vshrl.u32 %v1652, 16
        %v1708 = vor.u32 %v1706, %v1704
        %v1710 = vshll.u32 %v1653, 16
        %v1712 = vrot.slane %v1710, 1
        %v1713 = vsel %vm1669, %v1708, %v1712
        %v1714 = vshrl.u32 %v1653, 16
        %v1716 = vor.u32 %v1714, %v1712
        %v1718 = vshll.u32 %v1654, 16
        %v1720 = vrot.slane %v1718, 1
        %v1721 = vsel %vm1669, %v1716, %v1720
        %v1722 = vshrl.u32 %v1654, 16
        %v1724 = vor.u32 %v1722, %v1720
        %v1726 = vshll.u32 %v1655, 16
        %v1728 = vrot.slane %v1726, 1
        %v1729 = vsel %vm1669, %v1724, %v1728
        %v1730 = vshrl.u32 %v1655, 16
        %v1732 = vor.u32 %v1730, %v1728
        %v1734 = vshll.u32 %v1656, 16
        %v1736 = vrot.slane %v1734, 1
        %v1737 = vsel %vm1669, %v1732, %v1736
        %v1738 = vshrl.u32 %v1656, 16
        %v1740 = vor.u32 %v1738, %v1736
        %v1742 = vshll.u32 %v1668, 16
        %v1744 = vrot.slane %v1742, 1
        %v1745 = vsel %vm1669, %v1740, %v1744
        %v1756 = vunpack.c.l.b16 %v1587
        %v1757 = vpack.c.b16 %v1631, %v1756
        %vm1758 = vcmask 1046528
        %v1759 = vrot.slane %v1757, 1
        %v1760 = vrot.slane %v1649, 1
        %v1761 = vsel %vm1758, %v1759, %v1760
        %v1762 = vrot.slane %v1650, 1
        %v1763 = vsel %vm1758, %v1760, %v1762
        %v1764 = vrot.slane %v1651, 1
        %v1765 = vsel %vm1758, %v1762, %v1764
        %v1766 = vrot.slane %v1652, 1
        %v1767 = vsel %vm1758, %v1764, %v1766
        %v1768 = vrot.slane %v1653, 1
        %v1769 = vsel %vm1758, %v1766, %v1768
        %v1770 = vrot.slane %v1654, 1
        %v1771 = vsel %vm1758, %v1768, %v1770
        %v1772 = vrot.slane %v1655, 1
        %v1773 = vsel %vm1758, %v1770, %v1772
        %v1774 = vrot.slane %v1656, 1
        %v1775 = vsel %vm1758, %v1772, %v1774
        %v1776 = vrot.slane %v1668, 1
        %v1777 = vsel %vm1758, %v1774, %v1776
        %v1788 = vunpack.c.l.b16 %v1588
        %v1789 = vpack.c.b16 %v1788, %v1788
        %vm1790 = vsmask.f32 6400
        %v1792 = vshrl.u32 %v1757, 16
        %v1794 = vrot.slane %v1792, 1
        %v1795 = vshll.u32 %v1757, 16
        %v1797 = vrot.slane %v1795, 2
        %v1798 = vor.u32 %v1794, %v1797
        %v1799 = vrot.slane %v1682, 1
        %v1800 = vrot.slane %v1678, 2
        %v1801 = vor.u32 %v1799, %v1800
        %v1802 = vsel %vm1790, %v1798, %v1801
        %v1803 = vrot.slane %v1690, 1
        %v1804 = vrot.slane %v1686, 2
        %v1805 = vor.u32 %v1803, %v1804
        %v1806 = vsel %vm1790, %v1801, %v1805
        %v1807 = vrot.slane %v1698, 1
        %v1808 = vrot.slane %v1694, 2
        %v1809 = vor.u32 %v1807, %v1808
        %v1810 = vsel %vm1790, %v1805, %v1809
        %v1811 = vrot.slane %v1706, 1
        %v1812 = vrot.slane %v1702, 2
        %v1813 = vor.u32 %v1811, %v1812
        %v1814 = vsel %vm1790, %v1809, %v1813
        %v1815 = vrot.slane %v1714, 1
        %v1816 = vrot.slane %v1710, 2
        %v1817 = vor.u32 %v1815, %v1816
        %v1818 = vsel %vm1790, %v1813, %v1817
        %v1819 = vrot.slane %v1722, 1
        %v1820 = vrot.slane %v1718, 2
        %v1821 = vor.u32 %v1819, %v1820
        %v1822 = vsel %vm1790, %v1817, %v1821
        %v1823 = vrot.slane %v1730, 1
        %v1824 = vrot.slane %v1726, 2
        %v1825 = vor.u32 %v1823, %v1824
        %v1826 = vsel %vm1790, %v1821, %v1825
        %v1827 = vrot.slane %v1738, 1
        %v1828 = vrot.slane %v1734, 2
        %v1829 = vor.u32 %v1827, %v1828
        %v1830 = vsel %vm1790, %v1825, %v1829
        %v1832 = vshrl.u32 %v1789, 16
        %v1834 = vrot.slane %v1832, 1
        %v1835 = vshll.u32 %v1789, 16
        %v1837 = vrot.slane %v1835, 2
        %v1838 = vor.u32 %v1834, %v1837
        %v1839 = vsel %vm1790, %v1829, %v1838
        %v1850 = vunpack.c.l.b16 %v1589
        %v1851 = vpack.c.b16 %v1631, %v1850
        %vm1852 = vcmask 1045504
        %v1853 = vrot.slane %v1851, 2
        %v1854 = vrot.slane %v1649, 2
        %v1855 = vsel %vm1852, %v1853, %v1854
        %v1856 = vrot.slane %v1650, 2
        %v1857 = vsel %vm1852, %v1854, %v1856
        %v1858 = vrot.slane %v1651, 2
        %v1859 = vsel %vm1852, %v1856, %v1858
        %v1860 = vrot.slane %v1652, 2
        %v1861 = vsel %vm1852, %v1858, %v1860
        %v1862 = vrot.slane %v1653, 2
        %v1863 = vsel %vm1852, %v1860, %v1862
        %v1864 = vrot.slane %v1654, 2
        %v1865 = vsel %vm1852, %v1862, %v1864
        %v1866 = vrot.slane %v1655, 2
        %v1867 = vsel %vm1852, %v1864, %v1866
        %v1868 = vrot.slane %v1656, 2
        %v1869 = vsel %vm1852, %v1866, %v1868
        %v1870 = vrot.slane %v1789, 2
        %v1871 = vsel %vm1852, %v1868, %v1870
        %v1884 = vunpack.c.l.b16 %v1590
        %v1885 = vunpack.c.l.b16 %v1591
        %v1886 = vunpack.c.l.b16 %v1592
        %v1887 = vpack.c.b16 %v1632, %v1884
        %v1888 = vpack.c.b16 %v1634, %v1633
        %v1889 = vpack.c.b16 %v1636, %v1635
        %v1890 = vpack.c.b16 %v1638, %v1637
        %v1891 = vpack.c.b16 %v1640, %v1639
        %v1892 = vpack.c.b16 %v1642, %v1641
        %v1893 = vpack.c.b16 %v1644, %v1643
        %v1894 = vpack.c.b16 %v1646, %v1645
        %v1895 = vpack.c.b16 %v1885, %v1647
        %v1896 = vpack.c.b16 %v1886, %v1886
        %v1897 = vrot.slane %v1887, 2
        %v1898 = vrot.slane %v1888, 2
        %v1899 = vsel %vm1852, %v1897, %v1898
        %v1900 = vrot.slane %v1889, 2
        %v1901 = vsel %vm1852, %v1898, %v1900
        %v1902 = vrot.slane %v1890, 2
        %v1903 = vsel %vm1852, %v1900, %v1902
        %v1904 = vrot.slane %v1891, 2
        %v1905 = vsel %vm1852, %v1902, %v1904
        %v1906 = vrot.slane %v1892, 2
        %v1907 = vsel %vm1852, %v1904, %v1906
        %v1908 = vrot.slane %v1893, 2
        %v1909 = vsel %vm1852, %v1906, %v1908
        %v1910 = vrot.slane %v1894, 2
        %v1911 = vsel %vm1852, %v1908, %v1910
        %v1912 = vrot.slane %v1895, 2
        %v1913 = vsel %vm1852, %v1910, %v1912
        %v1914 = vrot.slane %v1896, 2
        %v1915 = vsel %vm1852, %v1912, %v1914
        %v1926 = vunpack.c.l.b16 %v1593
        %v1927 = vpack.c.b16 %v1926, %v1926
        %vm1928 = vsmask.f32 5376
        %v1930 = vshrl.u32 %v1887, 16
        %v1932 = vrot.slane %v1930, 2
        %v1933 = vshll.u32 %v1887, 16
        %v1935 = vrot.slane %v1933, 3
        %v1936 = vor.u32 %v1932, %v1935
        %v1938 = vshrl.u32 %v1888, 16
        %v1940 = vrot.slane %v1938, 2
        %v1941 = vshll.u32 %v1888, 16
        %v1943 = vrot.slane %v1941, 3
        %v1944 = vor.u32 %v1940, %v1943
        %v1945 = vsel %vm1928, %v1936, %v1944
        %v1947 = vshrl.u32 %v1889, 16
        %v1949 = vrot.slane %v1947, 2
        %v1950 = vshll.u32 %v1889, 16
        %v1952 = vrot.slane %v1950, 3
        %v1953 = vor.u32 %v1949, %v1952
        %v1954 = vsel %vm1928, %v1944, %v1953
        %v1956 = vshrl.u32 %v1890, 16
        %v1958 = vrot.slane %v1956, 2
        %v1959 = vshll.u32 %v1890, 16
        %v1961 = vrot.slane %v1959, 3
        %v1962 = vor.u32 %v1958, %v1961
        %v1963 = vsel %vm1928, %v1953, %v1962
        %v1965 = vshrl.u32 %v1891, 16
        %v1967 = vrot.slane %v1965, 2
        %v1968 = vshll.u32 %v1891, 16
        %v1970 = vrot.slane %v1968, 3
        %v1971 = vor.u32 %v1967, %v1970
        %v1972 = vsel %vm1928, %v1962, %v1971
        %v1974 = vshrl.u32 %v1892, 16
        %v1976 = vrot.slane %v1974, 2
        %v1977 = vshll.u32 %v1892, 16
        %v1979 = vrot.slane %v1977, 3
        %v1980 = vor.u32 %v1976, %v1979
        %v1981 = vsel %vm1928, %v1971, %v1980
        %v1983 = vshrl.u32 %v1893, 16
        %v1985 = vrot.slane %v1983, 2
        %v1986 = vshll.u32 %v1893, 16
        %v1988 = vrot.slane %v1986, 3
        %v1989 = vor.u32 %v1985, %v1988
        %v1990 = vsel %vm1928, %v1980, %v1989
        %v1992 = vshrl.u32 %v1894, 16
        %v1994 = vrot.slane %v1992, 2
        %v1995 = vshll.u32 %v1894, 16
        %v1997 = vrot.slane %v1995, 3
        %v1998 = vor.u32 %v1994, %v1997
        %v1999 = vsel %vm1928, %v1989, %v1998
        %v2001 = vshrl.u32 %v1895, 16
        %v2003 = vrot.slane %v2001, 2
        %v2004 = vshll.u32 %v1895, 16
        %v2006 = vrot.slane %v2004, 3
        %v2007 = vor.u32 %v2003, %v2006
        %v2008 = vsel %vm1928, %v1998, %v2007
        %v2010 = vshrl.u32 %v1927, 16
        %v2012 = vrot.slane %v2010, 2
        %v2013 = vshll.u32 %v1927, 16
        %v2015 = vrot.slane %v2013, 3
        %v2016 = vor.u32 %v2012, %v2015
        %v2017 = vsel %vm1928, %v2007, %v2016
        %v2028 = vunpack.c.l.b16 %v1594
        %v2029 = vpack.c.b16 %v1632, %v2028
        %vm2030 = vcmask 1044480
        %v2031 = vrot.slane %v2029, 3
        %v2032 = vrot.slane %v1888, 3
        %v2033 = vsel %vm2030, %v2031, %v2032
        %v2034 = vrot.slane %v1889, 3
        %v2035 = vsel %vm2030, %v2032, %v2034
        %v2036 = vrot.slane %v1890, 3
        %v2037 = vsel %vm2030, %v2034, %v2036
        %v2038 = vrot.slane %v1891, 3
        %v2039 = vsel %vm2030, %v2036, %v2038
        %v2040 = vrot.slane %v1892, 3
        %v2041 = vsel %vm2030, %v2038, %v2040
        %v2042 = vrot.slane %v1893, 3
        %v2043 = vsel %vm2030, %v2040, %v2042
        %v2044 = vrot.slane %v1894, 3
        %v2045 = vsel %vm2030, %v2042, %v2044
        %v2046 = vrot.slane %v1895, 3
        %v2047 = vsel %vm2030, %v2044, %v2046
        %v2048 = vrot.slane %v1927, 3
        %v2049 = vsel %vm2030, %v2046, %v2048
        %v2060 = vunpack.c.l.b16 %v1595
        %v2061 = vpack.c.b16 %v2060, %v2060
        %vm2062 = vsmask.f32 4352
        %v2064 = vshrl.u32 %v2029, 16
        %v2066 = vrot.slane %v2064, 3
        %v2067 = vshll.u32 %v2029, 16
        %v2069 = vrot.slane %v2067, 4
        %v2070 = vor.u32 %v2066, %v2069
        %v2071 = vrot.slane %v1938, 3
        %v2072 = vrot.slane %v1941, 4
        %v2073 = vor.u32 %v2071, %v2072
        %v2074 = vsel %vm2062, %v2070, %v2073
        %v2075 = vrot.slane %v1947, 3
        %v2076 = vrot.slane %v1950, 4
        %v2077 = vor.u32 %v2075, %v2076
        %v2078 = vsel %vm2062, %v2073, %v2077
        %v2079 = vrot.slane %v1956, 3
        %v2080 = vrot.slane %v1959, 4
        %v2081 = vor.u32 %v2079, %v2080
        %v2082 = vsel %vm2062, %v2077, %v2081
        %v2083 = vrot.slane %v1965, 3
        %v2084 = vrot.slane %v1968, 4
        %v2085 = vor.u32 %v2083, %v2084
        %v2086 = vsel %vm2062, %v2081, %v2085
        %v2087 = vrot.slane %v1974, 3
        %v2088 = vrot.slane %v1977, 4
        %v2089 = vor.u32 %v2087, %v2088
        %v2090 = vsel %vm2062, %v2085, %v2089
        %v2091 = vrot.slane %v1983, 3
        %v2092 = vrot.slane %v1986, 4
        %v2093 = vor.u32 %v2091, %v2092
        %v2094 = vsel %vm2062, %v2089, %v2093
        %v2095 = vrot.slane %v1992, 3
        %v2096 = vrot.slane %v1995, 4
        %v2097 = vor.u32 %v2095, %v2096
        %v2098 = vsel %vm2062, %v2093, %v2097
        %v2099 = vrot.slane %v2001, 3
        %v2100 = vrot.slane %v2004, 4
        %v2101 = vor.u32 %v2099, %v2100
        %v2102 = vsel %vm2062, %v2097, %v2101
        %v2104 = vshrl.u32 %v2061, 16
        %v2106 = vrot.slane %v2104, 3
        %v2107 = vshll.u32 %v2061, 16
        %v2109 = vrot.slane %v2107, 4
        %v2110 = vor.u32 %v2106, %v2109
        %v2111 = vsel %vm2062, %v2101, %v2110
        %v2121 = vpack.c.b16 %v2060, %v1885
        %v2124 = vunpack.c.l.b16 %v1596
        %v2125 = vpack.c.b16 %v2124, %v2060
        %v2136 = vunpack.c.l.b16 %v1597
        %v2137 = vpack.c.b16 %v2136, %v2136
        %v2138 = vrot.slane %v1941, 1
        %v2139 = vor.u32 %v1938, %v2138
        %v2140 = vrot.slane %v1950, 1
        %v2141 = vsel %vm1669, %v2139, %v2140
        %v2142 = vor.u32 %v1947, %v2140
        %v2143 = vrot.slane %v1959, 1
        %v2144 = vsel %vm1669, %v2142, %v2143
        %v2145 = vor.u32 %v1956, %v2143
        %v2146 = vrot.slane %v1968, 1
        %v2147 = vsel %vm1669, %v2145, %v2146
        %v2148 = vor.u32 %v1965, %v2146
        %v2149 = vrot.slane %v1977, 1
        %v2150 = vsel %vm1669, %v2148, %v2149
        %v2151 = vor.u32 %v1974, %v2149
        %v2152 = vrot.slane %v1986, 1
        %v2153 = vsel %vm1669, %v2151, %v2152
        %v2154 = vor.u32 %v1983, %v2152
        %v2155 = vrot.slane %v1995, 1
        %v2156 = vsel %vm1669, %v2154, %v2155
        %v2157 = vor.u32 %v1992, %v2155
        %v2158 = vrot.slane %v2004, 1
        %v2159 = vsel %vm1669, %v2157, %v2158
        %v2160 = vor.u32 %v2001, %v2158
        %v2162 = vshll.u32 %v2125, 16
        %v2164 = vrot.slane %v2162, 1
        %v2165 = vsel %vm1669, %v2160, %v2164
        %v2166 = vshrl.u32 %v2125, 16
        %v2168 = vor.u32 %v2166, %v2164
        %v2170 = vshll.u32 %v2137, 16
        %v2172 = vrot.slane %v2170, 1
        %v2173 = vsel %vm1669, %v2168, %v2172
        %v2184 = vunpack.c.l.b16 %v1598
        %v2185 = vpack.c.b16 %v1634, %v2184
        %v2186 = vrot.slane %v2185, 1
        %v2187 = vrot.slane %v1889, 1
        %v2188 = vsel %vm1758, %v2186, %v2187
        %v2189 = vrot.slane %v1890, 1
        %v2190 = vsel %vm1758, %v2187, %v2189
        %v2191 = vrot.slane %v1891, 1
        %v2192 = vsel %vm1758, %v2189, %v2191
        %v2193 = vrot.slane %v1892, 1
        %v2194 = vsel %vm1758, %v2191, %v2193
        %v2195 = vrot.slane %v1893, 1
        %v2196 = vsel %vm1758, %v2193, %v2195
        %v2197 = vrot.slane %v1894, 1
        %v2198 = vsel %vm1758, %v2195, %v2197
        %v2199 = vrot.slane %v1895, 1
        %v2200 = vsel %vm1758, %v2197, %v2199
        %v2201 = vrot.slane %v2125, 1
        %v2202 = vsel %vm1758, %v2199, %v2201
        %v2203 = vrot.slane %v2137, 1
        %v2204 = vsel %vm1758, %v2201, %v2203
        %v2215 = vunpack.c.l.b16 %v1599
        %v2216 = vpack.c.b16 %v2215, %v2215
        %v2218 = vshrl.u32 %v2185, 16
        %v2220 = vrot.slane %v2218, 1
        %v2221 = vshll.u32 %v2185, 16
        %v2223 = vrot.slane %v2221, 2
        %v2224 = vor.u32 %v2220, %v2223
        %v2225 = vrot.slane %v1947, 1
        %v2226 = vrot.slane %v1950, 2
        %v2227 = vor.u32 %v2225, %v2226
        %v2228 = vsel %vm1790, %v2224, %v2227
        %v2229 = vrot.slane %v1956, 1
        %v2230 = vrot.slane %v1959, 2
        %v2231 = vor.u32 %v2229, %v2230
        %v2232 = vsel %vm1790, %v2227, %v2231
        %v2233 = vrot.slane %v1965, 1
        %v2234 = vrot.slane %v1968, 2
        %v2235 = vor.u32 %v2233, %v2234
        %v2236 = vsel %vm1790, %v2231, %v2235
        %v2237 = vrot.slane %v1974, 1
        %v2238 = vrot.slane %v1977, 2
        %v2239 = vor.u32 %v2237, %v2238
        %v2240 = vsel %vm1790, %v2235, %v2239
        %v2241 = vrot.slane %v1983, 1
        %v2242 = vrot.slane %v1986, 2
        %v2243 = vor.u32 %v2241, %v2242
        %v2244 = vsel %vm1790, %v2239, %v2243
        %v2245 = vrot.slane %v1992, 1
        %v2246 = vrot.slane %v1995, 2
        %v2247 = vor.u32 %v2245, %v2246
        %v2248 = vsel %vm1790, %v2243, %v2247
        %v2249 = vrot.slane %v2001, 1
        %v2250 = vrot.slane %v2004, 2
        %v2251 = vor.u32 %v2249, %v2250
        %v2252 = vsel %vm1790, %v2247, %v2251
        %v2253 = vrot.slane %v2166, 1
        %v2254 = vrot.slane %v2162, 2
        %v2255 = vor.u32 %v2253, %v2254
        %v2256 = vsel %vm1790, %v2251, %v2255
        %v2258 = vshrl.u32 %v2216, 16
        %v2260 = vrot.slane %v2258, 1
        %v2261 = vshll.u32 %v2216, 16
        %v2263 = vrot.slane %v2261, 2
        %v2264 = vor.u32 %v2260, %v2263
        %v2265 = vsel %vm1790, %v2255, %v2264
        %v2276 = vunpack.c.l.b16 %v1600
        %v2277 = vpack.c.b16 %v1634, %v2276
        %v2278 = vrot.slane %v2277, 2
        %v2279 = vsel %vm1852, %v2278, %v1900
        %v2280 = vrot.slane %v2125, 2
        %v2281 = vsel %vm1852, %v1912, %v2280
        %v2282 = vrot.slane %v2216, 2
        %v2283 = vsel %vm1852, %v2280, %v2282
        %v2290 = vunpack.c.l.b16 %v1601
        %v2291 = vunpack.c.l.b16 %v1602
        %v2292 = vunpack.c.l.b16 %v1603
        %v2293 = vpack.c.b16 %v1635, %v2290
        %v2294 = vpack.c.b16 %v2291, %v2124
        %v2295 = vpack.c.b16 %v2292, %v2292
        %v2296 = vrot.slane %v2293, 2
        %v2297 = vsel %vm1852, %v2296, %v1858
        %v2298 = vrot.slane %v2121, 2
        %v2299 = vsel %vm1852, %v1868, %v2298
        %v2300 = vrot.slane %v2294, 2
        %v2301 = vsel %vm1852, %v2298, %v2300
        %v2302 = vrot.slane %v2295, 2
        %v2303 = vsel %vm1852, %v2300, %v2302
        %v2309 = vunpack.c.l.b16 %v1604
        %v2310 = vpack.c.b16 %v2309, %v2309
        %v2312 = vunpack.c.l.b16 %v1605
        %v2313 = vpack.c.b16 %v1635, %v2312
        %v2315 = vshrl.u32 %v2313, 16
        %v2317 = vshll.u32 %v2313, 16
        %v2319 = vrot.slane %v2317, 1
        %v2320 = vor.u32 %v2315, %v2319
        %v2321 = vsel %vm1669, %v2320, %v1696
        %v2323 = vshll.u32 %v2121, 16
        %v2325 = vrot.slane %v2323, 1
        %v2326 = vsel %vm1669, %v1740, %v2325
        %v2327 = vshrl.u32 %v2121, 16
        %v2329 = vor.u32 %v2327, %v2325
        %v2331 = vshll.u32 %v2294, 16
        %v2333 = vrot.slane %v2331, 1
        %v2334 = vsel %vm1669, %v2329, %v2333
        %v2335 = vshrl.u32 %v2294, 16
        %v2337 = vor.u32 %v2335, %v2333
        %v2339 = vshll.u32 %v2310, 16
        %v2341 = vrot.slane %v2339, 1
        %v2342 = vsel %vm1669, %v2337, %v2341
        %v2343 = vshrl.u32 %v2310, 16
        %v2345 = vor.u32 %v2343, %v2341
        %v2347 = vunpack.c.l.b16 %v1606
        %v2348 = vpack.c.b16 %v2347, %v2347
        %v2349 = vrot.slane %v2313, 1
        %v2350 = vsel %vm1758, %v2349, %v1764
        %v2351 = vrot.slane %v2121, 1
        %v2352 = vsel %vm1758, %v1774, %v2351
        %v2353 = vrot.slane %v2294, 1
        %v2354 = vsel %vm1758, %v2351, %v2353
        %v2355 = vrot.slane %v2348, 1
        %v2356 = vsel %vm1758, %v2353, %v2355
        %v2357 = vpack.c.b16 %v2347, %v2291
        %vm2358 = vsmask.f32 2304
        %v2359 = vrot.slane %v1947, 5
        %v2360 = vrot.slane %v1950, 6
        %v2361 = vor.u32 %v2359, %v2360
        %v2362 = vrot.slane %v1956, 5
        %v2363 = vrot.slane %v1959, 6
        %v2364 = vor.u32 %v2362, %v2363
        %v2365 = vsel %vm2358, %v2361, %v2364
        %v2366 = vrot.slane %v1965, 5
        %v2367 = vrot.slane %v1968, 6
        %v2368 = vor.u32 %v2366, %v2367
        %v2369 = vsel %vm2358, %v2364, %v2368
        %v2370 = vrot.slane %v1974, 5
        %v2371 = vrot.slane %v1977, 6
        %v2372 = vor.u32 %v2370, %v2371
        %v2373 = vsel %vm2358, %v2368, %v2372
        %v2374 = vrot.slane %v1983, 5
        %v2375 = vrot.slane %v1986, 6
        %v2376 = vor.u32 %v2374, %v2375
        %v2377 = vsel %vm2358, %v2372, %v2376
        %v2378 = vrot.slane %v1992, 5
        %v2379 = vrot.slane %v1995, 6
        %v2380 = vor.u32 %v2378, %v2379
        %v2381 = vsel %vm2358, %v2376, %v2380
        %v2382 = vrot.slane %v2001, 5
        %v2383 = vrot.slane %v2004, 6
        %v2384 = vor.u32 %v2382, %v2383
        %v2385 = vsel %vm2358, %v2380, %v2384
        %v2386 = vrot.slane %v2166, 5
        %v2387 = vrot.slane %v2162, 6
        %v2388 = vor.u32 %v2386, %v2387
        %v2389 = vsel %vm2358, %v2384, %v2388
        %v2391 = vshrl.u32 %v2357, 16
        %v2393 = vrot.slane %v2391, 5
        %v2394 = vshll.u32 %v2357, 16
        %v2396 = vrot.slane %v2394, 6
        %v2397 = vor.u32 %v2393, %v2396
        %v2398 = vsel %vm2358, %v2388, %v2397
        %v2400 = vunpack.c.l.b16 %v1607
        %v2401 = vpack.c.b16 %v2400, %v2347
        %v2402 = vrot.slane %v1698, 5
        %v2403 = vrot.slane %v1694, 6
        %v2404 = vor.u32 %v2402, %v2403
        %v2405 = vrot.slane %v1706, 5
        %v2406 = vrot.slane %v1702, 6
        %v2407 = vor.u32 %v2405, %v2406
        %v2408 = vsel %vm2358, %v2404, %v2407
        %v2409 = vrot.slane %v1714, 5
        %v2410 = vrot.slane %v1710, 6
        %v2411 = vor.u32 %v2409, %v2410
        %v2412 = vsel %vm2358, %v2407, %v2411
        %v2413 = vrot.slane %v1722, 5
        %v2414 = vrot.slane %v1718, 6
        %v2415 = vor.u32 %v2413, %v2414
        %v2416 = vsel %vm2358, %v2411, %v2415
        %v2417 = vrot.slane %v1730, 5
        %v2418 = vrot.slane %v1726, 6
        %v2419 = vor.u32 %v2417, %v2418
        %v2420 = vsel %vm2358, %v2415, %v2419
        %v2421 = vrot.slane %v1738, 5
        %v2422 = vrot.slane %v1734, 6
        %v2423 = vor.u32 %v2421, %v2422
        %v2424 = vsel %vm2358, %v2419, %v2423
        %v2425 = vrot.slane %v2327, 5
        %v2426 = vrot.slane %v2323, 6
        %v2427 = vor.u32 %v2425, %v2426
        %v2428 = vsel %vm2358, %v2423, %v2427
        %v2429 = vrot.slane %v2335, 5
        %v2430 = vrot.slane %v2331, 6
        %v2431 = vor.u32 %v2429, %v2430
        %v2432 = vsel %vm2358, %v2427, %v2431
        %v2434 = vshrl.u32 %v2401, 16
        %v2436 = vrot.slane %v2434, 5
        %v2437 = vshll.u32 %v2401, 16
        %v2439 = vrot.slane %v2437, 6
        %v2440 = vor.u32 %v2436, %v2439
        %v2441 = vsel %vm2358, %v2431, %v2440
        %v2443 = vunpack.c.l.b16 %v1608
        %v2444 = vpack.c.b16 %v2443, %v2443
        %vm2445 = vcmask 1041408
        %v2446 = vrot.slane %v1651, 6
        %v2447 = vrot.slane %v1652, 6
        %v2448 = vsel %vm2445, %v2446, %v2447
        %v2449 = vrot.slane %v1653, 6
        %v2450 = vsel %vm2445, %v2447, %v2449
        %v2451 = vrot.slane %v1654, 6
        %v2452 = vsel %vm2445, %v2449, %v2451
        %v2453 = vrot.slane %v1655, 6
        %v2454 = vsel %vm2445, %v2451, %v2453
        %v2455 = vrot.slane %v1656, 6
        %v2456 = vsel %vm2445, %v2453, %v2455
        %v2457 = vrot.slane %v2121, 6
        %v2458 = vsel %vm2445, %v2455, %v2457
        %v2459 = vrot.slane %v2294, 6
        %v2460 = vsel %vm2445, %v2457, %v2459
        %v2461 = vrot.slane %v2401, 6
        %v2462 = vsel %vm2445, %v2459, %v2461
        %v2463 = vrot.slane %v2444, 6
        %v2464 = vsel %vm2445, %v2461, %v2463
        %v2466 = vunpack.c.l.b16 %v1609
        %v2467 = vpack.c.b16 %v1637, %v2466
        %vm2468 = vsmask.f32 1280
        %v2470 = vshrl.u32 %v2467, 16
        %v2472 = vrot.slane %v2470, 6
        %v2473 = vshll.u32 %v2467, 16
        %v2475 = vrot.slane %v2473, 7
        %v2476 = vor.u32 %v2472, %v2475
        %v2477 = vrot.slane %v1706, 6
        %v2478 = vrot.slane %v1702, 7
        %v2479 = vor.u32 %v2477, %v2478
        %v2480 = vsel %vm2468, %v2476, %v2479
        %v2481 = vrot.slane %v1714, 6
        %v2482 = vrot.slane %v1710, 7
        %v2483 = vor.u32 %v2481, %v2482
        %v2484 = vsel %vm2468, %v2479, %v2483
        %v2485 = vrot.slane %v1722, 6
        %v2486 = vrot.slane %v1718, 7
        %v2487 = vor.u32 %v2485, %v2486
        %v2488 = vsel %vm2468, %v2483, %v2487
        %v2489 = vrot.slane %v1730, 6
        %v2490 = vrot.slane %v1726, 7
        %v2491 = vor.u32 %v2489, %v2490
        %v2492 = vsel %vm2468, %v2487, %v2491
        %v2493 = vrot.slane %v1738, 6
        %v2494 = vrot.slane %v1734, 7
        %v2495 = vor.u32 %v2493, %v2494
        %v2496 = vsel %vm2468, %v2491, %v2495
        %v2497 = vrot.slane %v2327, 6
        %v2498 = vrot.slane %v2323, 7
        %v2499 = vor.u32 %v2497, %v2498
        %v2500 = vsel %vm2468, %v2495, %v2499
        %v2501 = vrot.slane %v2335, 6
        %v2502 = vrot.slane %v2331, 7
        %v2503 = vor.u32 %v2501, %v2502
        %v2504 = vsel %vm2468, %v2499, %v2503
        %v2505 = vrot.slane %v2434, 6
        %v2506 = vrot.slane %v2437, 7
        %v2507 = vor.u32 %v2505, %v2506
        %v2508 = vsel %vm2468, %v2503, %v2507
        %v2510 = vshrl.u32 %v2444, 16
        %v2512 = vrot.slane %v2510, 6
        %v2513 = vshll.u32 %v2444, 16
        %v2515 = vrot.slane %v2513, 7
        %v2516 = vor.u32 %v2512, %v2515
        %v2517 = vsel %vm2468, %v2507, %v2516
        %v2519 = vunpack.c.l.b16 %v1610
        %v2520 = vpack.c.b16 %v2519, %v2519
        %vm2521 = vcmask 1040384
        %v2522 = vrot.slane %v2467, 7
        %v2523 = vrot.slane %v1652, 7
        %v2524 = vsel %vm2521, %v2522, %v2523
        %v2525 = vrot.slane %v1653, 7
        %v2526 = vsel %vm2521, %v2523, %v2525
        %v2527 = vrot.slane %v1654, 7
        %v2528 = vsel %vm2521, %v2525, %v2527
        %v2529 = vrot.slane %v1655, 7
        %v2530 = vsel %vm2521, %v2527, %v2529
        %v2531 = vrot.slane %v1656, 7
        %v2532 = vsel %vm2521, %v2529, %v2531
        %v2533 = vrot.slane %v2121, 7
        %v2534 = vsel %vm2521, %v2531, %v2533
        %v2535 = vrot.slane %v2294, 7
        %v2536 = vsel %vm2521, %v2533, %v2535
        %v2537 = vrot.slane %v2401, 7
        %v2538 = vsel %vm2521, %v2535, %v2537
        %v2539 = vrot.slane %v2520, 7
        %v2540 = vsel %vm2521, %v2537, %v2539
        %v2542 = vunpack.c.l.b16 %v1611
        %v2543 = vpack.c.b16 %v1637, %v2542
        %vm2544 = vsmask.f32 256
        %v2546 = vshrl.u32 %v2543, 16
        %v2548 = vrot.slane %v2546, 7
        %v2549 = vshll.u32 %v2543, 16
        %v2551 = vor.u32 %v2548, %v2549
        %v2552 = vrot.slane %v1706, 7
        %v2553 = vor.u32 %v2552, %v1702
        %v2554 = vsel %vm2544, %v2548, %v2553
        %v2555 = vrot.slane %v1714, 7
        %v2556 = vor.u32 %v2555, %v1710
        %v2557 = vsel %vm2544, %v2552, %v2556
        %v2558 = vrot.slane %v1722, 7
        %v2559 = vor.u32 %v2558, %v1718
        %v2560 = vsel %vm2544, %v2555, %v2559
        %v2561 = vrot.slane %v1730, 7
        %v2562 = vor.u32 %v2561, %v1726
        %v2563 = vsel %vm2544, %v2558, %v2562
        %v2564 = vrot.slane %v1738, 7
        %v2565 = vor.u32 %v2564, %v1734
        %v2566 = vsel %vm2544, %v2561, %v2565
        %v2567 = vrot.slane %v2327, 7
        %v2568 = vor.u32 %v2567, %v2323
        %v2569 = vsel %vm2544, %v2564, %v2568
        %v2570 = vrot.slane %v2335, 7
        %v2571 = vor.u32 %v2570, %v2331
        %v2572 = vsel %vm2544, %v2567, %v2571
        %v2573 = vrot.slane %v2434, 7
        %v2574 = vor.u32 %v2573, %v2437
        %v2575 = vsel %vm2544, %v2570, %v2574
        %v2577 = vshrl.u32 %v2520, 16
        %v2579 = vrot.slane %v2577, 7
        %v2580 = vshll.u32 %v2520, 16
        %v2582 = vor.u32 %v2579, %v2580
        %v2583 = vsel %vm2544, %v2573, %v2582
        %v2585 = vshrl.u32 %v2293, 16
        %v2587 = vrot.slane %v2585, 2
        %v2588 = vshll.u32 %v2293, 16
        %v2590 = vrot.slane %v2588, 3
        %v2591 = vor.u32 %v2587, %v2590
        %v2592 = vrot.slane %v1698, 2
        %v2593 = vrot.slane %v1694, 3
        %v2594 = vor.u32 %v2592, %v2593
        %v2595 = vsel %vm1928, %v2591, %v2594
        %v2597 = vshrl.u32 %v2321, 16
        %v2599 = vrot.slane %v2597, 2
        %v2600 = vshll.u32 %v2321, 16
        %v2602 = vrot.slane %v2600, 3
        %v2603 = vor.u32 %v2599, %v2602
        %v2605 = vshrl.u32 %v1705, 16
        %v2607 = vrot.slane %v2605, 2
        %v2608 = vshll.u32 %v1705, 16
        %v2610 = vrot.slane %v2608, 3
        %v2611 = vor.u32 %v2607, %v2610
        %v2612 = vsel %vm1928, %v2603, %v2611
        %v2614 = vshrl.u32 %v2350, 16
        %v2616 = vrot.slane %v2614, 2
        %v2617 = vshll.u32 %v2350, 16
        %v2619 = vrot.slane %v2617, 3
        %v2620 = vor.u32 %v2616, %v2619
        %v2622 = vshrl.u32 %v1767, 16
        %v2624 = vrot.slane %v2622, 2
        %v2625 = vshll.u32 %v1767, 16
        %v2627 = vrot.slane %v2625, 3
        %v2628 = vor.u32 %v2624, %v2627
        %v2629 = vsel %vm1928, %v2620, %v2628
        %v2631 = vshrl.u32 %v2361, 16
        %v2633 = vrot.slane %v2631, 2
        %v2634 = vshll.u32 %v2361, 16
        %v2636 = vrot.slane %v2634, 3
        %v2637 = vor.u32 %v2633, %v2636
        %v2639 = vshrl.u32 %v2365, 16
        %v2641 = vrot.slane %v2639, 2
        %v2642 = vshll.u32 %v2365, 16
        %v2644 = vrot.slane %v2642, 3
        %v2645 = vor.u32 %v2641, %v2644
        %v2646 = vsel %vm1928, %v2637, %v2645
        %v2648 = vshrl.u32 %v2404, 16
        %v2650 = vrot.slane %v2648, 2
        %v2651 = vshll.u32 %v2404, 16
        %v2653 = vrot.slane %v2651, 3
        %v2654 = vor.u32 %v2650, %v2653
        %v2656 = vshrl.u32 %v2408, 16
        %v2658 = vrot.slane %v2656, 2
        %v2659 = vshll.u32 %v2408, 16
        %v2661 = vrot.slane %v2659, 3
        %v2662 = vor.u32 %v2658, %v2661
        %v2663 = vsel %vm1928, %v2654, %v2662
        %v2665 = vshrl.u32 %v2446, 16
        %v2667 = vrot.slane %v2665, 2
        %v2668 = vshll.u32 %v2446, 16
        %v2670 = vrot.slane %v2668, 3
        %v2671 = vor.u32 %v2667, %v2670
        %v2673 = vshrl.u32 %v2448, 16
        %v2675 = vrot.slane %v2673, 2
        %v2676 = vshll.u32 %v2448, 16
        %v2678 = vrot.slane %v2676, 3
        %v2679 = vor.u32 %v2675, %v2678
        %v2680 = vsel %vm1928, %v2671, %v2679
        %v2682 = vshrl.u32 %v2476, 16
        %v2684 = vrot.slane %v2682, 2
        %v2685 = vshll.u32 %v2476, 16
        %v2687 = vrot.slane %v2685, 3
        %v2688 = vor.u32 %v2684, %v2687
        %v2690 = vshrl.u32 %v2480, 16
        %v2692 = vrot.slane %v2690, 2
        %v2693 = vshll.u32 %v2480, 16
        %v2695 = vrot.slane %v2693, 3
        %v2696 = vor.u32 %v2692, %v2695
        %v2697 = vsel %vm1928, %v2688, %v2696
        %v2699 = vshrl.u32 %v2522, 16
        %v2701 = vrot.slane %v2699, 2
        %v2702 = vshll.u32 %v2522, 16
        %v2704 = vrot.slane %v2702, 3
        %v2705 = vor.u32 %v2701, %v2704
        %v2707 = vshrl.u32 %v2524, 16
        %v2709 = vrot.slane %v2707, 2
        %v2710 = vshll.u32 %v2524, 16
        %v2712 = vrot.slane %v2710, 3
        %v2713 = vor.u32 %v2709, %v2712
        %v2714 = vsel %vm1928, %v2705, %v2713
        %v2716 = vshrl.u32 %v2551, 16
        %v2718 = vrot.slane %v2716, 2
        %v2719 = vshll.u32 %v2551, 16
        %v2721 = vrot.slane %v2719, 3
        %v2722 = vor.u32 %v2718, %v2721
        %v2724 = vshrl.u32 %v2554, 16
        %v2726 = vrot.slane %v2724, 2
        %v2727 = vshll.u32 %v2554, 16
        %v2729 = vrot.slane %v2727, 3
        %v2730 = vor.u32 %v2726, %v2729
        %v2731 = vsel %vm1928, %v2722, %v2730
        %v2732 = vrot.slane %v1706, 2
        %v2733 = vrot.slane %v1702, 3
        %v2734 = vor.u32 %v2732, %v2733
        %v2735 = vsel %vm1928, %v2594, %v2734
        %v2737 = vshrl.u32 %v1713, 16
        %v2739 = vrot.slane %v2737, 2
        %v2740 = vshll.u32 %v1713, 16
        %v2742 = vrot.slane %v2740, 3
        %v2743 = vor.u32 %v2739, %v2742
        %v2744 = vsel %vm1928, %v2611, %v2743
        %v2746 = vshrl.u32 %v1769, 16
        %v2748 = vrot.slane %v2746, 2
        %v2749 = vshll.u32 %v1769, 16
        %v2751 = vrot.slane %v2749, 3
        %v2752 = vor.u32 %v2748, %v2751
        %v2753 = vsel %vm1928, %v2628, %v2752
        %v2755 = vshrl.u32 %v2369, 16
        %v2757 = vrot.slane %v2755, 2
        %v2758 = vshll.u32 %v2369, 16
        %v2760 = vrot.slane %v2758, 3
        %v2761 = vor.u32 %v2757, %v2760
        %v2762 = vsel %vm1928, %v2645, %v2761
        %v2764 = vshrl.u32 %v2412, 16
        %v2766 = vrot.slane %v2764, 2
        %v2767 = vshll.u32 %v2412, 16
        %v2769 = vrot.slane %v2767, 3
        %v2770 = vor.u32 %v2766, %v2769
        %v2771 = vsel %vm1928, %v2662, %v2770
        %v2773 = vshrl.u32 %v2450, 16
        %v2775 = vrot.slane %v2773, 2
        %v2776 = vshll.u32 %v2450, 16
        %v2778 = vrot.slane %v2776, 3
        %v2779 = vor.u32 %v2775, %v2778
        %v2780 = vsel %vm1928, %v2679, %v2779
        %v2782 = vshrl.u32 %v2484, 16
        %v2784 = vrot.slane %v2782, 2
        %v2785 = vshll.u32 %v2484, 16
        %v2787 = vrot.slane %v2785, 3
        %v2788 = vor.u32 %v2784, %v2787
        %v2789 = vsel %vm1928, %v2696, %v2788
        %v2791 = vshrl.u32 %v2526, 16
        %v2793 = vrot.slane %v2791, 2
        %v2794 = vshll.u32 %v2526, 16
        %v2796 = vrot.slane %v2794, 3
        %v2797 = vor.u32 %v2793, %v2796
        %v2798 = vsel %vm1928, %v2713, %v2797
        %v2800 = vshrl.u32 %v2557, 16
        %v2802 = vrot.slane %v2800, 2
        %v2803 = vshll.u32 %v2557, 16
        %v2805 = vrot.slane %v2803, 3
        %v2806 = vor.u32 %v2802, %v2805
        %v2807 = vsel %vm1928, %v2730, %v2806
        %v2808 = vrot.slane %v1714, 2
        %v2809 = vrot.slane %v1710, 3
        %v2810 = vor.u32 %v2808, %v2809
        %v2811 = vsel %vm1928, %v2734, %v2810
        %v2813 = vshrl.u32 %v1721, 16
        %v2815 = vrot.slane %v2813, 2
        %v2816 = vshll.u32 %v1721, 16
        %v2818 = vrot.slane %v2816, 3
        %v2819 = vor.u32 %v2815, %v2818
        %v2820 = vsel %vm1928, %v2743, %v2819
        %v2822 = vshrl.u32 %v1771, 16
        %v2824 = vrot.slane %v2822, 2
        %v2825 = vshll.u32 %v1771, 16
        %v2827 = vrot.slane %v2825, 3
        %v2828 = vor.u32 %v2824, %v2827
        %v2829 = vsel %vm1928, %v2752, %v2828
        %v2831 = vshrl.u32 %v2373, 16
        %v2833 = vrot.slane %v2831, 2
        %v2834 = vshll.u32 %v2373, 16
        %v2836 = vrot.slane %v2834, 3
        %v2837 = vor.u32 %v2833, %v2836
        %v2838 = vsel %vm1928, %v2761, %v2837
        %v2840 = vshrl.u32 %v2416, 16
        %v2842 = vrot.slane %v2840, 2
        %v2843 = vshll.u32 %v2416, 16
        %v2845 = vrot.slane %v2843, 3
        %v2846 = vor.u32 %v2842, %v2845
        %v2847 = vsel %vm1928, %v2770, %v2846
        %v2849 = vshrl.u32 %v2452, 16
        %v2851 = vrot.slane %v2849, 2
        %v2852 = vshll.u32 %v2452, 16
        %v2854 = vrot.slane %v2852, 3
        %v2855 = vor.u32 %v2851, %v2854
        %v2856 = vsel %vm1928, %v2779, %v2855
        %v2858 = vshrl.u32 %v2488, 16
        %v2860 = vrot.slane %v2858, 2
        %v2861 = vshll.u32 %v2488, 16
        %v2863 = vrot.slane %v2861, 3
        %v2864 = vor.u32 %v2860, %v2863
        %v2865 = vsel %vm1928, %v2788, %v2864
        %v2867 = vshrl.u32 %v2528, 16
        %v2869 = vrot.slane %v2867, 2
        %v2870 = vshll.u32 %v2528, 16
        %v2872 = vrot.slane %v2870, 3
        %v2873 = vor.u32 %v2869, %v2872
        %v2874 = vsel %vm1928, %v2797, %v2873
        %v2876 = vshrl.u32 %v2560, 16
        %v2878 = vrot.slane %v2876, 2
        %v2879 = vshll.u32 %v2560, 16
        %v2881 = vrot.slane %v2879, 3
        %v2882 = vor.u32 %v2878, %v2881
        %v2883 = vsel %vm1928, %v2806, %v2882
        %v2884 = vrot.slane %v1722, 2
        %v2885 = vrot.slane %v1718, 3
        %v2886 = vor.u32 %v2884, %v2885
        %v2887 = vsel %vm1928, %v2810, %v2886
        %v2889 = vshrl.u32 %v1729, 16
        %v2891 = vrot.slane %v2889, 2
        %v2892 = vshll.u32 %v1729, 16
        %v2894 = vrot.slane %v2892, 3
        %v2895 = vor.u32 %v2891, %v2894
        %v2896 = vsel %vm1928, %v2819, %v2895
        %v2898 = vshrl.u32 %v1773, 16
        %v2900 = vrot.slane %v2898, 2
        %v2901 = vshll.u32 %v1773, 16
        %v2903 = vrot.slane %v2901, 3
        %v2904 = vor.u32 %v2900, %v2903
        %v2905 = vsel %vm1928, %v2828, %v2904
        %v2907 = vshrl.u32 %v2377, 16
        %v2909 = vrot.slane %v2907, 2
        %v2910 = vshll.u32 %v2377, 16
        %v2912 = vrot.slane %v2910, 3
        %v2913 = vor.u32 %v2909, %v2912
        %v2914 = vsel %vm1928, %v2837, %v2913
        %v2916 = vshrl.u32 %v2420, 16
        %v2918 = vrot.slane %v2916, 2
        %v2919 = vshll.u32 %v2420, 16
        %v2921 = vrot.slane %v2919, 3
        %v2922 = vor.u32 %v2918, %v2921
        %v2923 = vsel %vm1928, %v2846, %v2922
        %v2925 = vshrl.u32 %v2454, 16
        %v2927 = vrot.slane %v2925, 2
        %v2928 = vshll.u32 %v2454, 16
        %v2930 = vrot.slane %v2928, 3
        %v2931 = vor.u32 %v2927, %v2930
        %v2932 = vsel %vm1928, %v2855, %v2931
        %v2934 = vshrl.u32 %v2492, 16
        %v2936 = vrot.slane %v2934, 2
        %v2937 = vshll.u32 %v2492, 16
        %v2939 = vrot.slane %v2937, 3
        %v2940 = vor.u32 %v2936, %v2939
        %v2941 = vsel %vm1928, %v2864, %v2940
        %v2943 = vshrl.u32 %v2530, 16
        %v2945 = vrot.slane %v2943, 2
        %v2946 = vshll.u32 %v2530, 16
        %v2948 = vrot.slane %v2946, 3
        %v2949 = vor.u32 %v2945, %v2948
        %v2950 = vsel %vm1928, %v2873, %v2949
        %v2952 = vshrl.u32 %v2563, 16
        %v2954 = vrot.slane %v2952, 2
        %v2955 = vshll.u32 %v2563, 16
        %v2957 = vrot.slane %v2955, 3
        %v2958 = vor.u32 %v2954, %v2957
        %v2959 = vsel %vm1928, %v2882, %v2958
        %v2960 = vrot.slane %v1730, 2
        %v2961 = vrot.slane %v1726, 3
        %v2962 = vor.u32 %v2960, %v2961
        %v2963 = vsel %vm1928, %v2886, %v2962
        %v2965 = vshrl.u32 %v1737, 16
        %v2967 = vrot.slane %v2965, 2
        %v2968 = vshll.u32 %v1737, 16
        %v2970 = vrot.slane %v2968, 3
        %v2971 = vor.u32 %v2967, %v2970
        %v2972 = vsel %vm1928, %v2895, %v2971
        %v2974 = vshrl.u32 %v1775, 16
        %v2976 = vrot.slane %v2974, 2
        %v2977 = vshll.u32 %v1775, 16
        %v2979 = vrot.slane %v2977, 3
        %v2980 = vor.u32 %v2976, %v2979
        %v2981 = vsel %vm1928, %v2904, %v2980
        %v2983 = vshrl.u32 %v2381, 16
        %v2985 = vrot.slane %v2983, 2
        %v2986 = vshll.u32 %v2381, 16
        %v2988 = vrot.slane %v2986, 3
        %v2989 = vor.u32 %v2985, %v2988
        %v2990 = vsel %vm1928, %v2913, %v2989
        %v2992 = vshrl.u32 %v2424, 16
        %v2994 = vrot.slane %v2992, 2
        %v2995 = vshll.u32 %v2424, 16
        %v2997 = vrot.slane %v2995, 3
        %v2998 = vor.u32 %v2994, %v2997
        %v2999 = vsel %vm1928, %v2922, %v2998
        %v3001 = vshrl.u32 %v2456, 16
        %v3003 = vrot.slane %v3001, 2
        %v3004 = vshll.u32 %v2456, 16
        %v3006 = vrot.slane %v3004, 3
        %v3007 = vor.u32 %v3003, %v3006
        %v3008 = vsel %vm1928, %v2931, %v3007
        %v3010 = vshrl.u32 %v2496, 16
        %v3012 = vrot.slane %v3010, 2
        %v3013 = vshll.u32 %v2496, 16
        %v3015 = vrot.slane %v3013, 3
        %v3016 = vor.u32 %v3012, %v3015
        %v3017 = vsel %vm1928, %v2940, %v3016
        %v3019 = vshrl.u32 %v2532, 16
        %v3021 = vrot.slane %v3019, 2
        %v3022 = vshll.u32 %v2532, 16
        %v3024 = vrot.slane %v3022, 3
        %v3025 = vor.u32 %v3021, %v3024
        %v3026 = vsel %vm1928, %v2949, %v3025
        %v3028 = vshrl.u32 %v2566, 16
        %v3030 = vrot.slane %v3028, 2
        %v3031 = vshll.u32 %v2566, 16
        %v3033 = vrot.slane %v3031, 3
        %v3034 = vor.u32 %v3030, %v3033
        %v3035 = vsel %vm1928, %v2958, %v3034
        %v3036 = vrot.slane %v1738, 2
        %v3037 = vrot.slane %v1734, 3
        %v3038 = vor.u32 %v3036, %v3037
        %v3039 = vsel %vm1928, %v2962, %v3038
        %v3041 = vshrl.u32 %v2326, 16
        %v3043 = vrot.slane %v3041, 2
        %v3044 = vshll.u32 %v2326, 16
        %v3046 = vrot.slane %v3044, 3
        %v3047 = vor.u32 %v3043, %v3046
        %v3048 = vsel %vm1928, %v2971, %v3047
        %v3050 = vshrl.u32 %v2352, 16
        %v3052 = vrot.slane %v3050, 2
        %v3053 = vshll.u32 %v2352, 16
        %v3055 = vrot.slane %v3053, 3
        %v3056 = vor.u32 %v3052, %v3055
        %v3057 = vsel %vm1928, %v2980, %v3056
        %v3059 = vshrl.u32 %v2385, 16
        %v3061 = vrot.slane %v3059, 2
        %v3062 = vshll.u32 %v2385, 16
        %v3064 = vrot.slane %v3062, 3
        %v3065 = vor.u32 %v3061, %v3064
        %v3066 = vsel %vm1928, %v2989, %v3065
        %v3068 = vshrl.u32 %v2428, 16
        %v3070 = vrot.slane %v3068, 2
        %v3071 = vshll.u32 %v2428, 16
        %v3073 = vrot.slane %v3071, 3
        %v3074 = vor.u32 %v3070, %v3073
        %v3075 = vsel %vm1928, %v2998, %v3074
        %v3077 = vshrl.u32 %v2458, 16
        %v3079 = vrot.slane %v3077, 2
        %v3080 = vshll.u32 %v2458, 16
        %v3082 = vrot.slane %v3080, 3
        %v3083 = vor.u32 %v3079, %v3082
        %v3084 = vsel %vm1928, %v3007, %v3083
        %v3086 = vshrl.u32 %v2500, 16
        %v3088 = vrot.slane %v3086, 2
        %v3089 = vshll.u32 %v2500, 16
        %v3091 = vrot.slane %v3089, 3
        %v3092 = vor.u32 %v3088, %v3091
        %v3093 = vsel %vm1928, %v3016, %v3092
        %v3095 = vshrl.u32 %v2534, 16
        %v3097 = vrot.slane %v3095, 2
        %v3098 = vshll.u32 %v2534, 16
        %v3100 = vrot.slane %v3098, 3
        %v3101 = vor.u32 %v3097, %v3100
        %v3102 = vsel %vm1928, %v3025, %v3101
        %v3104 = vshrl.u32 %v2569, 16
        %v3106 = vrot.slane %v3104, 2
        %v3107 = vshll.u32 %v2569, 16
        %v3109 = vrot.slane %v3107, 3
        %v3110 = vor.u32 %v3106, %v3109
        %v3111 = vsel %vm1928, %v3034, %v3110
        %v3112 = vrot.slane %v2327, 2
        %v3113 = vrot.slane %v2323, 3
        %v3114 = vor.u32 %v3112, %v3113
        %v3115 = vsel %vm1928, %v3038, %v3114
        %v3117 = vshrl.u32 %v2334, 16
        %v3119 = vrot.slane %v3117, 2
        %v3120 = vshll.u32 %v2334, 16
        %v3122 = vrot.slane %v3120, 3
        %v3123 = vor.u32 %v3119, %v3122
        %v3124 = vsel %vm1928, %v3047, %v3123
        %v3126 = vshrl.u32 %v2354, 16
        %v3128 = vrot.slane %v3126, 2
        %v3129 = vshll.u32 %v2354, 16
        %v3131 = vrot.slane %v3129, 3
        %v3132 = vor.u32 %v3128, %v3131
        %v3133 = vsel %vm1928, %v3056, %v3132
        %v3135 = vshrl.u32 %v2389, 16
        %v3137 = vrot.slane %v3135, 2
        %v3138 = vshll.u32 %v2389, 16
        %v3140 = vrot.slane %v3138, 3
        %v3141 = vor.u32 %v3137, %v3140
        %v3142 = vsel %vm1928, %v3065, %v3141
        %v3144 = vshrl.u32 %v2432, 16
        %v3146 = vrot.slane %v3144, 2
        %v3147 = vshll.u32 %v2432, 16
        %v3149 = vrot.slane %v3147, 3
        %v3150 = vor.u32 %v3146, %v3149
        %v3151 = vsel %vm1928, %v3074, %v3150
        %v3153 = vshrl.u32 %v2460, 16
        %v3155 = vrot.slane %v3153, 2
        %v3156 = vshll.u32 %v2460, 16
        %v3158 = vrot.slane %v3156, 3
        %v3159 = vor.u32 %v3155, %v3158
        %v3160 = vsel %vm1928, %v3083, %v3159
        %v3162 = vshrl.u32 %v2504, 16
        %v3164 = vrot.slane %v3162, 2
        %v3165 = vshll.u32 %v2504, 16
        %v3167 = vrot.slane %v3165, 3
        %v3168 = vor.u32 %v3164, %v3167
        %v3169 = vsel %vm1928, %v3092, %v3168
        %v3171 = vshrl.u32 %v2536, 16
        %v3173 = vrot.slane %v3171, 2
        %v3174 = vshll.u32 %v2536, 16
        %v3176 = vrot.slane %v3174, 3
        %v3177 = vor.u32 %v3173, %v3176
        %v3178 = vsel %vm1928, %v3101, %v3177
        %v3180 = vshrl.u32 %v2572, 16
        %v3182 = vrot.slane %v3180, 2
        %v3183 = vshll.u32 %v2572, 16
        %v3185 = vrot.slane %v3183, 3
        %v3186 = vor.u32 %v3182, %v3185
        %v3187 = vsel %vm1928, %v3110, %v3186
        %v3188 = vrot.slane %v2335, 2
        %v3189 = vrot.slane %v2331, 3
        %v3190 = vor.u32 %v3188, %v3189
        %v3191 = vsel %vm1928, %v3114, %v3190
        %v3193 = vshrl.u32 %v2342, 16
        %v3195 = vrot.slane %v3193, 2
        %v3196 = vshll.u32 %v2342, 16
        %v3198 = vrot.slane %v3196, 3
        %v3199 = vor.u32 %v3195, %v3198
        %v3200 = vsel %vm1928, %v3123, %v3199
        %v3202 = vshrl.u32 %v2356, 16
        %v3204 = vrot.slane %v3202, 2
        %v3205 = vshll.u32 %v2356, 16
        %v3207 = vrot.slane %v3205, 3
        %v3208 = vor.u32 %v3204, %v3207
        %v3209 = vsel %vm1928, %v3132, %v3208
        %v3211 = vshrl.u32 %v2398, 16
        %v3213 = vrot.slane %v3211, 2
        %v3214 = vshll.u32 %v2398, 16
        %v3216 = vrot.slane %v3214, 3
        %v3217 = vor.u32 %v3213, %v3216
        %v3218 = vsel %vm1928, %v3141, %v3217
        %v3220 = vshrl.u32 %v2441, 16
        %v3222 = vrot.slane %v3220, 2
        %v3223 = vshll.u32 %v2441, 16
        %v3225 = vrot.slane %v3223, 3
        %v3226 = vor.u32 %v3222, %v3225
        %v3227 = vsel %vm1928, %v3150, %v3226
        %v3229 = vshrl.u32 %v2462, 16
        %v3231 = vrot.slane %v3229, 2
        %v3232 = vshll.u32 %v2462, 16
        %v3234 = vrot.slane %v3232, 3
        %v3235 = vor.u32 %v3231, %v3234
        %v3236 = vsel %vm1928, %v3159, %v3235
        %v3238 = vshrl.u32 %v2508, 16
        %v3240 = vrot.slane %v3238, 2
        %v3241 = vshll.u32 %v2508, 16
        %v3243 = vrot.slane %v3241, 3
        %v3244 = vor.u32 %v3240, %v3243
        %v3245 = vsel %vm1928, %v3168, %v3244
        %v3247 = vshrl.u32 %v2538, 16
        %v3249 = vrot.slane %v3247, 2
        %v3250 = vshll.u32 %v2538, 16
        %v3252 = vrot.slane %v3250, 3
        %v3253 = vor.u32 %v3249, %v3252
        %v3254 = vsel %vm1928, %v3177, %v3253
        %v3256 = vshrl.u32 %v2575, 16
        %v3258 = vrot.slane %v3256, 2
        %v3259 = vshll.u32 %v2575, 16
        %v3261 = vrot.slane %v3259, 3
        %v3262 = vor.u32 %v3258, %v3261
        %v3263 = vsel %vm1928, %v3186, %v3262
        %v3264 = vrot.slane %v2343, 2
        %v3265 = vrot.slane %v2339, 3
        %v3266 = vor.u32 %v3264, %v3265
        %v3267 = vsel %vm1928, %v3190, %v3266
        %v3269 = vshrl.u32 %v2345, 16
        %v3271 = vrot.slane %v3269, 2
        %v3272 = vshll.u32 %v2345, 16
        %v3274 = vrot.slane %v3272, 3
        %v3275 = vor.u32 %v3271, %v3274
        %v3276 = vsel %vm1928, %v3199, %v3275
        %v3278 = vshrl.u32 %v2355, 16
        %v3280 = vrot.slane %v3278, 2
        %v3281 = vshll.u32 %v2355, 16
        %v3283 = vrot.slane %v3281, 3
        %v3284 = vor.u32 %v3280, %v3283
        %v3285 = vsel %vm1928, %v3208, %v3284
        %v3287 = vshrl.u32 %v2397, 16
        %v3289 = vrot.slane %v3287, 2
        %v3290 = vshll.u32 %v2397, 16
        %v3292 = vrot.slane %v3290, 3
        %v3293 = vor.u32 %v3289, %v3292
        %v3294 = vsel %vm1928, %v3217, %v3293
        %v3296 = vshrl.u32 %v2440, 16
        %v3298 = vrot.slane %v3296, 2
        %v3299 = vshll.u32 %v2440, 16
        %v3301 = vrot.slane %v3299, 3
        %v3302 = vor.u32 %v3298, %v3301
        %v3303 = vsel %vm1928, %v3226, %v3302
        %v3305 = vshrl.u32 %v2464, 16
        %v3307 = vrot.slane %v3305, 2
        %v3308 = vshll.u32 %v2464, 16
        %v3310 = vrot.slane %v3308, 3
        %v3311 = vor.u32 %v3307, %v3310
        %v3312 = vsel %vm1928, %v3235, %v3311
        %v3314 = vshrl.u32 %v2517, 16
        %v3316 = vrot.slane %v3314, 2
        %v3317 = vshll.u32 %v2517, 16
        %v3319 = vrot.slane %v3317, 3
        %v3320 = vor.u32 %v3316, %v3319
        %v3321 = vsel %vm1928, %v3244, %v3320
        %v3323 = vshrl.u32 %v2540, 16
        %v3325 = vrot.slane %v3323, 2
        %v3326 = vshll.u32 %v2540, 16
        %v3328 = vrot.slane %v3326, 3
        %v3329 = vor.u32 %v3325, %v3328
        %v3330 = vsel %vm1928, %v3253, %v3329
        %v3332 = vshrl.u32 %v2583, 16
        %v3334 = vrot.slane %v3332, 2
        %v3335 = vshll.u32 %v2583, 16
        %v3337 = vrot.slane %v3335, 3
        %v3338 = vor.u32 %v3334, %v3337
        %v3339 = vsel %vm1928, %v3262, %v3338
        %v3421 = vld [vmem:[%s3] sm:$0xf]
        %v3422 = vld [vmem:[%s3 + $0x4] sm:$0xf]
        %v3423 = vld [vmem:[%s3 + $0x8] sm:$0xf]
        %v3424 = vld [vmem:[%s3 + $0xc] sm:$0xf]
        %v3425 = vld [vmem:[%s3 + $0x10] sm:$0xf]
        %v3426 = vld [vmem:[%s3 + $0x14] sm:$0xf]
        %v3427 = vld [vmem:[%s3 + $0x18] sm:$0xf]
        %v3428 = vld [vmem:[%s3 + $0x1c] sm:$0xf]
        %v3429 = vld [vmem:[%s3 + $0x20] sm:$0xf]
        %v3430 = vld [vmem:[%s3 + $0x24] sm:$0xf]
        %v3431 = vld [vmem:[%s3 + $0x28] sm:$0xf]
        %v3432 = vld [vmem:[%s3 + $0x2c] sm:$0xf]
        %v3433 = vld [vmem:[%s3 + $0x30] sm:$0xf]
        %v3434 = vld [vmem:[%s3 + $0x34] sm:$0xf]
        %v3435 = vld [vmem:[%s3 + $0x38] sm:$0xf]
        %v3436 = vld [vmem:[%s3 + $0x3c] sm:$0xf]
        %v3437 = vld [vmem:[%s3 + $0x40] sm:$0xf]
        %v3438 = vld [vmem:[%s3 + $0x44] sm:$0xf]
        %v3439 = vld [vmem:[%s3 + $0x48] sm:$0xf]
        %v3440 = vld [vmem:[%s3 + $0x4c] sm:$0xf]
        %v3441 = vld [vmem:[%s3 + $0x50] sm:$0xf]
        %v3442 = vld [vmem:[%s3 + $0x54] sm:$0xf]
        %v3443 = vld [vmem:[%s3 + $0x58] sm:$0xf]
        %v3444 = vld [vmem:[%s3 + $0x5c] sm:$0xf]
        %v3445 = vld [vmem:[%s3 + $0x60] sm:$0xf]
        %v3446 = vld [vmem:[%s3 + $0x64] sm:$0xf]
        %v3447 = vld [vmem:[%s3 + $0x68] sm:$0xf]
        %v3448 = vld [vmem:[%s3 + $0x6c] sm:$0xf]
        %v3449 = vld [vmem:[%s3 + $0x70] sm:$0xf]
        %v3450 = vld [vmem:[%s3 + $0x74] sm:$0xf]
        %v3451 = vld [vmem:[%s3 + $0x78] sm:$0xf]
        %v3452 = vld [vmem:[%s3 + $0x7c] sm:$0xf]
        %v3453 = vld [vmem:[%s3 + $0x80] sm:$0xf]
        %v3454 = vld [vmem:[%s3 + $0x84] sm:$0xf]
        %v3455 = vld [vmem:[%s3 + $0x88] sm:$0xf]
        %v3456 = vld [vmem:[%s3 + $0x8c] sm:$0xf]
        %v3457 = vld [vmem:[%s3 + $0x90] sm:$0xf]
        %v3458 = vld [vmem:[%s3 + $0x94] sm:$0xf]
        %v3459 = vld [vmem:[%s3 + $0x98] sm:$0xf]
        %v3460 = vld [vmem:[%s3 + $0x9c] sm:$0xf]
        %v3461 = vld [vmem:[%s3 + $0xa0] sm:$0xf]
        %v3462 = vld [vmem:[%s3 + $0xa4] sm:$0xf]
        %v3463 = vld [vmem:[%s3 + $0xa8] sm:$0xf]
        %v3464 = vld [vmem:[%s3 + $0xac] sm:$0xf]
        %v3465 = vld [vmem:[%s3 + $0xb0] sm:$0xf]
        %v3466 = vld [vmem:[%s3 + $0xb4] sm:$0xf]
        %v3467 = vld [vmem:[%s3 + $0xb8] sm:$0xf]
        %v3468 = vld [vmem:[%s3 + $0xbc] sm:$0xf]
        %v3469 = vld [vmem:[%s3 + $0xc0] sm:$0xf]
        %v3470 = vld [vmem:[%s3 + $0xc4] sm:$0xf]
        %v3471 = vld [vmem:[%s3 + $0xc8] sm:$0xf]
        %v3472 = vld [vmem:[%s3 + $0xcc] sm:$0xf]
        %v3473 = vld [vmem:[%s3 + $0xd0] sm:$0xf]
        %v3474 = vld [vmem:[%s3 + $0xd4] sm:$0xf]
        %v3475 = vld [vmem:[%s3 + $0xd8] sm:$0xf]
        %v3476 = vld [vmem:[%s3 + $0xdc] sm:$0xf]
        %v3477 = vld [vmem:[%s3 + $0xe0] sm:$0xf]
        %v3478 = vld [vmem:[%s3 + $0xe4] sm:$0xf]
        %v3479 = vld [vmem:[%s3 + $0xe8] sm:$0xf]
        %v3480 = vld [vmem:[%s3 + $0xec] sm:$0xf]
        %v3481 = vld [vmem:[%s3 + $0xf0] sm:$0xf]
        %v3482 = vld [vmem:[%s3 + $0xf4] sm:$0xf]
        %v3483 = vld [vmem:[%s3 + $0xf8] sm:$0xf]
        %v3484 = vld [vmem:[%s3 + $0xfc] sm:$0xf]
        %v3485 = vld [vmem:[%s3 + $0x100] sm:$0xf]
        %v3486 = vld [vmem:[%s3 + $0x104] sm:$0xf]
        %v3487 = vld [vmem:[%s3 + $0x108] sm:$0xf]
        %v3488 = vld [vmem:[%s3 + $0x10c] sm:$0xf]
        %v3489 = vld [vmem:[%s3 + $0x110] sm:$0xf]
        %v3490 = vld [vmem:[%s3 + $0x114] sm:$0xf]
        %v3491 = vld [vmem:[%s3 + $0x118] sm:$0xf]
        %v3492 = vld [vmem:[%s3 + $0x11c] sm:$0xf]
        %v3493 = vld [vmem:[%s3 + $0x120] sm:$0xf]
        %v3494 = vld [vmem:[%s3 + $0x124] sm:$0xf]
        %v3495 = vld [vmem:[%s3 + $0x128] sm:$0xf]
        %v3496 = vld [vmem:[%s3 + $0x12c] sm:$0xf]
        %v3497 = vld [vmem:[%s3 + $0x130] sm:$0xf]
        %v3498 = vld [vmem:[%s3 + $0x134] sm:$0xf]
        %v3499 = vld [vmem:[%s3 + $0x138] sm:$0xf]
        %v3500 = vld [vmem:[%s3 + $0x13c] sm:$0xf]
        %v3501 = vld [vmem:[%s3 + $0x140] sm:$0xf]
        %v3502 = vld [vmem:[%s3 + $0x144] sm:$0xf]
        %v3503 = vld [vmem:[%s3 + $0x148] sm:$0xf]
        %v3504 = vld [vmem:[%s3 + $0x14c] sm:$0xf]
        %v3505 = vld [vmem:[%s3 + $0x150] sm:$0xf]
        %v3506 = vld [vmem:[%s3 + $0x154] sm:$0xf]
        %v3507 = vld [vmem:[%s3 + $0x158] sm:$0xf]
        %v3508 = vld [vmem:[%s3 + $0x15c] sm:$0xf]
        %v3509 = vld [vmem:[%s3 + $0x160] sm:$0xf]
        %v3510 = vld [vmem:[%s3 + $0x164] sm:$0xf]
        %v3511 = vld [vmem:[%s3 + $0x168] sm:$0xf]
        %v3512 = vld [vmem:[%s3 + $0x16c] sm:$0xf]
        %v3513 = vld [vmem:[%s3 + $0x170] sm:$0xf]
        %v3514 = vld [vmem:[%s3 + $0x174] sm:$0xf]
        %v3515 = vld [vmem:[%s3 + $0x178] sm:$0xf]
        %v3516 = vld [vmem:[%s3 + $0x17c] sm:$0xf]
        %v3517 = vld [vmem:[%s3 + $0x180] sm:$0xf]
        %v3518 = vld [vmem:[%s3 + $0x184] sm:$0xf]
        %v3519 = vld [vmem:[%s3 + $0x188] sm:$0xf]
        %v3520 = vld [vmem:[%s3 + $0x18c] sm:$0xf]
        %v3521 = vld [vmem:[%s3 + $0x190] sm:$0xf]
        %v3522 = vld [vmem:[%s3 + $0x194] sm:$0xf]
        %v3523 = vld [vmem:[%s3 + $0x198] sm:$0xf]
        %v3524 = vld [vmem:[%s3 + $0x19c] sm:$0xf]
        %v3525 = vld [vmem:[%s3 + $0x1a0] sm:$0xf]
        %v3526 = vld [vmem:[%s3 + $0x1a4] sm:$0xf]
        %v3527 = vld [vmem:[%s3 + $0x1a8] sm:$0xf]
        %v3528 = vld [vmem:[%s3 + $0x1ac] sm:$0xf]
        %v3529 = vld [vmem:[%s3 + $0x1b0] sm:$0xf]
        %v3530 = vld [vmem:[%s3 + $0x1b4] sm:$0xf]
        %v3531 = vld [vmem:[%s3 + $0x1b8] sm:$0xf]
        %v3532 = vld [vmem:[%s3 + $0x1bc] sm:$0xf]
        %v3533 = vld [vmem:[%s3 + $0x1c0] sm:$0xf]
        %v3534 = vld [vmem:[%s3 + $0x1c4] sm:$0xf]
        %v3535 = vld [vmem:[%s3 + $0x1c8] sm:$0xf]
        %v3536 = vld [vmem:[%s3 + $0x1cc] sm:$0xf]
        %v3537 = vld [vmem:[%s3 + $0x1d0] sm:$0xf]
        %v3538 = vld [vmem:[%s3 + $0x1d4] sm:$0xf]
        %v3539 = vld [vmem:[%s3 + $0x1d8] sm:$0xf]
        %v3540 = vld [vmem:[%s3 + $0x1dc] sm:$0xf]
        %v3541 = vld [vmem:[%s3 + $0x1e0] sm:$0xf]
        %v3542 = vld [vmem:[%s3 + $0x1e4] sm:$0xf]
        %v3543 = vld [vmem:[%s3 + $0x1e8] sm:$0xf]
        %v3544 = vld [vmem:[%s3 + $0x1ec] sm:$0xf]
        %v3545 = vld [vmem:[%s3 + $0x1f0] sm:$0xf]
        %v3546 = vld [vmem:[%s3 + $0x1f4] sm:$0xf]
        %v3547 = vld [vmem:[%s3 + $0x1f8] sm:$0xf]
        %v3548 = vld [vmem:[%s3 + $0x1fc] sm:$0xf]
        %v3549 = vld [vmem:[%s3 + $0x200] sm:$0xf]
        %v3550 = vld [vmem:[%s3 + $0x204] sm:$0xf]
        %v3551 = vld [vmem:[%s3 + $0x208] sm:$0xf]
        %v3552 = vld [vmem:[%s3 + $0x20c] sm:$0xf]
        %v3553 = vld [vmem:[%s3 + $0x210] sm:$0xf]
        %v3554 = vld [vmem:[%s3 + $0x214] sm:$0xf]
        %v3555 = vld [vmem:[%s3 + $0x218] sm:$0xf]
        %v3556 = vld [vmem:[%s3 + $0x21c] sm:$0xf]
        %v3557 = vld [vmem:[%s3 + $0x220] sm:$0xf]
        %v3558 = vld [vmem:[%s3 + $0x224] sm:$0xf]
        %v3559 = vld [vmem:[%s3 + $0x228] sm:$0xf]
        %v3560 = vld [vmem:[%s3 + $0x22c] sm:$0xf]
        %v3561 = vld [vmem:[%s3 + $0x230] sm:$0xf]
        %v3562 = vld [vmem:[%s3 + $0x234] sm:$0xf]
        %v3563 = vld [vmem:[%s3 + $0x238] sm:$0xf]
        %v3564 = vld [vmem:[%s3 + $0x23c] sm:$0xf]
        %v3565 = vld [vmem:[%s3 + $0x240] sm:$0xf]
        %v3566 = vld [vmem:[%s3 + $0x244] sm:$0xf]
        %v3567 = vld [vmem:[%s3 + $0x248] sm:$0xf]
        %v3568 = vld [vmem:[%s3 + $0x24c] sm:$0xf]
        %v3569 = vld [vmem:[%s3 + $0x250] sm:$0xf]
        %v3570 = vld [vmem:[%s3 + $0x254] sm:$0xf]
        %v3571 = vld [vmem:[%s3 + $0x258] sm:$0xf]
        %v3572 = vld [vmem:[%s3 + $0x25c] sm:$0xf]
        %v3573 = vld [vmem:[%s3 + $0x260] sm:$0xf]
        %v3574 = vld [vmem:[%s3 + $0x264] sm:$0xf]
        %v3575 = vld [vmem:[%s3 + $0x268] sm:$0xf]
        %v3576 = vld [vmem:[%s3 + $0x26c] sm:$0xf]
        %v3577 = vld [vmem:[%s3 + $0x270] sm:$0xf]
        %v3578 = vld [vmem:[%s3 + $0x274] sm:$0xf]
        %v3579 = vld [vmem:[%s3 + $0x278] sm:$0xf]
        %v3580 = vld [vmem:[%s3 + $0x27c] sm:$0xf]
        %v3581 = vld [vmem:[%s3 + $0x280] sm:$0xf]
        %v3582 = vld [vmem:[%s3 + $0x284] sm:$0xf]
        %v3583 = vld [vmem:[%s3 + $0x288] sm:$0xf]
        %v3584 = vld [vmem:[%s3 + $0x28c] sm:$0xf]
        %v3585 = vld [vmem:[%s3 + $0x290] sm:$0xf]
        %v3586 = vld [vmem:[%s3 + $0x294] sm:$0xf]
        %v3587 = vld [vmem:[%s3 + $0x298] sm:$0xf]
        %v3588 = vld [vmem:[%s3 + $0x29c] sm:$0xf]
        %v3589 = vld [vmem:[%s3 + $0x2a0] sm:$0xf]
        %v3590 = vld [vmem:[%s3 + $0x2a4] sm:$0xf]
        %v3591 = vld [vmem:[%s3 + $0x2a8] sm:$0xf]
        %v3592 = vld [vmem:[%s3 + $0x2ac] sm:$0xf]
        %v3593 = vld [vmem:[%s3 + $0x2b0] sm:$0xf]
        %v3594 = vld [vmem:[%s3 + $0x2b4] sm:$0xf]
        %v3595 = vld [vmem:[%s3 + $0x2b8] sm:$0xf]
        %v3596 = vld [vmem:[%s3 + $0x2bc] sm:$0xf]
        %v3597 = vld [vmem:[%s3 + $0x2c0] sm:$0xf]
        %v3598 = vld [vmem:[%s3 + $0x2c4] sm:$0xf]
        %v3599 = vld [vmem:[%s3 + $0x2c8] sm:$0xf]
        %v3600 = vld [vmem:[%s3 + $0x2cc] sm:$0xf]
        %v3601 = vld [vmem:[%s3 + $0x2d0] sm:$0xf]
        %v3602 = vld [vmem:[%s3 + $0x2d4] sm:$0xf]
        %v3603 = vld [vmem:[%s3 + $0x2d8] sm:$0xf]
        %v3604 = vld [vmem:[%s3 + $0x2dc] sm:$0xf]
        %v3605 = vld [vmem:[%s3 + $0x2e0] sm:$0xf]
        %v3606 = vld [vmem:[%s3 + $0x2e4] sm:$0xf]
        %v3607 = vld [vmem:[%s3 + $0x2e8] sm:$0xf]
        %v3608 = vld [vmem:[%s3 + $0x2ec] sm:$0xf]
        %v3609 = vld [vmem:[%s3 + $0x2f0] sm:$0xf]
        %v3610 = vld [vmem:[%s3 + $0x2f4] sm:$0xf]
        %v3611 = vld [vmem:[%s3 + $0x2f8] sm:$0xf]
        %v3612 = vld [vmem:[%s3 + $0x2fc] sm:$0xf]
        %v3613 = vld [vmem:[%s3 + $0x300] sm:$0xf]
        %v3614 = vld [vmem:[%s3 + $0x304] sm:$0xf]
        %v3615 = vld [vmem:[%s3 + $0x308] sm:$0xf]
        %v3616 = vld [vmem:[%s3 + $0x30c] sm:$0xf]
        %v3617 = vld [vmem:[%s3 + $0x310] sm:$0xf]
        %v3618 = vld [vmem:[%s3 + $0x314] sm:$0xf]
        %v3619 = vld [vmem:[%s3 + $0x318] sm:$0xf]
        %v3620 = vld [vmem:[%s3 + $0x31c] sm:$0xf]
        %v3621 = vld [vmem:[%s3 + $0x320] sm:$0xf]
        %v3622 = vld [vmem:[%s3 + $0x324] sm:$0xf]
        %v3623 = vld [vmem:[%s3 + $0x328] sm:$0xf]
        %v3624 = vld [vmem:[%s3 + $0x32c] sm:$0xf]
        %v3625 = vld [vmem:[%s3 + $0x330] sm:$0xf]
        %v3626 = vld [vmem:[%s3 + $0x334] sm:$0xf]
        %v3627 = vld [vmem:[%s3 + $0x338] sm:$0xf]
        %v3628 = vld [vmem:[%s3 + $0x33c] sm:$0xf]
        %v3629 = vld [vmem:[%s3 + $0x340] sm:$0xf]
        %v3630 = vld [vmem:[%s3 + $0x344] sm:$0xf]
        %v3631 = vld [vmem:[%s3 + $0x348] sm:$0xf]
        %v3632 = vld [vmem:[%s3 + $0x34c] sm:$0xf]
        %v3633 = vld [vmem:[%s3 + $0x350] sm:$0xf]
        %v3634 = vld [vmem:[%s3 + $0x354] sm:$0xf]
        %v3635 = vld [vmem:[%s3 + $0x358] sm:$0xf]
        %v3636 = vld [vmem:[%s3 + $0x35c] sm:$0xf]
        %v3637 = vld [vmem:[%s3 + $0x360] sm:$0xf]
        %v3638 = vld [vmem:[%s3 + $0x364] sm:$0xf]
        %v3639 = vld [vmem:[%s3 + $0x368] sm:$0xf]
        %v3640 = vld [vmem:[%s3 + $0x36c] sm:$0xf]
        %v3641 = vld [vmem:[%s3 + $0x370] sm:$0xf]
        %v3642 = vld [vmem:[%s3 + $0x374] sm:$0xf]
        %v3643 = vld [vmem:[%s3 + $0x378] sm:$0xf]
        %v3644 = vld [vmem:[%s3 + $0x37c] sm:$0xf]
        %v3645 = vld [vmem:[%s3 + $0x380] sm:$0xf]
        %v3646 = vld [vmem:[%s3 + $0x384] sm:$0xf]
        %v3647 = vld [vmem:[%s3 + $0x388] sm:$0xf]
        %v3648 = vld [vmem:[%s3 + $0x38c] sm:$0xf]
        %v3649 = vld [vmem:[%s3 + $0x390] sm:$0xf]
        %v3650 = vld [vmem:[%s3 + $0x394] sm:$0xf]
        %v3651 = vld [vmem:[%s3 + $0x398] sm:$0xf]
        %v3652 = vld [vmem:[%s3 + $0x39c] sm:$0xf]
        %v3653 = vld [vmem:[%s3 + $0x3a0] sm:$0xf]
        %v3654 = vld [vmem:[%s3 + $0x3a4] sm:$0xf]
        %v3655 = vld [vmem:[%s3 + $0x3a8] sm:$0xf]
        %v3656 = vld [vmem:[%s3 + $0x3ac] sm:$0xf]
        %v3657 = vld [vmem:[%s3 + $0x3b0] sm:$0xf]
        %v3658 = vld [vmem:[%s3 + $0x3b4] sm:$0xf]
        %v3659 = vld [vmem:[%s3 + $0x3b8] sm:$0xf]
        %v3660 = vld [vmem:[%s3 + $0x3bc] sm:$0xf]
        %v3661 = vld [vmem:[%s3 + $0x3c0] sm:$0xf]
        %v3662 = vld [vmem:[%s3 + $0x3c4] sm:$0xf]
        %v3663 = vld [vmem:[%s3 + $0x3c8] sm:$0xf]
        %v3664 = vld [vmem:[%s3 + $0x3cc] sm:$0xf]
        %v3665 = vld [vmem:[%s3 + $0x3d0] sm:$0xf]
        %v3666 = vld [vmem:[%s3 + $0x3d4] sm:$0xf]
        %v3667 = vld [vmem:[%s3 + $0x3d8] sm:$0xf]
        %v3668 = vld [vmem:[%s3 + $0x3dc] sm:$0xf]
        %v3669 = vld [vmem:[%s3 + $0x3e0] sm:$0xf]
        %v3670 = vld [vmem:[%s3 + $0x3e4] sm:$0xf]
        %v3671 = vld [vmem:[%s3 + $0x3e8] sm:$0xf]
        %v3672 = vld [vmem:[%s3 + $0x3ec] sm:$0xf]
        %v3673 = vld [vmem:[%s3 + $0x3f0] sm:$0xf]
        %v3674 = vld [vmem:[%s3 + $0x3f4] sm:$0xf]
        %v3675 = vld [vmem:[%s3 + $0x3f8] sm:$0xf]
        %v3676 = vld [vmem:[%s3 + $0x3fc] sm:$0xf]
        %v3677 = vld [vmem:[%s3 + $0x400] sm:$0xf]
        %v3678 = vld [vmem:[%s3 + $0x404] sm:$0xf]
        %v3679 = vld [vmem:[%s3 + $0x408] sm:$0xf]
        %v3680 = vld [vmem:[%s3 + $0x40c] sm:$0xf]
        %v3681 = vld [vmem:[%s3 + $0x410] sm:$0xf]
        %v3682 = vld [vmem:[%s3 + $0x414] sm:$0xf]
        %v3683 = vld [vmem:[%s3 + $0x418] sm:$0xf]
        %v3684 = vld [vmem:[%s3 + $0x41c] sm:$0xf]
        %v3685 = vld [vmem:[%s3 + $0x420] sm:$0xf]
        %v3686 = vld [vmem:[%s3 + $0x424] sm:$0xf]
        %v3687 = vld [vmem:[%s3 + $0x428] sm:$0xf]
        %v3688 = vld [vmem:[%s3 + $0x42c] sm:$0xf]
        %v3689 = vld [vmem:[%s3 + $0x430] sm:$0xf]
        %v3690 = vld [vmem:[%s3 + $0x434] sm:$0xf]
        %v3691 = vld [vmem:[%s3 + $0x438] sm:$0xf]
        %v3692 = vld [vmem:[%s3 + $0x43c] sm:$0xf]
        %v3693 = vld [vmem:[%s3 + $0x440] sm:$0xf]
        %v3694 = vld [vmem:[%s3 + $0x444] sm:$0xf]
        %v3695 = vld [vmem:[%s3 + $0x448] sm:$0xf]
        %v3696 = vld [vmem:[%s3 + $0x44c] sm:$0xf]
        %v3697 = vld [vmem:[%s3 + $0x450] sm:$0xf]
        %v3698 = vld [vmem:[%s3 + $0x454] sm:$0xf]
        %v3699 = vld [vmem:[%s3 + $0x458] sm:$0xf]
        %v3700 = vld [vmem:[%s3 + $0x45c] sm:$0xf]
        %v3701 = vld [vmem:[%s3 + $0x460] sm:$0xf]
        %v3702 = vld [vmem:[%s3 + $0x464] sm:$0xf]
        %v3703 = vld [vmem:[%s3 + $0x468] sm:$0xf]
        %v3704 = vld [vmem:[%s3 + $0x46c] sm:$0xf]
        %v3705 = vld [vmem:[%s3 + $0x470] sm:$0xf]
        %v3706 = vld [vmem:[%s3 + $0x474] sm:$0xf]
        %v3707 = vld [vmem:[%s3 + $0x478] sm:$0xf]
        %v3708 = vld [vmem:[%s3 + $0x47c] sm:$0xf]
        %v3709 = vld [vmem:[%s3 + $0x480] sm:$0xf]
        %v3710 = vld [vmem:[%s3 + $0x484] sm:$0xf]
        %v3711 = vld [vmem:[%s3 + $0x488] sm:$0xf]
        %v3712 = vld [vmem:[%s3 + $0x48c] sm:$0xf]
        %v3713 = vld [vmem:[%s3 + $0x490] sm:$0xf]
        %v3714 = vld [vmem:[%s3 + $0x494] sm:$0xf]
        %v3715 = vld [vmem:[%s3 + $0x498] sm:$0xf]
        %v3716 = vld [vmem:[%s3 + $0x49c] sm:$0xf]
        %v3717 = vld [vmem:[%s3 + $0x4a0] sm:$0xf]
        %v3718 = vld [vmem:[%s3 + $0x4a4] sm:$0xf]
        %v3719 = vld [vmem:[%s3 + $0x4a8] sm:$0xf]
        %v3720 = vld [vmem:[%s3 + $0x4ac] sm:$0xf]
        %v3721 = vld [vmem:[%s3 + $0x4b0] sm:$0xf]
        %v3722 = vld [vmem:[%s3 + $0x4b4] sm:$0xf]
        %v3723 = vld [vmem:[%s3 + $0x4b8] sm:$0xf]
        %v3724 = vld [vmem:[%s3 + $0x4bc] sm:$0xf]
        %v3725 = vld [vmem:[%s3 + $0x4c0] sm:$0xf]
        %v3726 = vld [vmem:[%s3 + $0x4c4] sm:$0xf]
        %v3727 = vld [vmem:[%s3 + $0x4c8] sm:$0xf]
        %v3728 = vld [vmem:[%s3 + $0x4cc] sm:$0xf]
        %v3729 = vld [vmem:[%s3 + $0x4d0] sm:$0xf]
        %v3730 = vld [vmem:[%s3 + $0x4d4] sm:$0xf]
        %v3731 = vld [vmem:[%s3 + $0x4d8] sm:$0xf]
        %v3732 = vld [vmem:[%s3 + $0x4dc] sm:$0xf]
        %v3733 = vld [vmem:[%s3 + $0x4e0] sm:$0xf]
        %v3734 = vld [vmem:[%s3 + $0x4e4] sm:$0xf]
        %v3735 = vld [vmem:[%s3 + $0x4e8] sm:$0xf]
        %v3736 = vld [vmem:[%s3 + $0x4ec] sm:$0xf]
        %v3737 = vld [vmem:[%s3 + $0x4f0] sm:$0xf]
        %v3738 = vld [vmem:[%s3 + $0x4f4] sm:$0xf]
        %v3739 = vld [vmem:[%s3 + $0x4f8] sm:$0xf]
        %v3740 = vld [vmem:[%s3 + $0x4fc] sm:$0xf]
        %v3741 = vld [vmem:[%s3 + $0x500] sm:$0xf]
        %v3742 = vld [vmem:[%s3 + $0x504] sm:$0xf]
        %v3743 = vld [vmem:[%s3 + $0x508] sm:$0xf]
        %v3744 = vld [vmem:[%s3 + $0x50c] sm:$0xf]
        %v3745 = vld [vmem:[%s3 + $0x510] sm:$0xf]
        %v3746 = vld [vmem:[%s3 + $0x514] sm:$0xf]
        %v3747 = vld [vmem:[%s3 + $0x518] sm:$0xf]
        %v3748 = vld [vmem:[%s3 + $0x51c] sm:$0xf]
        %v3749 = vld [vmem:[%s3 + $0x520] sm:$0xf]
        %v3750 = vld [vmem:[%s3 + $0x524] sm:$0xf]
        %v3751 = vld [vmem:[%s3 + $0x528] sm:$0xf]
        %v3752 = vld [vmem:[%s3 + $0x52c] sm:$0xf]
        %v3753 = vld [vmem:[%s3 + $0x530] sm:$0xf]
        %v3754 = vld [vmem:[%s3 + $0x534] sm:$0xf]
        %v3755 = vld [vmem:[%s3 + $0x538] sm:$0xf]
        %v3756 = vld [vmem:[%s3 + $0x53c] sm:$0xf]
        %v3757 = vld [vmem:[%s3 + $0x540] sm:$0xf]
        %v3758 = vld [vmem:[%s3 + $0x544] sm:$0xf]
        %v3759 = vld [vmem:[%s3 + $0x548] sm:$0xf]
        %v3760 = vld [vmem:[%s3 + $0x54c] sm:$0xf]
        %v3761 = vld [vmem:[%s3 + $0x550] sm:$0xf]
        %v3762 = vld [vmem:[%s3 + $0x554] sm:$0xf]
        %v3763 = vld [vmem:[%s3 + $0x558] sm:$0xf]
        %v3764 = vld [vmem:[%s3 + $0x55c] sm:$0xf]
        %v3765 = vld [vmem:[%s3 + $0x560] sm:$0xf]
        %v3766 = vld [vmem:[%s3 + $0x564] sm:$0xf]
        %v3767 = vld [vmem:[%s3 + $0x568] sm:$0xf]
        %v3768 = vld [vmem:[%s3 + $0x56c] sm:$0xf]
        %v3769 = vld [vmem:[%s3 + $0x570] sm:$0xf]
        %v3770 = vld [vmem:[%s3 + $0x574] sm:$0xf]
        %v3771 = vld [vmem:[%s3 + $0x578] sm:$0xf]
        %v3772 = vld [vmem:[%s3 + $0x57c] sm:$0xf]
        %v3773 = vld [vmem:[%s3 + $0x580] sm:$0xf]
        %v3774 = vld [vmem:[%s3 + $0x584] sm:$0xf]
        %v3775 = vld [vmem:[%s3 + $0x588] sm:$0xf]
        %v3776 = vld [vmem:[%s3 + $0x58c] sm:$0xf]
        %v3777 = vld [vmem:[%s3 + $0x590] sm:$0xf]
        %v3778 = vld [vmem:[%s3 + $0x594] sm:$0xf]
        %v3779 = vld [vmem:[%s3 + $0x598] sm:$0xf]
        %v3780 = vld [vmem:[%s3 + $0x59c] sm:$0xf]
        %v3781 = vld [vmem:[%s3 + $0x5a0] sm:$0xf]
        %v3782 = vld [vmem:[%s3 + $0x5a4] sm:$0xf]
        %v3783 = vld [vmem:[%s3 + $0x5a8] sm:$0xf]
        %v3784 = vld [vmem:[%s3 + $0x5ac] sm:$0xf]
        %v3785 = vld [vmem:[%s3 + $0x5b0] sm:$0xf]
        %v3786 = vld [vmem:[%s3 + $0x5b4] sm:$0xf]
        %v3787 = vld [vmem:[%s3 + $0x5b8] sm:$0xf]
        %v3788 = vld [vmem:[%s3 + $0x5bc] sm:$0xf]
        %v3789 = vld [vmem:[%s3 + $0x5c0] sm:$0xf]
        %v3790 = vld [vmem:[%s3 + $0x5c4] sm:$0xf]
        %v3791 = vld [vmem:[%s3 + $0x5c8] sm:$0xf]
        %v3792 = vld [vmem:[%s3 + $0x5cc] sm:$0xf]
        %v3793 = vld [vmem:[%s3 + $0x5d0] sm:$0xf]
        %v3794 = vld [vmem:[%s3 + $0x5d4] sm:$0xf]
        %v3795 = vld [vmem:[%s3 + $0x5d8] sm:$0xf]
        %v3796 = vld [vmem:[%s3 + $0x5dc] sm:$0xf]
        %v3797 = vld [vmem:[%s3 + $0x5e0] sm:$0xf]
        %v3798 = vld [vmem:[%s3 + $0x5e4] sm:$0xf]
        %v3799 = vld [vmem:[%s3 + $0x5e8] sm:$0xf]
        %v3800 = vld [vmem:[%s3 + $0x5ec] sm:$0xf]
        %v3801 = vld [vmem:[%s3 + $0x5f0] sm:$0xf]
        %v3802 = vld [vmem:[%s3 + $0x5f4] sm:$0xf]
        %v3803 = vld [vmem:[%s3 + $0x5f8] sm:$0xf]
        %v3804 = vld [vmem:[%s3 + $0x5fc] sm:$0xf]
        %v3805 = vld [vmem:[%s3 + $0x600] sm:$0xf]
        %v3806 = vld [vmem:[%s3 + $0x604] sm:$0xf]
        %v3807 = vld [vmem:[%s3 + $0x608] sm:$0xf]
        %v3808 = vld [vmem:[%s3 + $0x60c] sm:$0xf]
        %v3809 = vld [vmem:[%s3 + $0x610] sm:$0xf]
        %v3810 = vld [vmem:[%s3 + $0x614] sm:$0xf]
        %v3811 = vld [vmem:[%s3 + $0x618] sm:$0xf]
        %v3812 = vld [vmem:[%s3 + $0x61c] sm:$0xf]
        %v3813 = vld [vmem:[%s3 + $0x620] sm:$0xf]
        %v3814 = vld [vmem:[%s3 + $0x624] sm:$0xf]
        %v3815 = vld [vmem:[%s3 + $0x628] sm:$0xf]
        %v3816 = vld [vmem:[%s3 + $0x62c] sm:$0xf]
        %v3817 = vld [vmem:[%s3 + $0x630] sm:$0xf]
        %v3818 = vld [vmem:[%s3 + $0x634] sm:$0xf]
        %v3819 = vld [vmem:[%s3 + $0x638] sm:$0xf]
        %v3820 = vld [vmem:[%s3 + $0x63c] sm:$0xf]
        %v3821 = vld [vmem:[%s4] sm:$0x1]
        %v3823 = vlaneseq
        %v3824 = vshrl.u32 %v3823, 7
        %v3825 = vsub.s32 0, %v3824
        %v3826 = vrot.slane %v3821, %v3825
        %v4228 = vunpack.c.l.b16 %v3421
        %v4229 = vunpack.c.l.b16 %v3422
        %v4230 = vunpack.c.l.b16 %v3423
        %v4231 = vunpack.c.l.b16 %v3424
        %v4232 = vunpack.c.l.b16 %v3425
        %v4233 = vunpack.c.l.b16 %v3426
        %v4234 = vunpack.c.l.b16 %v3427
        %v4235 = vunpack.c.l.b16 %v3428
        %v4236 = vunpack.c.l.b16 %v3429
        %v4237 = vunpack.c.l.b16 %v3430
        %v4238 = vunpack.c.l.b16 %v3431
        %v4239 = vunpack.c.l.b16 %v3432
        %v4240 = vunpack.c.l.b16 %v3433
        %v4241 = vunpack.c.l.b16 %v3434
        %v4242 = vunpack.c.l.b16 %v3435
        %v4243 = vunpack.c.l.b16 %v3436
        %v4244 = vunpack.c.l.b16 %v3437
        %v4245 = vunpack.c.l.b16 %v3438
        %v4246 = vunpack.c.l.b16 %v3439
        %v4247 = vunpack.c.l.b16 %v3440
        %v4248 = vunpack.c.l.b16 %v3441
        %v4249 = vunpack.c.l.b16 %v3442
        %v4250 = vunpack.c.l.b16 %v3443
        %v4251 = vunpack.c.l.b16 %v3444
        %v4252 = vunpack.c.l.b16 %v3445
        %v4253 = vunpack.c.l.b16 %v3446
        %v4254 = vunpack.c.l.b16 %v3447
        %v4255 = vunpack.c.l.b16 %v3448
        %v4256 = vunpack.c.l.b16 %v3449
        %v4257 = vunpack.c.l.b16 %v3450
        %v4258 = vunpack.c.l.b16 %v3451
        %v4259 = vunpack.c.l.b16 %v3452
        %v4260 = vunpack.c.l.b16 %v3453
        %v4261 = vunpack.c.l.b16 %v3454
        %v4262 = vunpack.c.l.b16 %v3455
        %v4263 = vunpack.c.l.b16 %v3456
        %v4264 = vunpack.c.l.b16 %v3457
        %v4265 = vunpack.c.l.b16 %v3458
        %v4266 = vunpack.c.l.b16 %v3459
        %v4267 = vunpack.c.l.b16 %v3460
        %v4268 = vunpack.c.l.b16 %v3461
        %v4269 = vunpack.c.l.b16 %v3462
        %v4270 = vunpack.c.l.b16 %v3463
        %v4271 = vunpack.c.l.b16 %v3464
        %v4272 = vunpack.c.l.b16 %v3465
        %v4273 = vunpack.c.l.b16 %v3466
        %v4274 = vunpack.c.l.b16 %v3467
        %v4275 = vunpack.c.l.b16 %v3468
        %v4276 = vunpack.c.l.b16 %v3469
        %v4277 = vunpack.c.l.b16 %v3470
        %v4278 = vunpack.c.l.b16 %v3471
        %v4279 = vunpack.c.l.b16 %v3472
        %v4280 = vunpack.c.l.b16 %v3473
        %v4281 = vunpack.c.l.b16 %v3474
        %v4282 = vunpack.c.l.b16 %v3475
        %v4283 = vunpack.c.l.b16 %v3476
        %v4284 = vunpack.c.l.b16 %v3477
        %v4285 = vunpack.c.l.b16 %v3478
        %v4286 = vunpack.c.l.b16 %v3479
        %v4287 = vunpack.c.l.b16 %v3480
        %v4288 = vunpack.c.l.b16 %v3481
        %v4289 = vunpack.c.l.b16 %v3482
        %v4290 = vunpack.c.l.b16 %v3483
        %v4291 = vunpack.c.l.b16 %v3484
        %v4292 = vunpack.c.l.b16 %v3485
        %v4293 = vunpack.c.l.b16 %v3486
        %v4294 = vunpack.c.l.b16 %v3487
        %v4295 = vunpack.c.l.b16 %v3488
        %v4296 = vunpack.c.l.b16 %v3489
        %v4297 = vunpack.c.l.b16 %v3490
        %v4298 = vunpack.c.l.b16 %v3491
        %v4299 = vunpack.c.l.b16 %v3492
        %v4300 = vunpack.c.l.b16 %v3493
        %v4301 = vunpack.c.l.b16 %v3494
        %v4302 = vunpack.c.l.b16 %v3495
        %v4303 = vunpack.c.l.b16 %v3496
        %v4304 = vunpack.c.l.b16 %v3497
        %v4305 = vunpack.c.l.b16 %v3498
        %v4306 = vunpack.c.l.b16 %v3499
        %v4307 = vunpack.c.l.b16 %v3500
        %v4308 = vunpack.c.l.b16 %v3501
        %v4309 = vunpack.c.l.b16 %v3502
        %v4310 = vunpack.c.l.b16 %v3503
        %v4311 = vunpack.c.l.b16 %v3504
        %v4312 = vunpack.c.l.b16 %v3505
        %v4313 = vunpack.c.l.b16 %v3506
        %v4314 = vunpack.c.l.b16 %v3507
        %v4315 = vunpack.c.l.b16 %v3508
        %v4316 = vunpack.c.l.b16 %v3509
        %v4317 = vunpack.c.l.b16 %v3510
        %v4318 = vunpack.c.l.b16 %v3511
        %v4319 = vunpack.c.l.b16 %v3512
        %v4320 = vunpack.c.l.b16 %v3513
        %v4321 = vunpack.c.l.b16 %v3514
        %v4322 = vunpack.c.l.b16 %v3515
        %v4323 = vunpack.c.l.b16 %v3516
        %v4324 = vunpack.c.l.b16 %v3517
        %v4325 = vunpack.c.l.b16 %v3518
        %v4326 = vunpack.c.l.b16 %v3519
        %v4327 = vunpack.c.l.b16 %v3520
        %v4328 = vunpack.c.l.b16 %v3521
        %v4329 = vunpack.c.l.b16 %v3522
        %v4330 = vunpack.c.l.b16 %v3523
        %v4331 = vunpack.c.l.b16 %v3524
        %v4332 = vunpack.c.l.b16 %v3525
        %v4333 = vunpack.c.l.b16 %v3526
        %v4334 = vunpack.c.l.b16 %v3527
        %v4335 = vunpack.c.l.b16 %v3528
        %v4336 = vunpack.c.l.b16 %v3529
        %v4337 = vunpack.c.l.b16 %v3530
        %v4338 = vunpack.c.l.b16 %v3531
        %v4339 = vunpack.c.l.b16 %v3532
        %v4340 = vunpack.c.l.b16 %v3533
        %v4341 = vunpack.c.l.b16 %v3534
        %v4342 = vunpack.c.l.b16 %v3535
        %v4343 = vunpack.c.l.b16 %v3536
        %v4344 = vunpack.c.l.b16 %v3537
        %v4345 = vunpack.c.l.b16 %v3538
        %v4346 = vunpack.c.l.b16 %v3539
        %v4347 = vunpack.c.l.b16 %v3540
        %v4348 = vunpack.c.l.b16 %v3541
        %v4349 = vunpack.c.l.b16 %v3542
        %v4350 = vunpack.c.l.b16 %v3543
        %v4351 = vunpack.c.l.b16 %v3544
        %v4352 = vunpack.c.l.b16 %v3545
        %v4353 = vunpack.c.l.b16 %v3546
        %v4354 = vunpack.c.l.b16 %v3547
        %v4355 = vunpack.c.l.b16 %v3548
        %v4356 = vunpack.c.l.b16 %v3549
        %v4357 = vunpack.c.l.b16 %v3550
        %v4358 = vunpack.c.l.b16 %v3551
        %v4359 = vunpack.c.l.b16 %v3552
        %v4360 = vunpack.c.l.b16 %v3553
        %v4361 = vunpack.c.l.b16 %v3554
        %v4362 = vunpack.c.l.b16 %v3555
        %v4363 = vunpack.c.l.b16 %v3556
        %v4364 = vunpack.c.l.b16 %v3557
        %v4365 = vunpack.c.l.b16 %v3558
        %v4366 = vunpack.c.l.b16 %v3559
        %v4367 = vunpack.c.l.b16 %v3560
        %v4368 = vunpack.c.l.b16 %v3561
        %v4369 = vunpack.c.l.b16 %v3562
        %v4370 = vunpack.c.l.b16 %v3563
        %v4371 = vunpack.c.l.b16 %v3564
        %v4372 = vunpack.c.l.b16 %v3565
        %v4373 = vunpack.c.l.b16 %v3566
        %v4374 = vunpack.c.l.b16 %v3567
        %v4375 = vunpack.c.l.b16 %v3568
        %v4376 = vunpack.c.l.b16 %v3569
        %v4377 = vunpack.c.l.b16 %v3570
        %v4378 = vunpack.c.l.b16 %v3571
        %v4379 = vunpack.c.l.b16 %v3572
        %v4380 = vunpack.c.l.b16 %v3573
        %v4381 = vunpack.c.l.b16 %v3574
        %v4382 = vunpack.c.l.b16 %v3575
        %v4383 = vunpack.c.l.b16 %v3576
        %v4384 = vunpack.c.l.b16 %v3577
        %v4385 = vunpack.c.l.b16 %v3578
        %v4386 = vunpack.c.l.b16 %v3579
        %v4387 = vunpack.c.l.b16 %v3580
        %v4388 = vunpack.c.l.b16 %v3581
        %v4389 = vunpack.c.l.b16 %v3582
        %v4390 = vunpack.c.l.b16 %v3583
        %v4391 = vunpack.c.l.b16 %v3584
        %v4392 = vunpack.c.l.b16 %v3585
        %v4393 = vunpack.c.l.b16 %v3586
        %v4394 = vunpack.c.l.b16 %v3587
        %v4395 = vunpack.c.l.b16 %v3588
        %v4396 = vunpack.c.l.b16 %v3589
        %v4397 = vunpack.c.l.b16 %v3590
        %v4398 = vunpack.c.l.b16 %v3591
        %v4399 = vunpack.c.l.b16 %v3592
        %v4400 = vunpack.c.l.b16 %v3593
        %v4401 = vunpack.c.l.b16 %v3594
        %v4402 = vunpack.c.l.b16 %v3595
        %v4403 = vunpack.c.l.b16 %v3596
        %v4404 = vunpack.c.l.b16 %v3597
        %v4405 = vunpack.c.l.b16 %v3598
        %v4406 = vunpack.c.l.b16 %v3599
        %v4407 = vunpack.c.l.b16 %v3600
        %v4408 = vunpack.c.l.b16 %v3601
        %v4409 = vunpack.c.l.b16 %v3602
        %v4410 = vunpack.c.l.b16 %v3603
        %v4411 = vunpack.c.l.b16 %v3604
        %v4412 = vunpack.c.l.b16 %v3605
        %v4413 = vunpack.c.l.b16 %v3606
        %v4414 = vunpack.c.l.b16 %v3607
        %v4415 = vunpack.c.l.b16 %v3608
        %v4416 = vunpack.c.l.b16 %v3609
        %v4417 = vunpack.c.l.b16 %v3610
        %v4418 = vunpack.c.l.b16 %v3611
        %v4419 = vunpack.c.l.b16 %v3612
        %v4420 = vunpack.c.l.b16 %v3613
        %v4421 = vunpack.c.l.b16 %v3614
        %v4422 = vunpack.c.l.b16 %v3615
        %v4423 = vunpack.c.l.b16 %v3616
        %v4424 = vunpack.c.l.b16 %v3617
        %v4425 = vunpack.c.l.b16 %v3618
        %v4426 = vunpack.c.l.b16 %v3619
        %v4427 = vunpack.c.l.b16 %v3620
        %v4428 = vunpack.c.l.b16 %v3621
        %v4429 = vunpack.c.l.b16 %v3622
        %v4430 = vunpack.c.l.b16 %v3623
        %v4431 = vunpack.c.l.b16 %v3624
        %v4432 = vunpack.c.l.b16 %v3625
        %v4433 = vunpack.c.l.b16 %v3626
        %v4434 = vunpack.c.l.b16 %v3627
        %v4435 = vunpack.c.l.b16 %v3628
        %v4436 = vunpack.c.l.b16 %v3629
        %v4437 = vunpack.c.l.b16 %v3630
        %v4438 = vunpack.c.l.b16 %v3631
        %v4439 = vunpack.c.l.b16 %v3632
        %v4440 = vunpack.c.l.b16 %v3633
        %v4441 = vunpack.c.l.b16 %v3634
        %v4442 = vunpack.c.l.b16 %v3635
        %v4443 = vunpack.c.l.b16 %v3636
        %v4444 = vunpack.c.l.b16 %v3637
        %v4445 = vunpack.c.l.b16 %v3638
        %v4446 = vunpack.c.l.b16 %v3639
        %v4447 = vunpack.c.l.b16 %v3640
        %v4448 = vunpack.c.l.b16 %v3641
        %v4449 = vunpack.c.l.b16 %v3642
        %v4450 = vunpack.c.l.b16 %v3643
        %v4451 = vunpack.c.l.b16 %v3644
        %v4452 = vunpack.c.l.b16 %v3645
        %v4453 = vunpack.c.l.b16 %v3646
        %v4454 = vunpack.c.l.b16 %v3647
        %v4455 = vunpack.c.l.b16 %v3648
        %v4456 = vunpack.c.l.b16 %v3649
        %v4457 = vunpack.c.l.b16 %v3650
        %v4458 = vunpack.c.l.b16 %v3651
        %v4459 = vunpack.c.l.b16 %v3652
        %v4460 = vunpack.c.l.b16 %v3653
        %v4461 = vunpack.c.l.b16 %v3654
        %v4462 = vunpack.c.l.b16 %v3655
        %v4463 = vunpack.c.l.b16 %v3656
        %v4464 = vunpack.c.l.b16 %v3657
        %v4465 = vunpack.c.l.b16 %v3658
        %v4466 = vunpack.c.l.b16 %v3659
        %v4467 = vunpack.c.l.b16 %v3660
        %v4468 = vunpack.c.l.b16 %v3661
        %v4469 = vunpack.c.l.b16 %v3662
        %v4470 = vunpack.c.l.b16 %v3663
        %v4471 = vunpack.c.l.b16 %v3664
        %v4472 = vunpack.c.l.b16 %v3665
        %v4473 = vunpack.c.l.b16 %v3666
        %v4474 = vunpack.c.l.b16 %v3667
        %v4475 = vunpack.c.l.b16 %v3668
        %v4476 = vunpack.c.l.b16 %v3669
        %v4477 = vunpack.c.l.b16 %v3670
        %v4478 = vunpack.c.l.b16 %v3671
        %v4479 = vunpack.c.l.b16 %v3672
        %v4480 = vunpack.c.l.b16 %v3673
        %v4481 = vunpack.c.l.b16 %v3674
        %v4482 = vunpack.c.l.b16 %v3675
        %v4483 = vunpack.c.l.b16 %v3676
        %v4484 = vunpack.c.l.b16 %v3677
        %v4485 = vunpack.c.l.b16 %v3678
        %v4486 = vunpack.c.l.b16 %v3679
        %v4487 = vunpack.c.l.b16 %v3680
        %v4488 = vunpack.c.l.b16 %v3681
        %v4489 = vunpack.c.l.b16 %v3682
        %v4490 = vunpack.c.l.b16 %v3683
        %v4491 = vunpack.c.l.b16 %v3684
        %v4492 = vunpack.c.l.b16 %v3685
        %v4493 = vunpack.c.l.b16 %v3686
        %v4494 = vunpack.c.l.b16 %v3687
        %v4495 = vunpack.c.l.b16 %v3688
        %v4496 = vunpack.c.l.b16 %v3689
        %v4497 = vunpack.c.l.b16 %v3690
        %v4498 = vunpack.c.l.b16 %v3691
        %v4499 = vunpack.c.l.b16 %v3692
        %v4500 = vunpack.c.l.b16 %v3693
        %v4501 = vunpack.c.l.b16 %v3694
        %v4502 = vunpack.c.l.b16 %v3695
        %v4503 = vunpack.c.l.b16 %v3696
        %v4504 = vunpack.c.l.b16 %v3697
        %v4505 = vunpack.c.l.b16 %v3698
        %v4506 = vunpack.c.l.b16 %v3699
        %v4507 = vunpack.c.l.b16 %v3700
        %v4508 = vunpack.c.l.b16 %v3701
        %v4509 = vunpack.c.l.b16 %v3702
        %v4510 = vunpack.c.l.b16 %v3703
        %v4511 = vunpack.c.l.b16 %v3704
        %v4512 = vunpack.c.l.b16 %v3705
        %v4513 = vunpack.c.l.b16 %v3706
        %v4514 = vunpack.c.l.b16 %v3707
        %v4515 = vunpack.c.l.b16 %v3708
        %v4516 = vunpack.c.l.b16 %v3709
        %v4517 = vunpack.c.l.b16 %v3710
        %v4518 = vunpack.c.l.b16 %v3711
        %v4519 = vunpack.c.l.b16 %v3712
        %v4520 = vunpack.c.l.b16 %v3713
        %v4521 = vunpack.c.l.b16 %v3714
        %v4522 = vunpack.c.l.b16 %v3715
        %v4523 = vunpack.c.l.b16 %v3716
        %v4524 = vunpack.c.l.b16 %v3717
        %v4525 = vunpack.c.l.b16 %v3718
        %v4526 = vunpack.c.l.b16 %v3719
        %v4527 = vunpack.c.l.b16 %v3720
        %v4528 = vunpack.c.l.b16 %v3721
        %v4529 = vunpack.c.l.b16 %v3722
        %v4530 = vunpack.c.l.b16 %v3723
        %v4531 = vunpack.c.l.b16 %v3724
        %v4532 = vunpack.c.l.b16 %v3725
        %v4533 = vunpack.c.l.b16 %v3726
        %v4534 = vunpack.c.l.b16 %v3727
        %v4535 = vunpack.c.l.b16 %v3728
        %v4536 = vunpack.c.l.b16 %v3729
        %v4537 = vunpack.c.l.b16 %v3730
        %v4538 = vunpack.c.l.b16 %v3731
        %v4539 = vunpack.c.l.b16 %v3732
        %v4540 = vunpack.c.l.b16 %v3733
        %v4541 = vunpack.c.l.b16 %v3734
        %v4542 = vunpack.c.l.b16 %v3735
        %v4543 = vunpack.c.l.b16 %v3736
        %v4544 = vunpack.c.l.b16 %v3737
        %v4545 = vunpack.c.l.b16 %v3738
        %v4546 = vunpack.c.l.b16 %v3739
        %v4547 = vunpack.c.l.b16 %v3740
        %v4548 = vunpack.c.l.b16 %v3741
        %v4549 = vunpack.c.l.b16 %v3742
        %v4550 = vunpack.c.l.b16 %v3743
        %v4551 = vunpack.c.l.b16 %v3744
        %v4552 = vunpack.c.l.b16 %v3745
        %v4553 = vunpack.c.l.b16 %v3746
        %v4554 = vunpack.c.l.b16 %v3747
        %v4555 = vunpack.c.l.b16 %v3748
        %v4556 = vunpack.c.l.b16 %v3749
        %v4557 = vunpack.c.l.b16 %v3750
        %v4558 = vunpack.c.l.b16 %v3751
        %v4559 = vunpack.c.l.b16 %v3752
        %v4560 = vunpack.c.l.b16 %v3753
        %v4561 = vunpack.c.l.b16 %v3754
        %v4562 = vunpack.c.l.b16 %v3755
        %v4563 = vunpack.c.l.b16 %v3756
        %v4564 = vunpack.c.l.b16 %v3757
        %v4565 = vunpack.c.l.b16 %v3758
        %v4566 = vunpack.c.l.b16 %v3759
        %v4567 = vunpack.c.l.b16 %v3760
        %v4568 = vunpack.c.l.b16 %v3761
        %v4569 = vunpack.c.l.b16 %v3762
        %v4570 = vunpack.c.l.b16 %v3763
        %v4571 = vunpack.c.l.b16 %v3764
        %v4572 = vunpack.c.l.b16 %v3765
        %v4573 = vunpack.c.l.b16 %v3766
        %v4574 = vunpack.c.l.b16 %v3767
        %v4575 = vunpack.c.l.b16 %v3768
        %v4576 = vunpack.c.l.b16 %v3769
        %v4577 = vunpack.c.l.b16 %v3770
        %v4578 = vunpack.c.l.b16 %v3771
        %v4579 = vunpack.c.l.b16 %v3772
        %v4580 = vunpack.c.l.b16 %v3773
        %v4581 = vunpack.c.l.b16 %v3774
        %v4582 = vunpack.c.l.b16 %v3775
        %v4583 = vunpack.c.l.b16 %v3776
        %v4584 = vunpack.c.l.b16 %v3777
        %v4585 = vunpack.c.l.b16 %v3778
        %v4586 = vunpack.c.l.b16 %v3779
        %v4587 = vunpack.c.l.b16 %v3780
        %v4588 = vunpack.c.l.b16 %v3781
        %v4589 = vunpack.c.l.b16 %v3782
        %v4590 = vunpack.c.l.b16 %v3783
        %v4591 = vunpack.c.l.b16 %v3784
        %v4592 = vunpack.c.l.b16 %v3785
        %v4593 = vunpack.c.l.b16 %v3786
        %v4594 = vunpack.c.l.b16 %v3787
        %v4595 = vunpack.c.l.b16 %v3788
        %v4596 = vunpack.c.l.b16 %v3789
        %v4597 = vunpack.c.l.b16 %v3790
        %v4598 = vunpack.c.l.b16 %v3791
        %v4599 = vunpack.c.l.b16 %v3792
        %v4600 = vunpack.c.l.b16 %v3793
        %v4601 = vunpack.c.l.b16 %v3794
        %v4602 = vunpack.c.l.b16 %v3795
        %v4603 = vunpack.c.l.b16 %v3796
        %v4604 = vunpack.c.l.b16 %v3797
        %v4605 = vunpack.c.l.b16 %v3798
        %v4606 = vunpack.c.l.b16 %v3799
        %v4607 = vunpack.c.l.b16 %v3800
        %v4608 = vunpack.c.l.b16 %v3801
        %v4609 = vunpack.c.l.b16 %v3802
        %v4610 = vunpack.c.l.b16 %v3803
        %v4611 = vunpack.c.l.b16 %v3804
        %v4612 = vunpack.c.l.b16 %v3805
        %v4613 = vunpack.c.l.b16 %v3806
        %v4614 = vunpack.c.l.b16 %v3807
        %v4615 = vunpack.c.l.b16 %v3808
        %v4616 = vunpack.c.l.b16 %v3809
        %v4617 = vunpack.c.l.b16 %v3810
        %v4618 = vunpack.c.l.b16 %v3811
        %v4619 = vunpack.c.l.b16 %v3812
        %v4620 = vunpack.c.l.b16 %v3813
        %v4621 = vunpack.c.l.b16 %v3814
        %v4622 = vunpack.c.l.b16 %v3815
        %v4623 = vunpack.c.l.b16 %v3816
        %v4624 = vunpack.c.l.b16 %v3817
        %v4625 = vunpack.c.l.b16 %v3818
        %v4626 = vunpack.c.l.b16 %v3819
        %v4627 = vunpack.c.l.b16 %v3820
        %v4628 = vpack.c.b16 %v4229, %v4228
        %v4629 = vpack.c.b16 %v4231, %v4230
        %v4630 = vpack.c.b16 %v4233, %v4232
        %v4631 = vpack.c.b16 %v4235, %v4234
        %v4632 = vpack.c.b16 %v4237, %v4236
        %v4633 = vpack.c.b16 %v4239, %v4238
        %v4634 = vpack.c.b16 %v4241, %v4240
        %v4635 = vpack.c.b16 %v4243, %v4242
        %v4636 = vpack.c.b16 %v4245, %v4244
        %v4637 = vpack.c.b16 %v4247, %v4246
        %v4638 = vpack.c.b16 %v4249, %v4248
        %v4639 = vpack.c.b16 %v4251, %v4250
        %v4640 = vpack.c.b16 %v4253, %v4252
        %v4641 = vpack.c.b16 %v4255, %v4254
        %v4642 = vpack.c.b16 %v4257, %v4256
        %v4643 = vpack.c.b16 %v4259, %v4258
        %v4644 = vpack.c.b16 %v4261, %v4260
        %v4645 = vpack.c.b16 %v4263, %v4262
        %v4646 = vpack.c.b16 %v4265, %v4264
        %v4647 = vpack.c.b16 %v4267, %v4266
        %v4648 = vpack.c.b16 %v4269, %v4268
        %v4649 = vpack.c.b16 %v4271, %v4270
        %v4650 = vpack.c.b16 %v4273, %v4272
        %v4651 = vpack.c.b16 %v4275, %v4274
        %v4652 = vpack.c.b16 %v4277, %v4276
        %v4653 = vpack.c.b16 %v4279, %v4278
        %v4654 = vpack.c.b16 %v4281, %v4280
        %v4655 = vpack.c.b16 %v4283, %v4282
        %v4656 = vpack.c.b16 %v4285, %v4284
        %v4657 = vpack.c.b16 %v4287, %v4286
        %v4658 = vpack.c.b16 %v4289, %v4288
        %v4659 = vpack.c.b16 %v4291, %v4290
        %v4660 = vpack.c.b16 %v4293, %v4292
        %v4661 = vpack.c.b16 %v4295, %v4294
        %v4662 = vpack.c.b16 %v4297, %v4296
        %v4663 = vpack.c.b16 %v4299, %v4298
        %v4664 = vpack.c.b16 %v4301, %v4300
        %v4665 = vpack.c.b16 %v4303, %v4302
        %v4666 = vpack.c.b16 %v4305, %v4304
        %v4667 = vpack.c.b16 %v4307, %v4306
        %v4668 = vpack.c.b16 %v4309, %v4308
        %v4669 = vpack.c.b16 %v4311, %v4310
        %v4670 = vpack.c.b16 %v4313, %v4312
        %v4671 = vpack.c.b16 %v4315, %v4314
        %v4672 = vpack.c.b16 %v4317, %v4316
        %v4673 = vpack.c.b16 %v4319, %v4318
        %v4674 = vpack.c.b16 %v4321, %v4320
        %v4675 = vpack.c.b16 %v4323, %v4322
        %v4676 = vpack.c.b16 %v4325, %v4324
        %v4677 = vpack.c.b16 %v4327, %v4326
        %v4678 = vpack.c.b16 %v4329, %v4328
        %v4679 = vpack.c.b16 %v4331, %v4330
        %v4680 = vpack.c.b16 %v4333, %v4332
        %v4681 = vpack.c.b16 %v4335, %v4334
        %v4682 = vpack.c.b16 %v4337, %v4336
        %v4683 = vpack.c.b16 %v4339, %v4338
        %v4684 = vpack.c.b16 %v4341, %v4340
        %v4685 = vpack.c.b16 %v4343, %v4342
        %v4686 = vpack.c.b16 %v4345, %v4344
        %v4687 = vpack.c.b16 %v4347, %v4346
        %v4688 = vpack.c.b16 %v4349, %v4348
        %v4689 = vpack.c.b16 %v4351, %v4350
        %v4690 = vpack.c.b16 %v4353, %v4352
        %v4691 = vpack.c.b16 %v4355, %v4354
        %v4692 = vpack.c.b16 %v4357, %v4356
        %v4693 = vpack.c.b16 %v4359, %v4358
        %v4694 = vpack.c.b16 %v4361, %v4360
        %v4695 = vpack.c.b16 %v4363, %v4362
        %v4696 = vpack.c.b16 %v4365, %v4364
        %v4697 = vpack.c.b16 %v4367, %v4366
        %v4698 = vpack.c.b16 %v4369, %v4368
        %v4699 = vpack.c.b16 %v4371, %v4370
        %v4700 = vpack.c.b16 %v4373, %v4372
        %v4701 = vpack.c.b16 %v4375, %v4374
        %v4702 = vpack.c.b16 %v4377, %v4376
        %v4703 = vpack.c.b16 %v4379, %v4378
        %v4704 = vpack.c.b16 %v4381, %v4380
        %v4705 = vpack.c.b16 %v4383, %v4382
        %v4706 = vpack.c.b16 %v4385, %v4384
        %v4707 = vpack.c.b16 %v4387, %v4386
        %v4708 = vpack.c.b16 %v4389, %v4388
        %v4709 = vpack.c.b16 %v4391, %v4390
        %v4710 = vpack.c.b16 %v4393, %v4392
        %v4711 = vpack.c.b16 %v4395, %v4394
        %v4712 = vpack.c.b16 %v4397, %v4396
        %v4713 = vpack.c.b16 %v4399, %v4398
        %v4714 = vpack.c.b16 %v4401, %v4400
        %v4715 = vpack.c.b16 %v4403, %v4402
        %v4716 = vpack.c.b16 %v4405, %v4404
        %v4717 = vpack.c.b16 %v4407, %v4406
        %v4718 = vpack.c.b16 %v4409, %v4408
        %v4719 = vpack.c.b16 %v4411, %v4410
        %v4720 = vpack.c.b16 %v4413, %v4412
        %v4721 = vpack.c.b16 %v4415, %v4414
        %v4722 = vpack.c.b16 %v4417, %v4416
        %v4723 = vpack.c.b16 %v4419, %v4418
        %v4724 = vpack.c.b16 %v4421, %v4420
        %v4725 = vpack.c.b16 %v4423, %v4422
        %v4726 = vpack.c.b16 %v4425, %v4424
        %v4727 = vpack.c.b16 %v4427, %v4426
        %v4728 = vpack.c.b16 %v4429, %v4428
        %v4729 = vpack.c.b16 %v4431, %v4430
        %v4730 = vpack.c.b16 %v4433, %v4432
        %v4731 = vpack.c.b16 %v4435, %v4434
        %v4732 = vpack.c.b16 %v4437, %v4436
        %v4733 = vpack.c.b16 %v4439, %v4438
        %v4734 = vpack.c.b16 %v4441, %v4440
        %v4735 = vpack.c.b16 %v4443, %v4442
        %v4736 = vpack.c.b16 %v4445, %v4444
        %v4737 = vpack.c.b16 %v4447, %v4446
        %v4738 = vpack.c.b16 %v4449, %v4448
        %v4739 = vpack.c.b16 %v4451, %v4450
        %v4740 = vpack.c.b16 %v4453, %v4452
        %v4741 = vpack.c.b16 %v4455, %v4454
        %v4742 = vpack.c.b16 %v4457, %v4456
        %v4743 = vpack.c.b16 %v4459, %v4458
        %v4744 = vpack.c.b16 %v4461, %v4460
        %v4745 = vpack.c.b16 %v4463, %v4462
        %v4746 = vpack.c.b16 %v4465, %v4464
        %v4747 = vpack.c.b16 %v4467, %v4466
        %v4748 = vpack.c.b16 %v4469, %v4468
        %v4749 = vpack.c.b16 %v4471, %v4470
        %v4750 = vpack.c.b16 %v4473, %v4472
        %v4751 = vpack.c.b16 %v4475, %v4474
        %v4752 = vpack.c.b16 %v4477, %v4476
        %v4753 = vpack.c.b16 %v4479, %v4478
        %v4754 = vpack.c.b16 %v4481, %v4480
        %v4755 = vpack.c.b16 %v4483, %v4482
        %v4756 = vpack.c.b16 %v4485, %v4484
        %v4757 = vpack.c.b16 %v4487, %v4486
        %v4758 = vpack.c.b16 %v4489, %v4488
        %v4759 = vpack.c.b16 %v4491, %v4490
        %v4760 = vpack.c.b16 %v4493, %v4492
        %v4761 = vpack.c.b16 %v4495, %v4494
        %v4762 = vpack.c.b16 %v4497, %v4496
        %v4763 = vpack.c.b16 %v4499, %v4498
        %v4764 = vpack.c.b16 %v4501, %v4500
        %v4765 = vpack.c.b16 %v4503, %v4502
        %v4766 = vpack.c.b16 %v4505, %v4504
        %v4767 = vpack.c.b16 %v4507, %v4506
        %v4768 = vpack.c.b16 %v4509, %v4508
        %v4769 = vpack.c.b16 %v4511, %v4510
        %v4770 = vpack.c.b16 %v4513, %v4512
        %v4771 = vpack.c.b16 %v4515, %v4514
        %v4772 = vpack.c.b16 %v4517, %v4516
        %v4773 = vpack.c.b16 %v4519, %v4518
        %v4774 = vpack.c.b16 %v4521, %v4520
        %v4775 = vpack.c.b16 %v4523, %v4522
        %v4776 = vpack.c.b16 %v4525, %v4524
        %v4777 = vpack.c.b16 %v4527, %v4526
        %v4778 = vpack.c.b16 %v4529, %v4528
        %v4779 = vpack.c.b16 %v4531, %v4530
        %v4780 = vpack.c.b16 %v4533, %v4532
        %v4781 = vpack.c.b16 %v4535, %v4534
        %v4782 = vpack.c.b16 %v4537, %v4536
        %v4783 = vpack.c.b16 %v4539, %v4538
        %v4784 = vpack.c.b16 %v4541, %v4540
        %v4785 = vpack.c.b16 %v4543, %v4542
        %v4786 = vpack.c.b16 %v4545, %v4544
        %v4787 = vpack.c.b16 %v4547, %v4546
        %v4788 = vpack.c.b16 %v4549, %v4548
        %v4789 = vpack.c.b16 %v4551, %v4550
        %v4790 = vpack.c.b16 %v4553, %v4552
        %v4791 = vpack.c.b16 %v4555, %v4554
        %v4792 = vpack.c.b16 %v4557, %v4556
        %v4793 = vpack.c.b16 %v4559, %v4558
        %v4794 = vpack.c.b16 %v4561, %v4560
        %v4795 = vpack.c.b16 %v4563, %v4562
        %v4796 = vpack.c.b16 %v4565, %v4564
        %v4797 = vpack.c.b16 %v4567, %v4566
        %v4798 = vpack.c.b16 %v4569, %v4568
        %v4799 = vpack.c.b16 %v4571, %v4570
        %v4800 = vpack.c.b16 %v4573, %v4572
        %v4801 = vpack.c.b16 %v4575, %v4574
        %v4802 = vpack.c.b16 %v4577, %v4576
        %v4803 = vpack.c.b16 %v4579, %v4578
        %v4804 = vpack.c.b16 %v4581, %v4580
        %v4805 = vpack.c.b16 %v4583, %v4582
        %v4806 = vpack.c.b16 %v4585, %v4584
        %v4807 = vpack.c.b16 %v4587, %v4586
        %v4808 = vpack.c.b16 %v4589, %v4588
        %v4809 = vpack.c.b16 %v4591, %v4590
        %v4810 = vpack.c.b16 %v4593, %v4592
        %v4811 = vpack.c.b16 %v4595, %v4594
        %v4812 = vpack.c.b16 %v4597, %v4596
        %v4813 = vpack.c.b16 %v4599, %v4598
        %v4814 = vpack.c.b16 %v4601, %v4600
        %v4815 = vpack.c.b16 %v4603, %v4602
        %v4816 = vpack.c.b16 %v4605, %v4604
        %v4817 = vpack.c.b16 %v4607, %v4606
        %v4818 = vpack.c.b16 %v4609, %v4608
        %v4819 = vpack.c.b16 %v4611, %v4610
        %v4820 = vpack.c.b16 %v4613, %v4612
        %v4821 = vpack.c.b16 %v4615, %v4614
        %v4822 = vpack.c.b16 %v4617, %v4616
        %v4823 = vpack.c.b16 %v4619, %v4618
        %v4824 = vpack.c.b16 %v4621, %v4620
        %v4825 = vpack.c.b16 %v4623, %v4622
        %v4826 = vpack.c.b16 %v4625, %v4624
        %v4827 = vpack.c.b16 %v4627, %v4626
        %5028 = vmatprep.subr.bf16.mxu0 0
        %5029 = vmatpush1.bf16.msra.mxu0 %v4628
        %5030 = vmatprep.subr.bf16.mxu0 0
        %5031 = vmatpush1.bf16.msra.mxu0 %v4629
        %5032 = vmatprep.subr.bf16.mxu0 0
        %5033 = vmatpush1.bf16.msra.mxu0 %v4630
        %5034 = vmatprep.subr.bf16.mxu0 0
        %5035 = vmatpush1.bf16.msra.mxu0 %v4631
        %5036 = vmatprep.subr.bf16.mxu0 0
        %5037 = vmatpush1.bf16.msra.mxu0 %v4632
        %5038 = vmatprep.subr.bf16.mxu0 0
        %5039 = vmatpush1.bf16.msra.mxu0 %v4633
        %5040 = vmatprep.subr.bf16.mxu0 0
        %5041 = vmatpush1.bf16.msra.mxu0 %v4634
        %5042 = vmatprep.subr.bf16.mxu0 0
        %5043 = vmatpush1.bf16.msra.mxu0 %v4635
        %5044 = vmatprep.subr.bf16.mxu0 0
        %5045 = vmatpush1.bf16.msra.mxu0 %v4636
        %5046 = vmatprep.subr.bf16.mxu0 0
        %5047 = vmatpush1.bf16.msra.mxu0 %v4637
        %5048 = vmatprep.subr.bf16.mxu0 0
        %5049 = vmatpush1.bf16.msra.mxu0 %v4638
        %5050 = vmatprep.subr.bf16.mxu0 0
        %5051 = vmatpush1.bf16.msra.mxu0 %v4639
        %5052 = vmatprep.subr.bf16.mxu0 0
        %5053 = vmatpush1.bf16.msra.mxu0 %v4640
        %5054 = vmatprep.subr.bf16.mxu0 0
        %5055 = vmatpush1.bf16.msra.mxu0 %v4641
        %5056 = vmatprep.subr.bf16.mxu0 0
        %5057 = vmatpush1.bf16.msra.mxu0 %v4642
        %5058 = vmatprep.subr.bf16.mxu0 0
        %5059 = vmatpush1.bf16.msra.mxu0 %v4643
        %5060 = vmatprep.mubr.bf16.mxu0 %v1681
        %5061 = vmatmul.mubr.bf16.gmra.mrb[0].mxu0 %v1648
        %v5062 = vpop.f32.mrb[0].mxu0
        %v5063 = vadd.f32 %v3826, %v5062
        %v5064 = vpop.f32.mrb[0].mxu0
        %v5065 = vpop.f32.mrb[0].mxu0
        %v5066 = vadd.f32 %v3826, %v5065
        %v5067 = vpop.f32.mrb[0].mxu0
        %5068 = vmatprep.mubr.bf16.mxu0 %v1689
        %5069 = vmatmul.mubr.bf16.gmra.mrb[0].mxu0 %v1649
        %v5070 = vpop.f32.mrb[0].mxu0
        %v5071 = vadd.f32 %v3826, %v5070
        %v5072 = vpop.f32.mrb[0].mxu0
        %v5073 = vpop.f32.mrb[0].mxu0
        %v5074 = vadd.f32 %v3826, %v5073
        %v5075 = vpop.f32.mrb[0].mxu0
        %5076 = vmatprep.mubr.bf16.mxu0 %v1697
        %5077 = vmatmul.mubr.bf16.gmra.mrb[0].mxu0 %v1650
        %v5078 = vpop.f32.mrb[0].mxu0
        %v5079 = vadd.f32 %v3826, %v5078
        %v5080 = vpop.f32.mrb[0].mxu0
        %v5081 = vpop.f32.mrb[0].mxu0
        %v5082 = vadd.f32 %v3826, %v5081
        %v5083 = vpop.f32.mrb[0].mxu0
        %5084 = vmatprep.mubr.bf16.mxu0 %v1705
        %5085 = vmatmul.mubr.bf16.gmra.mrb[0].mxu0 %v1651
        %v5086 = vpop.f32.mrb[0].mxu0
        %v5087 = vadd.f32 %v3826, %v5086
        %v5088 = vpop.f32.mrb[0].mxu0
        %v5089 = vpop.f32.mrb[0].mxu0
        %v5090 = vadd.f32 %v3826, %v5089
        %v5091 = vpop.f32.mrb[0].mxu0
        %5092 = vmatprep.mubr.bf16.mxu0 %v1713
        %5093 = vmatmul.mubr.bf16.gmra.mrb[0].mxu0 %v1652
        %v5094 = vpop.f32.mrb[0].mxu0
        %v5095 = vadd.f32 %v3826, %v5094
        %v5096 = vpop.f32.mrb[0].mxu0
        %v5097 = vpop.f32.mrb[0].mxu0
        %v5098 = vadd.f32 %v3826, %v5097
        %v5099 = vpop.f32.mrb[0].mxu0
        %5100 = vmatprep.mubr.bf16.mxu0 %v1721
        %5101 = vmatmul.mubr.bf16.gmra.mrb[0].mxu0 %v1653
        %v5102 = vpop.f32.mrb[0].mxu0
        %v5103 = vadd.f32 %v3826, %v5102
        %v5104 = vpop.f32.mrb[0].mxu0
        %v5105 = vpop.f32.mrb[0].mxu0
        %v5106 = vadd.f32 %v3826, %v5105
        %v5107 = vpop.f32.mrb[0].mxu0
        %5108 = vmatprep.mubr.bf16.mxu0 %v1729
        %5109 = vmatmul.mubr.bf16.gmra.mrb[0].mxu0 %v1654
        %v5110 = vpop.f32.mrb[0].mxu0
        %v5111 = vadd.f32 %v3826, %v5110
        %v5112 = vpop.f32.mrb[0].mxu0
        %v5113 = vpop.f32.mrb[0].mxu0
        %v5114 = vadd.f32 %v3826, %v5113
        %v5115 = vpop.f32.mrb[0].mxu0
        %5116 = vmatprep.mubr.bf16.mxu0 %v1737
        %5117 = vmatmul.mubr.bf16.gmra.mrb[0].mxu0 %v1655
        %v5118 = vpop.f32.mrb[0].mxu0
        %v5119 = vadd.f32 %v3826, %v5118
        %v5120 = vpop.f32.mrb[0].mxu0
        %v5121 = vpop.f32.mrb[0].mxu0
        %v5122 = vadd.f32 %v3826, %v5121
        %v5123 = vpop.f32.mrb[0].mxu0
        %5124 = vmatprep.mubr.bf16.mxu0 %v1745
        %5125 = vmatmul.mubr.bf16.gmra.mrb[0].mxu0 %v1656
        %v5126 = vpop.f32.mrb[0].mxu0
        %v5127 = vadd.f32 %v3826, %v5126
        %v5128 = vpop.f32.mrb[0].mxu0
        %v5129 = vpop.f32.mrb[0].mxu0
        %v5130 = vadd.f32 %v3826, %v5129
        %v5131 = vpop.f32.mrb[0].mxu0
        %5132 = vdwg.mxu0
        %5133 = vmatprep.subr.bf16.mxu0 0
        %5134 = vmatpush1.bf16.msra.mxu0 %v4644
        %5135 = vmatprep.subr.bf16.mxu0 0
        %5136 = vmatpush1.bf16.msra.mxu0 %v4645
        %5137 = vmatprep.subr.bf16.mxu0 0
        %5138 = vmatpush1.bf16.msra.mxu0 %v4646
        %5139 = vmatprep.subr.bf16.mxu0 0
        %5140 = vmatpush1.bf16.msra.mxu0 %v4647
        %5141 = vmatprep.subr.bf16.mxu0 0
        %5142 = vmatpush1.bf16.msra.mxu0 %v4648
        %5143 = vmatprep.subr.bf16.mxu0 0
        %5144 = vmatpush1.bf16.msra.mxu0 %v4649
        %5145 = vmatprep.subr.bf16.mxu0 0
        %5146 = vmatpush1.bf16.msra.mxu0 %v4650
        %5147 = vmatprep.subr.bf16.mxu0 0
        %5148 = vmatpush1.bf16.msra.mxu0 %v4651
        %5149 = vmatprep.subr.bf16.mxu0 0
        %5150 = vmatpush1.bf16.msra.mxu0 %v4652
        %5151 = vmatprep.subr.bf16.mxu0 0
        %5152 = vmatpush1.bf16.msra.mxu0 %v4653
        %5153 = vmatprep.subr.bf16.mxu0 0
        %5154 = vmatpush1.bf16.msra.mxu0 %v4654
        %5155 = vmatprep.subr.bf16.mxu0 0
        %5156 = vmatpush1.bf16.msra.mxu0 %v4655
        %5157 = vmatprep.subr.bf16.mxu0 0
        %5158 = vmatpush1.bf16.msra.mxu0 %v4656
        %5159 = vmatprep.subr.bf16.mxu0 0
        %5160 = vmatpush1.bf16.msra.mxu0 %v4657
        %5161 = vmatprep.subr.bf16.mxu0 0
        %5162 = vmatpush1.bf16.msra.mxu0 %v4658
        %5163 = vmatprep.subr.bf16.mxu0 0
        %5164 = vmatpush1.bf16.msra.mxu0 %v4659
        %5165 = vmatprep.mubr.bf16.mxu0 %v1802
        %5166 = vmatmul.mubr.bf16.gmra.mrb[0].mxu0 %v1761
        %v5167 = vpop.f32.mrb[0].mxu0
        %v5168 = vadd.f32 %v5063, %v5167
        %v5169 = vpop.f32.mrb[0].mxu0
        %v5170 = vpop.f32.mrb[0].mxu0
        %v5171 = vadd.f32 %v5066, %v5170
        %v5172 = vpop.f32.mrb[0].mxu0
        %5173 = vmatprep.mubr.bf16.mxu0 %v1806
        %5174 = vmatmul.mubr.bf16.gmra.mrb[0].mxu0 %v1763
        %v5175 = vpop.f32.mrb[0].mxu0
        %v5176 = vadd.f32 %v5071, %v5175
        %v5177 = vpop.f32.mrb[0].mxu0
        %v5178 = vpop.f32.mrb[0].mxu0
        %v5179 = vadd.f32 %v5074, %v5178
        %v5180 = vpop.f32.mrb[0].mxu0
        %5181 = vmatprep.mubr.bf16.mxu0 %v1810
        %5182 = vmatmul.mubr.bf16.gmra.mrb[0].mxu0 %v1765
        %v5183 = vpop.f32.mrb[0].mxu0
        %v5184 = vadd.f32 %v5079, %v5183
        %v5185 = vpop.f32.mrb[0].mxu0
        %v5186 = vpop.f32.mrb[0].mxu0
        %v5187 = vadd.f32 %v5082, %v5186
        %v5188 = vpop.f32.mrb[0].mxu0
        %5189 = vmatprep.mubr.bf16.mxu0 %v1814
        %5190 = vmatmul.mubr.bf16.gmra.mrb[0].mxu0 %v1767
        %v5191 = vpop.f32.mrb[0].mxu0
        %v5192 = vadd.f32 %v5087, %v5191
        %v5193 = vpop.f32.mrb[0].mxu0
        %v5194 = vpop.f32.mrb[0].mxu0
        %v5195 = vadd.f32 %v5090, %v5194
        %v5196 = vpop.f32.mrb[0].mxu0
        %5197 = vmatprep.mubr.bf16.mxu0 %v1818
        %5198 = vmatmul.mubr.bf16.gmra.mrb[0].mxu0 %v1769
        %v5199 = vpop.f32.mrb[0].mxu0
        %v5200 = vadd.f32 %v5095, %v5199
        %v5201 = vpop.f32.mrb[0].mxu0
        %v5202 = vpop.f32.mrb[0].mxu0
        %v5203 = vadd.f32 %v5098, %v5202
        %v5204 = vpop.f32.mrb[0].mxu0
        %5205 = vmatprep.mubr.bf16.mxu0 %v1822
        %5206 = vmatmul.mubr.bf16.gmra.mrb[0].mxu0 %v1771
        %v5207 = vpop.f32.mrb[0].mxu0
        %v5208 = vadd.f32 %v5103, %v5207
        %v5209 = vpop.f32.mrb[0].mxu0
        %v5210 = vpop.f32.mrb[0].mxu0
        %v5211 = vadd.f32 %v5106, %v5210
        %v5212 = vpop.f32.mrb[0].mxu0
        %5213 = vmatprep.mubr.bf16.mxu0 %v1826
        %5214 = vmatmul.mubr.bf16.gmra.mrb[0].mxu0 %v1773
        %v5215 = vpop.f32.mrb[0].mxu0
        %v5216 = vadd.f32 %v5111, %v5215
        %v5217 = vpop.f32.mrb[0].mxu0
        %v5218 = vpop.f32.mrb[0].mxu0
        %v5219 = vadd.f32 %v5114, %v5218
        %v5220 = vpop.f32.mrb[0].mxu0
        %5221 = vmatprep.mubr.bf16.mxu0 %v1830
        %5222 = vmatmul.mubr.bf16.gmra.mrb[0].mxu0 %v1775
        %v5223 = vpop.f32.mrb[0].mxu0
        %v5224 = vadd.f32 %v5119, %v5223
        %v5225 = vpop.f32.mrb[0].mxu0
        %v5226 = vpop.f32.mrb[0].mxu0
        %v5227 = vadd.f32 %v5122, %v5226
        %v5228 = vpop.f32.mrb[0].mxu0
        %5229 = vmatprep.mubr.bf16.mxu0 %v1839
        %5230 = vmatmul.mubr.bf16.gmra.mrb[0].mxu0 %v1777
        %v5231 = vpop.f32.mrb[0].mxu0
        %v5232 = vadd.f32 %v5127, %v5231
        %v5233 = vpop.f32.mrb[0].mxu0
        %v5234 = vpop.f32.mrb[0].mxu0
        %v5235 = vadd.f32 %v5130, %v5234
        %v5236 = vpop.f32.mrb[0].mxu0
        %5237 = vdwg.mxu0
        %5238 = vmatprep.subr.bf16.mxu0 0
        %5239 = vmatpush1.bf16.msra.mxu0 %v4660
        %5240 = vmatprep.subr.bf16.mxu0 0
        %5241 = vmatpush1.bf16.msra.mxu0 %v4661
        %5242 = vmatprep.subr.bf16.mxu0 0
        %5243 = vmatpush1.bf16.msra.mxu0 %v4662
        %5244 = vmatprep.subr.bf16.mxu0 0
        %5245 = vmatpush1.bf16.msra.mxu0 %v4663
        %5246 = vmatprep.subr.bf16.mxu0 0
        %5247 = vmatpush1.bf16.msra.mxu0 %v4664
        %5248 = vmatprep.subr.bf16.mxu0 0
        %5249 = vmatpush1.bf16.msra.mxu0 %v4665
        %5250 = vmatprep.subr.bf16.mxu0 0
        %5251 = vmatpush1.bf16.msra.mxu0 %v4666
        %5252 = vmatprep.subr.bf16.mxu0 0
        %5253 = vmatpush1.bf16.msra.mxu0 %v4667
        %5254 = vmatprep.subr.bf16.mxu0 0
        %5255 = vmatpush1.bf16.msra.mxu0 %v4668
        %5256 = vmatprep.subr.bf16.mxu0 0
        %5257 = vmatpush1.bf16.msra.mxu0 %v4669
        %5258 = vmatprep.subr.bf16.mxu0 0
        %5259 = vmatpush1.bf16.msra.mxu0 %v4670
        %5260 = vmatprep.subr.bf16.mxu0 0
        %5261 = vmatpush1.bf16.msra.mxu0 %v4671
        %5262 = vmatprep.subr.bf16.mxu0 0
        %5263 = vmatpush1.bf16.msra.mxu0 %v4672
        %5264 = vmatprep.subr.bf16.mxu0 0
        %5265 = vmatpush1.bf16.msra.mxu0 %v4673
        %5266 = vmatprep.subr.bf16.mxu0 0
        %5267 = vmatpush1.bf16.msra.mxu0 %v4674
        %5268 = vmatprep.subr.bf16.mxu0 0
        %5269 = vmatpush1.bf16.msra.mxu0 %v4675
        %5270 = vmatprep.mubr.bf16.mxu0 %v1899
        %5271 = vmatmul.mubr.bf16.gmra.mrb[0].mxu0 %v1855
        %v5272 = vpop.f32.mrb[0].mxu0
        %v5273 = vadd.f32 %v5168, %v5272
        %v5274 = vpop.f32.mrb[0].mxu0
        %v5275 = vpop.f32.mrb[0].mxu0
        %v5276 = vadd.f32 %v5171, %v5275
        %v5277 = vpop.f32.mrb[0].mxu0
        %5278 = vmatprep.mubr.bf16.mxu0 %v1901
        %5279 = vmatmul.mubr.bf16.gmra.mrb[0].mxu0 %v1857
        %v5280 = vpop.f32.mrb[0].mxu0
        %v5281 = vadd.f32 %v5176, %v5280
        %v5282 = vpop.f32.mrb[0].mxu0
        %v5283 = vpop.f32.mrb[0].mxu0
        %v5284 = vadd.f32 %v5179, %v5283
        %v5285 = vpop.f32.mrb[0].mxu0
        %5286 = vmatprep.mubr.bf16.mxu0 %v1903
        %5287 = vmatmul.mubr.bf16.gmra.mrb[0].mxu0 %v1859
        %v5288 = vpop.f32.mrb[0].mxu0
        %v5289 = vadd.f32 %v5184, %v5288
        %v5290 = vpop.f32.mrb[0].mxu0
        %v5291 = vpop.f32.mrb[0].mxu0
        %v5292 = vadd.f32 %v5187, %v5291
        %v5293 = vpop.f32.mrb[0].mxu0
        %5294 = vmatprep.mubr.bf16.mxu0 %v1905
        %5295 = vmatmul.mubr.bf16.gmra.mrb[0].mxu0 %v1861
        %v5296 = vpop.f32.mrb[0].mxu0
        %v5297 = vadd.f32 %v5192, %v5296
        %v5298 = vpop.f32.mrb[0].mxu0
        %v5299 = vpop.f32.mrb[0].mxu0
        %v5300 = vadd.f32 %v5195, %v5299
        %v5301 = vpop.f32.mrb[0].mxu0
        %5302 = vmatprep.mubr.bf16.mxu0 %v1907
        %5303 = vmatmul.mubr.bf16.gmra.mrb[0].mxu0 %v1863
        %v5304 = vpop.f32.mrb[0].mxu0
        %v5305 = vadd.f32 %v5200, %v5304
        %v5306 = vpop.f32.mrb[0].mxu0
        %v5307 = vpop.f32.mrb[0].mxu0
        %v5308 = vadd.f32 %v5203, %v5307
        %v5309 = vpop.f32.mrb[0].mxu0
        %5310 = vmatprep.mubr.bf16.mxu0 %v1909
        %5311 = vmatmul.mubr.bf16.gmra.mrb[0].mxu0 %v1865
        %v5312 = vpop.f32.mrb[0].mxu0
        %v5313 = vadd.f32 %v5208, %v5312
        %v5314 = vpop.f32.mrb[0].mxu0
        %v5315 = vpop.f32.mrb[0].mxu0
        %v5316 = vadd.f32 %v5211, %v5315
        %v5317 = vpop.f32.mrb[0].mxu0
        %5318 = vmatprep.mubr.bf16.mxu0 %v1911
        %5319 = vmatmul.mubr.bf16.gmra.mrb[0].mxu0 %v1867
        %v5320 = vpop.f32.mrb[0].mxu0
        %v5321 = vadd.f32 %v5216, %v5320
        %v5322 = vpop.f32.mrb[0].mxu0
        %v5323 = vpop.f32.mrb[0].mxu0
        %v5324 = vadd.f32 %v5219, %v5323
        %v5325 = vpop.f32.mrb[0].mxu0
        %5326 = vmatprep.mubr.bf16.mxu0 %v1913
        %5327 = vmatmul.mubr.bf16.gmra.mrb[0].mxu0 %v1869
        %v5328 = vpop.f32.mrb[0].mxu0
        %v5329 = vadd.f32 %v5224, %v5328
        %v5330 = vpop.f32.mrb[0].mxu0
        %v5331 = vpop.f32.mrb[0].mxu0
        %v5332 = vadd.f32 %v5227, %v5331
        %v5333 = vpop.f32.mrb[0].mxu0
        %5334 = vmatprep.mubr.bf16.mxu0 %v1915
        %5335 = vmatmul.mubr.bf16.gmra.mrb[0].mxu0 %v1871
        %v5336 = vpop.f32.mrb[0].mxu0
        %v5337 = vadd.f32 %v5232, %v5336
        %v5338 = vpop.f32.mrb[0].mxu0
        %v5339 = vpop.f32.mrb[0].mxu0
        %v5340 = vadd.f32 %v5235, %v5339
        %v5341 = vpop.f32.mrb[0].mxu0
        %5342 = vdwg.mxu0
        %5343 = vmatprep.subr.bf16.mxu0 0
        %5344 = vmatpush1.bf16.msra.mxu0 %v4676
        %5345 = vmatprep.subr.bf16.mxu0 0
        %5346 = vmatpush1.bf16.msra.mxu0 %v4677
        %5347 = vmatprep.subr.bf16.mxu0 0
        %5348 = vmatpush1.bf16.msra.mxu0 %v4678
        %5349 = vmatprep.subr.bf16.mxu0 0
        %5350 = vmatpush1.bf16.msra.mxu0 %v4679
        %5351 = vmatprep.subr.bf16.mxu0 0
        %5352 = vmatpush1.bf16.msra.mxu0 %v4680
        %5353 = vmatprep.subr.bf16.mxu0 0
        %5354 = vmatpush1.bf16.msra.mxu0 %v4681
        %5355 = vmatprep.subr.bf16.mxu0 0
        %5356 = vmatpush1.bf16.msra.mxu0 %v4682
        %5357 = vmatprep.subr.bf16.mxu0 0
        %5358 = vmatpush1.bf16.msra.mxu0 %v4683
        %5359 = vmatprep.subr.bf16.mxu0 0
        %5360 = vmatpush1.bf16.msra.mxu0 %v4684
        %5361 = vmatprep.subr.bf16.mxu0 0
        %5362 = vmatpush1.bf16.msra.mxu0 %v4685
        %5363 = vmatprep.subr.bf16.mxu0 0
        %5364 = vmatpush1.bf16.msra.mxu0 %v4686
        %5365 = vmatprep.subr.bf16.mxu0 0
        %5366 = vmatpush1.bf16.msra.mxu0 %v4687
        %5367 = vmatprep.subr.bf16.mxu0 0
        %5368 = vmatpush1.bf16.msra.mxu0 %v4688
        %5369 = vmatprep.subr.bf16.mxu0 0
        %5370 = vmatpush1.bf16.msra.mxu0 %v4689
        %5371 = vmatprep.subr.bf16.mxu0 0
        %5372 = vmatpush1.bf16.msra.mxu0 %v4690
        %5373 = vmatprep.subr.bf16.mxu0 0
        %5374 = vmatpush1.bf16.msra.mxu0 %v4691
        %5375 = vmatprep.mubr.bf16.mxu0 %v2033
        %5376 = vmatmul.mubr.bf16.gmra.mrb[0].mxu0 %v1945
        %v5377 = vpop.f32.mrb[0].mxu0
        %v5378 = vadd.f32 %v5273, %v5377
        %v5379 = vpop.f32.mrb[0].mxu0
        %v5380 = vpop.f32.mrb[0].mxu0
        %v5381 = vadd.f32 %v5276, %v5380
        %v5382 = vpop.f32.mrb[0].mxu0
        %5383 = vmatprep.mubr.bf16.mxu0 %v2035
        %5384 = vmatmul.mubr.bf16.gmra.mrb[0].mxu0 %v1954
        %v5385 = vpop.f32.mrb[0].mxu0
        %v5386 = vadd.f32 %v5281, %v5385
        %v5387 = vpop.f32.mrb[0].mxu0
        %v5388 = vpop.f32.mrb[0].mxu0
        %v5389 = vadd.f32 %v5284, %v5388
        %v5390 = vpop.f32.mrb[0].mxu0
        %5391 = vmatprep.mubr.bf16.mxu0 %v2037
        %5392 = vmatmul.mubr.bf16.gmra.mrb[0].mxu0 %v1963
        %v5393 = vpop.f32.mrb[0].mxu0
        %v5394 = vadd.f32 %v5289, %v5393
        %v5395 = vpop.f32.mrb[0].mxu0
        %v5396 = vpop.f32.mrb[0].mxu0
        %v5397 = vadd.f32 %v5292, %v5396
        %v5398 = vpop.f32.mrb[0].mxu0
        %5399 = vmatprep.mubr.bf16.mxu0 %v2039
        %5400 = vmatmul.mubr.bf16.gmra.mrb[0].mxu0 %v1972
        %v5401 = vpop.f32.mrb[0].mxu0
        %v5402 = vadd.f32 %v5297, %v5401
        %v5403 = vpop.f32.mrb[0].mxu0
        %v5404 = vpop.f32.mrb[0].mxu0
        %v5405 = vadd.f32 %v5300, %v5404
        %v5406 = vpop.f32.mrb[0].mxu0
        %5407 = vmatprep.mubr.bf16.mxu0 %v2041
        %5408 = vmatmul.mubr.bf16.gmra.mrb[0].mxu0 %v1981
        %v5409 = vpop.f32.mrb[0].mxu0
        %v5410 = vadd.f32 %v5305, %v5409
        %v5411 = vpop.f32.mrb[0].mxu0
        %v5412 = vpop.f32.mrb[0].mxu0
        %v5413 = vadd.f32 %v5308, %v5412
        %v5414 = vpop.f32.mrb[0].mxu0
        %5415 = vmatprep.mubr.bf16.mxu0 %v2043
        %5416 = vmatmul.mubr.bf16.gmra.mrb[0].mxu0 %v1990
        %v5417 = vpop.f32.mrb[0].mxu0
        %v5418 = vadd.f32 %v5313, %v5417
        %v5419 = vpop.f32.mrb[0].mxu0
        %v5420 = vpop.f32.mrb[0].mxu0
        %v5421 = vadd.f32 %v5316, %v5420
        %v5422 = vpop.f32.mrb[0].mxu0
        %5423 = vmatprep.mubr.bf16.mxu0 %v2045
        %5424 = vmatmul.mubr.bf16.gmra.mrb[0].mxu0 %v1999
        %v5425 = vpop.f32.mrb[0].mxu0
        %v5426 = vadd.f32 %v5321, %v5425
        %v5427 = vpop.f32.mrb[0].mxu0
        %v5428 = vpop.f32.mrb[0].mxu0
        %v5429 = vadd.f32 %v5324, %v5428
        %v5430 = vpop.f32.mrb[0].mxu0
        %5431 = vmatprep.mubr.bf16.mxu0 %v2047
        %5432 = vmatmul.mubr.bf16.gmra.mrb[0].mxu0 %v2008
        %v5433 = vpop.f32.mrb[0].mxu0
        %v5434 = vadd.f32 %v5329, %v5433
        %v5435 = vpop.f32.mrb[0].mxu0
        %v5436 = vpop.f32.mrb[0].mxu0
        %v5437 = vadd.f32 %v5332, %v5436
        %v5438 = vpop.f32.mrb[0].mxu0
        %5439 = vmatprep.mubr.bf16.mxu0 %v2049
        %5440 = vmatmul.mubr.bf16.gmra.mrb[0].mxu0 %v2017
        %v5441 = vpop.f32.mrb[0].mxu0
        %v5442 = vadd.f32 %v5337, %v5441
        %v5443 = vpop.f32.mrb[0].mxu0
        %v5444 = vpop.f32.mrb[0].mxu0
        %v5445 = vadd.f32 %v5340, %v5444
        %v5446 = vpop.f32.mrb[0].mxu0
        %5447 = vdwg.mxu0
        %5448 = vmatprep.subr.bf16.mxu0 0
        %5449 = vmatpush1.bf16.msra.mxu0 %v4692
        %5450 = vmatprep.subr.bf16.mxu0 0
        %5451 = vmatpush1.bf16.msra.mxu0 %v4693
        %5452 = vmatprep.subr.bf16.mxu0 0
        %5453 = vmatpush1.bf16.msra.mxu0 %v4694
        %5454 = vmatprep.subr.bf16.mxu0 0
        %5455 = vmatpush1.bf16.msra.mxu0 %v4695
        %5456 = vmatprep.subr.bf16.mxu0 0
        %5457 = vmatpush1.bf16.msra.mxu0 %v4696
        %5458 = vmatprep.subr.bf16.mxu0 0
        %5459 = vmatpush1.bf16.msra.mxu0 %v4697
        %5460 = vmatprep.subr.bf16.mxu0 0
        %5461 = vmatpush1.bf16.msra.mxu0 %v4698
        %5462 = vmatprep.subr.bf16.mxu0 0
        %5463 = vmatpush1.bf16.msra.mxu0 %v4699
        %5464 = vmatprep.subr.bf16.mxu0 0
        %5465 = vmatpush1.bf16.msra.mxu0 %v4700
        %5466 = vmatprep.subr.bf16.mxu0 0
        %5467 = vmatpush1.bf16.msra.mxu0 %v4701
        %5468 = vmatprep.subr.bf16.mxu0 0
        %5469 = vmatpush1.bf16.msra.mxu0 %v4702
        %5470 = vmatprep.subr.bf16.mxu0 0
        %5471 = vmatpush1.bf16.msra.mxu0 %v4703
        %5472 = vmatprep.subr.bf16.mxu0 0
        %5473 = vmatpush1.bf16.msra.mxu0 %v4704
        %5474 = vmatprep.subr.bf16.mxu0 0
        %5475 = vmatpush1.bf16.msra.mxu0 %v4705
        %5476 = vmatprep.subr.bf16.mxu0 0
        %5477 = vmatpush1.bf16.msra.mxu0 %v4706
        %5478 = vmatprep.subr.bf16.mxu0 0
        %5479 = vmatpush1.bf16.msra.mxu0 %v4707
        %5480 = vmatprep.mubr.bf16.mxu0 %v1649
        %5481 = vmatmul.mubr.bf16.gmra.mrb[0].mxu0 %v2074
        %v5482 = vpop.f32.mrb[0].mxu0
        %v5483 = vadd.f32 %v5378, %v5482
        %v5484 = vpop.f32.mrb[0].mxu0
        %v5485 = vpop.f32.mrb[0].mxu0
        %v5486 = vadd.f32 %v5381, %v5485
        %v5487 = vpop.f32.mrb[0].mxu0
        %5488 = vmatprep.mubr.bf16.mxu0 %v1650
        %5489 = vmatmul.mubr.bf16.gmra.mrb[0].mxu0 %v2078
        %v5490 = vpop.f32.mrb[0].mxu0
        %v5491 = vadd.f32 %v5386, %v5490
        %v5492 = vpop.f32.mrb[0].mxu0
        %v5493 = vpop.f32.mrb[0].mxu0
        %v5494 = vadd.f32 %v5389, %v5493
        %v5495 = vpop.f32.mrb[0].mxu0
        %5496 = vmatprep.mubr.bf16.mxu0 %v1651
        %5497 = vmatmul.mubr.bf16.gmra.mrb[0].mxu0 %v2082
        %v5498 = vpop.f32.mrb[0].mxu0
        %v5499 = vadd.f32 %v5394, %v5498
        %v5500 = vpop.f32.mrb[0].mxu0
        %v5501 = vpop.f32.mrb[0].mxu0
        %v5502 = vadd.f32 %v5397, %v5501
        %v5503 = vpop.f32.mrb[0].mxu0
        %5504 = vmatprep.mubr.bf16.mxu0 %v1652
        %5505 = vmatmul.mubr.bf16.gmra.mrb[0].mxu0 %v2086
        %v5506 = vpop.f32.mrb[0].mxu0
        %v5507 = vadd.f32 %v5402, %v5506
        %v5508 = vpop.f32.mrb[0].mxu0
        %v5509 = vpop.f32.mrb[0].mxu0
        %v5510 = vadd.f32 %v5405, %v5509
        %v5511 = vpop.f32.mrb[0].mxu0
        %5512 = vmatprep.mubr.bf16.mxu0 %v1653
        %5513 = vmatmul.mubr.bf16.gmra.mrb[0].mxu0 %v2090
        %v5514 = vpop.f32.mrb[0].mxu0
        %v5515 = vadd.f32 %v5410, %v5514
        %v5516 = vpop.f32.mrb[0].mxu0
        %v5517 = vpop.f32.mrb[0].mxu0
        %v5518 = vadd.f32 %v5413, %v5517
        %v5519 = vpop.f32.mrb[0].mxu0
        %5520 = vmatprep.mubr.bf16.mxu0 %v1654
        %5521 = vmatmul.mubr.bf16.gmra.mrb[0].mxu0 %v2094
        %v5522 = vpop.f32.mrb[0].mxu0
        %v5523 = vadd.f32 %v5418, %v5522
        %v5524 = vpop.f32.mrb[0].mxu0
        %v5525 = vpop.f32.mrb[0].mxu0
        %v5526 = vadd.f32 %v5421, %v5525
        %v5527 = vpop.f32.mrb[0].mxu0
        %5528 = vmatprep.mubr.bf16.mxu0 %v1655
        %5529 = vmatmul.mubr.bf16.gmra.mrb[0].mxu0 %v2098
        %v5530 = vpop.f32.mrb[0].mxu0
        %v5531 = vadd.f32 %v5426, %v5530
        %v5532 = vpop.f32.mrb[0].mxu0
        %v5533 = vpop.f32.mrb[0].mxu0
        %v5534 = vadd.f32 %v5429, %v5533
        %v5535 = vpop.f32.mrb[0].mxu0
        %5536 = vmatprep.mubr.bf16.mxu0 %v1656
        %5537 = vmatmul.mubr.bf16.gmra.mrb[0].mxu0 %v2102
        %v5538 = vpop.f32.mrb[0].mxu0
        %v5539 = vadd.f32 %v5434, %v5538
        %v5540 = vpop.f32.mrb[0].mxu0
        %v5541 = vpop.f32.mrb[0].mxu0
        %v5542 = vadd.f32 %v5437, %v5541
        %v5543 = vpop.f32.mrb[0].mxu0
        %5544 = vmatprep.mubr.bf16.mxu0 %v2121
        %5545 = vmatmul.mubr.bf16.gmra.mrb[0].mxu0 %v2111
        %v5546 = vpop.f32.mrb[0].mxu0
        %v5547 = vadd.f32 %v5442, %v5546
        %v5548 = vpop.f32.mrb[0].mxu0
        %v5549 = vpop.f32.mrb[0].mxu0
        %v5550 = vadd.f32 %v5445, %v5549
        %v5551 = vpop.f32.mrb[0].mxu0
        %5552 = vdwg.mxu0
        %5553 = vmatprep.subr.bf16.mxu0 0
        %5554 = vmatpush1.bf16.msra.mxu0 %v4708
        %5555 = vmatprep.subr.bf16.mxu0 0
        %5556 = vmatpush1.bf16.msra.mxu0 %v4709
        %5557 = vmatprep.subr.bf16.mxu0 0
        %5558 = vmatpush1.bf16.msra.mxu0 %v4710
        %5559 = vmatprep.subr.bf16.mxu0 0
        %5560 = vmatpush1.bf16.msra.mxu0 %v4711
        %5561 = vmatprep.subr.bf16.mxu0 0
        %5562 = vmatpush1.bf16.msra.mxu0 %v4712
        %5563 = vmatprep.subr.bf16.mxu0 0
        %5564 = vmatpush1.bf16.msra.mxu0 %v4713
        %5565 = vmatprep.subr.bf16.mxu0 0
        %5566 = vmatpush1.bf16.msra.mxu0 %v4714
        %5567 = vmatprep.subr.bf16.mxu0 0
        %5568 = vmatpush1.bf16.msra.mxu0 %v4715
        %5569 = vmatprep.subr.bf16.mxu0 0
        %5570 = vmatpush1.bf16.msra.mxu0 %v4716
        %5571 = vmatprep.subr.bf16.mxu0 0
        %5572 = vmatpush1.bf16.msra.mxu0 %v4717
        %5573 = vmatprep.subr.bf16.mxu0 0
        %5574 = vmatpush1.bf16.msra.mxu0 %v4718
        %5575 = vmatprep.subr.bf16.mxu0 0
        %5576 = vmatpush1.bf16.msra.mxu0 %v4719
        %5577 = vmatprep.subr.bf16.mxu0 0
        %5578 = vmatpush1.bf16.msra.mxu0 %v4720
        %5579 = vmatprep.subr.bf16.mxu0 0
        %5580 = vmatpush1.bf16.msra.mxu0 %v4721
        %5581 = vmatprep.subr.bf16.mxu0 0
        %5582 = vmatpush1.bf16.msra.mxu0 %v4722
        %5583 = vmatprep.subr.bf16.mxu0 0
        %5584 = vmatpush1.bf16.msra.mxu0 %v4723
        %5585 = vmatprep.mubr.bf16.mxu0 %v2141
        %5586 = vmatmul.mubr.bf16.gmra.mrb[0].mxu0 %v1888
        %v5587 = vpop.f32.mrb[0].mxu0
        %v5588 = vadd.f32 %v5483, %v5587
        %v5589 = vpop.f32.mrb[0].mxu0
        %v5590 = vpop.f32.mrb[0].mxu0
        %v5591 = vadd.f32 %v5486, %v5590
        %v5592 = vpop.f32.mrb[0].mxu0
        %5593 = vmatprep.mubr.bf16.mxu0 %v2144
        %5594 = vmatmul.mubr.bf16.gmra.mrb[0].mxu0 %v1889
        %v5595 = vpop.f32.mrb[0].mxu0
        %v5596 = vadd.f32 %v5491, %v5595
        %v5597 = vpop.f32.mrb[0].mxu0
        %v5598 = vpop.f32.mrb[0].mxu0
        %v5599 = vadd.f32 %v5494, %v5598
        %v5600 = vpop.f32.mrb[0].mxu0
        %5601 = vmatprep.mubr.bf16.mxu0 %v2147
        %5602 = vmatmul.mubr.bf16.gmra.mrb[0].mxu0 %v1890
        %v5603 = vpop.f32.mrb[0].mxu0
        %v5604 = vadd.f32 %v5499, %v5603
        %v5605 = vpop.f32.mrb[0].mxu0
        %v5606 = vpop.f32.mrb[0].mxu0
        %v5607 = vadd.f32 %v5502, %v5606
        %v5608 = vpop.f32.mrb[0].mxu0
        %5609 = vmatprep.mubr.bf16.mxu0 %v2150
        %5610 = vmatmul.mubr.bf16.gmra.mrb[0].mxu0 %v1891
        %v5611 = vpop.f32.mrb[0].mxu0
        %v5612 = vadd.f32 %v5507, %v5611
        %v5613 = vpop.f32.mrb[0].mxu0
        %v5614 = vpop.f32.mrb[0].mxu0
        %v5615 = vadd.f32 %v5510, %v5614
        %v5616 = vpop.f32.mrb[0].mxu0
        %5617 = vmatprep.mubr.bf16.mxu0 %v2153
        %5618 = vmatmul.mubr.bf16.gmra.mrb[0].mxu0 %v1892
        %v5619 = vpop.f32.mrb[0].mxu0
        %v5620 = vadd.f32 %v5515, %v5619
        %v5621 = vpop.f32.mrb[0].mxu0
        %v5622 = vpop.f32.mrb[0].mxu0
        %v5623 = vadd.f32 %v5518, %v5622
        %v5624 = vpop.f32.mrb[0].mxu0
        %5625 = vmatprep.mubr.bf16.mxu0 %v2156
        %5626 = vmatmul.mubr.bf16.gmra.mrb[0].mxu0 %v1893
        %v5627 = vpop.f32.mrb[0].mxu0
        %v5628 = vadd.f32 %v5523, %v5627
        %v5629 = vpop.f32.mrb[0].mxu0
        %v5630 = vpop.f32.mrb[0].mxu0
        %v5631 = vadd.f32 %v5526, %v5630
        %v5632 = vpop.f32.mrb[0].mxu0
        %5633 = vmatprep.mubr.bf16.mxu0 %v2159
        %5634 = vmatmul.mubr.bf16.gmra.mrb[0].mxu0 %v1894
        %v5635 = vpop.f32.mrb[0].mxu0
        %v5636 = vadd.f32 %v5531, %v5635
        %v5637 = vpop.f32.mrb[0].mxu0
        %v5638 = vpop.f32.mrb[0].mxu0
        %v5639 = vadd.f32 %v5534, %v5638
        %v5640 = vpop.f32.mrb[0].mxu0
        %5641 = vmatprep.mubr.bf16.mxu0 %v2165
        %5642 = vmatmul.mubr.bf16.gmra.mrb[0].mxu0 %v1895
        %v5643 = vpop.f32.mrb[0].mxu0
        %v5644 = vadd.f32 %v5539, %v5643
        %v5645 = vpop.f32.mrb[0].mxu0
        %v5646 = vpop.f32.mrb[0].mxu0
        %v5647 = vadd.f32 %v5542, %v5646
        %v5648 = vpop.f32.mrb[0].mxu0
        %5649 = vmatprep.mubr.bf16.mxu0 %v2173
        %5650 = vmatmul.mubr.bf16.gmra.mrb[0].mxu0 %v2125
        %v5651 = vpop.f32.mrb[0].mxu0
        %v5652 = vadd.f32 %v5547, %v5651
        %v5653 = vpop.f32.mrb[0].mxu0
        %v5654 = vpop.f32.mrb[0].mxu0
        %v5655 = vadd.f32 %v5550, %v5654
        %v5656 = vpop.f32.mrb[0].mxu0
        %5657 = vdwg.mxu0
        %5658 = vmatprep.subr.bf16.mxu0 0
        %5659 = vmatpush1.bf16.msra.mxu0 %v4724
        %5660 = vmatprep.subr.bf16.mxu0 0
        %5661 = vmatpush1.bf16.msra.mxu0 %v4725
        %5662 = vmatprep.subr.bf16.mxu0 0
        %5663 = vmatpush1.bf16.msra.mxu0 %v4726
        %5664 = vmatprep.subr.bf16.mxu0 0
        %5665 = vmatpush1.bf16.msra.mxu0 %v4727
        %5666 = vmatprep.subr.bf16.mxu0 0
        %5667 = vmatpush1.bf16.msra.mxu0 %v4728
        %5668 = vmatprep.subr.bf16.mxu0 0
        %5669 = vmatpush1.bf16.msra.mxu0 %v4729
        %5670 = vmatprep.subr.bf16.mxu0 0
        %5671 = vmatpush1.bf16.msra.mxu0 %v4730
        %5672 = vmatprep.subr.bf16.mxu0 0
        %5673 = vmatpush1.bf16.msra.mxu0 %v4731
        %5674 = vmatprep.subr.bf16.mxu0 0
        %5675 = vmatpush1.bf16.msra.mxu0 %v4732
        %5676 = vmatprep.subr.bf16.mxu0 0
        %5677 = vmatpush1.bf16.msra.mxu0 %v4733
        %5678 = vmatprep.subr.bf16.mxu0 0
        %5679 = vmatpush1.bf16.msra.mxu0 %v4734
        %5680 = vmatprep.subr.bf16.mxu0 0
        %5681 = vmatpush1.bf16.msra.mxu0 %v4735
        %5682 = vmatprep.subr.bf16.mxu0 0
        %5683 = vmatpush1.bf16.msra.mxu0 %v4736
        %5684 = vmatprep.subr.bf16.mxu0 0
        %5685 = vmatpush1.bf16.msra.mxu0 %v4737
        %5686 = vmatprep.subr.bf16.mxu0 0
        %5687 = vmatpush1.bf16.msra.mxu0 %v4738
        %5688 = vmatprep.subr.bf16.mxu0 0
        %5689 = vmatpush1.bf16.msra.mxu0 %v4739
        %5690 = vmatprep.mubr.bf16.mxu0 %v2228
        %5691 = vmatmul.mubr.bf16.gmra.mrb[0].mxu0 %v2188
        %v5692 = vpop.f32.mrb[0].mxu0
        %v5693 = vadd.f32 %v5588, %v5692
        %v5694 = vpop.f32.mrb[0].mxu0
        %v5695 = vpop.f32.mrb[0].mxu0
        %v5696 = vadd.f32 %v5591, %v5695
        %v5697 = vpop.f32.mrb[0].mxu0
        %5698 = vmatprep.mubr.bf16.mxu0 %v2232
        %5699 = vmatmul.mubr.bf16.gmra.mrb[0].mxu0 %v2190
        %v5700 = vpop.f32.mrb[0].mxu0
        %v5701 = vadd.f32 %v5596, %v5700
        %v5702 = vpop.f32.mrb[0].mxu0
        %v5703 = vpop.f32.mrb[0].mxu0
        %v5704 = vadd.f32 %v5599, %v5703
        %v5705 = vpop.f32.mrb[0].mxu0
        %5706 = vmatprep.mubr.bf16.mxu0 %v2236
        %5707 = vmatmul.mubr.bf16.gmra.mrb[0].mxu0 %v2192
        %v5708 = vpop.f32.mrb[0].mxu0
        %v5709 = vadd.f32 %v5604, %v5708
        %v5710 = vpop.f32.mrb[0].mxu0
        %v5711 = vpop.f32.mrb[0].mxu0
        %v5712 = vadd.f32 %v5607, %v5711
        %v5713 = vpop.f32.mrb[0].mxu0
        %5714 = vmatprep.mubr.bf16.mxu0 %v2240
        %5715 = vmatmul.mubr.bf16.gmra.mrb[0].mxu0 %v2194
        %v5716 = vpop.f32.mrb[0].mxu0
        %v5717 = vadd.f32 %v5612, %v5716
        %v5718 = vpop.f32.mrb[0].mxu0
        %v5719 = vpop.f32.mrb[0].mxu0
        %v5720 = vadd.f32 %v5615, %v5719
        %v5721 = vpop.f32.mrb[0].mxu0
        %5722 = vmatprep.mubr.bf16.mxu0 %v2244
        %5723 = vmatmul.mubr.bf16.gmra.mrb[0].mxu0 %v2196
        %v5724 = vpop.f32.mrb[0].mxu0
        %v5725 = vadd.f32 %v5620, %v5724
        %v5726 = vpop.f32.mrb[0].mxu0
        %v5727 = vpop.f32.mrb[0].mxu0
        %v5728 = vadd.f32 %v5623, %v5727
        %v5729 = vpop.f32.mrb[0].mxu0
        %5730 = vmatprep.mubr.bf16.mxu0 %v2248
        %5731 = vmatmul.mubr.bf16.gmra.mrb[0].mxu0 %v2198
        %v5732 = vpop.f32.mrb[0].mxu0
        %v5733 = vadd.f32 %v5628, %v5732
        %v5734 = vpop.f32.mrb[0].mxu0
        %v5735 = vpop.f32.mrb[0].mxu0
        %v5736 = vadd.f32 %v5631, %v5735
        %v5737 = vpop.f32.mrb[0].mxu0
        %5738 = vmatprep.mubr.bf16.mxu0 %v2252
        %5739 = vmatmul.mubr.bf16.gmra.mrb[0].mxu0 %v2200
        %v5740 = vpop.f32.mrb[0].mxu0
        %v5741 = vadd.f32 %v5636, %v5740
        %v5742 = vpop.f32.mrb[0].mxu0
        %v5743 = vpop.f32.mrb[0].mxu0
        %v5744 = vadd.f32 %v5639, %v5743
        %v5745 = vpop.f32.mrb[0].mxu0
        %5746 = vmatprep.mubr.bf16.mxu0 %v2256
        %5747 = vmatmul.mubr.bf16.gmra.mrb[0].mxu0 %v2202
        %v5748 = vpop.f32.mrb[0].mxu0
        %v5749 = vadd.f32 %v5644, %v5748
        %v5750 = vpop.f32.mrb[0].mxu0
        %v5751 = vpop.f32.mrb[0].mxu0
        %v5752 = vadd.f32 %v5647, %v5751
        %v5753 = vpop.f32.mrb[0].mxu0
        %5754 = vmatprep.mubr.bf16.mxu0 %v2265
        %5755 = vmatmul.mubr.bf16.gmra.mrb[0].mxu0 %v2204
        %v5756 = vpop.f32.mrb[0].mxu0
        %v5757 = vadd.f32 %v5652, %v5756
        %v5758 = vpop.f32.mrb[0].mxu0
        %v5759 = vpop.f32.mrb[0].mxu0
        %v5760 = vadd.f32 %v5655, %v5759
        %v5761 = vpop.f32.mrb[0].mxu0
        %5762 = vdwg.mxu0
        %5763 = vmatprep.subr.bf16.mxu0 0
        %5764 = vmatpush1.bf16.msra.mxu0 %v4740
        %5765 = vmatprep.subr.bf16.mxu0 0
        %5766 = vmatpush1.bf16.msra.mxu0 %v4741
        %5767 = vmatprep.subr.bf16.mxu0 0
        %5768 = vmatpush1.bf16.msra.mxu0 %v4742
        %5769 = vmatprep.subr.bf16.mxu0 0
        %5770 = vmatpush1.bf16.msra.mxu0 %v4743
        %5771 = vmatprep.subr.bf16.mxu0 0
        %5772 = vmatpush1.bf16.msra.mxu0 %v4744
        %5773 = vmatprep.subr.bf16.mxu0 0
        %5774 = vmatpush1.bf16.msra.mxu0 %v4745
        %5775 = vmatprep.subr.bf16.mxu0 0
        %5776 = vmatpush1.bf16.msra.mxu0 %v4746
        %5777 = vmatprep.subr.bf16.mxu0 0
        %5778 = vmatpush1.bf16.msra.mxu0 %v4747
        %5779 = vmatprep.subr.bf16.mxu0 0
        %5780 = vmatpush1.bf16.msra.mxu0 %v4748
        %5781 = vmatprep.subr.bf16.mxu0 0
        %5782 = vmatpush1.bf16.msra.mxu0 %v4749
        %5783 = vmatprep.subr.bf16.mxu0 0
        %5784 = vmatpush1.bf16.msra.mxu0 %v4750
        %5785 = vmatprep.subr.bf16.mxu0 0
        %5786 = vmatpush1.bf16.msra.mxu0 %v4751
        %5787 = vmatprep.subr.bf16.mxu0 0
        %5788 = vmatpush1.bf16.msra.mxu0 %v4752
        %5789 = vmatprep.subr.bf16.mxu0 0
        %5790 = vmatpush1.bf16.msra.mxu0 %v4753
        %5791 = vmatprep.subr.bf16.mxu0 0
        %5792 = vmatpush1.bf16.msra.mxu0 %v4754
        %5793 = vmatprep.subr.bf16.mxu0 0
        %5794 = vmatpush1.bf16.msra.mxu0 %v4755
        %5795 = vmatprep.mubr.bf16.mxu0 %v2297
        %5796 = vmatmul.mubr.bf16.gmra.mrb[0].mxu0 %v2279
        %v5797 = vpop.f32.mrb[0].mxu0
        %v5798 = vadd.f32 %v5693, %v5797
        %v5799 = vpop.f32.mrb[0].mxu0
        %v5800 = vpop.f32.mrb[0].mxu0
        %v5801 = vadd.f32 %v5696, %v5800
        %v5802 = vpop.f32.mrb[0].mxu0
        %5803 = vmatprep.mubr.bf16.mxu0 %v1861
        %5804 = vmatmul.mubr.bf16.gmra.mrb[0].mxu0 %v1903
        %v5805 = vpop.f32.mrb[0].mxu0
        %v5806 = vadd.f32 %v5701, %v5805
        %v5807 = vpop.f32.mrb[0].mxu0
        %v5808 = vpop.f32.mrb[0].mxu0
        %v5809 = vadd.f32 %v5704, %v5808
        %v5810 = vpop.f32.mrb[0].mxu0
        %5811 = vmatprep.mubr.bf16.mxu0 %v1863
        %5812 = vmatmul.mubr.bf16.gmra.mrb[0].mxu0 %v1905
        %v5813 = vpop.f32.mrb[0].mxu0
        %v5814 = vadd.f32 %v5709, %v5813
        %v5815 = vpop.f32.mrb[0].mxu0
        %v5816 = vpop.f32.mrb[0].mxu0
        %v5817 = vadd.f32 %v5712, %v5816
        %v5818 = vpop.f32.mrb[0].mxu0
        %5819 = vmatprep.mubr.bf16.mxu0 %v1865
        %5820 = vmatmul.mubr.bf16.gmra.mrb[0].mxu0 %v1907
        %v5821 = vpop.f32.mrb[0].mxu0
        %v5822 = vadd.f32 %v5717, %v5821
        %v5823 = vpop.f32.mrb[0].mxu0
        %v5824 = vpop.f32.mrb[0].mxu0
        %v5825 = vadd.f32 %v5720, %v5824
        %v5826 = vpop.f32.mrb[0].mxu0
        %5827 = vmatprep.mubr.bf16.mxu0 %v1867
        %5828 = vmatmul.mubr.bf16.gmra.mrb[0].mxu0 %v1909
        %v5829 = vpop.f32.mrb[0].mxu0
        %v5830 = vadd.f32 %v5725, %v5829
        %v5831 = vpop.f32.mrb[0].mxu0
        %v5832 = vpop.f32.mrb[0].mxu0
        %v5833 = vadd.f32 %v5728, %v5832
        %v5834 = vpop.f32.mrb[0].mxu0
        %5835 = vmatprep.mubr.bf16.mxu0 %v1869
        %5836 = vmatmul.mubr.bf16.gmra.mrb[0].mxu0 %v1911
        %v5837 = vpop.f32.mrb[0].mxu0
        %v5838 = vadd.f32 %v5733, %v5837
        %v5839 = vpop.f32.mrb[0].mxu0
        %v5840 = vpop.f32.mrb[0].mxu0
        %v5841 = vadd.f32 %v5736, %v5840
        %v5842 = vpop.f32.mrb[0].mxu0
        %5843 = vmatprep.mubr.bf16.mxu0 %v2299
        %5844 = vmatmul.mubr.bf16.gmra.mrb[0].mxu0 %v1913
        %v5845 = vpop.f32.mrb[0].mxu0
        %v5846 = vadd.f32 %v5741, %v5845
        %v5847 = vpop.f32.mrb[0].mxu0
        %v5848 = vpop.f32.mrb[0].mxu0
        %v5849 = vadd.f32 %v5744, %v5848
        %v5850 = vpop.f32.mrb[0].mxu0
        %5851 = vmatprep.mubr.bf16.mxu0 %v2301
        %5852 = vmatmul.mubr.bf16.gmra.mrb[0].mxu0 %v2281
        %v5853 = vpop.f32.mrb[0].mxu0
        %v5854 = vadd.f32 %v5749, %v5853
        %v5855 = vpop.f32.mrb[0].mxu0
        %v5856 = vpop.f32.mrb[0].mxu0
        %v5857 = vadd.f32 %v5752, %v5856
        %v5858 = vpop.f32.mrb[0].mxu0
        %5859 = vmatprep.mubr.bf16.mxu0 %v2303
        %5860 = vmatmul.mubr.bf16.gmra.mrb[0].mxu0 %v2283
        %v5861 = vpop.f32.mrb[0].mxu0
        %v5862 = vadd.f32 %v5757, %v5861
        %v5863 = vpop.f32.mrb[0].mxu0
        %v5864 = vpop.f32.mrb[0].mxu0
        %v5865 = vadd.f32 %v5760, %v5864
        %v5866 = vpop.f32.mrb[0].mxu0
        %5867 = vdwg.mxu0
        %5868 = vmatprep.subr.bf16.mxu0 0
        %5869 = vmatpush1.bf16.msra.mxu0 %v4756
        %5870 = vmatprep.subr.bf16.mxu0 0
        %5871 = vmatpush1.bf16.msra.mxu0 %v4757
        %5872 = vmatprep.subr.bf16.mxu0 0
        %5873 = vmatpush1.bf16.msra.mxu0 %v4758
        %5874 = vmatprep.subr.bf16.mxu0 0
        %5875 = vmatpush1.bf16.msra.mxu0 %v4759
        %5876 = vmatprep.subr.bf16.mxu0 0
        %5877 = vmatpush1.bf16.msra.mxu0 %v4760
        %5878 = vmatprep.subr.bf16.mxu0 0
        %5879 = vmatpush1.bf16.msra.mxu0 %v4761
        %5880 = vmatprep.subr.bf16.mxu0 0
        %5881 = vmatpush1.bf16.msra.mxu0 %v4762
        %5882 = vmatprep.subr.bf16.mxu0 0
        %5883 = vmatpush1.bf16.msra.mxu0 %v4763
        %5884 = vmatprep.subr.bf16.mxu0 0
        %5885 = vmatpush1.bf16.msra.mxu0 %v4764
        %5886 = vmatprep.subr.bf16.mxu0 0
        %5887 = vmatpush1.bf16.msra.mxu0 %v4765
        %5888 = vmatprep.subr.bf16.mxu0 0
        %5889 = vmatpush1.bf16.msra.mxu0 %v4766
        %5890 = vmatprep.subr.bf16.mxu0 0
        %5891 = vmatpush1.bf16.msra.mxu0 %v4767
        %5892 = vmatprep.subr.bf16.mxu0 0
        %5893 = vmatpush1.bf16.msra.mxu0 %v4768
        %5894 = vmatprep.subr.bf16.mxu0 0
        %5895 = vmatpush1.bf16.msra.mxu0 %v4769
        %5896 = vmatprep.subr.bf16.mxu0 0
        %5897 = vmatpush1.bf16.msra.mxu0 %v4770
        %5898 = vmatprep.subr.bf16.mxu0 0
        %5899 = vmatpush1.bf16.msra.mxu0 %v4771
        %5900 = vmatprep.mubr.bf16.mxu0 %v2612
        %5901 = vmatmul.mubr.bf16.gmra.mrb[0].mxu0 %v2595
        %v5902 = vpop.f32.mrb[0].mxu0
        %v5903 = vadd.f32 %v5798, %v5902
        %v5904 = vpop.f32.mrb[0].mxu0
        %v5905 = vpop.f32.mrb[0].mxu0
        %v5906 = vadd.f32 %v5801, %v5905
        %v5907 = vpop.f32.mrb[0].mxu0
        %5908 = vmatprep.mubr.bf16.mxu0 %v2744
        %5909 = vmatmul.mubr.bf16.gmra.mrb[0].mxu0 %v2735
        %v5910 = vpop.f32.mrb[0].mxu0
        %v5911 = vadd.f32 %v5806, %v5910
        %v5912 = vpop.f32.mrb[0].mxu0
        %v5913 = vpop.f32.mrb[0].mxu0
        %v5914 = vadd.f32 %v5809, %v5913
        %v5915 = vpop.f32.mrb[0].mxu0
        %5916 = vmatprep.mubr.bf16.mxu0 %v2820
        %5917 = vmatmul.mubr.bf16.gmra.mrb[0].mxu0 %v2811
        %v5918 = vpop.f32.mrb[0].mxu0
        %v5919 = vadd.f32 %v5814, %v5918
        %v5920 = vpop.f32.mrb[0].mxu0
        %v5921 = vpop.f32.mrb[0].mxu0
        %v5922 = vadd.f32 %v5817, %v5921
        %v5923 = vpop.f32.mrb[0].mxu0
        %5924 = vmatprep.mubr.bf16.mxu0 %v2896
        %5925 = vmatmul.mubr.bf16.gmra.mrb[0].mxu0 %v2887
        %v5926 = vpop.f32.mrb[0].mxu0
        %v5927 = vadd.f32 %v5822, %v5926
        %v5928 = vpop.f32.mrb[0].mxu0
        %v5929 = vpop.f32.mrb[0].mxu0
        %v5930 = vadd.f32 %v5825, %v5929
        %v5931 = vpop.f32.mrb[0].mxu0
        %5932 = vmatprep.mubr.bf16.mxu0 %v2972
        %5933 = vmatmul.mubr.bf16.gmra.mrb[0].mxu0 %v2963
        %v5934 = vpop.f32.mrb[0].mxu0
        %v5935 = vadd.f32 %v5830, %v5934
        %v5936 = vpop.f32.mrb[0].mxu0
        %v5937 = vpop.f32.mrb[0].mxu0
        %v5938 = vadd.f32 %v5833, %v5937
        %v5939 = vpop.f32.mrb[0].mxu0
        %5940 = vmatprep.mubr.bf16.mxu0 %v3048
        %5941 = vmatmul.mubr.bf16.gmra.mrb[0].mxu0 %v3039
        %v5942 = vpop.f32.mrb[0].mxu0
        %v5943 = vadd.f32 %v5838, %v5942
        %v5944 = vpop.f32.mrb[0].mxu0
        %v5945 = vpop.f32.mrb[0].mxu0
        %v5946 = vadd.f32 %v5841, %v5945
        %v5947 = vpop.f32.mrb[0].mxu0
        %5948 = vmatprep.mubr.bf16.mxu0 %v3124
        %5949 = vmatmul.mubr.bf16.gmra.mrb[0].mxu0 %v3115
        %v5950 = vpop.f32.mrb[0].mxu0
        %v5951 = vadd.f32 %v5846, %v5950
        %v5952 = vpop.f32.mrb[0].mxu0
        %v5953 = vpop.f32.mrb[0].mxu0
        %v5954 = vadd.f32 %v5849, %v5953
        %v5955 = vpop.f32.mrb[0].mxu0
        %5956 = vmatprep.mubr.bf16.mxu0 %v3200
        %5957 = vmatmul.mubr.bf16.gmra.mrb[0].mxu0 %v3191
        %v5958 = vpop.f32.mrb[0].mxu0
        %v5959 = vadd.f32 %v5854, %v5958
        %v5960 = vpop.f32.mrb[0].mxu0
        %v5961 = vpop.f32.mrb[0].mxu0
        %v5962 = vadd.f32 %v5857, %v5961
        %v5963 = vpop.f32.mrb[0].mxu0
        %5964 = vmatprep.mubr.bf16.mxu0 %v3276
        %5965 = vmatmul.mubr.bf16.gmra.mrb[0].mxu0 %v3267
        %v5966 = vpop.f32.mrb[0].mxu0
        %v5967 = vadd.f32 %v5862, %v5966
        %v5968 = vpop.f32.mrb[0].mxu0
        %v5969 = vpop.f32.mrb[0].mxu0
        %v5970 = vadd.f32 %v5865, %v5969
        %v5971 = vpop.f32.mrb[0].mxu0
        %5972 = vdwg.mxu0
        %5973 = vmatprep.subr.bf16.mxu0 0
        %5974 = vmatpush1.bf16.msra.mxu0 %v4772
        %5975 = vmatprep.subr.bf16.mxu0 0
        %5976 = vmatpush1.bf16.msra.mxu0 %v4773
        %5977 = vmatprep.subr.bf16.mxu0 0
        %5978 = vmatpush1.bf16.msra.mxu0 %v4774
        %5979 = vmatprep.subr.bf16.mxu0 0
        %5980 = vmatpush1.bf16.msra.mxu0 %v4775
        %5981 = vmatprep.subr.bf16.mxu0 0
        %5982 = vmatpush1.bf16.msra.mxu0 %v4776
        %5983 = vmatprep.subr.bf16.mxu0 0
        %5984 = vmatpush1.bf16.msra.mxu0 %v4777
        %5985 = vmatprep.subr.bf16.mxu0 0
        %5986 = vmatpush1.bf16.msra.mxu0 %v4778
        %5987 = vmatprep.subr.bf16.mxu0 0
        %5988 = vmatpush1.bf16.msra.mxu0 %v4779
        %5989 = vmatprep.subr.bf16.mxu0 0
        %5990 = vmatpush1.bf16.msra.mxu0 %v4780
        %5991 = vmatprep.subr.bf16.mxu0 0
        %5992 = vmatpush1.bf16.msra.mxu0 %v4781
        %5993 = vmatprep.subr.bf16.mxu0 0
        %5994 = vmatpush1.bf16.msra.mxu0 %v4782
        %5995 = vmatprep.subr.bf16.mxu0 0
        %5996 = vmatpush1.bf16.msra.mxu0 %v4783
        %5997 = vmatprep.subr.bf16.mxu0 0
        %5998 = vmatpush1.bf16.msra.mxu0 %v4784
        %5999 = vmatprep.subr.bf16.mxu0 0
        %6000 = vmatpush1.bf16.msra.mxu0 %v4785
        %6001 = vmatprep.subr.bf16.mxu0 0
        %6002 = vmatpush1.bf16.msra.mxu0 %v4786
        %6003 = vmatprep.subr.bf16.mxu0 0
        %6004 = vmatpush1.bf16.msra.mxu0 %v4787
        %6005 = vmatprep.mubr.bf16.mxu0 %v2646
        %6006 = vmatmul.mubr.bf16.gmra.mrb[0].mxu0 %v2629
        %v6007 = vpop.f32.mrb[0].mxu0
        %v6008 = vadd.f32 %v5903, %v6007
        %v6009 = vpop.f32.mrb[0].mxu0
        %v6010 = vpop.f32.mrb[0].mxu0
        %v6011 = vadd.f32 %v5906, %v6010
        %v6012 = vpop.f32.mrb[0].mxu0
        %6013 = vmatprep.mubr.bf16.mxu0 %v2762
        %6014 = vmatmul.mubr.bf16.gmra.mrb[0].mxu0 %v2753
        %v6015 = vpop.f32.mrb[0].mxu0
        %v6016 = vadd.f32 %v5911, %v6015
        %v6017 = vpop.f32.mrb[0].mxu0
        %v6018 = vpop.f32.mrb[0].mxu0
        %v6019 = vadd.f32 %v5914, %v6018
        %v6020 = vpop.f32.mrb[0].mxu0
        %6021 = vmatprep.mubr.bf16.mxu0 %v2838
        %6022 = vmatmul.mubr.bf16.gmra.mrb[0].mxu0 %v2829
        %v6023 = vpop.f32.mrb[0].mxu0
        %v6024 = vadd.f32 %v5919, %v6023
        %v6025 = vpop.f32.mrb[0].mxu0
        %v6026 = vpop.f32.mrb[0].mxu0
        %v6027 = vadd.f32 %v5922, %v6026
        %v6028 = vpop.f32.mrb[0].mxu0
        %6029 = vmatprep.mubr.bf16.mxu0 %v2914
        %6030 = vmatmul.mubr.bf16.gmra.mrb[0].mxu0 %v2905
        %v6031 = vpop.f32.mrb[0].mxu0
        %v6032 = vadd.f32 %v5927, %v6031
        %v6033 = vpop.f32.mrb[0].mxu0
        %v6034 = vpop.f32.mrb[0].mxu0
        %v6035 = vadd.f32 %v5930, %v6034
        %v6036 = vpop.f32.mrb[0].mxu0
        %6037 = vmatprep.mubr.bf16.mxu0 %v2990
        %6038 = vmatmul.mubr.bf16.gmra.mrb[0].mxu0 %v2981
        %v6039 = vpop.f32.mrb[0].mxu0
        %v6040 = vadd.f32 %v5935, %v6039
        %v6041 = vpop.f32.mrb[0].mxu0
        %v6042 = vpop.f32.mrb[0].mxu0
        %v6043 = vadd.f32 %v5938, %v6042
        %v6044 = vpop.f32.mrb[0].mxu0
        %6045 = vmatprep.mubr.bf16.mxu0 %v3066
        %6046 = vmatmul.mubr.bf16.gmra.mrb[0].mxu0 %v3057
        %v6047 = vpop.f32.mrb[0].mxu0
        %v6048 = vadd.f32 %v5943, %v6047
        %v6049 = vpop.f32.mrb[0].mxu0
        %v6050 = vpop.f32.mrb[0].mxu0
        %v6051 = vadd.f32 %v5946, %v6050
        %v6052 = vpop.f32.mrb[0].mxu0
        %6053 = vmatprep.mubr.bf16.mxu0 %v3142
        %6054 = vmatmul.mubr.bf16.gmra.mrb[0].mxu0 %v3133
        %v6055 = vpop.f32.mrb[0].mxu0
        %v6056 = vadd.f32 %v5951, %v6055
        %v6057 = vpop.f32.mrb[0].mxu0
        %v6058 = vpop.f32.mrb[0].mxu0
        %v6059 = vadd.f32 %v5954, %v6058
        %v6060 = vpop.f32.mrb[0].mxu0
        %6061 = vmatprep.mubr.bf16.mxu0 %v3218
        %6062 = vmatmul.mubr.bf16.gmra.mrb[0].mxu0 %v3209
        %v6063 = vpop.f32.mrb[0].mxu0
        %v6064 = vadd.f32 %v5959, %v6063
        %v6065 = vpop.f32.mrb[0].mxu0
        %v6066 = vpop.f32.mrb[0].mxu0
        %v6067 = vadd.f32 %v5962, %v6066
        %v6068 = vpop.f32.mrb[0].mxu0
        %6069 = vmatprep.mubr.bf16.mxu0 %v3294
        %6070 = vmatmul.mubr.bf16.gmra.mrb[0].mxu0 %v3285
        %v6071 = vpop.f32.mrb[0].mxu0
        %v6072 = vadd.f32 %v5967, %v6071
        %v6073 = vpop.f32.mrb[0].mxu0
        %v6074 = vpop.f32.mrb[0].mxu0
        %v6075 = vadd.f32 %v5970, %v6074
        %v6076 = vpop.f32.mrb[0].mxu0
        %6077 = vdwg.mxu0
        %6078 = vmatprep.subr.bf16.mxu0 0
        %6079 = vmatpush1.bf16.msra.mxu0 %v4788
        %6080 = vmatprep.subr.bf16.mxu0 0
        %6081 = vmatpush1.bf16.msra.mxu0 %v4789
        %6082 = vmatprep.subr.bf16.mxu0 0
        %6083 = vmatpush1.bf16.msra.mxu0 %v4790
        %6084 = vmatprep.subr.bf16.mxu0 0
        %6085 = vmatpush1.bf16.msra.mxu0 %v4791
        %6086 = vmatprep.subr.bf16.mxu0 0
        %6087 = vmatpush1.bf16.msra.mxu0 %v4792
        %6088 = vmatprep.subr.bf16.mxu0 0
        %6089 = vmatpush1.bf16.msra.mxu0 %v4793
        %6090 = vmatprep.subr.bf16.mxu0 0
        %6091 = vmatpush1.bf16.msra.mxu0 %v4794
        %6092 = vmatprep.subr.bf16.mxu0 0
        %6093 = vmatpush1.bf16.msra.mxu0 %v4795
        %6094 = vmatprep.subr.bf16.mxu0 0
        %6095 = vmatpush1.bf16.msra.mxu0 %v4796
        %6096 = vmatprep.subr.bf16.mxu0 0
        %6097 = vmatpush1.bf16.msra.mxu0 %v4797
        %6098 = vmatprep.subr.bf16.mxu0 0
        %6099 = vmatpush1.bf16.msra.mxu0 %v4798
        %6100 = vmatprep.subr.bf16.mxu0 0
        %6101 = vmatpush1.bf16.msra.mxu0 %v4799
        %6102 = vmatprep.subr.bf16.mxu0 0
        %6103 = vmatpush1.bf16.msra.mxu0 %v4800
        %6104 = vmatprep.subr.bf16.mxu0 0
        %6105 = vmatpush1.bf16.msra.mxu0 %v4801
        %6106 = vmatprep.subr.bf16.mxu0 0
        %6107 = vmatpush1.bf16.msra.mxu0 %v4802
        %6108 = vmatprep.subr.bf16.mxu0 0
        %6109 = vmatpush1.bf16.msra.mxu0 %v4803
        %6110 = vmatprep.mubr.bf16.mxu0 %v2680
        %6111 = vmatmul.mubr.bf16.gmra.mrb[0].mxu0 %v2663
        %v6112 = vpop.f32.mrb[0].mxu0
        %v6113 = vadd.f32 %v6008, %v6112
        %v6114 = vpop.f32.mrb[0].mxu0
        %v6115 = vpop.f32.mrb[0].mxu0
        %v6116 = vadd.f32 %v6011, %v6115
        %v6117 = vpop.f32.mrb[0].mxu0
        %6118 = vmatprep.mubr.bf16.mxu0 %v2780
        %6119 = vmatmul.mubr.bf16.gmra.mrb[0].mxu0 %v2771
        %v6120 = vpop.f32.mrb[0].mxu0
        %v6121 = vadd.f32 %v6016, %v6120
        %v6122 = vpop.f32.mrb[0].mxu0
        %v6123 = vpop.f32.mrb[0].mxu0
        %v6124 = vadd.f32 %v6019, %v6123
        %v6125 = vpop.f32.mrb[0].mxu0
        %6126 = vmatprep.mubr.bf16.mxu0 %v2856
        %6127 = vmatmul.mubr.bf16.gmra.mrb[0].mxu0 %v2847
        %v6128 = vpop.f32.mrb[0].mxu0
        %v6129 = vadd.f32 %v6024, %v6128
        %v6130 = vpop.f32.mrb[0].mxu0
        %v6131 = vpop.f32.mrb[0].mxu0
        %v6132 = vadd.f32 %v6027, %v6131
        %v6133 = vpop.f32.mrb[0].mxu0
        %6134 = vmatprep.mubr.bf16.mxu0 %v2932
        %6135 = vmatmul.mubr.bf16.gmra.mrb[0].mxu0 %v2923
        %v6136 = vpop.f32.mrb[0].mxu0
        %v6137 = vadd.f32 %v6032, %v6136
        %v6138 = vpop.f32.mrb[0].mxu0
        %v6139 = vpop.f32.mrb[0].mxu0
        %v6140 = vadd.f32 %v6035, %v6139
        %v6141 = vpop.f32.mrb[0].mxu0
        %6142 = vmatprep.mubr.bf16.mxu0 %v3008
        %6143 = vmatmul.mubr.bf16.gmra.mrb[0].mxu0 %v2999
        %v6144 = vpop.f32.mrb[0].mxu0
        %v6145 = vadd.f32 %v6040, %v6144
        %v6146 = vpop.f32.mrb[0].mxu0
        %v6147 = vpop.f32.mrb[0].mxu0
        %v6148 = vadd.f32 %v6043, %v6147
        %v6149 = vpop.f32.mrb[0].mxu0
        %6150 = vmatprep.mubr.bf16.mxu0 %v3084
        %6151 = vmatmul.mubr.bf16.gmra.mrb[0].mxu0 %v3075
        %v6152 = vpop.f32.mrb[0].mxu0
        %v6153 = vadd.f32 %v6048, %v6152
        %v6154 = vpop.f32.mrb[0].mxu0
        %v6155 = vpop.f32.mrb[0].mxu0
        %v6156 = vadd.f32 %v6051, %v6155
        %v6157 = vpop.f32.mrb[0].mxu0
        %6158 = vmatprep.mubr.bf16.mxu0 %v3160
        %6159 = vmatmul.mubr.bf16.gmra.mrb[0].mxu0 %v3151
        %v6160 = vpop.f32.mrb[0].mxu0
        %v6161 = vadd.f32 %v6056, %v6160
        %v6162 = vpop.f32.mrb[0].mxu0
        %v6163 = vpop.f32.mrb[0].mxu0
        %v6164 = vadd.f32 %v6059, %v6163
        %v6165 = vpop.f32.mrb[0].mxu0
        %6166 = vmatprep.mubr.bf16.mxu0 %v3236
        %6167 = vmatmul.mubr.bf16.gmra.mrb[0].mxu0 %v3227
        %v6168 = vpop.f32.mrb[0].mxu0
        %v6169 = vadd.f32 %v6064, %v6168
        %v6170 = vpop.f32.mrb[0].mxu0
        %v6171 = vpop.f32.mrb[0].mxu0
        %v6172 = vadd.f32 %v6067, %v6171
        %v6173 = vpop.f32.mrb[0].mxu0
        %6174 = vmatprep.mubr.bf16.mxu0 %v3312
        %6175 = vmatmul.mubr.bf16.gmra.mrb[0].mxu0 %v3303
        %v6176 = vpop.f32.mrb[0].mxu0
        %v6177 = vadd.f32 %v6072, %v6176
        %v6178 = vpop.f32.mrb[0].mxu0
        %v6179 = vpop.f32.mrb[0].mxu0
        %v6180 = vadd.f32 %v6075, %v6179
        %v6181 = vpop.f32.mrb[0].mxu0
        %6182 = vdwg.mxu0
        %6183 = vmatprep.subr.bf16.mxu0 0
        %6184 = vmatpush1.bf16.msra.mxu0 %v4804
        %6185 = vmatprep.subr.bf16.mxu0 0
        %6186 = vmatpush1.bf16.msra.mxu0 %v4805
        %6187 = vmatprep.subr.bf16.mxu0 0
        %6188 = vmatpush1.bf16.msra.mxu0 %v4806
        %6189 = vmatprep.subr.bf16.mxu0 0
        %6190 = vmatpush1.bf16.msra.mxu0 %v4807
        %6191 = vmatprep.subr.bf16.mxu0 0
        %6192 = vmatpush1.bf16.msra.mxu0 %v4808
        %6193 = vmatprep.subr.bf16.mxu0 0
        %6194 = vmatpush1.bf16.msra.mxu0 %v4809
        %6195 = vmatprep.subr.bf16.mxu0 0
        %6196 = vmatpush1.bf16.msra.mxu0 %v4810
        %6197 = vmatprep.subr.bf16.mxu0 0
        %6198 = vmatpush1.bf16.msra.mxu0 %v4811
        %6199 = vmatprep.subr.bf16.mxu0 0
        %6200 = vmatpush1.bf16.msra.mxu0 %v4812
        %6201 = vmatprep.subr.bf16.mxu0 0
        %6202 = vmatpush1.bf16.msra.mxu0 %v4813
        %6203 = vmatprep.subr.bf16.mxu0 0
        %6204 = vmatpush1.bf16.msra.mxu0 %v4814
        %6205 = vmatprep.subr.bf16.mxu0 0
        %6206 = vmatpush1.bf16.msra.mxu0 %v4815
        %6207 = vmatprep.subr.bf16.mxu0 0
        %6208 = vmatpush1.bf16.msra.mxu0 %v4816
        %6209 = vmatprep.subr.bf16.mxu0 0
        %6210 = vmatpush1.bf16.msra.mxu0 %v4817
        %6211 = vmatprep.subr.bf16.mxu0 0
        %6212 = vmatpush1.bf16.msra.mxu0 %v4818
        %6213 = vmatprep.subr.bf16.mxu0 0
        %6214 = vmatpush1.bf16.msra.mxu0 %v4819
        %6215 = vmatprep.mubr.bf16.mxu0 %v2714
        %6216 = vmatmul.mubr.bf16.gmra.mrb[0].mxu0 %v2697
        %v6217 = vpop.f32.mrb[0].mxu0
        %v6218 = vadd.f32 %v6113, %v6217
        %v6219 = vpop.f32.mrb[0].mxu0
        %v6220 = vpop.f32.mrb[0].mxu0
        %v6221 = vadd.f32 %v6116, %v6220
        %v6222 = vpop.f32.mrb[0].mxu0
        %6223 = vmatprep.mubr.bf16.mxu0 %v2798
        %6224 = vmatmul.mubr.bf16.gmra.mrb[0].mxu0 %v2789
        %v6225 = vpop.f32.mrb[0].mxu0
        %v6226 = vadd.f32 %v6121, %v6225
        %v6227 = vpop.f32.mrb[0].mxu0
        %v6228 = vpop.f32.mrb[0].mxu0
        %v6229 = vadd.f32 %v6124, %v6228
        %v6230 = vpop.f32.mrb[0].mxu0
        %6231 = vmatprep.mubr.bf16.mxu0 %v2874
        %6232 = vmatmul.mubr.bf16.gmra.mrb[0].mxu0 %v2865
        %v6233 = vpop.f32.mrb[0].mxu0
        %v6234 = vadd.f32 %v6129, %v6233
        %v6235 = vpop.f32.mrb[0].mxu0
        %v6236 = vpop.f32.mrb[0].mxu0
        %v6237 = vadd.f32 %v6132, %v6236
        %v6238 = vpop.f32.mrb[0].mxu0
        %6239 = vmatprep.mubr.bf16.mxu0 %v2950
        %6240 = vmatmul.mubr.bf16.gmra.mrb[0].mxu0 %v2941
        %v6241 = vpop.f32.mrb[0].mxu0
        %v6242 = vadd.f32 %v6137, %v6241
        %v6243 = vpop.f32.mrb[0].mxu0
        %v6244 = vpop.f32.mrb[0].mxu0
        %v6245 = vadd.f32 %v6140, %v6244
        %v6246 = vpop.f32.mrb[0].mxu0
        %6247 = vmatprep.mubr.bf16.mxu0 %v3026
        %6248 = vmatmul.mubr.bf16.gmra.mrb[0].mxu0 %v3017
        %v6249 = vpop.f32.mrb[0].mxu0
        %v6250 = vadd.f32 %v6145, %v6249
        %v6251 = vpop.f32.mrb[0].mxu0
        %v6252 = vpop.f32.mrb[0].mxu0
        %v6253 = vadd.f32 %v6148, %v6252
        %v6254 = vpop.f32.mrb[0].mxu0
        %6255 = vmatprep.mubr.bf16.mxu0 %v3102
        %6256 = vmatmul.mubr.bf16.gmra.mrb[0].mxu0 %v3093
        %v6257 = vpop.f32.mrb[0].mxu0
        %v6258 = vadd.f32 %v6153, %v6257
        %v6259 = vpop.f32.mrb[0].mxu0
        %v6260 = vpop.f32.mrb[0].mxu0
        %v6261 = vadd.f32 %v6156, %v6260
        %v6262 = vpop.f32.mrb[0].mxu0
        %6263 = vmatprep.mubr.bf16.mxu0 %v3178
        %6264 = vmatmul.mubr.bf16.gmra.mrb[0].mxu0 %v3169
        %v6265 = vpop.f32.mrb[0].mxu0
        %v6266 = vadd.f32 %v6161, %v6265
        %v6267 = vpop.f32.mrb[0].mxu0
        %v6268 = vpop.f32.mrb[0].mxu0
        %v6269 = vadd.f32 %v6164, %v6268
        %v6270 = vpop.f32.mrb[0].mxu0
        %6271 = vmatprep.mubr.bf16.mxu0 %v3254
        %6272 = vmatmul.mubr.bf16.gmra.mrb[0].mxu0 %v3245
        %v6273 = vpop.f32.mrb[0].mxu0
        %v6274 = vadd.f32 %v6169, %v6273
        %v6275 = vpop.f32.mrb[0].mxu0
        %v6276 = vpop.f32.mrb[0].mxu0
        %v6277 = vadd.f32 %v6172, %v6276
        %v6278 = vpop.f32.mrb[0].mxu0
        %6279 = vmatprep.mubr.bf16.mxu0 %v3330
        %6280 = vmatmul.mubr.bf16.gmra.mrb[0].mxu0 %v3321
        %v6281 = vpop.f32.mrb[0].mxu0
        %v6282 = vadd.f32 %v6177, %v6281
        %v6283 = vpop.f32.mrb[0].mxu0
        %v6284 = vpop.f32.mrb[0].mxu0
        %v6285 = vadd.f32 %v6180, %v6284
        %v6286 = vpop.f32.mrb[0].mxu0
        %6287 = vdwg.mxu0
        %6288 = vmatprep.subr.bf16.mxu0 0
        %6289 = vmatpush1.bf16.msra.mxu0 %v4820
        %6290 = vmatprep.subr.bf16.mxu0 0
        %6291 = vmatpush1.bf16.msra.mxu0 %v4821
        %6292 = vmatprep.subr.bf16.mxu0 0
        %6293 = vmatpush1.bf16.msra.mxu0 %v4822
        %6294 = vmatprep.subr.bf16.mxu0 0
        %6295 = vmatpush1.bf16.msra.mxu0 %v4823
        %6296 = vmatprep.subr.bf16.mxu0 0
        %6297 = vmatpush1.bf16.msra.mxu0 %v4824
        %6298 = vmatprep.subr.bf16.mxu0 0
        %6299 = vmatpush1.bf16.msra.mxu0 %v4825
        %6300 = vmatprep.subr.bf16.mxu0 0
        %6301 = vmatpush1.bf16.msra.mxu0 %v4826
        %6302 = vmatprep.subr.bf16.mxu0 0
        %6303 = vmatpush1.bf16.msra.mxu0 %v4827
        %6304 = vmatprep.subr.bf16.mxu0 0
        %6305 = vmatpush1.bf16.msra.mxu0 0
        %6306 = vmatprep.subr.bf16.mxu0 0
        %6307 = vmatpush1.bf16.msra.mxu0 0
        %6308 = vmatprep.subr.bf16.mxu0 0
        %6309 = vmatpush1.bf16.msra.mxu0 0
        %6310 = vmatprep.subr.bf16.mxu0 0
        %6311 = vmatpush1.bf16.msra.mxu0 0
        %6312 = vmatprep.subr.bf16.mxu0 0
        %6313 = vmatpush1.bf16.msra.mxu0 0
        %6314 = vmatprep.subr.bf16.mxu0 0
        %6315 = vmatpush1.bf16.msra.mxu0 0
        %6316 = vmatprep.subr.bf16.mxu0 0
        %6317 = vmatpush1.bf16.msra.mxu0 0
        %6318 = vmatprep.subr.bf16.mxu0 0
        %6319 = vmatpush1.bf16.msra.mxu0 0
        %6320 = vmatprep.mubr.bf16.mxu0 0
        %6321 = vmatmul.mubr.bf16.gmra.mrb[0].mxu0 %v2731
        %v6322 = vpop.f32.mrb[0].mxu0
        %v6323 = vadd.f32 %v6218, %v6322
        %v6324 = vpop.f32.mrb[0].mxu0
        %v6325 = vpop.f32.mrb[0].mxu0
        %v6326 = vadd.f32 %v6221, %v6325
        %v6327 = vpop.f32.mrb[0].mxu0
        %6328 = vmatprep.mubr.bf16.mxu0 0
        %6329 = vmatmul.mubr.bf16.gmra.mrb[0].mxu0 %v2807
        %v6330 = vpop.f32.mrb[0].mxu0
        %v6331 = vadd.f32 %v6226, %v6330
        %v6332 = vpop.f32.mrb[0].mxu0
        %v6333 = vpop.f32.mrb[0].mxu0
        %v6334 = vadd.f32 %v6229, %v6333
        %v6335 = vpop.f32.mrb[0].mxu0
        %6336 = vmatprep.mubr.bf16.mxu0 0
        %6337 = vmatmul.mubr.bf16.gmra.mrb[0].mxu0 %v2883
        %v6338 = vpop.f32.mrb[0].mxu0
        %v6339 = vadd.f32 %v6234, %v6338
        %v6340 = vpop.f32.mrb[0].mxu0
        %v6341 = vpop.f32.mrb[0].mxu0
        %v6342 = vadd.f32 %v6237, %v6341
        %v6343 = vpop.f32.mrb[0].mxu0
        %6344 = vmatprep.mubr.bf16.mxu0 0
        %6345 = vmatmul.mubr.bf16.gmra.mrb[0].mxu0 %v2959
        %v6346 = vpop.f32.mrb[0].mxu0
        %v6347 = vadd.f32 %v6242, %v6346
        %v6348 = vpop.f32.mrb[0].mxu0
        %v6349 = vpop.f32.mrb[0].mxu0
        %v6350 = vadd.f32 %v6245, %v6349
        %v6351 = vpop.f32.mrb[0].mxu0
        %6352 = vmatprep.mubr.bf16.mxu0 0
        %6353 = vmatmul.mubr.bf16.gmra.mrb[0].mxu0 %v3035
        %v6354 = vpop.f32.mrb[0].mxu0
        %v6355 = vadd.f32 %v6250, %v6354
        %v6356 = vpop.f32.mrb[0].mxu0
        %v6357 = vpop.f32.mrb[0].mxu0
        %v6358 = vadd.f32 %v6253, %v6357
        %v6359 = vpop.f32.mrb[0].mxu0
        %6360 = vmatprep.mubr.bf16.mxu0 0
        %6361 = vmatmul.mubr.bf16.gmra.mrb[0].mxu0 %v3111
        %v6362 = vpop.f32.mrb[0].mxu0
        %v6363 = vadd.f32 %v6258, %v6362
        %v6364 = vpop.f32.mrb[0].mxu0
        %v6365 = vpop.f32.mrb[0].mxu0
        %v6366 = vadd.f32 %v6261, %v6365
        %v6367 = vpop.f32.mrb[0].mxu0
        %6368 = vmatprep.mubr.bf16.mxu0 0
        %6369 = vmatmul.mubr.bf16.gmra.mrb[0].mxu0 %v3187
        %v6370 = vpop.f32.mrb[0].mxu0
        %v6371 = vadd.f32 %v6266, %v6370
        %v6372 = vpop.f32.mrb[0].mxu0
        %v6373 = vpop.f32.mrb[0].mxu0
        %v6374 = vadd.f32 %v6269, %v6373
        %v6375 = vpop.f32.mrb[0].mxu0
        %6376 = vmatprep.mubr.bf16.mxu0 0
        %6377 = vmatmul.mubr.bf16.gmra.mrb[0].mxu0 %v3263
        %v6378 = vpop.f32.mrb[0].mxu0
        %v6379 = vadd.f32 %v6274, %v6378
        %v6380 = vpop.f32.mrb[0].mxu0
        %v6381 = vpop.f32.mrb[0].mxu0
        %v6382 = vadd.f32 %v6277, %v6381
        %v6383 = vpop.f32.mrb[0].mxu0
        %6384 = vmatprep.mubr.bf16.mxu0 0
        %6385 = vmatmul.mubr.bf16.gmra.mrb[0].mxu0 %v3339
        %v6386 = vpop.f32.mrb[0].mxu0
        %v6387 = vadd.f32 %v6282, %v6386
        %v6388 = vpop.f32.mrb[0].mxu0
        %v6389 = vpop.f32.mrb[0].mxu0
        %v6390 = vadd.f32 %v6285, %v6389
        %v6391 = vpop.f32.mrb[0].mxu0
        %6392 = vdwg.mxu0
        %v6393 = vmax.f32 %v6323, 0.0
        %v6394 = vmax.f32 %v6326, 0.0
        %v6395 = vmax.f32 %v6331, 0.0
        %v6396 = vmax.f32 %v6334, 0.0
        %v6397 = vmax.f32 %v6339, 0.0
        %v6398 = vmax.f32 %v6342, 0.0
        %v6399 = vmax.f32 %v6347, 0.0
        %v6400 = vmax.f32 %v6350, 0.0
        %v6401 = vmax.f32 %v6355, 0.0
        %v6402 = vmax.f32 %v6358, 0.0
        %v6403 = vmax.f32 %v6363, 0.0
        %v6404 = vmax.f32 %v6366, 0.0
        %v6405 = vmax.f32 %v6371, 0.0
        %v6406 = vmax.f32 %v6374, 0.0
        %v6407 = vmax.f32 %v6379, 0.0
        %v6408 = vmax.f32 %v6382, 0.0
        %v6409 = vmax.f32 %v6387, 0.0
        %v6410 = vmax.f32 %v6390, 0.0
        %6411 = vst [vmem:[#allocation4] sm:$0xff] %v6393
        %6412 = vst [vmem:[#allocation4 + $0x8] sm:$0xff] %v6394
        %6413 = vst [vmem:[#allocation4 + $0x10] sm:$0xff] %v6395
        %6414 = vst [vmem:[#allocation4 + $0x18] sm:$0xff] %v6396
        %6415 = vst [vmem:[#allocation4 + $0x20] sm:$0xff] %v6397
        %6416 = vst [vmem:[#allocation4 + $0x28] sm:$0xff] %v6398
        %6417 = vst [vmem:[#allocation4 + $0x30] sm:$0xff] %v6399
        %6418 = vst [vmem:[#allocation4 + $0x38] sm:$0xff] %v6400
        %6419 = vst [vmem:[#allocation4 + $0x40] sm:$0xff] %v6401
        %6420 = vst [vmem:[#allocation4 + $0x48] sm:$0xff] %v6402
        %6421 = vst [vmem:[#allocation4 + $0x50] sm:$0xff] %v6403
        %6422 = vst [vmem:[#allocation4 + $0x58] sm:$0xff] %v6404
        %6423 = vst [vmem:[#allocation4 + $0x60] sm:$0xff] %v6405
        %6424 = vst [vmem:[#allocation4 + $0x68] sm:$0xff] %v6406
        %6425 = vst [vmem:[#allocation4 + $0x70] sm:$0xff] %v6407
        %6426 = vst [vmem:[#allocation4 + $0x78] sm:$0xff] %v6408
        %6427 = vst [vmem:[#allocation4 + $0x80] sm:$0xff] %v6409
        %6428 = vst [vmem:[#allocation4 + $0x88] sm:$0xff] %v6410
        %v6429 = vld [vmem:[#allocation4 + $0x1a] sm:$0x1]
        %v6430 = vld [vmem:[#allocation4 + $0x1b] sm:$0x1]
        %v6431 = vmax.f32 %v6429, %v6430
        %v6432 = vld [vmem:[#allocation4 + $0x26] sm:$0x1]
        %v6433 = vmax.f32 %v6431, %v6432
        %v6434 = vld [vmem:[#allocation4 + $0x27] sm:$0x1]
        %v6435 = vmax.f32 %v6433, %v6434
        %v6436 = vld [vmem:[#allocation4 + $0x1c] sm:$0x1]
        %v6437 = vld [vmem:[#allocation4 + $0x1d] sm:$0x1]
        %v6438 = vmax.f32 %v6436, %v6437
        %v6439 = vld [vmem:[#allocation4 + $0x28] sm:$0x1]
        %v6440 = vmax.f32 %v6438, %v6439
        %v6441 = vld [vmem:[#allocation4 + $0x29] sm:$0x1]
        %v6442 = vmax.f32 %v6440, %v6441
        %v6443 = vld [vmem:[#allocation4 + $0x1e] sm:$0x1]
        %v6444 = vld [vmem:[#allocation4 + $0x1f] sm:$0x1]
        %v6445 = vmax.f32 %v6443, %v6444
        %v6446 = vld [vmem:[#allocation4 + $0x2a] sm:$0x1]
        %v6447 = vmax.f32 %v6445, %v6446
        %v6448 = vld [vmem:[#allocation4 + $0x2b] sm:$0x1]
        %v6449 = vmax.f32 %v6447, %v6448
        %v6450 = vld [vmem:[#allocation4 + $0x20] sm:$0x1]
        %v6451 = vld [vmem:[#allocation4 + $0x21] sm:$0x1]
        %v6452 = vmax.f32 %v6450, %v6451
        %v6453 = vld [vmem:[#allocation4 + $0x2c] sm:$0x1]
        %v6454 = vmax.f32 %v6452, %v6453
        %v6455 = vld [vmem:[#allocation4 + $0x2d] sm:$0x1]
        %v6456 = vmax.f32 %v6454, %v6455
        %v6457 = vld [vmem:[#allocation4 + $0x32] sm:$0x1]
        %v6458 = vld [vmem:[#allocation4 + $0x33] sm:$0x1]
        %v6459 = vmax.f32 %v6457, %v6458
        %v6460 = vld [vmem:[#allocation4 + $0x3e] sm:$0x1]
        %v6461 = vmax.f32 %v6459, %v6460
        %v6462 = vld [vmem:[#allocation4 + $0x3f] sm:$0x1]
        %v6463 = vmax.f32 %v6461, %v6462
        %v6464 = vld [vmem:[#allocation4 + $0x34] sm:$0x1]
        %v6465 = vld [vmem:[#allocation4 + $0x35] sm:$0x1]
        %v6466 = vmax.f32 %v6464, %v6465
        %v6467 = vld [vmem:[#allocation4 + $0x40] sm:$0x1]
        %v6468 = vmax.f32 %v6466, %v6467
        %v6469 = vld [vmem:[#allocation4 + $0x41] sm:$0x1]
        %v6470 = vmax.f32 %v6468, %v6469
        %v6471 = vld [vmem:[#allocation4 + $0x36] sm:$0x1]
        %v6472 = vld [vmem:[#allocation4 + $0x37] sm:$0x1]
        %v6473 = vmax.f32 %v6471, %v6472
        %v6474 = vld [vmem:[#allocation4 + $0x42] sm:$0x1]
        %v6475 = vmax.f32 %v6473, %v6474
        %v6476 = vld [vmem:[#allocation4 + $0x43] sm:$0x1]
        %v6477 = vmax.f32 %v6475, %v6476
        %v6478 = vld [vmem:[#allocation4 + $0x38] sm:$0x1]
        %v6479 = vld [vmem:[#allocation4 + $0x39] sm:$0x1]
        %v6480 = vmax.f32 %v6478, %v6479
        %v6481 = vld [vmem:[#allocation4 + $0x44] sm:$0x1]
        %v6482 = vmax.f32 %v6480, %v6481
        %v6483 = vld [vmem:[#allocation4 + $0x45] sm:$0x1]
        %v6484 = vmax.f32 %v6482, %v6483
        %v6485 = vld [vmem:[#allocation4 + $0x4a] sm:$0x1]
        %v6486 = vld [vmem:[#allocation4 + $0x4b] sm:$0x1]
        %v6487 = vmax.f32 %v6485, %v6486
        %v6488 = vld [vmem:[#allocation4 + $0x56] sm:$0x1]
        %v6489 = vmax.f32 %v6487, %v6488
        %v6490 = vld [vmem:[#allocation4 + $0x57] sm:$0x1]
        %v6491 = vmax.f32 %v6489, %v6490
        %v6492 = vld [vmem:[#allocation4 + $0x4c] sm:$0x1]
        %v6493 = vld [vmem:[#allocation4 + $0x4d] sm:$0x1]
        %v6494 = vmax.f32 %v6492, %v6493
        %v6495 = vld [vmem:[#allocation4 + $0x58] sm:$0x1]
        %v6496 = vmax.f32 %v6494, %v6495
        %v6497 = vld [vmem:[#allocation4 + $0x59] sm:$0x1]
        %v6498 = vmax.f32 %v6496, %v6497
        %v6499 = vld [vmem:[#allocation4 + $0x4e] sm:$0x1]
        %v6500 = vld [vmem:[#allocation4 + $0x4f] sm:$0x1]
        %v6501 = vmax.f32 %v6499, %v6500
        %v6502 = vld [vmem:[#allocation4 + $0x5a] sm:$0x1]
        %v6503 = vmax.f32 %v6501, %v6502
        %v6504 = vld [vmem:[#allocation4 + $0x5b] sm:$0x1]
        %v6505 = vmax.f32 %v6503, %v6504
        %v6506 = vld [vmem:[#allocation4 + $0x50] sm:$0x1]
        %v6507 = vld [vmem:[#allocation4 + $0x51] sm:$0x1]
        %v6508 = vmax.f32 %v6506, %v6507
        %v6509 = vld [vmem:[#allocation4 + $0x5c] sm:$0x1]
        %v6510 = vmax.f32 %v6508, %v6509
        %v6511 = vld [vmem:[#allocation4 + $0x5d] sm:$0x1]
        %v6512 = vmax.f32 %v6510, %v6511
        %v6513 = vld [vmem:[#allocation4 + $0x62] sm:$0x1]
        %v6514 = vld [vmem:[#allocation4 + $0x63] sm:$0x1]
        %v6515 = vmax.f32 %v6513, %v6514
        %v6516 = vld [vmem:[#allocation4 + $0x6e] sm:$0x1]
        %v6517 = vmax.f32 %v6515, %v6516
        %v6518 = vld [vmem:[#allocation4 + $0x6f] sm:$0x1]
        %v6519 = vmax.f32 %v6517, %v6518
        %v6520 = vld [vmem:[#allocation4 + $0x64] sm:$0x1]
        %v6521 = vld [vmem:[#allocation4 + $0x65] sm:$0x1]
        %v6522 = vmax.f32 %v6520, %v6521
        %v6523 = vld [vmem:[#allocation4 + $0x70] sm:$0x1]
        %v6524 = vmax.f32 %v6522, %v6523
        %v6525 = vld [vmem:[#allocation4 + $0x71] sm:$0x1]
        %v6526 = vmax.f32 %v6524, %v6525
        %v6527 = vld [vmem:[#allocation4 + $0x66] sm:$0x1]
        %v6528 = vld [vmem:[#allocation4 + $0x67] sm:$0x1]
        %v6529 = vmax.f32 %v6527, %v6528
        %v6530 = vld [vmem:[#allocation4 + $0x72] sm:$0x1]
        %v6531 = vmax.f32 %v6529, %v6530
        %v6532 = vld [vmem:[#allocation4 + $0x73] sm:$0x1]
        %v6533 = vmax.f32 %v6531, %v6532
        %v6534 = vld [vmem:[#allocation4 + $0x68] sm:$0x1]
        %v6535 = vld [vmem:[#allocation4 + $0x69] sm:$0x1]
        %v6536 = vmax.f32 %v6534, %v6535
        %v6537 = vld [vmem:[#allocation4 + $0x74] sm:$0x1]
        %v6538 = vmax.f32 %v6536, %v6537
        %v6539 = vld [vmem:[#allocation4 + $0x75] sm:$0x1]
        %v6540 = vmax.f32 %v6538, %v6539
        %v6541 = vpack.c.bf16 %v6435, %v6435
        %v6542 = vpack.c.bf16 %v6442, %v6442
        %v6543 = vpack.c.bf16 %v6449, %v6449
        %v6544 = vpack.c.bf16 %v6456, %v6456
        %v6545 = vpack.c.bf16 %v6463, %v6463
        %v6546 = vpack.c.bf16 %v6470, %v6470
        %v6547 = vpack.c.bf16 %v6477, %v6477
        %v6548 = vpack.c.bf16 %v6484, %v6484
        %v6549 = vpack.c.bf16 %v6491, %v6491
        %v6550 = vpack.c.bf16 %v6498, %v6498
        %v6551 = vpack.c.bf16 %v6505, %v6505
        %v6552 = vpack.c.bf16 %v6512, %v6512
        %v6553 = vpack.c.bf16 %v6519, %v6519
        %v6554 = vpack.c.bf16 %v6526, %v6526
        %v6555 = vpack.c.bf16 %v6533, %v6533
        %v6556 = vpack.c.bf16 %v6540, %v6540
        %v6557 = vld [vmem:[%s5] sm:$0xf]
        %v6558 = vld [vmem:[%s5 + $0x4] sm:$0xf]
        %v6559 = vld [vmem:[%s5 + $0x8] sm:$0xf]
        %v6560 = vld [vmem:[%s5 + $0xc] sm:$0xf]
        %v6561 = vld [vmem:[%s5 + $0x10] sm:$0xf]
        %v6562 = vld [vmem:[%s5 + $0x14] sm:$0xf]
        %v6563 = vld [vmem:[%s5 + $0x18] sm:$0xf]
        %v6564 = vld [vmem:[%s5 + $0x1c] sm:$0xf]
        %v6565 = vld [vmem:[%s5 + $0x20] sm:$0xf]
        %v6566 = vld [vmem:[%s5 + $0x24] sm:$0xf]
        %v6567 = vld [vmem:[%s5 + $0x28] sm:$0xf]
        %v6568 = vld [vmem:[%s5 + $0x2c] sm:$0xf]
        %v6569 = vld [vmem:[%s5 + $0x30] sm:$0xf]
        %v6570 = vld [vmem:[%s5 + $0x34] sm:$0xf]
        %v6571 = vld [vmem:[%s5 + $0x38] sm:$0xf]
        %v6572 = vld [vmem:[%s5 + $0x3c] sm:$0xf]
        %v6573 = vld [vmem:[%s5 + $0x40] sm:$0xf]
        %v6574 = vld [vmem:[%s5 + $0x44] sm:$0xf]
        %v6575 = vld [vmem:[%s5 + $0x48] sm:$0xf]
        %v6576 = vld [vmem:[%s5 + $0x4c] sm:$0xf]
        %v6577 = vld [vmem:[%s5 + $0x50] sm:$0xf]
        %v6578 = vld [vmem:[%s5 + $0x54] sm:$0xf]
        %v6579 = vld [vmem:[%s5 + $0x58] sm:$0xf]
        %v6580 = vld [vmem:[%s5 + $0x5c] sm:$0xf]
        %v6581 = vld [vmem:[%s5 + $0x60] sm:$0xf]
        %v6582 = vld [vmem:[%s5 + $0x64] sm:$0xf]
        %v6583 = vld [vmem:[%s5 + $0x68] sm:$0xf]
        %v6584 = vld [vmem:[%s5 + $0x6c] sm:$0xf]
        %v6585 = vld [vmem:[%s5 + $0x70] sm:$0xf]
        %v6586 = vld [vmem:[%s5 + $0x74] sm:$0xf]
        %v6587 = vld [vmem:[%s5 + $0x78] sm:$0xf]
        %v6588 = vld [vmem:[%s5 + $0x7c] sm:$0xf]
        %v6589 = vld [vmem:[%s5 + $0x80] sm:$0xf]
        %v6590 = vld [vmem:[%s5 + $0x84] sm:$0xf]
        %v6591 = vld [vmem:[%s5 + $0x88] sm:$0xf]
        %v6592 = vld [vmem:[%s5 + $0x8c] sm:$0xf]
        %v6593 = vld [vmem:[%s5 + $0x90] sm:$0xf]
        %v6594 = vld [vmem:[%s5 + $0x94] sm:$0xf]
        %v6595 = vld [vmem:[%s5 + $0x98] sm:$0xf]
        %v6596 = vld [vmem:[%s5 + $0x9c] sm:$0xf]
        %v6597 = vld [vmem:[%s5 + $0xa0] sm:$0xf]
        %v6598 = vld [vmem:[%s5 + $0xa4] sm:$0xf]
        %v6599 = vld [vmem:[%s5 + $0xa8] sm:$0xf]
        %v6600 = vld [vmem:[%s5 + $0xac] sm:$0xf]
        %v6601 = vld [vmem:[%s5 + $0xb0] sm:$0xf]
        %v6602 = vld [vmem:[%s5 + $0xb4] sm:$0xf]
        %v6603 = vld [vmem:[%s5 + $0xb8] sm:$0xf]
        %v6604 = vld [vmem:[%s5 + $0xbc] sm:$0xf]
        %v6605 = vld [vmem:[%s5 + $0xc0] sm:$0xf]
        %v6606 = vld [vmem:[%s5 + $0xc4] sm:$0xf]
        %v6607 = vld [vmem:[%s5 + $0xc8] sm:$0xf]
        %v6608 = vld [vmem:[%s5 + $0xcc] sm:$0xf]
        %v6609 = vld [vmem:[%s5 + $0xd0] sm:$0xf]
        %v6610 = vld [vmem:[%s5 + $0xd4] sm:$0xf]
        %v6611 = vld [vmem:[%s5 + $0xd8] sm:$0xf]
        %v6612 = vld [vmem:[%s5 + $0xdc] sm:$0xf]
        %v6613 = vld [vmem:[%s5 + $0xe0] sm:$0xf]
        %v6614 = vld [vmem:[%s5 + $0xe4] sm:$0xf]
        %v6615 = vld [vmem:[%s5 + $0xe8] sm:$0xf]
        %v6616 = vld [vmem:[%s5 + $0xec] sm:$0xf]
        %v6617 = vld [vmem:[%s5 + $0xf0] sm:$0xf]
        %v6618 = vld [vmem:[%s5 + $0xf4] sm:$0xf]
        %v6619 = vld [vmem:[%s5 + $0xf8] sm:$0xf]
        %v6620 = vld [vmem:[%s5 + $0xfc] sm:$0xf]
        %v6621 = vld [vmem:[%s5 + $0x100] sm:$0xf]
        %v6622 = vld [vmem:[%s5 + $0x104] sm:$0xf]
        %v6623 = vld [vmem:[%s5 + $0x108] sm:$0xf]
        %v6624 = vld [vmem:[%s5 + $0x10c] sm:$0xf]
        %v6625 = vld [vmem:[%s5 + $0x110] sm:$0xf]
        %v6626 = vld [vmem:[%s5 + $0x114] sm:$0xf]
        %v6627 = vld [vmem:[%s5 + $0x118] sm:$0xf]
        %v6628 = vld [vmem:[%s5 + $0x11c] sm:$0xf]
        %v6629 = vld [vmem:[%s5 + $0x120] sm:$0xf]
        %v6630 = vld [vmem:[%s5 + $0x124] sm:$0xf]
        %v6631 = vld [vmem:[%s5 + $0x128] sm:$0xf]
        %v6632 = vld [vmem:[%s5 + $0x12c] sm:$0xf]
        %v6633 = vld [vmem:[%s5 + $0x130] sm:$0xf]
        %v6634 = vld [vmem:[%s5 + $0x134] sm:$0xf]
        %v6635 = vld [vmem:[%s5 + $0x138] sm:$0xf]
        %v6636 = vld [vmem:[%s5 + $0x13c] sm:$0xf]
        %v6637 = vld [vmem:[%s5 + $0x140] sm:$0xf]
        %v6638 = vld [vmem:[%s5 + $0x144] sm:$0xf]
        %v6639 = vld [vmem:[%s5 + $0x148] sm:$0xf]
        %v6640 = vld [vmem:[%s5 + $0x14c] sm:$0xf]
        %v6641 = vld [vmem:[%s5 + $0x150] sm:$0xf]
        %v6642 = vld [vmem:[%s5 + $0x154] sm:$0xf]
        %v6643 = vld [vmem:[%s5 + $0x158] sm:$0xf]
        %v6644 = vld [vmem:[%s5 + $0x15c] sm:$0xf]
        %v6645 = vld [vmem:[%s5 + $0x160] sm:$0xf]
        %v6646 = vld [vmem:[%s5 + $0x164] sm:$0xf]
        %v6647 = vld [vmem:[%s5 + $0x168] sm:$0xf]
        %v6648 = vld [vmem:[%s5 + $0x16c] sm:$0xf]
        %v6649 = vld [vmem:[%s5 + $0x170] sm:$0xf]
        %v6650 = vld [vmem:[%s5 + $0x174] sm:$0xf]
        %v6651 = vld [vmem:[%s5 + $0x178] sm:$0xf]
        %v6652 = vld [vmem:[%s5 + $0x17c] sm:$0xf]
        %v6653 = vld [vmem:[%s5 + $0x180] sm:$0xf]
        %v6654 = vld [vmem:[%s5 + $0x184] sm:$0xf]
        %v6655 = vld [vmem:[%s5 + $0x188] sm:$0xf]
        %v6656 = vld [vmem:[%s5 + $0x18c] sm:$0xf]
        %v6657 = vld [vmem:[%s5 + $0x190] sm:$0xf]
        %v6658 = vld [vmem:[%s5 + $0x194] sm:$0xf]
        %v6659 = vld [vmem:[%s5 + $0x198] sm:$0xf]
        %v6660 = vld [vmem:[%s5 + $0x19c] sm:$0xf]
        %v6661 = vld [vmem:[%s5 + $0x1a0] sm:$0xf]
        %v6662 = vld [vmem:[%s5 + $0x1a4] sm:$0xf]
        %v6663 = vld [vmem:[%s5 + $0x1a8] sm:$0xf]
        %v6664 = vld [vmem:[%s5 + $0x1ac] sm:$0xf]
        %v6665 = vld [vmem:[%s5 + $0x1b0] sm:$0xf]
        %v6666 = vld [vmem:[%s5 + $0x1b4] sm:$0xf]
        %v6667 = vld [vmem:[%s5 + $0x1b8] sm:$0xf]
        %v6668 = vld [vmem:[%s5 + $0x1bc] sm:$0xf]
        %v6669 = vld [vmem:[%s5 + $0x1c0] sm:$0xf]
        %v6670 = vld [vmem:[%s5 + $0x1c4] sm:$0xf]
        %v6671 = vld [vmem:[%s5 + $0x1c8] sm:$0xf]
        %v6672 = vld [vmem:[%s5 + $0x1cc] sm:$0xf]
        %v6673 = vld [vmem:[%s5 + $0x1d0] sm:$0xf]
        %v6674 = vld [vmem:[%s5 + $0x1d4] sm:$0xf]
        %v6675 = vld [vmem:[%s5 + $0x1d8] sm:$0xf]
        %v6676 = vld [vmem:[%s5 + $0x1dc] sm:$0xf]
        %v6677 = vld [vmem:[%s5 + $0x1e0] sm:$0xf]
        %v6678 = vld [vmem:[%s5 + $0x1e4] sm:$0xf]
        %v6679 = vld [vmem:[%s5 + $0x1e8] sm:$0xf]
        %v6680 = vld [vmem:[%s5 + $0x1ec] sm:$0xf]
        %v6681 = vld [vmem:[%s5 + $0x1f0] sm:$0xf]
        %v6682 = vld [vmem:[%s5 + $0x1f4] sm:$0xf]
        %v6683 = vld [vmem:[%s5 + $0x1f8] sm:$0xf]
        %v6684 = vld [vmem:[%s5 + $0x1fc] sm:$0xf]
        %v6685 = vld [vmem:[%s5 + $0x200] sm:$0xf]
        %v6686 = vld [vmem:[%s5 + $0x204] sm:$0xf]
        %v6687 = vld [vmem:[%s5 + $0x208] sm:$0xf]
        %v6688 = vld [vmem:[%s5 + $0x20c] sm:$0xf]
        %v6689 = vld [vmem:[%s5 + $0x210] sm:$0xf]
        %v6690 = vld [vmem:[%s5 + $0x214] sm:$0xf]
        %v6691 = vld [vmem:[%s5 + $0x218] sm:$0xf]
        %v6692 = vld [vmem:[%s5 + $0x21c] sm:$0xf]
        %v6693 = vld [vmem:[%s5 + $0x220] sm:$0xf]
        %v6694 = vld [vmem:[%s5 + $0x224] sm:$0xf]
        %v6695 = vld [vmem:[%s5 + $0x228] sm:$0xf]
        %v6696 = vld [vmem:[%s5 + $0x22c] sm:$0xf]
        %v6697 = vld [vmem:[%s5 + $0x230] sm:$0xf]
        %v6698 = vld [vmem:[%s5 + $0x234] sm:$0xf]
        %v6699 = vld [vmem:[%s5 + $0x238] sm:$0xf]
        %v6700 = vld [vmem:[%s5 + $0x23c] sm:$0xf]
        %v6701 = vld [vmem:[%s5 + $0x240] sm:$0xf]
        %v6702 = vld [vmem:[%s5 + $0x244] sm:$0xf]
        %v6703 = vld [vmem:[%s5 + $0x248] sm:$0xf]
        %v6704 = vld [vmem:[%s5 + $0x24c] sm:$0xf]
        %v6705 = vld [vmem:[%s5 + $0x250] sm:$0xf]
        %v6706 = vld [vmem:[%s5 + $0x254] sm:$0xf]
        %v6707 = vld [vmem:[%s5 + $0x258] sm:$0xf]
        %v6708 = vld [vmem:[%s5 + $0x25c] sm:$0xf]
        %v6709 = vld [vmem:[%s5 + $0x260] sm:$0xf]
        %v6710 = vld [vmem:[%s5 + $0x264] sm:$0xf]
        %v6711 = vld [vmem:[%s5 + $0x268] sm:$0xf]
        %v6712 = vld [vmem:[%s5 + $0x26c] sm:$0xf]
        %v6713 = vld [vmem:[%s5 + $0x270] sm:$0xf]
        %v6714 = vld [vmem:[%s5 + $0x274] sm:$0xf]
        %v6715 = vld [vmem:[%s5 + $0x278] sm:$0xf]
        %v6716 = vld [vmem:[%s5 + $0x27c] sm:$0xf]
        %v6717 = vld [vmem:[%s5 + $0x280] sm:$0xf]
        %v6718 = vld [vmem:[%s5 + $0x284] sm:$0xf]
        %v6719 = vld [vmem:[%s5 + $0x288] sm:$0xf]
        %v6720 = vld [vmem:[%s5 + $0x28c] sm:$0xf]
        %v6721 = vld [vmem:[%s5 + $0x290] sm:$0xf]
        %v6722 = vld [vmem:[%s5 + $0x294] sm:$0xf]
        %v6723 = vld [vmem:[%s5 + $0x298] sm:$0xf]
        %v6724 = vld [vmem:[%s5 + $0x29c] sm:$0xf]
        %v6725 = vld [vmem:[%s5 + $0x2a0] sm:$0xf]
        %v6726 = vld [vmem:[%s5 + $0x2a4] sm:$0xf]
        %v6727 = vld [vmem:[%s5 + $0x2a8] sm:$0xf]
        %v6728 = vld [vmem:[%s5 + $0x2ac] sm:$0xf]
        %v6729 = vld [vmem:[%s5 + $0x2b0] sm:$0xf]
        %v6730 = vld [vmem:[%s5 + $0x2b4] sm:$0xf]
        %v6731 = vld [vmem:[%s5 + $0x2b8] sm:$0xf]
        %v6732 = vld [vmem:[%s5 + $0x2bc] sm:$0xf]
        %v6733 = vld [vmem:[%s5 + $0x2c0] sm:$0xf]
        %v6734 = vld [vmem:[%s5 + $0x2c4] sm:$0xf]
        %v6735 = vld [vmem:[%s5 + $0x2c8] sm:$0xf]
        %v6736 = vld [vmem:[%s5 + $0x2cc] sm:$0xf]
        %v6737 = vld [vmem:[%s5 + $0x2d0] sm:$0xf]
        %v6738 = vld [vmem:[%s5 + $0x2d4] sm:$0xf]
        %v6739 = vld [vmem:[%s5 + $0x2d8] sm:$0xf]
        %v6740 = vld [vmem:[%s5 + $0x2dc] sm:$0xf]
        %v6741 = vld [vmem:[%s5 + $0x2e0] sm:$0xf]
        %v6742 = vld [vmem:[%s5 + $0x2e4] sm:$0xf]
        %v6743 = vld [vmem:[%s5 + $0x2e8] sm:$0xf]
        %v6744 = vld [vmem:[%s5 + $0x2ec] sm:$0xf]
        %v6745 = vld [vmem:[%s5 + $0x2f0] sm:$0xf]
        %v6746 = vld [vmem:[%s5 + $0x2f4] sm:$0xf]
        %v6747 = vld [vmem:[%s5 + $0x2f8] sm:$0xf]
        %v6748 = vld [vmem:[%s5 + $0x2fc] sm:$0xf]
        %v6749 = vld [vmem:[%s5 + $0x300] sm:$0xf]
        %v6750 = vld [vmem:[%s5 + $0x304] sm:$0xf]
        %v6751 = vld [vmem:[%s5 + $0x308] sm:$0xf]
        %v6752 = vld [vmem:[%s5 + $0x30c] sm:$0xf]
        %v6753 = vld [vmem:[%s5 + $0x310] sm:$0xf]
        %v6754 = vld [vmem:[%s5 + $0x314] sm:$0xf]
        %v6755 = vld [vmem:[%s5 + $0x318] sm:$0xf]
        %v6756 = vld [vmem:[%s5 + $0x31c] sm:$0xf]
        %v6757 = vld [vmem:[%s5 + $0x320] sm:$0xf]
        %v6758 = vld [vmem:[%s5 + $0x324] sm:$0xf]
        %v6759 = vld [vmem:[%s5 + $0x328] sm:$0xf]
        %v6760 = vld [vmem:[%s5 + $0x32c] sm:$0xf]
        %v6761 = vld [vmem:[%s5 + $0x330] sm:$0xf]
        %v6762 = vld [vmem:[%s5 + $0x334] sm:$0xf]
        %v6763 = vld [vmem:[%s5 + $0x338] sm:$0xf]
        %v6764 = vld [vmem:[%s5 + $0x33c] sm:$0xf]
        %v6765 = vld [vmem:[%s5 + $0x340] sm:$0xf]
        %v6766 = vld [vmem:[%s5 + $0x344] sm:$0xf]
        %v6767 = vld [vmem:[%s5 + $0x348] sm:$0xf]
        %v6768 = vld [vmem:[%s5 + $0x34c] sm:$0xf]
        %v6769 = vld [vmem:[%s5 + $0x350] sm:$0xf]
        %v6770 = vld [vmem:[%s5 + $0x354] sm:$0xf]
        %v6771 = vld [vmem:[%s5 + $0x358] sm:$0xf]
        %v6772 = vld [vmem:[%s5 + $0x35c] sm:$0xf]
        %v6773 = vld [vmem:[%s5 + $0x360] sm:$0xf]
        %v6774 = vld [vmem:[%s5 + $0x364] sm:$0xf]
        %v6775 = vld [vmem:[%s5 + $0x368] sm:$0xf]
        %v6776 = vld [vmem:[%s5 + $0x36c] sm:$0xf]
        %v6777 = vld [vmem:[%s5 + $0x370] sm:$0xf]
        %v6778 = vld [vmem:[%s5 + $0x374] sm:$0xf]
        %v6779 = vld [vmem:[%s5 + $0x378] sm:$0xf]
        %v6780 = vld [vmem:[%s5 + $0x37c] sm:$0xf]
        %v6781 = vld [vmem:[%s5 + $0x380] sm:$0xf]
        %v6782 = vld [vmem:[%s5 + $0x384] sm:$0xf]
        %v6783 = vld [vmem:[%s5 + $0x388] sm:$0xf]
        %v6784 = vld [vmem:[%s5 + $0x38c] sm:$0xf]
        %v6785 = vld [vmem:[%s5 + $0x390] sm:$0xf]
        %v6786 = vld [vmem:[%s5 + $0x394] sm:$0xf]
        %v6787 = vld [vmem:[%s5 + $0x398] sm:$0xf]
        %v6788 = vld [vmem:[%s5 + $0x39c] sm:$0xf]
        %v6789 = vld [vmem:[%s5 + $0x3a0] sm:$0xf]
        %v6790 = vld [vmem:[%s5 + $0x3a4] sm:$0xf]
        %v6791 = vld [vmem:[%s5 + $0x3a8] sm:$0xf]
        %v6792 = vld [vmem:[%s5 + $0x3ac] sm:$0xf]
        %v6793 = vld [vmem:[%s5 + $0x3b0] sm:$0xf]
        %v6794 = vld [vmem:[%s5 + $0x3b4] sm:$0xf]
        %v6795 = vld [vmem:[%s5 + $0x3b8] sm:$0xf]
        %v6796 = vld [vmem:[%s5 + $0x3bc] sm:$0xf]
        %v6797 = vld [vmem:[%s5 + $0x3c0] sm:$0xf]
        %v6798 = vld [vmem:[%s5 + $0x3c4] sm:$0xf]
        %v6799 = vld [vmem:[%s5 + $0x3c8] sm:$0xf]
        %v6800 = vld [vmem:[%s5 + $0x3cc] sm:$0xf]
        %v6801 = vld [vmem:[%s5 + $0x3d0] sm:$0xf]
        %v6802 = vld [vmem:[%s5 + $0x3d4] sm:$0xf]
        %v6803 = vld [vmem:[%s5 + $0x3d8] sm:$0xf]
        %v6804 = vld [vmem:[%s5 + $0x3dc] sm:$0xf]
        %v6805 = vld [vmem:[%s5 + $0x3e0] sm:$0xf]
        %v6806 = vld [vmem:[%s5 + $0x3e4] sm:$0xf]
        %v6807 = vld [vmem:[%s5 + $0x3e8] sm:$0xf]
        %v6808 = vld [vmem:[%s5 + $0x3ec] sm:$0xf]
        %v6809 = vld [vmem:[%s5 + $0x3f0] sm:$0xf]
        %v6810 = vld [vmem:[%s5 + $0x3f4] sm:$0xf]
        %v6811 = vld [vmem:[%s5 + $0x3f8] sm:$0xf]
        %v6812 = vld [vmem:[%s5 + $0x3fc] sm:$0xf]
        %v6813 = vld [vmem:[%s6] sm:$0x1]
        %v7070 = vunpack.c.l.b16 %v6557
        %v7071 = vunpack.c.l.b16 %v6558
        %v7072 = vunpack.c.l.b16 %v6559
        %v7073 = vunpack.c.l.b16 %v6560
        %v7074 = vunpack.c.l.b16 %v6561
        %v7075 = vunpack.c.l.b16 %v6562
        %v7076 = vunpack.c.l.b16 %v6563
        %v7077 = vunpack.c.l.b16 %v6564
        %v7078 = vunpack.c.l.b16 %v6565
        %v7079 = vunpack.c.l.b16 %v6566
        %v7080 = vunpack.c.l.b16 %v6567
        %v7081 = vunpack.c.l.b16 %v6568
        %v7082 = vunpack.c.l.b16 %v6569
        %v7083 = vunpack.c.l.b16 %v6570
        %v7084 = vunpack.c.l.b16 %v6571
        %v7085 = vunpack.c.l.b16 %v6572
        %v7086 = vunpack.c.l.b16 %v6573
        %v7087 = vunpack.c.l.b16 %v6574
        %v7088 = vunpack.c.l.b16 %v6575
        %v7089 = vunpack.c.l.b16 %v6576
        %v7090 = vunpack.c.l.b16 %v6577
        %v7091 = vunpack.c.l.b16 %v6578
        %v7092 = vunpack.c.l.b16 %v6579
        %v7093 = vunpack.c.l.b16 %v6580
        %v7094 = vunpack.c.l.b16 %v6581
        %v7095 = vunpack.c.l.b16 %v6582
        %v7096 = vunpack.c.l.b16 %v6583
        %v7097 = vunpack.c.l.b16 %v6584
        %v7098 = vunpack.c.l.b16 %v6585
        %v7099 = vunpack.c.l.b16 %v6586
        %v7100 = vunpack.c.l.b16 %v6587
        %v7101 = vunpack.c.l.b16 %v6588
        %v7102 = vunpack.c.l.b16 %v6589
        %v7103 = vunpack.c.l.b16 %v6590
        %v7104 = vunpack.c.l.b16 %v6591
        %v7105 = vunpack.c.l.b16 %v6592
        %v7106 = vunpack.c.l.b16 %v6593
        %v7107 = vunpack.c.l.b16 %v6594
        %v7108 = vunpack.c.l.b16 %v6595
        %v7109 = vunpack.c.l.b16 %v6596
        %v7110 = vunpack.c.l.b16 %v6597
        %v7111 = vunpack.c.l.b16 %v6598
        %v7112 = vunpack.c.l.b16 %v6599
        %v7113 = vunpack.c.l.b16 %v6600
        %v7114 = vunpack.c.l.b16 %v6601
        %v7115 = vunpack.c.l.b16 %v6602
        %v7116 = vunpack.c.l.b16 %v6603
        %v7117 = vunpack.c.l.b16 %v6604
        %v7118 = vunpack.c.l.b16 %v6605
        %v7119 = vunpack.c.l.b16 %v6606
        %v7120 = vunpack.c.l.b16 %v6607
        %v7121 = vunpack.c.l.b16 %v6608
        %v7122 = vunpack.c.l.b16 %v6609
        %v7123 = vunpack.c.l.b16 %v6610
        %v7124 = vunpack.c.l.b16 %v6611
        %v7125 = vunpack.c.l.b16 %v6612
        %v7126 = vunpack.c.l.b16 %v6613
        %v7127 = vunpack.c.l.b16 %v6614
        %v7128 = vunpack.c.l.b16 %v6615
        %v7129 = vunpack.c.l.b16 %v6616
        %v7130 = vunpack.c.l.b16 %v6617
        %v7131 = vunpack.c.l.b16 %v6618
        %v7132 = vunpack.c.l.b16 %v6619
        %v7133 = vunpack.c.l.b16 %v6620
        %v7134 = vunpack.c.l.b16 %v6621
        %v7135 = vunpack.c.l.b16 %v6622
        %v7136 = vunpack.c.l.b16 %v6623
        %v7137 = vunpack.c.l.b16 %v6624
        %v7138 = vunpack.c.l.b16 %v6625
        %v7139 = vunpack.c.l.b16 %v6626
        %v7140 = vunpack.c.l.b16 %v6627
        %v7141 = vunpack.c.l.b16 %v6628
        %v7142 = vunpack.c.l.b16 %v6629
        %v7143 = vunpack.c.l.b16 %v6630
        %v7144 = vunpack.c.l.b16 %v6631
        %v7145 = vunpack.c.l.b16 %v6632
        %v7146 = vunpack.c.l.b16 %v6633
        %v7147 = vunpack.c.l.b16 %v6634
        %v7148 = vunpack.c.l.b16 %v6635
        %v7149 = vunpack.c.l.b16 %v6636
        %v7150 = vunpack.c.l.b16 %v6637
        %v7151 = vunpack.c.l.b16 %v6638
        %v7152 = vunpack.c.l.b16 %v6639
        %v7153 = vunpack.c.l.b16 %v6640
        %v7154 = vunpack.c.l.b16 %v6641
        %v7155 = vunpack.c.l.b16 %v6642
        %v7156 = vunpack.c.l.b16 %v6643
        %v7157 = vunpack.c.l.b16 %v6644
        %v7158 = vunpack.c.l.b16 %v6645
        %v7159 = vunpack.c.l.b16 %v6646
        %v7160 = vunpack.c.l.b16 %v6647
        %v7161 = vunpack.c.l.b16 %v6648
        %v7162 = vunpack.c.l.b16 %v6649
        %v7163 = vunpack.c.l.b16 %v6650
        %v7164 = vunpack.c.l.b16 %v6651
        %v7165 = vunpack.c.l.b16 %v6652
        %v7166 = vunpack.c.l.b16 %v6653
        %v7167 = vunpack.c.l.b16 %v6654
        %v7168 = vunpack.c.l.b16 %v6655
        %v7169 = vunpack.c.l.b16 %v6656
        %v7170 = vunpack.c.l.b16 %v6657
        %v7171 = vunpack.c.l.b16 %v6658
        %v7172 = vunpack.c.l.b16 %v6659
        %v7173 = vunpack.c.l.b16 %v6660
        %v7174 = vunpack.c.l.b16 %v6661
        %v7175 = vunpack.c.l.b16 %v6662
        %v7176 = vunpack.c.l.b16 %v6663
        %v7177 = vunpack.c.l.b16 %v6664
        %v7178 = vunpack.c.l.b16 %v6665
        %v7179 = vunpack.c.l.b16 %v6666
        %v7180 = vunpack.c.l.b16 %v6667
        %v7181 = vunpack.c.l.b16 %v6668
        %v7182 = vunpack.c.l.b16 %v6669
        %v7183 = vunpack.c.l.b16 %v6670
        %v7184 = vunpack.c.l.b16 %v6671
        %v7185 = vunpack.c.l.b16 %v6672
        %v7186 = vunpack.c.l.b16 %v6673
        %v7187 = vunpack.c.l.b16 %v6674
        %v7188 = vunpack.c.l.b16 %v6675
        %v7189 = vunpack.c.l.b16 %v6676
        %v7190 = vunpack.c.l.b16 %v6677
        %v7191 = vunpack.c.l.b16 %v6678
        %v7192 = vunpack.c.l.b16 %v6679
        %v7193 = vunpack.c.l.b16 %v6680
        %v7194 = vunpack.c.l.b16 %v6681
        %v7195 = vunpack.c.l.b16 %v6682
        %v7196 = vunpack.c.l.b16 %v6683
        %v7197 = vunpack.c.l.b16 %v6684
        %v7198 = vunpack.c.l.b16 %v6685
        %v7199 = vunpack.c.l.b16 %v6686
        %v7200 = vunpack.c.l.b16 %v6687
        %v7201 = vunpack.c.l.b16 %v6688
        %v7202 = vunpack.c.l.b16 %v6689
        %v7203 = vunpack.c.l.b16 %v6690
        %v7204 = vunpack.c.l.b16 %v6691
        %v7205 = vunpack.c.l.b16 %v6692
        %v7206 = vunpack.c.l.b16 %v6693
        %v7207 = vunpack.c.l.b16 %v6694
        %v7208 = vunpack.c.l.b16 %v6695
        %v7209 = vunpack.c.l.b16 %v6696
        %v7210 = vunpack.c.l.b16 %v6697
        %v7211 = vunpack.c.l.b16 %v6698
        %v7212 = vunpack.c.l.b16 %v6699
        %v7213 = vunpack.c.l.b16 %v6700
        %v7214 = vunpack.c.l.b16 %v6701
        %v7215 = vunpack.c.l.b16 %v6702
        %v7216 = vunpack.c.l.b16 %v6703
        %v7217 = vunpack.c.l.b16 %v6704
        %v7218 = vunpack.c.l.b16 %v6705
        %v7219 = vunpack.c.l.b16 %v6706
        %v7220 = vunpack.c.l.b16 %v6707
        %v7221 = vunpack.c.l.b16 %v6708
        %v7222 = vunpack.c.l.b16 %v6709
        %v7223 = vunpack.c.l.b16 %v6710
        %v7224 = vunpack.c.l.b16 %v6711
        %v7225 = vunpack.c.l.b16 %v6712
        %v7226 = vunpack.c.l.b16 %v6713
        %v7227 = vunpack.c.l.b16 %v6714
        %v7228 = vunpack.c.l.b16 %v6715
        %v7229 = vunpack.c.l.b16 %v6716
        %v7230 = vunpack.c.l.b16 %v6717
        %v7231 = vunpack.c.l.b16 %v6718
        %v7232 = vunpack.c.l.b16 %v6719
        %v7233 = vunpack.c.l.b16 %v6720
        %v7234 = vunpack.c.l.b16 %v6721
        %v7235 = vunpack.c.l.b16 %v6722
        %v7236 = vunpack.c.l.b16 %v6723
        %v7237 = vunpack.c.l.b16 %v6724
        %v7238 = vunpack.c.l.b16 %v6725
        %v7239 = vunpack.c.l.b16 %v6726
        %v7240 = vunpack.c.l.b16 %v6727
        %v7241 = vunpack.c.l.b16 %v6728
        %v7242 = vunpack.c.l.b16 %v6729
        %v7243 = vunpack.c.l.b16 %v6730
        %v7244 = vunpack.c.l.b16 %v6731
        %v7245 = vunpack.c.l.b16 %v6732
        %v7246 = vunpack.c.l.b16 %v6733
        %v7247 = vunpack.c.l.b16 %v6734
        %v7248 = vunpack.c.l.b16 %v6735
        %v7249 = vunpack.c.l.b16 %v6736
        %v7250 = vunpack.c.l.b16 %v6737
        %v7251 = vunpack.c.l.b16 %v6738
        %v7252 = vunpack.c.l.b16 %v6739
        %v7253 = vunpack.c.l.b16 %v6740
        %v7254 = vunpack.c.l.b16 %v6741
        %v7255 = vunpack.c.l.b16 %v6742
        %v7256 = vunpack.c.l.b16 %v6743
        %v7257 = vunpack.c.l.b16 %v6744
        %v7258 = vunpack.c.l.b16 %v6745
        %v7259 = vunpack.c.l.b16 %v6746
        %v7260 = vunpack.c.l.b16 %v6747
        %v7261 = vunpack.c.l.b16 %v6748
        %v7262 = vunpack.c.l.b16 %v6749
        %v7263 = vunpack.c.l.b16 %v6750
        %v7264 = vunpack.c.l.b16 %v6751
        %v7265 = vunpack.c.l.b16 %v6752
        %v7266 = vunpack.c.l.b16 %v6753
        %v7267 = vunpack.c.l.b16 %v6754
        %v7268 = vunpack.c.l.b16 %v6755
        %v7269 = vunpack.c.l.b16 %v6756
        %v7270 = vunpack.c.l.b16 %v6757
        %v7271 = vunpack.c.l.b16 %v6758
        %v7272 = vunpack.c.l.b16 %v6759
        %v7273 = vunpack.c.l.b16 %v6760
        %v7274 = vunpack.c.l.b16 %v6761
        %v7275 = vunpack.c.l.b16 %v6762
        %v7276 = vunpack.c.l.b16 %v6763
        %v7277 = vunpack.c.l.b16 %v6764
        %v7278 = vunpack.c.l.b16 %v6765
        %v7279 = vunpack.c.l.b16 %v6766
        %v7280 = vunpack.c.l.b16 %v6767
        %v7281 = vunpack.c.l.b16 %v6768
        %v7282 = vunpack.c.l.b16 %v6769
        %v7283 = vunpack.c.l.b16 %v6770
        %v7284 = vunpack.c.l.b16 %v6771
        %v7285 = vunpack.c.l.b16 %v6772
        %v7286 = vunpack.c.l.b16 %v6773
        %v7287 = vunpack.c.l.b16 %v6774
        %v7288 = vunpack.c.l.b16 %v6775
        %v7289 = vunpack.c.l.b16 %v6776
        %v7290 = vunpack.c.l.b16 %v6777
        %v7291 = vunpack.c.l.b16 %v6778
        %v7292 = vunpack.c.l.b16 %v6779
        %v7293 = vunpack.c.l.b16 %v6780
        %v7294 = vunpack.c.l.b16 %v6781
        %v7295 = vunpack.c.l.b16 %v6782
        %v7296 = vunpack.c.l.b16 %v6783
        %v7297 = vunpack.c.l.b16 %v6784
        %v7298 = vunpack.c.l.b16 %v6785
        %v7299 = vunpack.c.l.b16 %v6786
        %v7300 = vunpack.c.l.b16 %v6787
        %v7301 = vunpack.c.l.b16 %v6788
        %v7302 = vunpack.c.l.b16 %v6789
        %v7303 = vunpack.c.l.b16 %v6790
        %v7304 = vunpack.c.l.b16 %v6791
        %v7305 = vunpack.c.l.b16 %v6792
        %v7306 = vunpack.c.l.b16 %v6793
        %v7307 = vunpack.c.l.b16 %v6794
        %v7308 = vunpack.c.l.b16 %v6795
        %v7309 = vunpack.c.l.b16 %v6796
        %v7310 = vunpack.c.l.b16 %v6797
        %v7311 = vunpack.c.l.b16 %v6798
        %v7312 = vunpack.c.l.b16 %v6799
        %v7313 = vunpack.c.l.b16 %v6800
        %v7314 = vunpack.c.l.b16 %v6801
        %v7315 = vunpack.c.l.b16 %v6802
        %v7316 = vunpack.c.l.b16 %v6803
        %v7317 = vunpack.c.l.b16 %v6804
        %v7318 = vunpack.c.l.b16 %v6805
        %v7319 = vunpack.c.l.b16 %v6806
        %v7320 = vunpack.c.l.b16 %v6807
        %v7321 = vunpack.c.l.b16 %v6808
        %v7322 = vunpack.c.l.b16 %v6809
        %v7323 = vunpack.c.l.b16 %v6810
        %v7324 = vunpack.c.l.b16 %v6811
        %v7325 = vunpack.c.l.b16 %v6812
        %v7326 = vpack.c.b16 %v7071, %v7070
        %v7327 = vpack.c.b16 %v7073, %v7072
        %v7328 = vpack.c.b16 %v7075, %v7074
        %v7329 = vpack.c.b16 %v7077, %v7076
        %v7330 = vpack.c.b16 %v7079, %v7078
        %v7331 = vpack.c.b16 %v7081, %v7080
        %v7332 = vpack.c.b16 %v7083, %v7082
        %v7333 = vpack.c.b16 %v7085, %v7084
        %v7334 = vpack.c.b16 %v7087, %v7086
        %v7335 = vpack.c.b16 %v7089, %v7088
        %v7336 = vpack.c.b16 %v7091, %v7090
        %v7337 = vpack.c.b16 %v7093, %v7092
        %v7338 = vpack.c.b16 %v7095, %v7094
        %v7339 = vpack.c.b16 %v7097, %v7096
        %v7340 = vpack.c.b16 %v7099, %v7098
        %v7341 = vpack.c.b16 %v7101, %v7100
        %v7342 = vpack.c.b16 %v7103, %v7102
        %v7343 = vpack.c.b16 %v7105, %v7104
        %v7344 = vpack.c.b16 %v7107, %v7106
        %v7345 = vpack.c.b16 %v7109, %v7108
        %v7346 = vpack.c.b16 %v7111, %v7110
        %v7347 = vpack.c.b16 %v7113, %v7112
        %v7348 = vpack.c.b16 %v7115, %v7114
        %v7349 = vpack.c.b16 %v7117, %v7116
        %v7350 = vpack.c.b16 %v7119, %v7118
        %v7351 = vpack.c.b16 %v7121, %v7120
        %v7352 = vpack.c.b16 %v7123, %v7122
        %v7353 = vpack.c.b16 %v7125, %v7124
        %v7354 = vpack.c.b16 %v7127, %v7126
        %v7355 = vpack.c.b16 %v7129, %v7128
        %v7356 = vpack.c.b16 %v7131, %v7130
        %v7357 = vpack.c.b16 %v7133, %v7132
        %v7358 = vpack.c.b16 %v7135, %v7134
        %v7359 = vpack.c.b16 %v7137, %v7136
        %v7360 = vpack.c.b16 %v7139, %v7138
        %v7361 = vpack.c.b16 %v7141, %v7140
        %v7362 = vpack.c.b16 %v7143, %v7142
        %v7363 = vpack.c.b16 %v7145, %v7144
        %v7364 = vpack.c.b16 %v7147, %v7146
        %v7365 = vpack.c.b16 %v7149, %v7148
        %v7366 = vpack.c.b16 %v7151, %v7150
        %v7367 = vpack.c.b16 %v7153, %v7152
        %v7368 = vpack.c.b16 %v7155, %v7154
        %v7369 = vpack.c.b16 %v7157, %v7156
        %v7370 = vpack.c.b16 %v7159, %v7158
        %v7371 = vpack.c.b16 %v7161, %v7160
        %v7372 = vpack.c.b16 %v7163, %v7162
        %v7373 = vpack.c.b16 %v7165, %v7164
        %v7374 = vpack.c.b16 %v7167, %v7166
        %v7375 = vpack.c.b16 %v7169, %v7168
        %v7376 = vpack.c.b16 %v7171, %v7170
        %v7377 = vpack.c.b16 %v7173, %v7172
        %v7378 = vpack.c.b16 %v7175, %v7174
        %v7379 = vpack.c.b16 %v7177, %v7176
        %v7380 = vpack.c.b16 %v7179, %v7178
        %v7381 = vpack.c.b16 %v7181, %v7180
        %v7382 = vpack.c.b16 %v7183, %v7182
        %v7383 = vpack.c.b16 %v7185, %v7184
        %v7384 = vpack.c.b16 %v7187, %v7186
        %v7385 = vpack.c.b16 %v7189, %v7188
        %v7386 = vpack.c.b16 %v7191, %v7190
        %v7387 = vpack.c.b16 %v7193, %v7192
        %v7388 = vpack.c.b16 %v7195, %v7194
        %v7389 = vpack.c.b16 %v7197, %v7196
        %v7390 = vpack.c.b16 %v7199, %v7198
        %v7391 = vpack.c.b16 %v7201, %v7200
        %v7392 = vpack.c.b16 %v7203, %v7202
        %v7393 = vpack.c.b16 %v7205, %v7204
        %v7394 = vpack.c.b16 %v7207, %v7206
        %v7395 = vpack.c.b16 %v7209, %v7208
        %v7396 = vpack.c.b16 %v7211, %v7210
        %v7397 = vpack.c.b16 %v7213, %v7212
        %v7398 = vpack.c.b16 %v7215, %v7214
        %v7399 = vpack.c.b16 %v7217, %v7216
        %v7400 = vpack.c.b16 %v7219, %v7218
        %v7401 = vpack.c.b16 %v7221, %v7220
        %v7402 = vpack.c.b16 %v7223, %v7222
        %v7403 = vpack.c.b16 %v7225, %v7224
        %v7404 = vpack.c.b16 %v7227, %v7226
        %v7405 = vpack.c.b16 %v7229, %v7228
        %v7406 = vpack.c.b16 %v7231, %v7230
        %v7407 = vpack.c.b16 %v7233, %v7232
        %v7408 = vpack.c.b16 %v7235, %v7234
        %v7409 = vpack.c.b16 %v7237, %v7236
        %v7410 = vpack.c.b16 %v7239, %v7238
        %v7411 = vpack.c.b16 %v7241, %v7240
        %v7412 = vpack.c.b16 %v7243, %v7242
        %v7413 = vpack.c.b16 %v7245, %v7244
        %v7414 = vpack.c.b16 %v7247, %v7246
        %v7415 = vpack.c.b16 %v7249, %v7248
        %v7416 = vpack.c.b16 %v7251, %v7250
        %v7417 = vpack.c.b16 %v7253, %v7252
        %v7418 = vpack.c.b16 %v7255, %v7254
        %v7419 = vpack.c.b16 %v7257, %v7256
        %v7420 = vpack.c.b16 %v7259, %v7258
        %v7421 = vpack.c.b16 %v7261, %v7260
        %v7422 = vpack.c.b16 %v7263, %v7262
        %v7423 = vpack.c.b16 %v7265, %v7264
        %v7424 = vpack.c.b16 %v7267, %v7266
        %v7425 = vpack.c.b16 %v7269, %v7268
        %v7426 = vpack.c.b16 %v7271, %v7270
        %v7427 = vpack.c.b16 %v7273, %v7272
        %v7428 = vpack.c.b16 %v7275, %v7274
        %v7429 = vpack.c.b16 %v7277, %v7276
        %v7430 = vpack.c.b16 %v7279, %v7278
        %v7431 = vpack.c.b16 %v7281, %v7280
        %v7432 = vpack.c.b16 %v7283, %v7282
        %v7433 = vpack.c.b16 %v7285, %v7284
        %v7434 = vpack.c.b16 %v7287, %v7286
        %v7435 = vpack.c.b16 %v7289, %v7288
        %v7436 = vpack.c.b16 %v7291, %v7290
        %v7437 = vpack.c.b16 %v7293, %v7292
        %v7438 = vpack.c.b16 %v7295, %v7294
        %v7439 = vpack.c.b16 %v7297, %v7296
        %v7440 = vpack.c.b16 %v7299, %v7298
        %v7441 = vpack.c.b16 %v7301, %v7300
        %v7442 = vpack.c.b16 %v7303, %v7302
        %v7443 = vpack.c.b16 %v7305, %v7304
        %v7444 = vpack.c.b16 %v7307, %v7306
        %v7445 = vpack.c.b16 %v7309, %v7308
        %v7446 = vpack.c.b16 %v7311, %v7310
        %v7447 = vpack.c.b16 %v7313, %v7312
        %v7448 = vpack.c.b16 %v7315, %v7314
        %v7449 = vpack.c.b16 %v7317, %v7316
        %v7450 = vpack.c.b16 %v7319, %v7318
        %v7451 = vpack.c.b16 %v7321, %v7320
        %v7452 = vpack.c.b16 %v7323, %v7322
        %v7453 = vpack.c.b16 %v7325, %v7324
        %7582 = vmatprep.subr.bf16.mxu0 0
        %7583 = vmatpush1.bf16.msra.mxu0 %v7326
        %7584 = vmatprep.subr.bf16.mxu0 0
        %7585 = vmatpush1.bf16.msra.mxu0 %v7327
        %7586 = vmatprep.subr.bf16.mxu0 0
        %7587 = vmatpush1.bf16.msra.mxu0 %v7328
        %7588 = vmatprep.subr.bf16.mxu0 0
        %7589 = vmatpush1.bf16.msra.mxu0 %v7329
        %7590 = vmatprep.subr.bf16.mxu0 0
        %7591 = vmatpush1.bf16.msra.mxu0 %v7330
        %7592 = vmatprep.subr.bf16.mxu0 0
        %7593 = vmatpush1.bf16.msra.mxu0 %v7331
        %7594 = vmatprep.subr.bf16.mxu0 0
        %7595 = vmatpush1.bf16.msra.mxu0 %v7332
        %7596 = vmatprep.subr.bf16.mxu0 0
        %7597 = vmatpush1.bf16.msra.mxu0 %v7333
        %7598 = vmatprep.subr.bf16.mxu0 0
        %7599 = vmatpush1.bf16.msra.mxu0 %v7334
        %7600 = vmatprep.subr.bf16.mxu0 0
        %7601 = vmatpush1.bf16.msra.mxu0 %v7335
        %7602 = vmatprep.subr.bf16.mxu0 0
        %7603 = vmatpush1.bf16.msra.mxu0 %v7336
        %7604 = vmatprep.subr.bf16.mxu0 0
        %7605 = vmatpush1.bf16.msra.mxu0 %v7337
        %7606 = vmatprep.subr.bf16.mxu0 0
        %7607 = vmatpush1.bf16.msra.mxu0 %v7338
        %7608 = vmatprep.subr.bf16.mxu0 0
        %7609 = vmatpush1.bf16.msra.mxu0 %v7339
        %7610 = vmatprep.subr.bf16.mxu0 0
        %7611 = vmatpush1.bf16.msra.mxu0 %v7340
        %7612 = vmatprep.subr.bf16.mxu0 0
        %7613 = vmatpush1.bf16.msra.mxu0 %v7341
        %7614 = vmatprep.mubr.bf16.mxu0 %v6542
        %7615 = vmatmul.mubr.bf16.gmra.mrb[0].mxu0 %v6541
        %v7616 = vpop.f32.mrb[0].mxu0
        %v7617 = vadd.f32 %v6813, %v7616
        %v7618 = vpop.f32.mrb[0].mxu0
        %v7619 = vpop.f32.mrb[0].mxu0
        %v7620 = vpop.f32.mrb[0].mxu0
        %7621 = vdwg.mxu0
        %7622 = vmatprep.subr.bf16.mxu0 0
        %7623 = vmatpush1.bf16.msra.mxu0 %v7342
        %7624 = vmatprep.subr.bf16.mxu0 0
        %7625 = vmatpush1.bf16.msra.mxu0 %v7343
        %7626 = vmatprep.subr.bf16.mxu0 0
        %7627 = vmatpush1.bf16.msra.mxu0 %v7344
        %7628 = vmatprep.subr.bf16.mxu0 0
        %7629 = vmatpush1.bf16.msra.mxu0 %v7345
        %7630 = vmatprep.subr.bf16.mxu0 0
        %7631 = vmatpush1.bf16.msra.mxu0 %v7346
        %7632 = vmatprep.subr.bf16.mxu0 0
        %7633 = vmatpush1.bf16.msra.mxu0 %v7347
        %7634 = vmatprep.subr.bf16.mxu0 0
        %7635 = vmatpush1.bf16.msra.mxu0 %v7348
        %7636 = vmatprep.subr.bf16.mxu0 0
        %7637 = vmatpush1.bf16.msra.mxu0 %v7349
        %7638 = vmatprep.subr.bf16.mxu0 0
        %7639 = vmatpush1.bf16.msra.mxu0 %v7350
        %7640 = vmatprep.subr.bf16.mxu0 0
        %7641 = vmatpush1.bf16.msra.mxu0 %v7351
        %7642 = vmatprep.subr.bf16.mxu0 0
        %7643 = vmatpush1.bf16.msra.mxu0 %v7352
        %7644 = vmatprep.subr.bf16.mxu0 0
        %7645 = vmatpush1.bf16.msra.mxu0 %v7353
        %7646 = vmatprep.subr.bf16.mxu0 0
        %7647 = vmatpush1.bf16.msra.mxu0 %v7354
        %7648 = vmatprep.subr.bf16.mxu0 0
        %7649 = vmatpush1.bf16.msra.mxu0 %v7355
        %7650 = vmatprep.subr.bf16.mxu0 0
        %7651 = vmatpush1.bf16.msra.mxu0 %v7356
        %7652 = vmatprep.subr.bf16.mxu0 0
        %7653 = vmatpush1.bf16.msra.mxu0 %v7357
        %7654 = vmatprep.mubr.bf16.mxu0 %v6544
        %7655 = vmatmul.mubr.bf16.gmra.mrb[0].mxu0 %v6543
        %v7656 = vpop.f32.mrb[0].mxu0
        %v7657 = vadd.f32 %v7617, %v7656
        %v7658 = vpop.f32.mrb[0].mxu0
        %v7659 = vpop.f32.mrb[0].mxu0
        %v7660 = vpop.f32.mrb[0].mxu0
        %7661 = vdwg.mxu0
        %7662 = vmatprep.subr.bf16.mxu0 0
        %7663 = vmatpush1.bf16.msra.mxu0 %v7358
        %7664 = vmatprep.subr.bf16.mxu0 0
        %7665 = vmatpush1.bf16.msra.mxu0 %v7359
        %7666 = vmatprep.subr.bf16.mxu0 0
        %7667 = vmatpush1.bf16.msra.mxu0 %v7360
        %7668 = vmatprep.subr.bf16.mxu0 0
        %7669 = vmatpush1.bf16.msra.mxu0 %v7361
        %7670 = vmatprep.subr.bf16.mxu0 0
        %7671 = vmatpush1.bf16.msra.mxu0 %v7362
        %7672 = vmatprep.subr.bf16.mxu0 0
        %7673 = vmatpush1.bf16.msra.mxu0 %v7363
        %7674 = vmatprep.subr.bf16.mxu0 0
        %7675 = vmatpush1.bf16.msra.mxu0 %v7364
        %7676 = vmatprep.subr.bf16.mxu0 0
        %7677 = vmatpush1.bf16.msra.mxu0 %v7365
        %7678 = vmatprep.subr.bf16.mxu0 0
        %7679 = vmatpush1.bf16.msra.mxu0 %v7366
        %7680 = vmatprep.subr.bf16.mxu0 0
        %7681 = vmatpush1.bf16.msra.mxu0 %v7367
        %7682 = vmatprep.subr.bf16.mxu0 0
        %7683 = vmatpush1.bf16.msra.mxu0 %v7368
        %7684 = vmatprep.subr.bf16.mxu0 0
        %7685 = vmatpush1.bf16.msra.mxu0 %v7369
        %7686 = vmatprep.subr.bf16.mxu0 0
        %7687 = vmatpush1.bf16.msra.mxu0 %v7370
        %7688 = vmatprep.subr.bf16.mxu0 0
        %7689 = vmatpush1.bf16.msra.mxu0 %v7371
        %7690 = vmatprep.subr.bf16.mxu0 0
        %7691 = vmatpush1.bf16.msra.mxu0 %v7372
        %7692 = vmatprep.subr.bf16.mxu0 0
        %7693 = vmatpush1.bf16.msra.mxu0 %v7373
        %7694 = vmatprep.mubr.bf16.mxu0 %v6546
        %7695 = vmatmul.mubr.bf16.gmra.mrb[0].mxu0 %v6545
        %v7696 = vpop.f32.mrb[0].mxu0
        %v7697 = vadd.f32 %v7657, %v7696
        %v7698 = vpop.f32.mrb[0].mxu0
        %v7699 = vpop.f32.mrb[0].mxu0
        %v7700 = vpop.f32.mrb[0].mxu0
        %7701 = vdwg.mxu0
        %7702 = vmatprep.subr.bf16.mxu0 0
        %7703 = vmatpush1.bf16.msra.mxu0 %v7374
        %7704 = vmatprep.subr.bf16.mxu0 0
        %7705 = vmatpush1.bf16.msra.mxu0 %v7375
        %7706 = vmatprep.subr.bf16.mxu0 0
        %7707 = vmatpush1.bf16.msra.mxu0 %v7376
        %7708 = vmatprep.subr.bf16.mxu0 0
        %7709 = vmatpush1.bf16.msra.mxu0 %v7377
        %7710 = vmatprep.subr.bf16.mxu0 0
        %7711 = vmatpush1.bf16.msra.mxu0 %v7378
        %7712 = vmatprep.subr.bf16.mxu0 0
        %7713 = vmatpush1.bf16.msra.mxu0 %v7379
        %7714 = vmatprep.subr.bf16.mxu0 0
        %7715 = vmatpush1.bf16.msra.mxu0 %v7380
        %7716 = vmatprep.subr.bf16.mxu0 0
        %7717 = vmatpush1.bf16.msra.mxu0 %v7381
        %7718 = vmatprep.subr.bf16.mxu0 0
        %7719 = vmatpush1.bf16.msra.mxu0 %v7382
        %7720 = vmatprep.subr.bf16.mxu0 0
        %7721 = vmatpush1.bf16.msra.mxu0 %v7383
        %7722 = vmatprep.subr.bf16.mxu0 0
        %7723 = vmatpush1.bf16.msra.mxu0 %v7384
        %7724 = vmatprep.subr.bf16.mxu0 0
        %7725 = vmatpush1.bf16.msra.mxu0 %v7385
        %7726 = vmatprep.subr.bf16.mxu0 0
        %7727 = vmatpush1.bf16.msra.mxu0 %v7386
        %7728 = vmatprep.subr.bf16.mxu0 0
        %7729 = vmatpush1.bf16.msra.mxu0 %v7387
        %7730 = vmatprep.subr.bf16.mxu0 0
        %7731 = vmatpush1.bf16.msra.mxu0 %v7388
        %7732 = vmatprep.subr.bf16.mxu0 0
        %7733 = vmatpush1.bf16.msra.mxu0 %v7389
        %7734 = vmatprep.mubr.bf16.mxu0 %v6548
        %7735 = vmatmul.mubr.bf16.gmra.mrb[0].mxu0 %v6547
        %v7736 = vpop.f32.mrb[0].mxu0
        %v7737 = vadd.f32 %v7697, %v7736
        %v7738 = vpop.f32.mrb[0].mxu0
        %v7739 = vpop.f32.mrb[0].mxu0
        %v7740 = vpop.f32.mrb[0].mxu0
        %7741 = vdwg.mxu0
        %7742 = vmatprep.subr.bf16.mxu0 0
        %7743 = vmatpush1.bf16.msra.mxu0 %v7390
        %7744 = vmatprep.subr.bf16.mxu0 0
        %7745 = vmatpush1.bf16.msra.mxu0 %v7391
        %7746 = vmatprep.subr.bf16.mxu0 0
        %7747 = vmatpush1.bf16.msra.mxu0 %v7392
        %7748 = vmatprep.subr.bf16.mxu0 0
        %7749 = vmatpush1.bf16.msra.mxu0 %v7393
        %7750 = vmatprep.subr.bf16.mxu0 0
        %7751 = vmatpush1.bf16.msra.mxu0 %v7394
        %7752 = vmatprep.subr.bf16.mxu0 0
        %7753 = vmatpush1.bf16.msra.mxu0 %v7395
        %7754 = vmatprep.subr.bf16.mxu0 0
        %7755 = vmatpush1.bf16.msra.mxu0 %v7396
        %7756 = vmatprep.subr.bf16.mxu0 0
        %7757 = vmatpush1.bf16.msra.mxu0 %v7397
        %7758 = vmatprep.subr.bf16.mxu0 0
        %7759 = vmatpush1.bf16.msra.mxu0 %v7398
        %7760 = vmatprep.subr.bf16.mxu0 0
        %7761 = vmatpush1.bf16.msra.mxu0 %v7399
        %7762 = vmatprep.subr.bf16.mxu0 0
        %7763 = vmatpush1.bf16.msra.mxu0 %v7400
        %7764 = vmatprep.subr.bf16.mxu0 0
        %7765 = vmatpush1.bf16.msra.mxu0 %v7401
        %7766 = vmatprep.subr.bf16.mxu0 0
        %7767 = vmatpush1.bf16.msra.mxu0 %v7402
        %7768 = vmatprep.subr.bf16.mxu0 0
        %7769 = vmatpush1.bf16.msra.mxu0 %v7403
        %7770 = vmatprep.subr.bf16.mxu0 0
        %7771 = vmatpush1.bf16.msra.mxu0 %v7404
        %7772 = vmatprep.subr.bf16.mxu0 0
        %7773 = vmatpush1.bf16.msra.mxu0 %v7405
        %7774 = vmatprep.mubr.bf16.mxu0 %v6550
        %7775 = vmatmul.mubr.bf16.gmra.mrb[0].mxu0 %v6549
        %v7776 = vpop.f32.mrb[0].mxu0
        %v7777 = vadd.f32 %v7737, %v7776
        %v7778 = vpop.f32.mrb[0].mxu0
        %v7779 = vpop.f32.mrb[0].mxu0
        %v7780 = vpop.f32.mrb[0].mxu0
        %7781 = vdwg.mxu0
        %7782 = vmatprep.subr.bf16.mxu0 0
        %7783 = vmatpush1.bf16.msra.mxu0 %v7406
        %7784 = vmatprep.subr.bf16.mxu0 0
        %7785 = vmatpush1.bf16.msra.mxu0 %v7407
        %7786 = vmatprep.subr.bf16.mxu0 0
        %7787 = vmatpush1.bf16.msra.mxu0 %v7408
        %7788 = vmatprep.subr.bf16.mxu0 0
        %7789 = vmatpush1.bf16.msra.mxu0 %v7409
        %7790 = vmatprep.subr.bf16.mxu0 0
        %7791 = vmatpush1.bf16.msra.mxu0 %v7410
        %7792 = vmatprep.subr.bf16.mxu0 0
        %7793 = vmatpush1.bf16.msra.mxu0 %v7411
        %7794 = vmatprep.subr.bf16.mxu0 0
        %7795 = vmatpush1.bf16.msra.mxu0 %v7412
        %7796 = vmatprep.subr.bf16.mxu0 0
        %7797 = vmatpush1.bf16.msra.mxu0 %v7413
        %7798 = vmatprep.subr.bf16.mxu0 0
        %7799 = vmatpush1.bf16.msra.mxu0 %v7414
        %7800 = vmatprep.subr.bf16.mxu0 0
        %7801 = vmatpush1.bf16.msra.mxu0 %v7415
        %7802 = vmatprep.subr.bf16.mxu0 0
        %7803 = vmatpush1.bf16.msra.mxu0 %v7416
        %7804 = vmatprep.subr.bf16.mxu0 0
        %7805 = vmatpush1.bf16.msra.mxu0 %v7417
        %7806 = vmatprep.subr.bf16.mxu0 0
        %7807 = vmatpush1.bf16.msra.mxu0 %v7418
        %7808 = vmatprep.subr.bf16.mxu0 0
        %7809 = vmatpush1.bf16.msra.mxu0 %v7419
        %7810 = vmatprep.subr.bf16.mxu0 0
        %7811 = vmatpush1.bf16.msra.mxu0 %v7420
        %7812 = vmatprep.subr.bf16.mxu0 0
        %7813 = vmatpush1.bf16.msra.mxu0 %v7421
        %7814 = vmatprep.mubr.bf16.mxu0 %v6552
        %7815 = vmatmul.mubr.bf16.gmra.mrb[0].mxu0 %v6551
        %v7816 = vpop.f32.mrb[0].mxu0
        %v7817 = vadd.f32 %v7777, %v7816
        %v7818 = vpop.f32.mrb[0].mxu0
        %v7819 = vpop.f32.mrb[0].mxu0
        %v7820 = vpop.f32.mrb[0].mxu0
        %7821 = vdwg.mxu0
        %7822 = vmatprep.subr.bf16.mxu0 0
        %7823 = vmatpush1.bf16.msra.mxu0 %v7422
        %7824 = vmatprep.subr.bf16.mxu0 0
        %7825 = vmatpush1.bf16.msra.mxu0 %v7423
        %7826 = vmatprep.subr.bf16.mxu0 0
        %7827 = vmatpush1.bf16.msra.mxu0 %v7424
        %7828 = vmatprep.subr.bf16.mxu0 0
        %7829 = vmatpush1.bf16.msra.mxu0 %v7425
        %7830 = vmatprep.subr.bf16.mxu0 0
        %7831 = vmatpush1.bf16.msra.mxu0 %v7426
        %7832 = vmatprep.subr.bf16.mxu0 0
        %7833 = vmatpush1.bf16.msra.mxu0 %v7427
        %7834 = vmatprep.subr.bf16.mxu0 0
        %7835 = vmatpush1.bf16.msra.mxu0 %v7428
        %7836 = vmatprep.subr.bf16.mxu0 0
        %7837 = vmatpush1.bf16.msra.mxu0 %v7429
        %7838 = vmatprep.subr.bf16.mxu0 0
        %7839 = vmatpush1.bf16.msra.mxu0 %v7430
        %7840 = vmatprep.subr.bf16.mxu0 0
        %7841 = vmatpush1.bf16.msra.mxu0 %v7431
        %7842 = vmatprep.subr.bf16.mxu0 0
        %7843 = vmatpush1.bf16.msra.mxu0 %v7432
        %7844 = vmatprep.subr.bf16.mxu0 0
        %7845 = vmatpush1.bf16.msra.mxu0 %v7433
        %7846 = vmatprep.subr.bf16.mxu0 0
        %7847 = vmatpush1.bf16.msra.mxu0 %v7434
        %7848 = vmatprep.subr.bf16.mxu0 0
        %7849 = vmatpush1.bf16.msra.mxu0 %v7435
        %7850 = vmatprep.subr.bf16.mxu0 0
        %7851 = vmatpush1.bf16.msra.mxu0 %v7436
        %7852 = vmatprep.subr.bf16.mxu0 0
        %7853 = vmatpush1.bf16.msra.mxu0 %v7437
        %7854 = vmatprep.mubr.bf16.mxu0 %v6554
        %7855 = vmatmul.mubr.bf16.gmra.mrb[0].mxu0 %v6553
        %v7856 = vpop.f32.mrb[0].mxu0
        %v7857 = vadd.f32 %v7817, %v7856
        %v7858 = vpop.f32.mrb[0].mxu0
        %v7859 = vpop.f32.mrb[0].mxu0
        %v7860 = vpop.f32.mrb[0].mxu0
        %7861 = vdwg.mxu0
        %7862 = vmatprep.subr.bf16.mxu0 0
        %7863 = vmatpush1.bf16.msra.mxu0 %v7438
        %7864 = vmatprep.subr.bf16.mxu0 0
        %7865 = vmatpush1.bf16.msra.mxu0 %v7439
        %7866 = vmatprep.subr.bf16.mxu0 0
        %7867 = vmatpush1.bf16.msra.mxu0 %v7440
        %7868 = vmatprep.subr.bf16.mxu0 0
        %7869 = vmatpush1.bf16.msra.mxu0 %v7441
        %7870 = vmatprep.subr.bf16.mxu0 0
        %7871 = vmatpush1.bf16.msra.mxu0 %v7442
        %7872 = vmatprep.subr.bf16.mxu0 0
        %7873 = vmatpush1.bf16.msra.mxu0 %v7443
        %7874 = vmatprep.subr.bf16.mxu0 0
        %7875 = vmatpush1.bf16.msra.mxu0 %v7444
        %7876 = vmatprep.subr.bf16.mxu0 0
        %7877 = vmatpush1.bf16.msra.mxu0 %v7445
        %7878 = vmatprep.subr.bf16.mxu0 0
        %7879 = vmatpush1.bf16.msra.mxu0 %v7446
        %7880 = vmatprep.subr.bf16.mxu0 0
        %7881 = vmatpush1.bf16.msra.mxu0 %v7447
        %7882 = vmatprep.subr.bf16.mxu0 0
        %7883 = vmatpush1.bf16.msra.mxu0 %v7448
        %7884 = vmatprep.subr.bf16.mxu0 0
        %7885 = vmatpush1.bf16.msra.mxu0 %v7449
        %7886 = vmatprep.subr.bf16.mxu0 0
        %7887 = vmatpush1.bf16.msra.mxu0 %v7450
        %7888 = vmatprep.subr.bf16.mxu0 0
        %7889 = vmatpush1.bf16.msra.mxu0 %v7451
        %7890 = vmatprep.subr.bf16.mxu0 0
        %7891 = vmatpush1.bf16.msra.mxu0 %v7452
        %7892 = vmatprep.subr.bf16.mxu0 0
        %7893 = vmatpush1.bf16.msra.mxu0 %v7453
        %7894 = vmatprep.mubr.bf16.mxu0 %v6556
        %7895 = vmatmul.mubr.bf16.gmra.mrb[0].mxu0 %v6555
        %v7896 = vpop.f32.mrb[0].mxu0
        %v7897 = vadd.f32 %v7857, %v7896
        %v7898 = vpop.f32.mrb[0].mxu0
        %v7899 = vpop.f32.mrb[0].mxu0
        %v7900 = vpop.f32.mrb[0].mxu0
        %7901 = vdwg.mxu0
        %v7902 = vmax.f32 %v7897, 0.0
        %v7903 = vpack.c.bf16 %v7902, %v7902
        %v7904 = vld [vmem:[%s7] sm:$0xf]
        %v7905 = vld [vmem:[%s7 + $0x4] sm:$0xf]
        %v7906 = vld [vmem:[%s7 + $0x8] sm:$0xf]
        %v7907 = vld [vmem:[%s7 + $0xc] sm:$0xf]
        %v7908 = vld [vmem:[%s7 + $0x10] sm:$0xf]
        %v7909 = vld [vmem:[%s7 + $0x14] sm:$0xf]
        %v7910 = vld [vmem:[%s7 + $0x18] sm:$0xf]
        %v7911 = vld [vmem:[%s7 + $0x1c] sm:$0xf]
        %v7912 = vld [vmem:[%s7 + $0x20] sm:$0xf]
        %v7913 = vld [vmem:[%s7 + $0x24] sm:$0xf]
        %v7914 = vld [vmem:[%s7 + $0x28] sm:$0xf]
        %v7915 = vld [vmem:[%s7 + $0x2c] sm:$0xf]
        %v7916 = vld [vmem:[%s7 + $0x30] sm:$0xf]
        %v7917 = vld [vmem:[%s7 + $0x34] sm:$0xf]
        %v7918 = vld [vmem:[%s7 + $0x38] sm:$0xf]
        %v7919 = vld [vmem:[%s7 + $0x3c] sm:$0xf]
        %v7920 = vld [vmem:[%s8] sm:$0x1]
        %v7937 = vunpack.c.l.b16 %v7904
        %v7938 = vunpack.c.l.b16 %v7905
        %v7939 = vunpack.c.l.b16 %v7906
        %v7940 = vunpack.c.l.b16 %v7907
        %v7941 = vunpack.c.l.b16 %v7908
        %v7942 = vunpack.c.l.b16 %v7909
        %v7943 = vunpack.c.l.b16 %v7910
        %v7944 = vunpack.c.l.b16 %v7911
        %v7945 = vunpack.c.l.b16 %v7912
        %v7946 = vunpack.c.l.b16 %v7913
        %v7947 = vunpack.c.l.b16 %v7914
        %v7948 = vunpack.c.l.b16 %v7915
        %v7949 = vunpack.c.l.b16 %v7916
        %v7950 = vunpack.c.l.b16 %v7917
        %v7951 = vunpack.c.l.b16 %v7918
        %v7952 = vunpack.c.l.b16 %v7919
        %v7953 = vpack.c.b16 %v7938, %v7937
        %v7954 = vpack.c.b16 %v7940, %v7939
        %v7955 = vpack.c.b16 %v7942, %v7941
        %v7956 = vpack.c.b16 %v7944, %v7943
        %v7957 = vpack.c.b16 %v7946, %v7945
        %v7958 = vpack.c.b16 %v7948, %v7947
        %v7959 = vpack.c.b16 %v7950, %v7949
        %v7960 = vpack.c.b16 %v7952, %v7951
        %7969 = vmatprep.subr.bf16.mxu0 0
        %7970 = vmatpush1.bf16.msra.mxu0 %v7953
        %7971 = vmatprep.subr.bf16.mxu0 0
        %7972 = vmatpush1.bf16.msra.mxu0 %v7954
        %7973 = vmatprep.subr.bf16.mxu0 0
        %7974 = vmatpush1.bf16.msra.mxu0 %v7955
        %7975 = vmatprep.subr.bf16.mxu0 0
        %7976 = vmatpush1.bf16.msra.mxu0 %v7956
        %7977 = vmatprep.subr.bf16.mxu0 0
        %7978 = vmatpush1.bf16.msra.mxu0 %v7957
        %7979 = vmatprep.subr.bf16.mxu0 0
        %7980 = vmatpush1.bf16.msra.mxu0 %v7958
        %7981 = vmatprep.subr.bf16.mxu0 0
        %7982 = vmatpush1.bf16.msra.mxu0 %v7959
        %7983 = vmatprep.subr.bf16.mxu0 0
        %7984 = vmatpush1.bf16.msra.mxu0 %v7960
        %7985 = vmatprep.subr.bf16.mxu0 0
        %7986 = vmatpush1.bf16.msra.mxu0 0
        %7987 = vmatprep.subr.bf16.mxu0 0
        %7988 = vmatpush1.bf16.msra.mxu0 0
        %7989 = vmatprep.subr.bf16.mxu0 0
        %7990 = vmatpush1.bf16.msra.mxu0 0
        %7991 = vmatprep.subr.bf16.mxu0 0
        %7992 = vmatpush1.bf16.msra.mxu0 0
        %7993 = vmatprep.subr.bf16.mxu0 0
        %7994 = vmatpush1.bf16.msra.mxu0 0
        %7995 = vmatprep.subr.bf16.mxu0 0
        %7996 = vmatpush1.bf16.msra.mxu0 0
        %7997 = vmatprep.subr.bf16.mxu0 0
        %7998 = vmatpush1.bf16.msra.mxu0 0
        %7999 = vmatprep.subr.bf16.mxu0 0
        %8000 = vmatpush1.bf16.msra.mxu0 0
        %8001 = vmatprep.mubr.bf16.mxu0 0
        %8002 = vmatmul.mubr.bf16.gmra.mrb[0].mxu0 %v7903
        %v8003 = vpop.f32.mrb[0].mxu0
        %v8004 = vadd.f32 %v7920, %v8003
        %v8005 = vpop.f32.mrb[0].mxu0
        %v8006 = vpop.f32.mrb[0].mxu0
        %v8007 = vpop.f32.mrb[0].mxu0
        %8008 = vdwg.mxu0
        %v8009 = vmax.f32 %v8004, 0.0
        %v8010 = vpack.c.bf16 %v8009, %v8009
        %v8011 = vld [vmem:[%s9] sm:$0xf]
        %v8012 = vld [vmem:[%s9 + $0x4] sm:$0xf]
        %v8013 = vld [vmem:[%s9 + $0x8] sm:$0xf]
        %v8014 = vld [vmem:[%s9 + $0xc] sm:$0xf]
        %v8015 = vld [vmem:[%s9 + $0x10] sm:$0xf]
        %v8016 = vld [vmem:[%s9 + $0x14] sm:$0xf]
        %v8017 = vld [vmem:[%s9 + $0x18] sm:$0xf]
        %v8018 = vld [vmem:[%s9 + $0x1c] sm:$0xf]
        %v8019 = vld [vmem:[%s9 + $0x20] sm:$0xf]
        %v8020 = vld [vmem:[%s9 + $0x24] sm:$0xf]
        %v8021 = vld [vmem:[%s9 + $0x28] sm:$0xf]
        %v8022 = vld [vmem:[%s9 + $0x2c] sm:$0xf]
        %v8023 = vld [vmem:[%s9 + $0x30] sm:$0xf]
        %v8024 = vld [vmem:[%s9 + $0x34] sm:$0xf]
        %v8025 = vld [vmem:[%s9 + $0x38] sm:$0xf]
        %v8026 = vld [vmem:[%s9 + $0x3c] sm:$0xf]
        %v8027 = vld [vmem:[%s10] sm:$0x1]
        %v8044 = vunpack.c.l.b16 %v8011
        %v8045 = vunpack.c.l.b16 %v8012
        %v8046 = vunpack.c.l.b16 %v8013
        %v8047 = vunpack.c.l.b16 %v8014
        %v8048 = vunpack.c.l.b16 %v8015
        %v8049 = vunpack.c.l.b16 %v8016
        %v8050 = vunpack.c.l.b16 %v8017
        %v8051 = vunpack.c.l.b16 %v8018
        %v8052 = vunpack.c.l.b16 %v8019
        %v8053 = vunpack.c.l.b16 %v8020
        %v8054 = vunpack.c.l.b16 %v8021
        %v8055 = vunpack.c.l.b16 %v8022
        %v8056 = vunpack.c.l.b16 %v8023
        %v8057 = vunpack.c.l.b16 %v8024
        %v8058 = vunpack.c.l.b16 %v8025
        %v8059 = vunpack.c.l.b16 %v8026
        %v8060 = vpack.c.b16 %v8045, %v8044
        %v8061 = vpack.c.b16 %v8047, %v8046
        %v8062 = vpack.c.b16 %v8049, %v8048
        %v8063 = vpack.c.b16 %v8051, %v8050
        %v8064 = vpack.c.b16 %v8053, %v8052
        %v8065 = vpack.c.b16 %v8055, %v8054
        %v8066 = vpack.c.b16 %v8057, %v8056
        %v8067 = vpack.c.b16 %v8059, %v8058
        %8076 = vmatprep.subr.bf16.mxu0 0
        %8077 = vmatpush1.bf16.msra.mxu0 %v8060
        %8078 = vmatprep.subr.bf16.mxu0 0
        %8079 = vmatpush1.bf16.msra.mxu0 %v8061
        %8080 = vmatprep.subr.bf16.mxu0 0
        %8081 = vmatpush1.bf16.msra.mxu0 %v8062
        %8082 = vmatprep.subr.bf16.mxu0 0
        %8083 = vmatpush1.bf16.msra.mxu0 %v8063
        %8084 = vmatprep.subr.bf16.mxu0 0
        %8085 = vmatpush1.bf16.msra.mxu0 %v8064
        %8086 = vmatprep.subr.bf16.mxu0 0
        %8087 = vmatpush1.bf16.msra.mxu0 %v8065
        %8088 = vmatprep.subr.bf16.mxu0 0
        %8089 = vmatpush1.bf16.msra.mxu0 %v8066
        %8090 = vmatprep.subr.bf16.mxu0 0
        %8091 = vmatpush1.bf16.msra.mxu0 %v8067
        %8092 = vmatprep.subr.bf16.mxu0 0
        %8093 = vmatpush1.bf16.msra.mxu0 0
        %8094 = vmatprep.subr.bf16.mxu0 0
        %8095 = vmatpush1.bf16.msra.mxu0 0
        %8096 = vmatprep.subr.bf16.mxu0 0
        %8097 = vmatpush1.bf16.msra.mxu0 0
        %8098 = vmatprep.subr.bf16.mxu0 0
        %8099 = vmatpush1.bf16.msra.mxu0 0
        %8100 = vmatprep.subr.bf16.mxu0 0
        %8101 = vmatpush1.bf16.msra.mxu0 0
        %8102 = vmatprep.subr.bf16.mxu0 0
        %8103 = vmatpush1.bf16.msra.mxu0 0
        %8104 = vmatprep.subr.bf16.mxu0 0
        %8105 = vmatpush1.bf16.msra.mxu0 0
        %8106 = vmatprep.subr.bf16.mxu0 0
        %8107 = vmatpush1.bf16.msra.mxu0 0
        %8108 = vmatprep.mubr.bf16.mxu0 0
        %8109 = vmatmul.mubr.bf16.gmra.mrb[0].mxu0 %v8010
        %v8110 = vpop.f32.mrb[0].mxu0
        %v8111 = vadd.f32 %v8027, %v8110
        %v8112 = vpop.f32.mrb[0].mxu0
        %v8113 = vpop.f32.mrb[0].mxu0
        %v8114 = vpop.f32.mrb[0].mxu0
        %8115 = vdwg.mxu0
        %v8116 = vmax.f32 %v8111, 0.0
        %v8117 = vpack.c.bf16 %v8116, %v8116
        %v8118 = vld [vmem:[%s11] sm:$0xf]
        %v8119 = vld [vmem:[%s11 + $0x4] sm:$0xf]
        %v8120 = vld [vmem:[%s11 + $0x8] sm:$0xf]
        %v8121 = vld [vmem:[%s11 + $0xc] sm:$0xf]
        %v8122 = vld [vmem:[%s11 + $0x10] sm:$0xf]
        %v8123 = vld [vmem:[%s11 + $0x14] sm:$0xf]
        %v8124 = vld [vmem:[%s11 + $0x18] sm:$0xf]
        %v8125 = vld [vmem:[%s11 + $0x1c] sm:$0xf]
        %v8126 = vld [vmem:[%s11 + $0x20] sm:$0xf]
        %v8127 = vld [vmem:[%s11 + $0x24] sm:$0xf]
        %v8128 = vld [vmem:[%s11 + $0x28] sm:$0xf]
        %v8129 = vld [vmem:[%s11 + $0x2c] sm:$0xf]
        %v8130 = vld [vmem:[%s11 + $0x30] sm:$0xf]
        %v8131 = vld [vmem:[%s11 + $0x34] sm:$0xf]
        %v8132 = vld [vmem:[%s11 + $0x38] sm:$0xf]
        %v8133 = vld [vmem:[%s11 + $0x3c] sm:$0xf]
        %v8134 = vld [vmem:[%s12] sm:$0x1]
        %v8151 = vunpack.c.l.b16 %v8118
        %v8152 = vunpack.c.l.b16 %v8119
        %v8153 = vunpack.c.l.b16 %v8120
        %v8154 = vunpack.c.l.b16 %v8121
        %v8155 = vunpack.c.l.b16 %v8122
        %v8156 = vunpack.c.l.b16 %v8123
        %v8157 = vunpack.c.l.b16 %v8124
        %v8158 = vunpack.c.l.b16 %v8125
        %v8159 = vunpack.c.l.b16 %v8126
        %v8160 = vunpack.c.l.b16 %v8127
        %v8161 = vunpack.c.l.b16 %v8128
        %v8162 = vunpack.c.l.b16 %v8129
        %v8163 = vunpack.c.l.b16 %v8130
        %v8164 = vunpack.c.l.b16 %v8131
        %v8165 = vunpack.c.l.b16 %v8132
        %v8166 = vunpack.c.l.b16 %v8133
        %v8167 = vpack.c.b16 %v8152, %v8151
        %v8168 = vpack.c.b16 %v8154, %v8153
        %v8169 = vpack.c.b16 %v8156, %v8155
        %v8170 = vpack.c.b16 %v8158, %v8157
        %v8171 = vpack.c.b16 %v8160, %v8159
        %v8172 = vpack.c.b16 %v8162, %v8161
        %v8173 = vpack.c.b16 %v8164, %v8163
        %v8174 = vpack.c.b16 %v8166, %v8165
        %8183 = vmatprep.subr.bf16.mxu0 0
        %8184 = vmatpush1.bf16.msra.mxu0 %v8167
        %8185 = vmatprep.subr.bf16.mxu0 0
        %8186 = vmatpush1.bf16.msra.mxu0 %v8168
        %8187 = vmatprep.subr.bf16.mxu0 0
        %8188 = vmatpush1.bf16.msra.mxu0 %v8169
        %8189 = vmatprep.subr.bf16.mxu0 0
        %8190 = vmatpush1.bf16.msra.mxu0 %v8170
        %8191 = vmatprep.subr.bf16.mxu0 0
        %8192 = vmatpush1.bf16.msra.mxu0 %v8171
        %8193 = vmatprep.subr.bf16.mxu0 0
        %8194 = vmatpush1.bf16.msra.mxu0 %v8172
        %8195 = vmatprep.subr.bf16.mxu0 0
        %8196 = vmatpush1.bf16.msra.mxu0 %v8173
        %8197 = vmatprep.subr.bf16.mxu0 0
        %8198 = vmatpush1.bf16.msra.mxu0 %v8174
        %8199 = vmatprep.subr.bf16.mxu0 0
        %8200 = vmatpush1.bf16.msra.mxu0 0
        %8201 = vmatprep.subr.bf16.mxu0 0
        %8202 = vmatpush1.bf16.msra.mxu0 0
        %8203 = vmatprep.subr.bf16.mxu0 0
        %8204 = vmatpush1.bf16.msra.mxu0 0
        %8205 = vmatprep.subr.bf16.mxu0 0
        %8206 = vmatpush1.bf16.msra.mxu0 0
        %8207 = vmatprep.subr.bf16.mxu0 0
        %8208 = vmatpush1.bf16.msra.mxu0 0
        %8209 = vmatprep.subr.bf16.mxu0 0
        %8210 = vmatpush1.bf16.msra.mxu0 0
        %8211 = vmatprep.subr.bf16.mxu0 0
        %8212 = vmatpush1.bf16.msra.mxu0 0
        %8213 = vmatprep.subr.bf16.mxu0 0
        %8214 = vmatpush1.bf16.msra.mxu0 0
        %8215 = vmatprep.mubr.bf16.mxu0 0
        %8216 = vmatmul.mubr.bf16.gmra.mrb[0].mxu0 %v8117
        %v8217 = vpop.f32.mrb[0].mxu0
        %v8218 = vadd.f32 %v8134, %v8217
        %v8219 = vpop.f32.mrb[0].mxu0
        %v8220 = vpop.f32.mrb[0].mxu0
        %v8221 = vpop.f32.mrb[0].mxu0
        %8222 = vdwg.mxu0
        %8223 = vst [vmem:[%s432] sm:$0x1] %v8218
        %s8224 = sand.u32 %s313, 1
        %s8225 = scalar_lea.sflag [#allocation6], %s8224
        %s8226 = sand.u32 %s313, 1
        %s8227 = scalar_lea.vmem [#allocation5], %s8226
        // Predicated region
        $region73: #{convnet_forward.1} parent=71 // pred_check
          %p8228 = pneg %p323
        $region74: #{convnet_forward.1} parent=71 // pred_check_branch
          %8230 = sbr.rel (%p8228) target = $region76
        $region75: #{convnet_forward.1} parent=71 // pred_region
          %s8232 = ssub.s32 16, 16
          %8233 = vsyncadd %s8225, %s8232
          %s8234 = smul.addr %s27, 16
          %s8235 = scalar_lea.hbm %s13, %s8234
          %s8237 = sshll.u32 %s8227, 4
          %s8238 = int_to_ptr.vmem [resolvable:$true] %s8237
          %8240 = dma.vmem_to_hbm [thread:$0]  %s8238, 16, %s8235, %s8225
        $region76: #{convnet_forward.1} parent=71 // pred_fallthru
          _
      $region72: #{convnet_forward.1} parent=5 // pred_fallthru
        _
      %p8241 = scmp.le.s32.totalorder 2, %s22
      // Predicated region
      $region77: #{convnet_forward.1} parent=5 // pred_check
        %p8242 = pneg %p8241
      $region78: #{convnet_forward.1} parent=5 // pred_check_branch
        %8244 = sbr.rel (%p8242) target = $region80
      $region79: #{convnet_forward.1} parent=5 // pred_region
        %s8245 = ssub.s32 %s22, 2
        // Predicated region
        $region81: #{convnet_forward.1} parent=79 // pred_check
          %p8246 = pneg %p329
        $region82: #{convnet_forward.1} parent=79 // pred_check_branch
          %8248 = sbr.rel (%p8246) target = $region84
        $region83: #{convnet_forward.1} parent=79 // pred_region
          %s8249 = sand.u32 %s314, 1
          %s8250 = scalar_lea.sflag [#allocation6], %s8249
          %s8251 = sand.u32 %s314, 1
          %s8252 = scalar_lea.vmem [#allocation5], %s8251
          %8253 = dma.done %s8250, 16
        $region84: #{convnet_forward.1} parent=79 // pred_fallthru
          _
      $region80: #{convnet_forward.1} parent=5 // pred_fallthru
        _
    $region6: #{convnet_forward.1} parent=1 // loop_footer
      %s26 = sadd.s32 1, %s22
    $region7: #{convnet_forward.1} parent=1 // loop_footer_branch
      %21 = sbr.rel target = $region3
    $region8: #{convnet_forward.1} parent=1 // loop_exit
      _
    %8254 = vsyncpa [#allocation6], 1
    %s8255 = scalar_lea.sflag [#allocation6], 1
    %8256 = vsyncpa %s8255, 1

</llo_original>
